<compile_context>
chip_gen: v6e
topology: v6e:2x2x1
jax: 0.10.0
libtpu: 0.0.40
codegen_flags: <defaults>
</compile_context>

<pallas_src>
import math

import jax
import jax.numpy as jnp
from jax import lax
from jax.experimental import pallas as pl
from jax.experimental.pallas import tpu as pltpu


# 48 MiB: above the 32 MiB scoped default on v5e/v6e, <= v7x's 64 MiB/TC.
_VMEM_LIMIT = 48 * 1024 * 1024


# ---------------------------------------------------------------------------
# Pallas kernel: one GatedMaskedConv2d layer (optionally + fused output head)
# on a single (H, W, C) image block.  Taps are built in VMEM, no HBM im2col.
# ---------------------------------------------------------------------------
def _make_layer_kernel(d, kernel, nvh, nh_taps, layer0, residual, head):
    p = kernel // 2

    def body(*refs):
        if head:
            (xin_ref, wv_ref, bv_ref, wh_ref, bh_ref, wr_ref, br_ref,
             w1_ref, b1_ref, w2_ref, b2_ref, out_ref) = refs
        else:
            (xin_ref, wv_ref, bv_ref, wh_ref, bh_ref, wr_ref, br_ref,
             out_ref) = refs

        x = xin_ref[0]                               # (H, W, Cin) bf16
        H, W = x.shape[0], x.shape[1]
        n = H * W
        dt = x.dtype

        if layer0:
            xv, xh = x, x                            # layer 0: x_v == x_h
        else:
            xv, xh = x[:, :, :d], x[:, :, d:]

        # ---- causal taps built in VMEM (static slices of a zero-padded copy)
        # vertical stack: output (i, j) sees rows i-p .. i-p+nvh-1, cols j-p..j+p
        xv_pad = jnp.concatenate([jnp.zeros((p, W, d), dt), xv], axis=0)
        zc = jnp.zeros((H + p, p, d), dt)
        xv_pad = jnp.concatenate([zc, xv_pad, zc], axis=1)       # (H+p, W+2p, d)
        taps_v = jnp.concatenate(
            [xv_pad[dh:dh + H, dw:dw + W, :].reshape(n, d)
             for dh in range(nvh) for dw in range(kernel)], axis=-1)

        # horizontal stack: output (i, j) sees cols j-p .. j-p+nh_taps-1
        xh_pad = jnp.concatenate([jnp.zeros((H, p, d), dt), xh], axis=1)
        taps_h = jnp.concatenate(
            [xh_pad[:, dw:dw + W, :].reshape(n, d) for dw in range(nh_taps)],
            axis=-1)

        # ---- fused masked-conv matmuls (bf16 operands, f32 MXU accumulation)
        hv = jnp.dot(taps_v, wv_ref[...],
                     preferred_element_type=jnp.float32) + bv_ref[...]
        hh = jnp.dot(taps_h, wh_ref[...],
                     preferred_element_type=jnp.float32) + bh_ref[...]

        if head:
            # last layer: only the vert_to_horiz half of the fused weight was
            # passed (out_v of the final layer is never used).
            v2h = hv
        else:
            v2h = hv[:, 2 * d:]
            out_v = jnp.tanh(hv[:, :d]) * jax.nn.sigmoid(hv[:, d:2 * d])

        g = v2h + hh
        out = jnp.tanh(g[:, :d]) * jax.nn.sigmoid(g[:, d:])
        oh = jnp.dot(out.astype(jnp.bfloat16), wr_ref[...],
                     preferred_element_type=jnp.float32) + br_ref[...]
        if residual:
            oh = oh + xh.reshape(n, d).astype(jnp.float32)

        if head:
            # fused output head: 1x1 conv -> ReLU -> 1x1 conv (codebook padded
            # to a lane-dense multiple of 128).
            h1 = jnp.dot(oh.astype(jnp.bfloat16), w1_ref[...],
                         preferred_element_type=jnp.float32) + b1_ref[...]
            h1 = jnp.maximum(h1, 0.0)
            logits = jnp.dot(h1.astype(jnp.bfloat16), w2_ref[...],
                             preferred_element_type=jnp.float32) + b2_ref[...]
            out_ref[0] = logits.reshape(H, W, -1).astype(out_ref.dtype)
        else:
            # combined lane-dense bf16 output: [:d] = out_v, [d:] = out_h
            res = jnp.concatenate([out_v, oh], axis=-1)
            out_ref[0] = res.reshape(H, W, 2 * d).astype(out_ref.dtype)

    return body


# ---------------------------------------------------------------------------
# pallas_call wrapper for one layer
# ---------------------------------------------------------------------------
def _full_spec(a):
    nd = a.ndim
    return pl.BlockSpec(a.shape, lambda b, _nd=nd: (0,) * _nd)


def run_layer(x_in, lp, *, d, kernel, layer0, residual, head_weights=None):
    B, H, W, c_in = x_in.shape
    nv_taps = lp["wv"].shape[0] // d
    nvh = nv_taps // kernel
    nh_taps = lp["wh"].shape[0] // d
    head = head_weights is not None

    if head:
        wv, bv = lp["wv"][:, 2 * d:], lp["bv"][:, 2 * d:]   # vert_to_horiz half only
    else:
        wv, bv = lp["wv"], lp["bv"]

    weights = [wv, bv, lp["wh"], lp["bh"], lp["wres"], lp["bres"]]
    if head:
        weights += list(head_weights)                        # w1, b1, w2, b2
    c_out = head_weights[2].shape[1] if head else 2 * d
    out_dtype = jnp.float32 if head else jnp.bfloat16

    def act_spec(c):
        return pl.BlockSpec((1, H, W, c), lambda b: (b, 0, 0, 0))

    n = B * H * W
    flops = (2 * n * (nv_taps * d) * wv.shape[1]
             + 2 * n * (nh_taps * d) * 2 * d
             + 2 * n * d * d)
    trans = 2 * n * d if head else 4 * n * d
    if head:
        flops += 2 * n * d * d + 2 * n * d * c_out
    bytes_acc = (x_in.size * x_in.dtype.itemsize
                 + B * sum(w.size * w.dtype.itemsize for w in weights)
                 + n * c_out * (4 if head else 2))
    cost = pl.CostEstimate(flops=int(flops), transcendentals=int(trans),
                           bytes_accessed=int(bytes_acc))

    kern = _make_layer_kernel(d=d, kernel=kernel, nvh=nvh, nh_taps=nh_taps,
                              layer0=layer0, residual=residual, head=head)
    return pl.pallas_call(
        kern,
        out_shape=jax.ShapeDtypeStruct((B, H, W, c_out), out_dtype),
        grid=(B,),
        in_specs=[act_spec(c_in)] + [_full_spec(w) for w in weights],
        out_specs=act_spec(c_out),
        compiler_params=pltpu.CompilerParams(
            dimension_semantics=("parallel",),      # batch splits across v7x TCs
            vmem_limit_bytes=_VMEM_LIMIT),
        cost_estimate=cost,
    )(x_in, *weights)


# ---------------------------------------------------------------------------
# Parameter initialization (deterministic, synthetic - mirrors weights_init)
# ---------------------------------------------------------------------------
def _xavier_conv(key, out_ch, in_ch, kh, kw):
    fan_in = in_ch * kh * kw
    fan_out = out_ch * kh * kw
    bound = math.sqrt(6.0 / (fan_in + fan_out))
    # stored as (kh, kw, in, out)
    return jax.random.uniform(key, (kh, kw, in_ch, out_ch), jnp.float32,
                              -bound, bound)


def init_params(key, codebook_size, hidden_dim, n_layers, n_classes):
    del n_classes  # conditional=False -> class_cond_embedding is zero & frozen
    d = hidden_dim
    keys = jax.random.split(key, 4 * n_layers + 3)
    ki = 0
    emb = jax.random.normal(keys[ki], (codebook_size, d), jnp.float32); ki += 1

    layers, ref_layers = [], []
    for i in range(n_layers):
        kernel = 7 if i == 0 else 3
        p = kernel // 2
        kh = p + 1
        mask_a = (i == 0)
        wv_full = _xavier_conv(keys[ki], 2 * d, d, kh, kernel); ki += 1  # (kh,k,d,2d)
        wh_full = _xavier_conv(keys[ki], 2 * d, d, 1, p + 1); ki += 1    # (1,p+1,d,2d)
        wv2h = _xavier_conv(keys[ki], 2 * d, 2 * d, 1, 1).reshape(2 * d, 2 * d); ki += 1
        wres = _xavier_conv(keys[ki], d, d, 1, 1).reshape(d, d); ki += 1
        if mask_a:
            # make_causal(): zero last vertical kernel row / last horizontal col.
            wv_full = wv_full.at[kh - 1].set(0.0)
            wh_full = wh_full.at[:, p].set(0.0)
        # kernel-format weights: drop the all-zero mask-'A' taps entirely and
        # fuse vert_to_horiz into the vertical tap matmul (f32 product -> bf16).
        wv_taps = wv_full[:kh - 1] if mask_a else wv_full
        wh_taps = wh_full[:, :p] if mask_a else wh_full
        wv2 = wv_taps.reshape(-1, 2 * d)
        bv = jnp.zeros((1, 2 * d), jnp.float32)
        bv2h = jnp.zeros((1, 2 * d), jnp.float32)
        wv_fused = jnp.concatenate([wv2, wv2 @ wv2h], axis=1)        # (nv*d, 4d)
        bv_fused = jnp.concatenate([bv, bv @ wv2h + bv2h], axis=1)   # (1, 4d)
        layers.append(dict(
            wv=wv_fused.astype(jnp.bfloat16), bv=bv_fused,
            wh=wh_taps.reshape(-1, 2 * d).astype(jnp.bfloat16),
            bh=jnp.zeros((1, 2 * d), jnp.float32),
            wres=wres.astype(jnp.bfloat16),
            bres=jnp.zeros((1, d), jnp.float32)))
        ref_layers.append(dict(wv=wv_full, wh=wh_full, wv2h=wv2h, wres=wres,
                               residual=(i != 0), kernel=kernel))

    out_w1 = _xavier_conv(keys[ki], d, d, 1, 1).reshape(d, d); ki += 1
    out_w2 = _xavier_conv(keys[ki], codebook_size, d, 1, 1).reshape(d, codebook_size); ki += 1

    params = dict(embedding=emb, layers=layers,
                  out_w1=out_w1, out_b1=jnp.zeros((1, d), jnp.float32),
                  out_w2=out_w2,
                  out_b2=jnp.zeros((1, codebook_size), jnp.float32))
    ref = dict(embedding=emb, layers=ref_layers, out_w1=out_w1, out_w2=out_w2)
    return params, ref


# ---------------------------------------------------------------------------
# Forward pass (glue in JAX, hot path in Pallas)
# ---------------------------------------------------------------------------
def gated_pixelcnn_forward(params, x_idx, label):
    del label  # conditional=False -> class_cond_embedding is all-zero & frozen
    B, H, W = x_idx.shape
    d = params["embedding"].shape[1]
    # TODO(synk): embedding lookup is a gather; kept in plain-JAX glue.
    x = jnp.take(params["embedding"], x_idx.reshape(-1), axis=0)
    act = x.reshape(B, H, W, d).astype(jnp.bfloat16)

    K = params["out_w2"].shape[1]
    Kp = pl.cdiv(K, 128) * 128          # lane-dense padded codebook dim
    head_weights = (
        params["out_w1"].astype(jnp.bfloat16),
        params["out_b1"],
        jnp.pad(params["out_w2"], ((0, 0), (0, Kp - K))).astype(jnp.bfloat16),
        jnp.pad(params["out_b2"], ((0, 0), (0, Kp - K))),
    )

    n_layers = len(params["layers"])
    for i, lp in enumerate(params["layers"]):
        kernel = 7 if i == 0 else 3
        act = run_layer(
            act, lp, d=d, kernel=kernel, layer0=(i == 0), residual=(i != 0),
            head_weights=head_weights if i == n_layers - 1 else None)

    # act: (B, H, W, Kp) f32 logits; slice padding, return PyTorch NCHW.
    return act[..., :K].transpose(0, 3, 1, 2)


# ---------------------------------------------------------------------------
# Pure-f32 JAX reference (lax convs mirroring the PyTorch module), used to
# validate the bf16 Pallas path with an explicit tolerance.  Assumes H == W.
# ---------------------------------------------------------------------------
def reference_forward(ref, x_idx):
    B, H, W = x_idx.shape
    d = ref["embedding"].shape[1]
    hp = lax.Precision.HIGHEST
    x = jnp.take(ref["embedding"], x_idx.reshape(-1), axis=0).reshape(B, H, W, d)
    x_v, x_h = x, x
    for lp in ref["layers"]:
        p = lp["kernel"] // 2
        hv = lax.conv_general_dilated(
            x_v, lp["wv"], (1, 1), ((p, p), (p, p)),
            dimension_numbers=("NHWC", "HWIO", "NHWC"), precision=hp)[:, :H]
        out_v = jnp.tanh(hv[..., :d]) * jax.nn.sigmoid(hv[..., d:])
        hh = lax.conv_general_dilated(
            x_h, lp["wh"], (1, 1), ((0, 0), (p, p)),
            dimension_numbers=("NHWC", "HWIO", "NHWC"), precision=hp)[:, :, :W]
        v2h = jnp.einsum("bhwc,co->bhwo", hv, lp["wv2h"], precision=hp)
        g = v2h + hh
        out = jnp.tanh(g[..., :d]) * jax.nn.sigmoid(g[..., d:])
        oh = jnp.einsum("bhwc,co->bhwo", out, lp["wres"], precision=hp)
        if lp["residual"]:
            oh = oh + x_h
        x_v, x_h = out_v, oh
    h1 = jnp.maximum(
        jnp.einsum("bhwc,co->bhwo", x_h, ref["out_w1"], precision=hp), 0.0)
    logits = jnp.einsum("bhwc,co->bhwo", h1, ref["out_w2"], precision=hp)
    return logits.transpose(0, 3, 1, 2)


if __name__ == "__main__":
    codebook_size = 64
    hidden_dim = 32
    n_layers = 3          # layer 0: mask 'A', k=7; rest: mask 'B', k=3 + residual
    n_classes = 10
    B, H, W = 2, 16, 16   # grid=(B,)=(2,) -> both v7x TensorCores busy

    key = jax.random.PRNGKey(0)
    k_param, k_x, k_lbl = jax.random.split(key, 3)
    params, ref = init_params(k_param, codebook_size, hidden_dim,
                              n_layers, n_classes)

    x = jax.random.randint(k_x, (B, H, W), 0, codebook_size, dtype=jnp.int32)
    label = jax.random.randint(k_lbl, (B,), 0, n_classes, dtype=jnp.int32)

    fwd = jax.jit(gated_pixelcnn_forward)
    logits = jax.block_until_ready(fwd(params, x, label))

    assert logits.shape == (B, codebook_size, H, W), logits.shape
    assert bool(jnp.all(jnp.isfinite(logits)))

    # validate the bf16 Pallas path against the pure-f32 reference
    ref_logits = reference_forward(ref, x)
    max_err = float(jnp.max(jnp.abs(logits - ref_logits)))
    assert max_err < 1e-1, max_err   # bf16 activations/weights vs f32 reference

    print("KERNEL_OK")
</pallas_src>

<mosaic_0001>
module attributes {stable_mosaic.version = 11 : i64} {
  func.func @body(%arg0: i32, %arg1: memref<1x16x16x64xbf16, #tpu.memory_space<vmem>>, %arg2: memref<192x128xbf16, #tpu.memory_space<vmem>>, %arg3: memref<1x128xf32, #tpu.memory_space<vmem>>, %arg4: memref<64x64xbf16, #tpu.memory_space<vmem>>, %arg5: memref<1x64xf32, #tpu.memory_space<vmem>>, %arg6: memref<32x32xbf16, #tpu.memory_space<vmem>>, %arg7: memref<1x32xf32, #tpu.memory_space<vmem>>, %arg8: memref<1x16x16x64xbf16, #tpu.memory_space<vmem>>) attributes {dimension_semantics = [#tpu.dimension_semantics<parallel>], iteration_bounds = array<i64: 2>, scalar_prefetch = 0 : i64, scratch_operands = 0 : i64, tpu.core_type = #tpu.core_type<tc>, window_params = [{transform_indices = @transform_0, window_bounds = array<i64: 1, 16, 16, 64>}, {pipeline_mode = #tpu.pipeline_mode<synchronous>, transform_indices = @transform_1, window_bounds = array<i64: 192, 128>}, {pipeline_mode = #tpu.pipeline_mode<synchronous>, transform_indices = @transform_2, window_bounds = array<i64: 1, 128>}, {pipeline_mode = #tpu.pipeline_mode<synchronous>, transform_indices = @transform_3, window_bounds = array<i64: 64, 64>}, {pipeline_mode = #tpu.pipeline_mode<synchronous>, transform_indices = @transform_4, window_bounds = array<i64: 1, 64>}, {pipeline_mode = #tpu.pipeline_mode<synchronous>, transform_indices = @transform_5, window_bounds = array<i64: 32, 32>}, {pipeline_mode = #tpu.pipeline_mode<synchronous>, transform_indices = @transform_6, window_bounds = array<i64: 1, 32>}, {transform_indices = @transform_7, window_bounds = array<i64: 1, 16, 16, 64>}]} {
    %c0 = arith.constant 0 : index
    %c0_0 = arith.constant 0 : index
    %c0_1 = arith.constant 0 : index
    %c0_2 = arith.constant 0 : index
    %0 = vector.load %arg1[%c0, %c0_0, %c0_1, %c0_2] : memref<1x16x16x64xbf16, #tpu.memory_space<vmem>>, vector<1x16x16x64xbf16>
    %1 = vector.shape_cast %0 : vector<1x16x16x64xbf16> to vector<16x16x64xbf16>
    %2 = vector.extract_strided_slice %1 {offsets = [0, 0, 0], sizes = [16, 16, 32], strides = [1, 1, 1]} : vector<16x16x64xbf16> to vector<16x16x32xbf16>
    %3 = vector.extract_strided_slice %1 {offsets = [0, 0, 32], sizes = [16, 16, 32], strides = [1, 1, 1]} : vector<16x16x64xbf16> to vector<16x16x32xbf16>
    %cst = arith.constant 0.000000e+00 : bf16
    %4 = vector.broadcast %cst : bf16 to vector<1x16x32xbf16>
    %5 = tpu.concatenate %4, %2 in 0 : vector<1x16x32xbf16>, vector<16x16x32xbf16> -> vector<17x16x32xbf16>
    %cst_3 = arith.constant 0.000000e+00 : bf16
    %6 = vector.broadcast %cst_3 : bf16 to vector<17x1x32xbf16>
    %7 = tpu.concatenate %6, %5, %6 in 1 : vector<17x1x32xbf16>, vector<17x16x32xbf16>, vector<17x1x32xbf16> -> vector<17x18x32xbf16>
    %8 = vector.extract_strided_slice %7 {offsets = [0, 0, 0], sizes = [16, 16, 32], strides = [1, 1, 1]} : vector<17x18x32xbf16> to vector<16x16x32xbf16>
    %9 = vector.shape_cast %8 : vector<16x16x32xbf16> to vector<256x32xbf16>
    %10 = vector.extract_strided_slice %7 {offsets = [0, 1, 0], sizes = [16, 16, 32], strides = [1, 1, 1]} : vector<17x18x32xbf16> to vector<16x16x32xbf16>
    %11 = vector.shape_cast %10 : vector<16x16x32xbf16> to vector<256x32xbf16>
    %12 = vector.extract_strided_slice %7 {offsets = [0, 2, 0], sizes = [16, 16, 32], strides = [1, 1, 1]} : vector<17x18x32xbf16> to vector<16x16x32xbf16>
    %13 = vector.shape_cast %12 : vector<16x16x32xbf16> to vector<256x32xbf16>
    %14 = vector.extract_strided_slice %7 {offsets = [1, 0, 0], sizes = [16, 16, 32], strides = [1, 1, 1]} : vector<17x18x32xbf16> to vector<16x16x32xbf16>
    %15 = vector.shape_cast %14 : vector<16x16x32xbf16> to vector<256x32xbf16>
    %16 = vector.extract_strided_slice %7 {offsets = [1, 1, 0], sizes = [16, 16, 32], strides = [1, 1, 1]} : vector<17x18x32xbf16> to vector<16x16x32xbf16>
    %17 = vector.shape_cast %16 : vector<16x16x32xbf16> to vector<256x32xbf16>
    %18 = vector.extract_strided_slice %7 {offsets = [1, 2, 0], sizes = [16, 16, 32], strides = [1, 1, 1]} : vector<17x18x32xbf16> to vector<16x16x32xbf16>
    %19 = vector.shape_cast %18 : vector<16x16x32xbf16> to vector<256x32xbf16>
    %20 = tpu.concatenate %9, %11, %13, %15, %17, %19 in 1 : vector<256x32xbf16>, vector<256x32xbf16>, vector<256x32xbf16>, vector<256x32xbf16>, vector<256x32xbf16>, vector<256x32xbf16> -> vector<256x192xbf16>
    %cst_4 = arith.constant 0.000000e+00 : bf16
    %21 = vector.broadcast %cst_4 : bf16 to vector<16x1x32xbf16>
    %22 = tpu.concatenate %21, %3 in 1 : vector<16x1x32xbf16>, vector<16x16x32xbf16> -> vector<16x17x32xbf16>
    %23 = vector.extract_strided_slice %22 {offsets = [0, 0, 0], sizes = [16, 16, 32], strides = [1, 1, 1]} : vector<16x17x32xbf16> to vector<16x16x32xbf16>
    %24 = vector.shape_cast %23 : vector<16x16x32xbf16> to vector<256x32xbf16>
    %25 = vector.extract_strided_slice %22 {offsets = [0, 1, 0], sizes = [16, 16, 32], strides = [1, 1, 1]} : vector<16x17x32xbf16> to vector<16x16x32xbf16>
    %26 = vector.shape_cast %25 : vector<16x16x32xbf16> to vector<256x32xbf16>
    %27 = tpu.concatenate %24, %26 in 1 : vector<256x32xbf16>, vector<256x32xbf16> -> vector<256x64xbf16>
    %c0_5 = arith.constant 0 : index
    %c0_6 = arith.constant 0 : index
    %28 = vector.load %arg2[%c0_5, %c0_6] : memref<192x128xbf16, #tpu.memory_space<vmem>>, vector<192x128xbf16>
    %cst_7 = arith.constant dense<0.000000e+00> : vector<256x128xf32>
    %29 = tpu.matmul %20, %28, %cst_7 {dimension_numbers = #tpu.dot_dimension_numbers<[1], [0], [0], [1], [0, 0, 1, 1], [], []>} : vector<256x192xbf16>, vector<192x128xbf16>, vector<256x128xf32> -> vector<256x128xf32>
    %c0_8 = arith.constant 0 : index
    %c0_9 = arith.constant 0 : index
    %30 = vector.load %arg3[%c0_8, %c0_9] : memref<1x128xf32, #tpu.memory_space<vmem>>, vector<1x128xf32>
    %31 = vector.broadcast %30 : vector<1x128xf32> to vector<256x128xf32>
    %32 = arith.addf %29, %31 : vector<256x128xf32>
    %c0_10 = arith.constant 0 : index
    %c0_11 = arith.constant 0 : index
    %33 = vector.load %arg4[%c0_10, %c0_11] : memref<64x64xbf16, #tpu.memory_space<vmem>>, vector<64x64xbf16>
    %cst_12 = arith.constant dense<0.000000e+00> : vector<256x64xf32>
    %34 = tpu.matmul %27, %33, %cst_12 {dimension_numbers = #tpu.dot_dimension_numbers<[1], [0], [0], [1], [0, 0, 1, 1], [], []>} : vector<256x64xbf16>, vector<64x64xbf16>, vector<256x64xf32> -> vector<256x64xf32>
    %c0_13 = arith.constant 0 : index
    %c0_14 = arith.constant 0 : index
    %35 = vector.load %arg5[%c0_13, %c0_14] : memref<1x64xf32, #tpu.memory_space<vmem>>, vector<1x64xf32>
    %36 = vector.broadcast %35 : vector<1x64xf32> to vector<256x64xf32>
    %37 = arith.addf %34, %36 : vector<256x64xf32>
    %38 = vector.extract_strided_slice %32 {offsets = [0, 64], sizes = [256, 64], strides = [1, 1]} : vector<256x128xf32> to vector<256x64xf32>
    %39 = vector.extract_strided_slice %32 {offsets = [0, 0], sizes = [256, 32], strides = [1, 1]} : vector<256x128xf32> to vector<256x32xf32>
    %40 = math.tanh %39 : vector<256x32xf32>
    %41 = vector.extract_strided_slice %32 {offsets = [0, 32], sizes = [256, 32], strides = [1, 1]} : vector<256x128xf32> to vector<256x32xf32>
    %42 = arith.negf %41 : vector<256x32xf32>
    %43 = math.exp %42 : vector<256x32xf32>
    %cst_15 = arith.constant 1.000000e+00 : f32
    %44 = vector.broadcast %cst_15 : f32 to vector<256x32xf32>
    %45 = arith.addf %44, %43 : vector<256x32xf32>
    %46 = arith.divf %44, %45 : vector<256x32xf32>
    %47 = arith.mulf %40, %46 : vector<256x32xf32>
    %48 = arith.addf %38, %37 : vector<256x64xf32>
    %49 = vector.extract_strided_slice %48 {offsets = [0, 0], sizes = [256, 32], strides = [1, 1]} : vector<256x64xf32> to vector<256x32xf32>
    %50 = math.tanh %49 : vector<256x32xf32>
    %51 = vector.extract_strided_slice %48 {offsets = [0, 32], sizes = [256, 32], strides = [1, 1]} : vector<256x64xf32> to vector<256x32xf32>
    %52 = arith.negf %51 : vector<256x32xf32>
    %53 = math.exp %52 : vector<256x32xf32>
    %cst_16 = arith.constant 1.000000e+00 : f32
    %54 = vector.broadcast %cst_16 : f32 to vector<256x32xf32>
    %55 = arith.addf %54, %53 : vector<256x32xf32>
    %56 = arith.divf %54, %55 : vector<256x32xf32>
    %57 = arith.mulf %50, %56 : vector<256x32xf32>
    %58 = arith.truncf %57 : vector<256x32xf32> to vector<256x32xbf16>
    %c0_17 = arith.constant 0 : index
    %c0_18 = arith.constant 0 : index
    %59 = vector.load %arg6[%c0_17, %c0_18] : memref<32x32xbf16, #tpu.memory_space<vmem>>, vector<32x32xbf16>
    %cst_19 = arith.constant dense<0.000000e+00> : vector<256x32xf32>
    %60 = tpu.matmul %58, %59, %cst_19 {dimension_numbers = #tpu.dot_dimension_numbers<[1], [0], [0], [1], [0, 0, 1, 1], [], []>} : vector<256x32xbf16>, vector<32x32xbf16>, vector<256x32xf32> -> vector<256x32xf32>
    %c0_20 = arith.constant 0 : index
    %c0_21 = arith.constant 0 : index
    %61 = vector.load %arg7[%c0_20, %c0_21] : memref<1x32xf32, #tpu.memory_space<vmem>>, vector<1x32xf32>
    %62 = vector.broadcast %61 : vector<1x32xf32> to vector<256x32xf32>
    %63 = arith.addf %60, %62 : vector<256x32xf32>
    %64 = vector.shape_cast %3 : vector<16x16x32xbf16> to vector<256x32xbf16>
    %65 = arith.extf %64 : vector<256x32xbf16> to vector<256x32xf32>
    %66 = arith.addf %63, %65 : vector<256x32xf32>
    %67 = tpu.concatenate %47, %66 in 1 : vector<256x32xf32>, vector<256x32xf32> -> vector<256x64xf32>
    %68 = vector.shape_cast %67 : vector<256x64xf32> to vector<16x16x64xf32>
    %69 = arith.truncf %68 : vector<16x16x64xf32> to vector<16x16x64xbf16>
    %c0_22 = arith.constant 0 : index
    %c0_23 = arith.constant 0 : index
    %c0_24 = arith.constant 0 : index
    %c0_25 = arith.constant 0 : index
    %70 = vector.load %arg8[%c0_22, %c0_23, %c0_24, %c0_25] : memref<1x16x16x64xbf16, #tpu.memory_space<vmem>>, vector<1x16x16x64xbf16>
    %71 = vector.shape_cast %70 : vector<1x16x16x64xbf16> to vector<16x16x64xbf16>
    %72 = vector.shape_cast %69 : vector<16x16x64xbf16> to vector<1x16x16x64xbf16>
    tpu.vector_store %arg8[%c0_22, %c0_23, %c0_24, %c0_25], %72 {strides = array<i32>} : memref<1x16x16x64xbf16, #tpu.memory_space<vmem>>, vector<1x16x16x64xbf16>,
    return
  }
  func.func @transform_0(%arg0: i32) -> (i32, i32, i32, i32) {
    %c0_i32 = arith.constant 0 : i32
    %c0_i32_0 = arith.constant 0 : i32
    %c0_i32_1 = arith.constant 0 : i32
    %c0_i32_2 = arith.constant 0 : i32
    return %arg0, %c0_i32, %c0_i32_0, %c0_i32_1 : i32, i32, i32, i32
  }
  func.func @transform_1(%arg0: i32) -> (i32, i32) {
    %c0_i32 = arith.constant 0 : i32
    %c0_i32_0 = arith.constant 0 : i32
    %c0_i32_1 = arith.constant 0 : i32
    return %c0_i32, %c0_i32_0 : i32, i32
  }
  func.func @transform_2(%arg0: i32) -> (i32, i32) {
    %c0_i32 = arith.constant 0 : i32
    %c0_i32_0 = arith.constant 0 : i32
    %c0_i32_1 = arith.constant 0 : i32
    return %c0_i32, %c0_i32_0 : i32, i32
  }
  func.func @transform_3(%arg0: i32) -> (i32, i32) {
    %c0_i32 = arith.constant 0 : i32
    %c0_i32_0 = arith.constant 0 : i32
    %c0_i32_1 = arith.constant 0 : i32
    return %c0_i32, %c0_i32_0 : i32, i32
  }
  func.func @transform_4(%arg0: i32) -> (i32, i32) {
    %c0_i32 = arith.constant 0 : i32
    %c0_i32_0 = arith.constant 0 : i32
    %c0_i32_1 = arith.constant 0 : i32
    return %c0_i32, %c0_i32_0 : i32, i32
  }
  func.func @transform_5(%arg0: i32) -> (i32, i32) {
    %c0_i32 = arith.constant 0 : i32
    %c0_i32_0 = arith.constant 0 : i32
    %c0_i32_1 = arith.constant 0 : i32
    return %c0_i32, %c0_i32_0 : i32, i32
  }
  func.func @transform_6(%arg0: i32) -> (i32, i32) {
    %c0_i32 = arith.constant 0 : i32
    %c0_i32_0 = arith.constant 0 : i32
    %c0_i32_1 = arith.constant 0 : i32
    return %c0_i32, %c0_i32_0 : i32, i32
  }
  func.func @transform_7(%arg0: i32) -> (i32, i32, i32, i32) {
    %c0_i32 = arith.constant 0 : i32
    %c0_i32_0 = arith.constant 0 : i32
    %c0_i32_1 = arith.constant 0 : i32
    %c0_i32_2 = arith.constant 0 : i32
    return %arg0, %c0_i32, %c0_i32_0, %c0_i32_1 : i32, i32, i32, i32
  }
}

module attributes {stable_mosaic.version = 11 : i64} {
  func.func @body(%arg0: i32, %arg1: memref<1x16x16x32xbf16, #tpu.memory_space<vmem>>, %arg2: memref<672x128xbf16, #tpu.memory_space<vmem>>, %arg3: memref<1x128xf32, #tpu.memory_space<vmem>>, %arg4: memref<96x64xbf16, #tpu.memory_space<vmem>>, %arg5: memref<1x64xf32, #tpu.memory_space<vmem>>, %arg6: memref<32x32xbf16, #tpu.memory_space<vmem>>, %arg7: memref<1x32xf32, #tpu.memory_space<vmem>>, %arg8: memref<1x16x16x64xbf16, #tpu.memory_space<vmem>>) attributes {dimension_semantics = [#tpu.dimension_semantics<parallel>], iteration_bounds = array<i64: 2>, scalar_prefetch = 0 : i64, scratch_operands = 0 : i64, tpu.core_type = #tpu.core_type<tc>, window_params = [{transform_indices = @transform_0, window_bounds = array<i64: 1, 16, 16, 32>}, {pipeline_mode = #tpu.pipeline_mode<synchronous>, transform_indices = @transform_1, window_bounds = array<i64: 672, 128>}, {pipeline_mode = #tpu.pipeline_mode<synchronous>, transform_indices = @transform_2, window_bounds = array<i64: 1, 128>}, {pipeline_mode = #tpu.pipeline_mode<synchronous>, transform_indices = @transform_3, window_bounds = array<i64: 96, 64>}, {pipeline_mode = #tpu.pipeline_mode<synchronous>, transform_indices = @transform_4, window_bounds = array<i64: 1, 64>}, {pipeline_mode = #tpu.pipeline_mode<synchronous>, transform_indices = @transform_5, window_bounds = array<i64: 32, 32>}, {pipeline_mode = #tpu.pipeline_mode<synchronous>, transform_indices = @transform_6, window_bounds = array<i64: 1, 32>}, {transform_indices = @transform_7, window_bounds = array<i64: 1, 16, 16, 64>}]} {
    %c0 = arith.constant 0 : index
    %c0_0 = arith.constant 0 : index
    %c0_1 = arith.constant 0 : index
    %c0_2 = arith.constant 0 : index
    %0 = vector.load %arg1[%c0, %c0_0, %c0_1, %c0_2] : memref<1x16x16x32xbf16, #tpu.memory_space<vmem>>, vector<1x16x16x32xbf16>
    %1 = vector.shape_cast %0 : vector<1x16x16x32xbf16> to vector<16x16x32xbf16>
    %cst = arith.constant 0.000000e+00 : bf16
    %2 = vector.broadcast %cst : bf16 to vector<3x16x32xbf16>
    %3 = tpu.concatenate %2, %1 in 0 : vector<3x16x32xbf16>, vector<16x16x32xbf16> -> vector<19x16x32xbf16>
    %cst_3 = arith.constant 0.000000e+00 : bf16
    %4 = vector.broadcast %cst_3 : bf16 to vector<19x3x32xbf16>
    %5 = tpu.concatenate %4, %3, %4 in 1 : vector<19x3x32xbf16>, vector<19x16x32xbf16>, vector<19x3x32xbf16> -> vector<19x22x32xbf16>
    %6 = vector.extract_strided_slice %5 {offsets = [0, 0, 0], sizes = [16, 16, 32], strides = [1, 1, 1]} : vector<19x22x32xbf16> to vector<16x16x32xbf16>
    %7 = vector.shape_cast %6 : vector<16x16x32xbf16> to vector<256x32xbf16>
    %8 = vector.extract_strided_slice %5 {offsets = [0, 1, 0], sizes = [16, 16, 32], strides = [1, 1, 1]} : vector<19x22x32xbf16> to vector<16x16x32xbf16>
    %9 = vector.shape_cast %8 : vector<16x16x32xbf16> to vector<256x32xbf16>
    %10 = vector.extract_strided_slice %5 {offsets = [0, 2, 0], sizes = [16, 16, 32], strides = [1, 1, 1]} : vector<19x22x32xbf16> to vector<16x16x32xbf16>
    %11 = vector.shape_cast %10 : vector<16x16x32xbf16> to vector<256x32xbf16>
    %12 = vector.extract_strided_slice %5 {offsets = [0, 3, 0], sizes = [16, 16, 32], strides = [1, 1, 1]} : vector<19x22x32xbf16> to vector<16x16x32xbf16>
    %13 = vector.shape_cast %12 : vector<16x16x32xbf16> to vector<256x32xbf16>
    %14 = vector.extract_strided_slice %5 {offsets = [0, 4, 0], sizes = [16, 16, 32], strides = [1, 1, 1]} : vector<19x22x32xbf16> to vector<16x16x32xbf16>
    %15 = vector.shape_cast %14 : vector<16x16x32xbf16> to vector<256x32xbf16>
    %16 = vector.extract_strided_slice %5 {offsets = [0, 5, 0], sizes = [16, 16, 32], strides = [1, 1, 1]} : vector<19x22x32xbf16> to vector<16x16x32xbf16>
    %17 = vector.shape_cast %16 : vector<16x16x32xbf16> to vector<256x32xbf16>
    %18 = vector.extract_strided_slice %5 {offsets = [0, 6, 0], sizes = [16, 16, 32], strides = [1, 1, 1]} : vector<19x22x32xbf16> to vector<16x16x32xbf16>
    %19 = vector.shape_cast %18 : vector<16x16x32xbf16> to vector<256x32xbf16>
    %20 = vector.extract_strided_slice %5 {offsets = [1, 0, 0], sizes = [16, 16, 32], strides = [1, 1, 1]} : vector<19x22x32xbf16> to vector<16x16x32xbf16>
    %21 = vector.shape_cast %20 : vector<16x16x32xbf16> to vector<256x32xbf16>
    %22 = vector.extract_strided_slice %5 {offsets = [1, 1, 0], sizes = [16, 16, 32], strides = [1, 1, 1]} : vector<19x22x32xbf16> to vector<16x16x32xbf16>
    %23 = vector.shape_cast %22 : vector<16x16x32xbf16> to vector<256x32xbf16>
    %24 = vector.extract_strided_slice %5 {offsets = [1, 2, 0], sizes = [16, 16, 32], strides = [1, 1, 1]} : vector<19x22x32xbf16> to vector<16x16x32xbf16>
    %25 = vector.shape_cast %24 : vector<16x16x32xbf16> to vector<256x32xbf16>
    %26 = vector.extract_strided_slice %5 {offsets = [1, 3, 0], sizes = [16, 16, 32], strides = [1, 1, 1]} : vector<19x22x32xbf16> to vector<16x16x32xbf16>
    %27 = vector.shape_cast %26 : vector<16x16x32xbf16> to vector<256x32xbf16>
    %28 = vector.extract_strided_slice %5 {offsets = [1, 4, 0], sizes = [16, 16, 32], strides = [1, 1, 1]} : vector<19x22x32xbf16> to vector<16x16x32xbf16>
    %29 = vector.shape_cast %28 : vector<16x16x32xbf16> to vector<256x32xbf16>
    %30 = vector.extract_strided_slice %5 {offsets = [1, 5, 0], sizes = [16, 16, 32], strides = [1, 1, 1]} : vector<19x22x32xbf16> to vector<16x16x32xbf16>
    %31 = vector.shape_cast %30 : vector<16x16x32xbf16> to vector<256x32xbf16>
    %32 = vector.extract_strided_slice %5 {offsets = [1, 6, 0], sizes = [16, 16, 32], strides = [1, 1, 1]} : vector<19x22x32xbf16> to vector<16x16x32xbf16>
    %33 = vector.shape_cast %32 : vector<16x16x32xbf16> to vector<256x32xbf16>
    %34 = vector.extract_strided_slice %5 {offsets = [2, 0, 0], sizes = [16, 16, 32], strides = [1, 1, 1]} : vector<19x22x32xbf16> to vector<16x16x32xbf16>
    %35 = vector.shape_cast %34 : vector<16x16x32xbf16> to vector<256x32xbf16>
    %36 = vector.extract_strided_slice %5 {offsets = [2, 1, 0], sizes = [16, 16, 32], strides = [1, 1, 1]} : vector<19x22x32xbf16> to vector<16x16x32xbf16>
    %37 = vector.shape_cast %36 : vector<16x16x32xbf16> to vector<256x32xbf16>
    %38 = vector.extract_strided_slice %5 {offsets = [2, 2, 0], sizes = [16, 16, 32], strides = [1, 1, 1]} : vector<19x22x32xbf16> to vector<16x16x32xbf16>
    %39 = vector.shape_cast %38 : vector<16x16x32xbf16> to vector<256x32xbf16>
    %40 = vector.extract_strided_slice %5 {offsets = [2, 3, 0], sizes = [16, 16, 32], strides = [1, 1, 1]} : vector<19x22x32xbf16> to vector<16x16x32xbf16>
    %41 = vector.shape_cast %40 : vector<16x16x32xbf16> to vector<256x32xbf16>
    %42 = vector.extract_strided_slice %5 {offsets = [2, 4, 0], sizes = [16, 16, 32], strides = [1, 1, 1]} : vector<19x22x32xbf16> to vector<16x16x32xbf16>
    %43 = vector.shape_cast %42 : vector<16x16x32xbf16> to vector<256x32xbf16>
    %44 = vector.extract_strided_slice %5 {offsets = [2, 5, 0], sizes = [16, 16, 32], strides = [1, 1, 1]} : vector<19x22x32xbf16> to vector<16x16x32xbf16>
    %45 = vector.shape_cast %44 : vector<16x16x32xbf16> to vector<256x32xbf16>
    %46 = vector.extract_strided_slice %5 {offsets = [2, 6, 0], sizes = [16, 16, 32], strides = [1, 1, 1]} : vector<19x22x32xbf16> to vector<16x16x32xbf16>
    %47 = vector.shape_cast %46 : vector<16x16x32xbf16> to vector<256x32xbf16>
    %48 = tpu.concatenate %7, %9, %11, %13, %15, %17, %19, %21, %23, %25, %27, %29, %31, %33, %35, %37 in 1 : vector<256x32xbf16>, vector<256x32xbf16>, vector<256x32xbf16>, vector<256x32xbf16>, vector<256x32xbf16>, vector<256x32xbf16>, vector<256x32xbf16>, vector<256x32xbf16>, vector<256x32xbf16>, vector<256x32xbf16>, vector<256x32xbf16>, vector<256x32xbf16>, vector<256x32xbf16>, vector<256x32xbf16>, vector<256x32xbf16>, vector<256x32xbf16> -> vector<256x512xbf16>
    %49 = tpu.concatenate %39, %41, %43, %45, %47 in 1 : vector<256x32xbf16>, vector<256x32xbf16>, vector<256x32xbf16>, vector<256x32xbf16>, vector<256x32xbf16> -> vector<256x160xbf16>
    %50 = tpu.concatenate %48, %49 in 1 : vector<256x512xbf16>, vector<256x160xbf16> -> vector<256x672xbf16>
    %cst_4 = arith.constant 0.000000e+00 : bf16
    %51 = vector.broadcast %cst_4 : bf16 to vector<16x3x32xbf16>
    %52 = tpu.concatenate %51, %1 in 1 : vector<16x3x32xbf16>, vector<16x16x32xbf16> -> vector<16x19x32xbf16>
    %53 = vector.extract_strided_slice %52 {offsets = [0, 0, 0], sizes = [16, 16, 32], strides = [1, 1, 1]} : vector<16x19x32xbf16> to vector<16x16x32xbf16>
    %54 = vector.shape_cast %53 : vector<16x16x32xbf16> to vector<256x32xbf16>
    %55 = vector.extract_strided_slice %52 {offsets = [0, 1, 0], sizes = [16, 16, 32], strides = [1, 1, 1]} : vector<16x19x32xbf16> to vector<16x16x32xbf16>
    %56 = vector.shape_cast %55 : vector<16x16x32xbf16> to vector<256x32xbf16>
    %57 = vector.extract_strided_slice %52 {offsets = [0, 2, 0], sizes = [16, 16, 32], strides = [1, 1, 1]} : vector<16x19x32xbf16> to vector<16x16x32xbf16>
    %58 = vector.shape_cast %57 : vector<16x16x32xbf16> to vector<256x32xbf16>
    %59 = tpu.concatenate %54, %56, %58 in 1 : vector<256x32xbf16>, vector<256x32xbf16>, vector<256x32xbf16> -> vector<256x96xbf16>
    %c0_5 = arith.constant 0 : index
    %c0_6 = arith.constant 0 : index
    %60 = vector.load %arg2[%c0_5, %c0_6] : memref<672x128xbf16, #tpu.memory_space<vmem>>, vector<672x128xbf16>
    %cst_7 = arith.constant dense<0.000000e+00> : vector<256x128xf32>
    %61 = tpu.matmul %50, %60, %cst_7 {dimension_numbers = #tpu.dot_dimension_numbers<[1], [0], [0], [1], [0, 0, 1, 1], [], []>} : vector<256x672xbf16>, vector<672x128xbf16>, vector<256x128xf32> -> vector<256x128xf32>
    %c0_8 = arith.constant 0 : index
    %c0_9 = arith.constant 0 : index
    %62 = vector.load %arg3[%c0_8, %c0_9] : memref<1x128xf32, #tpu.memory_space<vmem>>, vector<1x128xf32>
    %63 = vector.broadcast %62 : vector<1x128xf32> to vector<256x128xf32>
    %64 = arith.addf %61, %63 : vector<256x128xf32>
    %c0_10 = arith.constant 0 : index
    %c0_11 = arith.constant 0 : index
    %65 = vector.load %arg4[%c0_10, %c0_11] : memref<96x64xbf16, #tpu.memory_space<vmem>>, vector<96x64xbf16>
    %cst_12 = arith.constant dense<0.000000e+00> : vector<256x64xf32>
    %66 = tpu.matmul %59, %65, %cst_12 {dimension_numbers = #tpu.dot_dimension_numbers<[1], [0], [0], [1], [0, 0, 1, 1], [], []>} : vector<256x96xbf16>, vector<96x64xbf16>, vector<256x64xf32> -> vector<256x64xf32>
    %c0_13 = arith.constant 0 : index
    %c0_14 = arith.constant 0 : index
    %67 = vector.load %arg5[%c0_13, %c0_14] : memref<1x64xf32, #tpu.memory_space<vmem>>, vector<1x64xf32>
    %68 = vector.broadcast %67 : vector<1x64xf32> to vector<256x64xf32>
    %69 = arith.addf %66, %68 : vector<256x64xf32>
    %70 = vector.extract_strided_slice %64 {offsets = [0, 64], sizes = [256, 64], strides = [1, 1]} : vector<256x128xf32> to vector<256x64xf32>
    %71 = vector.extract_strided_slice %64 {offsets = [0, 0], sizes = [256, 32], strides = [1, 1]} : vector<256x128xf32> to vector<256x32xf32>
    %72 = math.tanh %71 : vector<256x32xf32>
    %73 = vector.extract_strided_slice %64 {offsets = [0, 32], sizes = [256, 32], strides = [1, 1]} : vector<256x128xf32> to vector<256x32xf32>
    %74 = arith.negf %73 : vector<256x32xf32>
    %75 = math.exp %74 : vector<256x32xf32>
    %cst_15 = arith.constant 1.000000e+00 : f32
    %76 = vector.broadcast %cst_15 : f32 to vector<256x32xf32>
    %77 = arith.addf %76, %75 : vector<256x32xf32>
    %78 = arith.divf %76, %77 : vector<256x32xf32>
    %79 = arith.mulf %72, %78 : vector<256x32xf32>
    %80 = arith.addf %70, %69 : vector<256x64xf32>
    %81 = vector.extract_strided_slice %80 {offsets = [0, 0], sizes = [256, 32], strides = [1, 1]} : vector<256x64xf32> to vector<256x32xf32>
    %82 = math.tanh %81 : vector<256x32xf32>
    %83 = vector.extract_strided_slice %80 {offsets = [0, 32], sizes = [256, 32], strides = [1, 1]} : vector<256x64xf32> to vector<256x32xf32>
    %84 = arith.negf %83 : vector<256x32xf32>
    %85 = math.exp %84 : vector<256x32xf32>
    %cst_16 = arith.constant 1.000000e+00 : f32
    %86 = vector.broadcast %cst_16 : f32 to vector<256x32xf32>
    %87 = arith.addf %86, %85 : vector<256x32xf32>
    %88 = arith.divf %86, %87 : vector<256x32xf32>
    %89 = arith.mulf %82, %88 : vector<256x32xf32>
    %90 = arith.truncf %89 : vector<256x32xf32> to vector<256x32xbf16>
    %c0_17 = arith.constant 0 : index
    %c0_18 = arith.constant 0 : index
    %91 = vector.load %arg6[%c0_17, %c0_18] : memref<32x32xbf16, #tpu.memory_space<vmem>>, vector<32x32xbf16>
    %cst_19 = arith.constant dense<0.000000e+00> : vector<256x32xf32>
    %92 = tpu.matmul %90, %91, %cst_19 {dimension_numbers = #tpu.dot_dimension_numbers<[1], [0], [0], [1], [0, 0, 1, 1], [], []>} : vector<256x32xbf16>, vector<32x32xbf16>, vector<256x32xf32> -> vector<256x32xf32>
    %c0_20 = arith.constant 0 : index
    %c0_21 = arith.constant 0 : index
    %93 = vector.load %arg7[%c0_20, %c0_21] : memref<1x32xf32, #tpu.memory_space<vmem>>, vector<1x32xf32>
    %94 = vector.broadcast %93 : vector<1x32xf32> to vector<256x32xf32>
    %95 = arith.addf %92, %94 : vector<256x32xf32>
    %96 = tpu.concatenate %79, %95 in 1 : vector<256x32xf32>, vector<256x32xf32> -> vector<256x64xf32>
    %97 = vector.shape_cast %96 : vector<256x64xf32> to vector<16x16x64xf32>
    %98 = arith.truncf %97 : vector<16x16x64xf32> to vector<16x16x64xbf16>
    %c0_22 = arith.constant 0 : index
    %c0_23 = arith.constant 0 : index
    %c0_24 = arith.constant 0 : index
    %c0_25 = arith.constant 0 : index
    %99 = vector.load %arg8[%c0_22, %c0_23, %c0_24, %c0_25] : memref<1x16x16x64xbf16, #tpu.memory_space<vmem>>, vector<1x16x16x64xbf16>
    %100 = vector.shape_cast %99 : vector<1x16x16x64xbf16> to vector<16x16x64xbf16>
    %101 = vector.shape_cast %98 : vector<16x16x64xbf16> to vector<1x16x16x64xbf16>
    tpu.vector_store %arg8[%c0_22, %c0_23, %c0_24, %c0_25], %101 {strides = array<i32>} : memref<1x16x16x64xbf16, #tpu.memory_space<vmem>>, vector<1x16x16x64xbf16>,
    return
  }
  func.func @transform_0(%arg0: i32) -> (i32, i32, i32, i32) {
    %c0_i32 = arith.constant 0 : i32
    %c0_i32_0 = arith.constant 0 : i32
    %c0_i32_1 = arith.constant 0 : i32
    %c0_i32_2 = arith.constant 0 : i32
    return %arg0, %c0_i32, %c0_i32_0, %c0_i32_1 : i32, i32, i32, i32
  }
  func.func @transform_1(%arg0: i32) -> (i32, i32) {
    %c0_i32 = arith.constant 0 : i32
    %c0_i32_0 = arith.constant 0 : i32
    %c0_i32_1 = arith.constant 0 : i32
    return %c0_i32, %c0_i32_0 : i32, i32
  }
  func.func @transform_2(%arg0: i32) -> (i32, i32) {
    %c0_i32 = arith.constant 0 : i32
    %c0_i32_0 = arith.constant 0 : i32
    %c0_i32_1 = arith.constant 0 : i32
    return %c0_i32, %c0_i32_0 : i32, i32
  }
  func.func @transform_3(%arg0: i32) -> (i32, i32) {
    %c0_i32 = arith.constant 0 : i32
    %c0_i32_0 = arith.constant 0 : i32
    %c0_i32_1 = arith.constant 0 : i32
    return %c0_i32, %c0_i32_0 : i32, i32
  }
  func.func @transform_4(%arg0: i32) -> (i32, i32) {
    %c0_i32 = arith.constant 0 : i32
    %c0_i32_0 = arith.constant 0 : i32
    %c0_i32_1 = arith.constant 0 : i32
    return %c0_i32, %c0_i32_0 : i32, i32
  }
  func.func @transform_5(%arg0: i32) -> (i32, i32) {
    %c0_i32 = arith.constant 0 : i32
    %c0_i32_0 = arith.constant 0 : i32
    %c0_i32_1 = arith.constant 0 : i32
    return %c0_i32, %c0_i32_0 : i32, i32
  }
  func.func @transform_6(%arg0: i32) -> (i32, i32) {
    %c0_i32 = arith.constant 0 : i32
    %c0_i32_0 = arith.constant 0 : i32
    %c0_i32_1 = arith.constant 0 : i32
    return %c0_i32, %c0_i32_0 : i32, i32
  }
  func.func @transform_7(%arg0: i32) -> (i32, i32, i32, i32) {
    %c0_i32 = arith.constant 0 : i32
    %c0_i32_0 = arith.constant 0 : i32
    %c0_i32_1 = arith.constant 0 : i32
    %c0_i32_2 = arith.constant 0 : i32
    return %arg0, %c0_i32, %c0_i32_0, %c0_i32_1 : i32, i32, i32, i32
  }
}

module attributes {stable_mosaic.version = 11 : i64} {
  func.func @body(%arg0: i32, %arg1: memref<1x16x16x64xbf16, #tpu.memory_space<vmem>>, %arg2: memref<192x64xbf16, #tpu.memory_space<vmem>>, %arg3: memref<1x64xf32, #tpu.memory_space<vmem>>, %arg4: memref<64x64xbf16, #tpu.memory_space<vmem>>, %arg5: memref<1x64xf32, #tpu.memory_space<vmem>>, %arg6: memref<32x32xbf16, #tpu.memory_space<vmem>>, %arg7: memref<1x32xf32, #tpu.memory_space<vmem>>, %arg8: memref<32x32xbf16, #tpu.memory_space<vmem>>, %arg9: memref<1x32xf32, #tpu.memory_space<vmem>>, %arg10: memref<32x128xbf16, #tpu.memory_space<vmem>>, %arg11: memref<1x128xf32, #tpu.memory_space<vmem>>, %arg12: memref<1x16x16x128xf32, #tpu.memory_space<vmem>>) attributes {dimension_semantics = [#tpu.dimension_semantics<parallel>], iteration_bounds = array<i64: 2>, scalar_prefetch = 0 : i64, scratch_operands = 0 : i64, tpu.core_type = #tpu.core_type<tc>, window_params = [{transform_indices = @transform_0, window_bounds = array<i64: 1, 16, 16, 64>}, {pipeline_mode = #tpu.pipeline_mode<synchronous>, transform_indices = @transform_1, window_bounds = array<i64: 192, 64>}, {pipeline_mode = #tpu.pipeline_mode<synchronous>, transform_indices = @transform_2, window_bounds = array<i64: 1, 64>}, {pipeline_mode = #tpu.pipeline_mode<synchronous>, transform_indices = @transform_3, window_bounds = array<i64: 64, 64>}, {pipeline_mode = #tpu.pipeline_mode<synchronous>, transform_indices = @transform_4, window_bounds = array<i64: 1, 64>}, {pipeline_mode = #tpu.pipeline_mode<synchronous>, transform_indices = @transform_5, window_bounds = array<i64: 32, 32>}, {pipeline_mode = #tpu.pipeline_mode<synchronous>, transform_indices = @transform_6, window_bounds = array<i64: 1, 32>}, {pipeline_mode = #tpu.pipeline_mode<synchronous>, transform_indices = @transform_7, window_bounds = array<i64: 32, 32>}, {pipeline_mode = #tpu.pipeline_mode<synchronous>, transform_indices = @transform_8, window_bounds = array<i64: 1, 32>}, {pipeline_mode = #tpu.pipeline_mode<synchronous>, transform_indices = @transform_9, window_bounds = array<i64: 32, 128>}, {pipeline_mode = #tpu.pipeline_mode<synchronous>, transform_indices = @transform_10, window_bounds = array<i64: 1, 128>}, {transform_indices = @transform_11, window_bounds = array<i64: 1, 16, 16, 128>}]} {
    %c0 = arith.constant 0 : index
    %c0_0 = arith.constant 0 : index
    %c0_1 = arith.constant 0 : index
    %c0_2 = arith.constant 0 : index
    %0 = vector.load %arg1[%c0, %c0_0, %c0_1, %c0_2] : memref<1x16x16x64xbf16, #tpu.memory_space<vmem>>, vector<1x16x16x64xbf16>
    %1 = vector.shape_cast %0 : vector<1x16x16x64xbf16> to vector<16x16x64xbf16>
    %2 = vector.extract_strided_slice %1 {offsets = [0, 0, 0], sizes = [16, 16, 32], strides = [1, 1, 1]} : vector<16x16x64xbf16> to vector<16x16x32xbf16>
    %3 = vector.extract_strided_slice %1 {offsets = [0, 0, 32], sizes = [16, 16, 32], strides = [1, 1, 1]} : vector<16x16x64xbf16> to vector<16x16x32xbf16>
    %cst = arith.constant 0.000000e+00 : bf16
    %4 = vector.broadcast %cst : bf16 to vector<1x16x32xbf16>
    %5 = tpu.concatenate %4, %2 in 0 : vector<1x16x32xbf16>, vector<16x16x32xbf16> -> vector<17x16x32xbf16>
    %cst_3 = arith.constant 0.000000e+00 : bf16
    %6 = vector.broadcast %cst_3 : bf16 to vector<17x1x32xbf16>
    %7 = tpu.concatenate %6, %5, %6 in 1 : vector<17x1x32xbf16>, vector<17x16x32xbf16>, vector<17x1x32xbf16> -> vector<17x18x32xbf16>
    %8 = vector.extract_strided_slice %7 {offsets = [0, 0, 0], sizes = [16, 16, 32], strides = [1, 1, 1]} : vector<17x18x32xbf16> to vector<16x16x32xbf16>
    %9 = vector.shape_cast %8 : vector<16x16x32xbf16> to vector<256x32xbf16>
    %10 = vector.extract_strided_slice %7 {offsets = [0, 1, 0], sizes = [16, 16, 32], strides = [1, 1, 1]} : vector<17x18x32xbf16> to vector<16x16x32xbf16>
    %11 = vector.shape_cast %10 : vector<16x16x32xbf16> to vector<256x32xbf16>
    %12 = vector.extract_strided_slice %7 {offsets = [0, 2, 0], sizes = [16, 16, 32], strides = [1, 1, 1]} : vector<17x18x32xbf16> to vector<16x16x32xbf16>
    %13 = vector.shape_cast %12 : vector<16x16x32xbf16> to vector<256x32xbf16>
    %14 = vector.extract_strided_slice %7 {offsets = [1, 0, 0], sizes = [16, 16, 32], strides = [1, 1, 1]} : vector<17x18x32xbf16> to vector<16x16x32xbf16>
    %15 = vector.shape_cast %14 : vector<16x16x32xbf16> to vector<256x32xbf16>
    %16 = vector.extract_strided_slice %7 {offsets = [1, 1, 0], sizes = [16, 16, 32], strides = [1, 1, 1]} : vector<17x18x32xbf16> to vector<16x16x32xbf16>
    %17 = vector.shape_cast %16 : vector<16x16x32xbf16> to vector<256x32xbf16>
    %18 = vector.extract_strided_slice %7 {offsets = [1, 2, 0], sizes = [16, 16, 32], strides = [1, 1, 1]} : vector<17x18x32xbf16> to vector<16x16x32xbf16>
    %19 = vector.shape_cast %18 : vector<16x16x32xbf16> to vector<256x32xbf16>
    %20 = tpu.concatenate %9, %11, %13, %15, %17, %19 in 1 : vector<256x32xbf16>, vector<256x32xbf16>, vector<256x32xbf16>, vector<256x32xbf16>, vector<256x32xbf16>, vector<256x32xbf16> -> vector<256x192xbf16>
    %cst_4 = arith.constant 0.000000e+00 : bf16
    %21 = vector.broadcast %cst_4 : bf16 to vector<16x1x32xbf16>
    %22 = tpu.concatenate %21, %3 in 1 : vector<16x1x32xbf16>, vector<16x16x32xbf16> -> vector<16x17x32xbf16>
    %23 = vector.extract_strided_slice %22 {offsets = [0, 0, 0], sizes = [16, 16, 32], strides = [1, 1, 1]} : vector<16x17x32xbf16> to vector<16x16x32xbf16>
    %24 = vector.shape_cast %23 : vector<16x16x32xbf16> to vector<256x32xbf16>
    %25 = vector.extract_strided_slice %22 {offsets = [0, 1, 0], sizes = [16, 16, 32], strides = [1, 1, 1]} : vector<16x17x32xbf16> to vector<16x16x32xbf16>
    %26 = vector.shape_cast %25 : vector<16x16x32xbf16> to vector<256x32xbf16>
    %27 = tpu.concatenate %24, %26 in 1 : vector<256x32xbf16>, vector<256x32xbf16> -> vector<256x64xbf16>
    %c0_5 = arith.constant 0 : index
    %c0_6 = arith.constant 0 : index
    %28 = vector.load %arg2[%c0_5, %c0_6] : memref<192x64xbf16, #tpu.memory_space<vmem>>, vector<192x64xbf16>
    %cst_7 = arith.constant dense<0.000000e+00> : vector<256x64xf32>
    %29 = tpu.matmul %20, %28, %cst_7 {dimension_numbers = #tpu.dot_dimension_numbers<[1], [0], [0], [1], [0, 0, 1, 1], [], []>} : vector<256x192xbf16>, vector<192x64xbf16>, vector<256x64xf32> -> vector<256x64xf32>
    %c0_8 = arith.constant 0 : index
    %c0_9 = arith.constant 0 : index
    %30 = vector.load %arg3[%c0_8, %c0_9] : memref<1x64xf32, #tpu.memory_space<vmem>>, vector<1x64xf32>
    %31 = vector.broadcast %30 : vector<1x64xf32> to vector<256x64xf32>
    %32 = arith.addf %29, %31 : vector<256x64xf32>
    %c0_10 = arith.constant 0 : index
    %c0_11 = arith.constant 0 : index
    %33 = vector.load %arg4[%c0_10, %c0_11] : memref<64x64xbf16, #tpu.memory_space<vmem>>, vector<64x64xbf16>
    %cst_12 = arith.constant dense<0.000000e+00> : vector<256x64xf32>
    %34 = tpu.matmul %27, %33, %cst_12 {dimension_numbers = #tpu.dot_dimension_numbers<[1], [0], [0], [1], [0, 0, 1, 1], [], []>} : vector<256x64xbf16>, vector<64x64xbf16>, vector<256x64xf32> -> vector<256x64xf32>
    %c0_13 = arith.constant 0 : index
    %c0_14 = arith.constant 0 : index
    %35 = vector.load %arg5[%c0_13, %c0_14] : memref<1x64xf32, #tpu.memory_space<vmem>>, vector<1x64xf32>
    %36 = vector.broadcast %35 : vector<1x64xf32> to vector<256x64xf32>
    %37 = arith.addf %34, %36 : vector<256x64xf32>
    %38 = arith.addf %32, %37 : vector<256x64xf32>
    %39 = vector.extract_strided_slice %38 {offsets = [0, 0], sizes = [256, 32], strides = [1, 1]} : vector<256x64xf32> to vector<256x32xf32>
    %40 = math.tanh %39 : vector<256x32xf32>
    %41 = vector.extract_strided_slice %38 {offsets = [0, 32], sizes = [256, 32], strides = [1, 1]} : vector<256x64xf32> to vector<256x32xf32>
    %42 = arith.negf %41 : vector<256x32xf32>
    %43 = math.exp %42 : vector<256x32xf32>
    %cst_15 = arith.constant 1.000000e+00 : f32
    %44 = vector.broadcast %cst_15 : f32 to vector<256x32xf32>
    %45 = arith.addf %44, %43 : vector<256x32xf32>
    %46 = arith.divf %44, %45 : vector<256x32xf32>
    %47 = arith.mulf %40, %46 : vector<256x32xf32>
    %48 = arith.truncf %47 : vector<256x32xf32> to vector<256x32xbf16>
    %c0_16 = arith.constant 0 : index
    %c0_17 = arith.constant 0 : index
    %49 = vector.load %arg6[%c0_16, %c0_17] : memref<32x32xbf16, #tpu.memory_space<vmem>>, vector<32x32xbf16>
    %cst_18 = arith.constant dense<0.000000e+00> : vector<256x32xf32>
    %50 = tpu.matmul %48, %49, %cst_18 {dimension_numbers = #tpu.dot_dimension_numbers<[1], [0], [0], [1], [0, 0, 1, 1], [], []>} : vector<256x32xbf16>, vector<32x32xbf16>, vector<256x32xf32> -> vector<256x32xf32>
    %c0_19 = arith.constant 0 : index
    %c0_20 = arith.constant 0 : index
    %51 = vector.load %arg7[%c0_19, %c0_20] : memref<1x32xf32, #tpu.memory_space<vmem>>, vector<1x32xf32>
    %52 = vector.broadcast %51 : vector<1x32xf32> to vector<256x32xf32>
    %53 = arith.addf %50, %52 : vector<256x32xf32>
    %54 = vector.shape_cast %3 : vector<16x16x32xbf16> to vector<256x32xbf16>
    %55 = arith.extf %54 : vector<256x32xbf16> to vector<256x32xf32>
    %56 = arith.addf %53, %55 : vector<256x32xf32>
    %57 = arith.truncf %56 : vector<256x32xf32> to vector<256x32xbf16>
    %c0_21 = arith.constant 0 : index
    %c0_22 = arith.constant 0 : index
    %58 = vector.load %arg8[%c0_21, %c0_22] : memref<32x32xbf16, #tpu.memory_space<vmem>>, vector<32x32xbf16>
    %cst_23 = arith.constant dense<0.000000e+00> : vector<256x32xf32>
    %59 = tpu.matmul %57, %58, %cst_23 {dimension_numbers = #tpu.dot_dimension_numbers<[1], [0], [0], [1], [0, 0, 1, 1], [], []>} : vector<256x32xbf16>, vector<32x32xbf16>, vector<256x32xf32> -> vector<256x32xf32>
    %c0_24 = arith.constant 0 : index
    %c0_25 = arith.constant 0 : index
    %60 = vector.load %arg9[%c0_24, %c0_25] : memref<1x32xf32, #tpu.memory_space<vmem>>, vector<1x32xf32>
    %61 = vector.broadcast %60 : vector<1x32xf32> to vector<256x32xf32>
    %62 = arith.addf %59, %61 : vector<256x32xf32>
    %cst_26 = arith.constant 0.000000e+00 : f32
    %63 = vector.broadcast %cst_26 : f32 to vector<256x32xf32>
    %64 = arith.maximumf %62, %63 : vector<256x32xf32>
    %65 = arith.truncf %64 : vector<256x32xf32> to vector<256x32xbf16>
    %c0_27 = arith.constant 0 : index
    %c0_28 = arith.constant 0 : index
    %66 = vector.load %arg10[%c0_27, %c0_28] : memref<32x128xbf16, #tpu.memory_space<vmem>>, vector<32x128xbf16>
    %cst_29 = arith.constant dense<0.000000e+00> : vector<256x128xf32>
    %67 = tpu.matmul %65, %66, %cst_29 {dimension_numbers = #tpu.dot_dimension_numbers<[1], [0], [0], [1], [0, 0, 1, 1], [], []>} : vector<256x32xbf16>, vector<32x128xbf16>, vector<256x128xf32> -> vector<256x128xf32>
    %c0_30 = arith.constant 0 : index
    %c0_31 = arith.constant 0 : index
    %68 = vector.load %arg11[%c0_30, %c0_31] : memref<1x128xf32, #tpu.memory_space<vmem>>, vector<1x128xf32>
    %69 = vector.broadcast %68 : vector<1x128xf32> to vector<256x128xf32>
    %70 = arith.addf %67, %69 : vector<256x128xf32>
    %71 = vector.shape_cast %70 : vector<256x128xf32> to vector<16x16x128xf32>
    %c0_32 = arith.constant 0 : index
    %c0_33 = arith.constant 0 : index
    %c0_34 = arith.constant 0 : index
    %c0_35 = arith.constant 0 : index
    %72 = vector.load %arg12[%c0_32, %c0_33, %c0_34, %c0_35] : memref<1x16x16x128xf32, #tpu.memory_space<vmem>>, vector<1x16x16x128xf32>
    %73 = vector.shape_cast %72 : vector<1x16x16x128xf32> to vector<16x16x128xf32>
    %74 = vector.shape_cast %71 : vector<16x16x128xf32> to vector<1x16x16x128xf32>
    tpu.vector_store %arg12[%c0_32, %c0_33, %c0_34, %c0_35], %74 {strides = array<i32>} : memref<1x16x16x128xf32, #tpu.memory_space<vmem>>, vector<1x16x16x128xf32>,
    return
  }
  func.func @transform_0(%arg0: i32) -> (i32, i32, i32, i32) {
    %c0_i32 = arith.constant 0 : i32
    %c0_i32_0 = arith.constant 0 : i32
    %c0_i32_1 = arith.constant 0 : i32
    %c0_i32_2 = arith.constant 0 : i32
    return %arg0, %c0_i32, %c0_i32_0, %c0_i32_1 : i32, i32, i32, i32
  }
  func.func @transform_1(%arg0: i32) -> (i32, i32) {
    %c0_i32 = arith.constant 0 : i32
    %c0_i32_0 = arith.constant 0 : i32
    %c0_i32_1 = arith.constant 0 : i32
    return %c0_i32, %c0_i32_0 : i32, i32
  }
  func.func @transform_2(%arg0: i32) -> (i32, i32) {
    %c0_i32 = arith.constant 0 : i32
    %c0_i32_0 = arith.constant 0 : i32
    %c0_i32_1 = arith.constant 0 : i32
    return %c0_i32, %c0_i32_0 : i32, i32
  }
  func.func @transform_3(%arg0: i32) -> (i32, i32) {
    %c0_i32 = arith.constant 0 : i32
    %c0_i32_0 = arith.constant 0 : i32
    %c0_i32_1 = arith.constant 0 : i32
    return %c0_i32, %c0_i32_0 : i32, i32
  }
  func.func @transform_4(%arg0: i32) -> (i32, i32) {
    %c0_i32 = arith.constant 0 : i32
    %c0_i32_0 = arith.constant 0 : i32
    %c0_i32_1 = arith.constant 0 : i32
    return %c0_i32, %c0_i32_0 : i32, i32
  }
  func.func @transform_5(%arg0: i32) -> (i32, i32) {
    %c0_i32 = arith.constant 0 : i32
    %c0_i32_0 = arith.constant 0 : i32
    %c0_i32_1 = arith.constant 0 : i32
    return %c0_i32, %c0_i32_0 : i32, i32
  }
  func.func @transform_6(%arg0: i32) -> (i32, i32) {
    %c0_i32 = arith.constant 0 : i32
    %c0_i32_0 = arith.constant 0 : i32
    %c0_i32_1 = arith.constant 0 : i32
    return %c0_i32, %c0_i32_0 : i32, i32
  }
  func.func @transform_7(%arg0: i32) -> (i32, i32) {
    %c0_i32 = arith.constant 0 : i32
    %c0_i32_0 = arith.constant 0 : i32
    %c0_i32_1 = arith.constant 0 : i32
    return %c0_i32, %c0_i32_0 : i32, i32
  }
  func.func @transform_8(%arg0: i32) -> (i32, i32) {
    %c0_i32 = arith.constant 0 : i32
    %c0_i32_0 = arith.constant 0 : i32
    %c0_i32_1 = arith.constant 0 : i32
    return %c0_i32, %c0_i32_0 : i32, i32
  }
  func.func @transform_9(%arg0: i32) -> (i32, i32) {
    %c0_i32 = arith.constant 0 : i32
    %c0_i32_0 = arith.constant 0 : i32
    %c0_i32_1 = arith.constant 0 : i32
    return %c0_i32, %c0_i32_0 : i32, i32
  }
  func.func @transform_10(%arg0: i32) -> (i32, i32) {
    %c0_i32 = arith.constant 0 : i32
    %c0_i32_0 = arith.constant 0 : i32
    %c0_i32_1 = arith.constant 0 : i32
    return %c0_i32, %c0_i32_0 : i32, i32
  }
  func.func @transform_11(%arg0: i32) -> (i32, i32, i32, i32) {
    %c0_i32 = arith.constant 0 : i32
    %c0_i32_0 = arith.constant 0 : i32
    %c0_i32_1 = arith.constant 0 : i32
    %c0_i32_2 = arith.constant 0 : i32
    return %arg0, %c0_i32, %c0_i32_0, %c0_i32_1 : i32, i32, i32, i32
  }
}

</mosaic_0001>

<llo_original>
// kernel: gated_pixelcnn_forward.4
$region0: #{gated_pixelcnn_forward.4}
  #allocation0 [shape = 'u32[]', space=smem, size = 0x4, offset = 0x4, fixed_abs, tag = 'smem constant byte address 0x4 - core index']
  #allocation1 [shape = 'u32[144,128]{1,0:T(1,128)}', space=vmem, size = 0x12000, scoped, tag = 'internal scratch']
  %s0 = inlined_call_operand.vmem [shape: bf16[2,16,16,64], index: 0, kind: input, shape index: {}]
  %s1 = inlined_call_operand.vmem [shape: bf16[192,128], index: 1, kind: input, shape index: {}]
  %s2 = inlined_call_operand.vmem [shape: f32[1,128], index: 2, kind: input, shape index: {}]
  %s3 = inlined_call_operand.vmem [shape: bf16[64,64], index: 3, kind: input, shape index: {}]
  %s4 = inlined_call_operand.vmem [shape: f32[1,64], index: 4, kind: input, shape index: {}]
  %s5 = inlined_call_operand.vmem [shape: bf16[32,32], index: 5, kind: input, shape index: {}]
  %s6 = inlined_call_operand.vmem [shape: f32[1,32], index: 6, kind: input, shape index: {}]
  %s7 = inlined_call_operand.vmem [shape: bf16[2,16,16,64], index: 7, kind: output, shape index: {}]
  %s8 = sld [smem:[#allocation0]]
  $region61: #{gated_pixelcnn_forward.4} parent=0
    _
  %s10 = ssub.s32 1, %s8
  %s11 = scalar_select 0, %s10, %s8
  loop: start=0, step=1, limit=4
  $region2: #{gated_pixelcnn_forward.4} parent=0 // loop_pre_header
    _
  $region3: #{gated_pixelcnn_forward.4} parent=0 // loop_header
    %s13 = sphi 0, %s17
    %p14 = scmp.ge.s32.totalorder %s13, 4
    %s23 = sphi 0, %s25
    %s26 = sphi 0, %s23
    %s27 = sphi 0, %s26
    %s43 = sphi 0, %s27
    %s47 = sphi 0, %s47
    %s49 = sphi 0, %s47
    %s50 = sphi 0, %s49
    %s64 = sphi 0, %s50
    %s68 = sphi 0, %s68
    %s70 = sphi 0, %s68
    %s71 = sphi 0, %s70
    %s85 = sphi 0, %s71
    %s89 = sphi 0, %s89
    %s91 = sphi 0, %s89
    %s92 = sphi 0, %s91
    %s106 = sphi 0, %s92
    %s110 = sphi 0, %s110
    %s112 = sphi 0, %s110
    %s113 = sphi 0, %s112
    %s127 = sphi 0, %s113
    %s131 = sphi 0, %s131
    %s133 = sphi 0, %s131
    %s134 = sphi 0, %s133
    %s148 = sphi 0, %s134
    %s152 = sphi 0, %s152
    %s154 = sphi 0, %s152
    %s155 = sphi 0, %s154
    %s169 = sphi 0, %s155
    %s175 = sphi 0, %s177
    %s178 = sphi 0, %s175
    %s179 = sphi 0, %s178
    %s195 = sphi 0, %s179
  $region4: #{gated_pixelcnn_forward.4} parent=0 // loop_header_branch
    %16 = sbr.rel (%p14) target = $region8
  $region5: #{gated_pixelcnn_forward.4} parent=0 // loop_body
    %s18 = ssub.s32 %s13, 1
    %s19 = ssub.s32 %s13, 2
    %s20 = sadd.s32 %s13, 1
    %s21 = ssub.s32 %s13, %s20
    %p22 = scmp.eq.s32.totalorder %s21, 0
    %s24 = sadd.s32 %s23, 1
    %s25 = scalar_select %p22, %s23, %s24
    %p28 = pneg %p22
    %p29 = scmp.eq.s32.totalorder %s13, 1
    %p30 = por %p28, %p29
    %p31 = scmp.ne.s32.totalorder %s23, %s26
    %p32 = scmp.eq.s32.totalorder %s13, 0
    %p33 = por %p31, %p32
    %p34 = scmp.ne.s32.totalorder %s23, %s26
    %p35 = scmp.eq.s32.totalorder %s18, 1
    %p36 = por %p34, %p35
    %p37 = scmp.ne.s32.totalorder %s26, %s27
    %p38 = scmp.eq.s32.totalorder %s18, 0
    %p39 = por %p37, %p38
    %p40 = scmp.ne.s32.totalorder %s26, %s27
    %p41 = scmp.eq.s32.totalorder %s19, 1
    %p42 = por %p40, %p41
    %p44 = scmp.ne.s32.totalorder %s27, %s43
    %p45 = scmp.eq.s32.totalorder %s19, 0
    %p46 = por %p44, %p45
    %s48 = sadd.s32 %s47, 1
    %p51 = scmp.eq.s32.totalorder %s13, 1
    %p52 = scmp.ne.s32.totalorder %s47, %s49
    %p53 = scmp.eq.s32.totalorder %s13, 0
    %p54 = por %p52, %p53
    %p55 = scmp.ne.s32.totalorder %s47, %s49
    %p56 = scmp.eq.s32.totalorder %s18, 1
    %p57 = por %p55, %p56
    %p58 = scmp.ne.s32.totalorder %s49, %s50
    %p59 = scmp.eq.s32.totalorder %s18, 0
    %p60 = por %p58, %p59
    %p61 = scmp.ne.s32.totalorder %s49, %s50
    %p62 = scmp.eq.s32.totalorder %s19, 1
    %p63 = por %p61, %p62
    %p65 = scmp.ne.s32.totalorder %s50, %s64
    %p66 = scmp.eq.s32.totalorder %s19, 0
    %p67 = por %p65, %p66
    %s69 = sadd.s32 %s68, 1
    %p72 = scmp.eq.s32.totalorder %s13, 1
    %p73 = scmp.ne.s32.totalorder %s68, %s70
    %p74 = scmp.eq.s32.totalorder %s13, 0
    %p75 = por %p73, %p74
    %p76 = scmp.ne.s32.totalorder %s68, %s70
    %p77 = scmp.eq.s32.totalorder %s18, 1
    %p78 = por %p76, %p77
    %p79 = scmp.ne.s32.totalorder %s70, %s71
    %p80 = scmp.eq.s32.totalorder %s18, 0
    %p81 = por %p79, %p80
    %p82 = scmp.ne.s32.totalorder %s70, %s71
    %p83 = scmp.eq.s32.totalorder %s19, 1
    %p84 = por %p82, %p83
    %p86 = scmp.ne.s32.totalorder %s71, %s85
    %p87 = scmp.eq.s32.totalorder %s19, 0
    %p88 = por %p86, %p87
    %s90 = sadd.s32 %s89, 1
    %p93 = scmp.eq.s32.totalorder %s13, 1
    %p94 = scmp.ne.s32.totalorder %s89, %s91
    %p95 = scmp.eq.s32.totalorder %s13, 0
    %p96 = por %p94, %p95
    %p97 = scmp.ne.s32.totalorder %s89, %s91
    %p98 = scmp.eq.s32.totalorder %s18, 1
    %p99 = por %p97, %p98
    %p100 = scmp.ne.s32.totalorder %s91, %s92
    %p101 = scmp.eq.s32.totalorder %s18, 0
    %p102 = por %p100, %p101
    %p103 = scmp.ne.s32.totalorder %s91, %s92
    %p104 = scmp.eq.s32.totalorder %s19, 1
    %p105 = por %p103, %p104
    %p107 = scmp.ne.s32.totalorder %s92, %s106
    %p108 = scmp.eq.s32.totalorder %s19, 0
    %p109 = por %p107, %p108
    %s111 = sadd.s32 %s110, 1
    %p114 = scmp.eq.s32.totalorder %s13, 1
    %p115 = scmp.ne.s32.totalorder %s110, %s112
    %p116 = scmp.eq.s32.totalorder %s13, 0
    %p117 = por %p115, %p116
    %p118 = scmp.ne.s32.totalorder %s110, %s112
    %p119 = scmp.eq.s32.totalorder %s18, 1
    %p120 = por %p118, %p119
    %p121 = scmp.ne.s32.totalorder %s112, %s113
    %p122 = scmp.eq.s32.totalorder %s18, 0
    %p123 = por %p121, %p122
    %p124 = scmp.ne.s32.totalorder %s112, %s113
    %p125 = scmp.eq.s32.totalorder %s19, 1
    %p126 = por %p124, %p125
    %p128 = scmp.ne.s32.totalorder %s113, %s127
    %p129 = scmp.eq.s32.totalorder %s19, 0
    %p130 = por %p128, %p129
    %s132 = sadd.s32 %s131, 1
    %p135 = scmp.eq.s32.totalorder %s13, 1
    %p136 = scmp.ne.s32.totalorder %s131, %s133
    %p137 = scmp.eq.s32.totalorder %s13, 0
    %p138 = por %p136, %p137
    %p139 = scmp.ne.s32.totalorder %s131, %s133
    %p140 = scmp.eq.s32.totalorder %s18, 1
    %p141 = por %p139, %p140
    %p142 = scmp.ne.s32.totalorder %s133, %s134
    %p143 = scmp.eq.s32.totalorder %s18, 0
    %p144 = por %p142, %p143
    %p145 = scmp.ne.s32.totalorder %s133, %s134
    %p146 = scmp.eq.s32.totalorder %s19, 1
    %p147 = por %p145, %p146
    %p149 = scmp.ne.s32.totalorder %s134, %s148
    %p150 = scmp.eq.s32.totalorder %s19, 0
    %p151 = por %p149, %p150
    %s153 = sadd.s32 %s152, 1
    %p156 = scmp.eq.s32.totalorder %s13, 1
    %p157 = scmp.ne.s32.totalorder %s152, %s154
    %p158 = scmp.eq.s32.totalorder %s13, 0
    %p159 = por %p157, %p158
    %p160 = scmp.ne.s32.totalorder %s152, %s154
    %p161 = scmp.eq.s32.totalorder %s18, 1
    %p162 = por %p160, %p161
    %p163 = scmp.ne.s32.totalorder %s154, %s155
    %p164 = scmp.eq.s32.totalorder %s18, 0
    %p165 = por %p163, %p164
    %p166 = scmp.ne.s32.totalorder %s154, %s155
    %p167 = scmp.eq.s32.totalorder %s19, 1
    %p168 = por %p166, %p167
    %p170 = scmp.ne.s32.totalorder %s155, %s169
    %p171 = scmp.eq.s32.totalorder %s19, 0
    %p172 = por %p170, %p171
    %s173 = ssub.s32 %s13, %s20
    %p174 = scmp.eq.s32.totalorder %s173, 0
    %s176 = sadd.s32 %s175, 1
    %s177 = scalar_select %p174, %s175, %s176
    %p180 = pneg %p174
    %p181 = scmp.eq.s32.totalorder %s13, 1
    %p182 = por %p180, %p181
    %p183 = scmp.ne.s32.totalorder %s175, %s178
    %p184 = scmp.eq.s32.totalorder %s13, 0
    %p185 = por %p183, %p184
    %p186 = scmp.ne.s32.totalorder %s175, %s178
    %p187 = scmp.eq.s32.totalorder %s18, 1
    %p188 = por %p186, %p187
    %p189 = scmp.ne.s32.totalorder %s178, %s179
    %p190 = scmp.eq.s32.totalorder %s18, 0
    %p191 = por %p189, %p190
    %p192 = scmp.ne.s32.totalorder %s178, %s179
    %p193 = scmp.eq.s32.totalorder %s19, 1
    %p194 = por %p192, %p193
    %p196 = scmp.ne.s32.totalorder %s179, %s195
    %p197 = scmp.eq.s32.totalorder %s19, 0
    %p198 = por %p196, %p197
    %p199 = scmp.le.s32.totalorder 1, %s13
    %p200 = scmp.lt.s32.totalorder %s13, 3
    %p201 = pnand %p199, %p200
    %p202 = pneg %p201
    // Predicated region
    $region9: #{gated_pixelcnn_forward.4} parent=5 // pred_check
      _
    $region10: #{gated_pixelcnn_forward.4} parent=5 // pred_check_branch
      %204 = sbr.rel (%p201) target = $region12
    $region11: #{gated_pixelcnn_forward.4} parent=5 // pred_region
      %s205 = ssub.s32 %s13, 1
      // Predicated region
      $region13: #{gated_pixelcnn_forward.4} parent=11 // pred_check
        %p206 = pneg %p60
      $region14: #{gated_pixelcnn_forward.4} parent=11 // pred_check_branch
        %208 = sbr.rel (%p206) target = $region16
      $region15: #{gated_pixelcnn_forward.4} parent=11 // pred_region
        _
      $region16: #{gated_pixelcnn_forward.4} parent=11 // pred_fallthru
        _
      // Predicated region
      $region17: #{gated_pixelcnn_forward.4} parent=11 // pred_check
        %p209 = pneg %p81
      $region18: #{gated_pixelcnn_forward.4} parent=11 // pred_check_branch
        %211 = sbr.rel (%p209) target = $region20
      $region19: #{gated_pixelcnn_forward.4} parent=11 // pred_region
        _
      $region20: #{gated_pixelcnn_forward.4} parent=11 // pred_fallthru
        _
      // Predicated region
      $region21: #{gated_pixelcnn_forward.4} parent=11 // pred_check
        %p212 = pneg %p102
      $region22: #{gated_pixelcnn_forward.4} parent=11 // pred_check_branch
        %214 = sbr.rel (%p212) target = $region24
      $region23: #{gated_pixelcnn_forward.4} parent=11 // pred_region
        _
      $region24: #{gated_pixelcnn_forward.4} parent=11 // pred_fallthru
        _
      // Predicated region
      $region25: #{gated_pixelcnn_forward.4} parent=11 // pred_check
        %p215 = pneg %p123
      $region26: #{gated_pixelcnn_forward.4} parent=11 // pred_check_branch
        %217 = sbr.rel (%p215) target = $region28
      $region27: #{gated_pixelcnn_forward.4} parent=11 // pred_region
        _
      $region28: #{gated_pixelcnn_forward.4} parent=11 // pred_fallthru
        _
      // Predicated region
      $region29: #{gated_pixelcnn_forward.4} parent=11 // pred_check
        %p218 = pneg %p144
      $region30: #{gated_pixelcnn_forward.4} parent=11 // pred_check_branch
        %220 = sbr.rel (%p218) target = $region32
      $region31: #{gated_pixelcnn_forward.4} parent=11 // pred_region
        _
      $region32: #{gated_pixelcnn_forward.4} parent=11 // pred_fallthru
        _
      // Predicated region
      $region33: #{gated_pixelcnn_forward.4} parent=11 // pred_check
        %p221 = pneg %p165
      $region34: #{gated_pixelcnn_forward.4} parent=11 // pred_check_branch
        %223 = sbr.rel (%p221) target = $region36
      $region35: #{gated_pixelcnn_forward.4} parent=11 // pred_region
        _
      $region36: #{gated_pixelcnn_forward.4} parent=11 // pred_fallthru
        _
    $region12: #{gated_pixelcnn_forward.4} parent=5 // pred_fallthru
      _
    %p224 = scmp.lt.s32.totalorder %s13, 2
    // Predicated region
    $region37: #{gated_pixelcnn_forward.4} parent=5 // pred_check
      %p225 = pneg %p224
    $region38: #{gated_pixelcnn_forward.4} parent=5 // pred_check_branch
      %227 = sbr.rel (%p225) target = $region40
    $region39: #{gated_pixelcnn_forward.4} parent=5 // pred_region
      // Predicated region
      $region41: #{gated_pixelcnn_forward.4} parent=39 // pred_check
        %p228 = pneg %p33
      $region42: #{gated_pixelcnn_forward.4} parent=39 // pred_check_branch
        %230 = sbr.rel (%p228) target = $region44
      $region43: #{gated_pixelcnn_forward.4} parent=39 // pred_region
        %p231 = scmp.lt.s32.totalorder %s13, 1
        %s232 = scalar_select %p231, %s13, 1
        %s233 = smul.addr %s232, 32
        %s234 = smul.addr %s233, 4
        %s235 = scalar_lea.vmem %s0, %s234
      $region44: #{gated_pixelcnn_forward.4} parent=39 // pred_fallthru
        _
    $region40: #{gated_pixelcnn_forward.4} parent=5 // pred_fallthru
      _
    %p236 = scmp.le.s32.totalorder 1, %s13
    %p237 = scmp.lt.s32.totalorder %s13, 3
    %p238 = pnand %p236, %p237
    %p239 = pneg %p238
    // Predicated region
    $region45: #{gated_pixelcnn_forward.4} parent=5 // pred_check
      _
    $region46: #{gated_pixelcnn_forward.4} parent=5 // pred_check_branch
      %241 = sbr.rel (%p238) target = $region48
    $region47: #{gated_pixelcnn_forward.4} parent=5 // pred_region
      %s242 = ssub.s32 %s13, 1
      %p243 = scmp.lt.s32.totalorder %s18, 1
      %s244 = scalar_select %p243, %s18, 1
      %s245 = smul.addr %s244, 32
      %s246 = smul.addr %s245, 4
      %s247 = scalar_lea.vmem %s0, %s246
      %p248 = pneg %p39
      %p249 = pneg %p36
      %p250 = pneg %p60
      %p251 = pneg %p57
      %p252 = pneg %p81
      %p253 = pneg %p78
      %p254 = pneg %p102
      %p255 = pneg %p99
      %p256 = pneg %p123
      %p257 = pneg %p120
      %p258 = pneg %p144
      %p259 = pneg %p141
      %p260 = pneg %p165
      %p261 = pneg %p162
      %p262 = pneg %p191
      %p263 = pneg %p188
      %p264 = scmp.lt.s32.totalorder %s18, 1
      %s265 = scalar_select %p264, %s18, 1
      %s266 = smul.addr %s265, 32
      %s267 = smul.addr %s266, 4
      %s268 = scalar_lea.vmem %s7, %s267
      %p269 = scmp.lt.s32.totalorder %s18, 1
      %s270 = scalar_select %p269, %s18, 1
      %s271 = smul.addr %s270, 32
      %s272 = smul.addr %s271, 4
      %s273 = scalar_lea.vmem %s0, %s272
      %p274 = scmp.lt.s32.totalorder %s18, 1
      %s275 = scalar_select %p274, %s18, 1
      %s276 = smul.addr %s275, 32
      %s277 = smul.addr %s276, 4
      %s278 = scalar_lea.vmem %s7, %s277
      %v280 = vld [vmem:[%s273] sm:$0xf]
      %v281 = vld [vmem:[%s273 + $0x4] sm:$0xf]
      %v282 = vld [vmem:[%s273 + $0x8] sm:$0xf]
      %v283 = vld [vmem:[%s273 + $0xc] sm:$0xf]
      %v284 = vld [vmem:[%s273 + $0x10] sm:$0xf]
      %v285 = vld [vmem:[%s273 + $0x14] sm:$0xf]
      %v286 = vld [vmem:[%s273 + $0x18] sm:$0xf]
      %v287 = vld [vmem:[%s273 + $0x1c] sm:$0xf]
      %v288 = vld [vmem:[%s273 + $0x20] sm:$0xf]
      %v289 = vld [vmem:[%s273 + $0x24] sm:$0xf]
      %v290 = vld [vmem:[%s273 + $0x28] sm:$0xf]
      %v291 = vld [vmem:[%s273 + $0x2c] sm:$0xf]
      %v292 = vld [vmem:[%s273 + $0x30] sm:$0xf]
      %v293 = vld [vmem:[%s273 + $0x34] sm:$0xf]
      %v294 = vld [vmem:[%s273 + $0x38] sm:$0xf]
      %v295 = vld [vmem:[%s273 + $0x3c] sm:$0xf]
      %v296 = vld [vmem:[%s273 + $0x40] sm:$0xf]
      %v297 = vld [vmem:[%s273 + $0x44] sm:$0xf]
      %v298 = vld [vmem:[%s273 + $0x48] sm:$0xf]
      %v299 = vld [vmem:[%s273 + $0x4c] sm:$0xf]
      %v300 = vld [vmem:[%s273 + $0x50] sm:$0xf]
      %v301 = vld [vmem:[%s273 + $0x54] sm:$0xf]
      %v302 = vld [vmem:[%s273 + $0x58] sm:$0xf]
      %v303 = vld [vmem:[%s273 + $0x5c] sm:$0xf]
      %v304 = vld [vmem:[%s273 + $0x60] sm:$0xf]
      %v305 = vld [vmem:[%s273 + $0x64] sm:$0xf]
      %v306 = vld [vmem:[%s273 + $0x68] sm:$0xf]
      %v307 = vld [vmem:[%s273 + $0x6c] sm:$0xf]
      %v308 = vld [vmem:[%s273 + $0x70] sm:$0xf]
      %v309 = vld [vmem:[%s273 + $0x74] sm:$0xf]
      %v310 = vld [vmem:[%s273 + $0x78] sm:$0xf]
      %v311 = vld [vmem:[%s273 + $0x7c] sm:$0xf]
      %v344 = vunpack.c.l.b16 %v280
      %v345 = vunpack.c.l.b16 %v281
      %v346 = vunpack.c.l.b16 %v282
      %v347 = vunpack.c.l.b16 %v283
      %v348 = vunpack.c.l.b16 %v284
      %v349 = vunpack.c.l.b16 %v285
      %v350 = vunpack.c.l.b16 %v286
      %v351 = vunpack.c.l.b16 %v287
      %v352 = vunpack.c.l.b16 %v288
      %v353 = vunpack.c.l.b16 %v289
      %v354 = vunpack.c.l.b16 %v290
      %v355 = vunpack.c.l.b16 %v291
      %v356 = vunpack.c.l.b16 %v292
      %v357 = vunpack.c.l.b16 %v293
      %v358 = vunpack.c.l.b16 %v294
      %v359 = vunpack.c.l.b16 %v295
      %v360 = vunpack.c.l.b16 %v296
      %v361 = vunpack.c.l.b16 %v297
      %v362 = vunpack.c.l.b16 %v298
      %v363 = vunpack.c.l.b16 %v299
      %v364 = vunpack.c.l.b16 %v300
      %v365 = vunpack.c.l.b16 %v301
      %v366 = vunpack.c.l.b16 %v302
      %v367 = vunpack.c.l.b16 %v303
      %v368 = vunpack.c.l.b16 %v304
      %v369 = vunpack.c.l.b16 %v305
      %v370 = vunpack.c.l.b16 %v306
      %v371 = vunpack.c.l.b16 %v307
      %v372 = vunpack.c.l.b16 %v308
      %v373 = vunpack.c.l.b16 %v309
      %v374 = vunpack.c.l.b16 %v310
      %v375 = vunpack.c.l.b16 %v311
      %v376 = vpack.c.b16 %v345, %v344
      %v377 = vpack.c.b16 %v347, %v346
      %v378 = vpack.c.b16 %v349, %v348
      %v379 = vpack.c.b16 %v351, %v350
      %v380 = vpack.c.b16 %v353, %v352
      %v381 = vpack.c.b16 %v355, %v354
      %v382 = vpack.c.b16 %v357, %v356
      %v383 = vpack.c.b16 %v359, %v358
      %v384 = vpack.c.b16 %v361, %v360
      %v385 = vpack.c.b16 %v363, %v362
      %v386 = vpack.c.b16 %v365, %v364
      %v387 = vpack.c.b16 %v367, %v366
      %v388 = vpack.c.b16 %v369, %v368
      %v389 = vpack.c.b16 %v371, %v370
      %v390 = vpack.c.b16 %v373, %v372
      %v391 = vpack.c.b16 %v375, %v374
      %v393 = vshrl.u32 0, 16
      %v395 = vrot.slane %v393, 7
      %v396 = vshll.u32 0, 16
      %v398 = vor.u32 %v395, %v396
      %v400 = vshrl.u32 %v376, 16
      %v402 = vrot.slane %v400, 7
      %v403 = vshll.u32 %v376, 16
      %v405 = vor.u32 %v402, %v403
      %v407 = vshrl.u32 %v377, 16
      %v409 = vrot.slane %v407, 7
      %v410 = vshll.u32 %v377, 16
      %v412 = vor.u32 %v409, %v410
      %v414 = vshrl.u32 %v378, 16
      %v416 = vrot.slane %v414, 7
      %v417 = vshll.u32 %v378, 16
      %v419 = vor.u32 %v416, %v417
      %v421 = vshrl.u32 %v379, 16
      %v423 = vrot.slane %v421, 7
      %v424 = vshll.u32 %v379, 16
      %v426 = vor.u32 %v423, %v424
      %v428 = vshrl.u32 %v380, 16
      %v430 = vrot.slane %v428, 7
      %v431 = vshll.u32 %v380, 16
      %v433 = vor.u32 %v430, %v431
      %v435 = vshrl.u32 %v381, 16
      %v437 = vrot.slane %v435, 7
      %v438 = vshll.u32 %v381, 16
      %v440 = vor.u32 %v437, %v438
      %v442 = vshrl.u32 %v382, 16
      %v444 = vrot.slane %v442, 7
      %v445 = vshll.u32 %v382, 16
      %v447 = vor.u32 %v444, %v445
      %v449 = vshrl.u32 %v383, 16
      %v451 = vrot.slane %v449, 7
      %v452 = vshll.u32 %v383, 16
      %v454 = vor.u32 %v451, %v452
      %v456 = vshrl.u32 %v384, 16
      %v458 = vrot.slane %v456, 7
      %v459 = vshll.u32 %v384, 16
      %v461 = vor.u32 %v458, %v459
      %v463 = vshrl.u32 %v385, 16
      %v465 = vrot.slane %v463, 7
      %v466 = vshll.u32 %v385, 16
      %v468 = vor.u32 %v465, %v466
      %v470 = vshrl.u32 %v386, 16
      %v472 = vrot.slane %v470, 7
      %v473 = vshll.u32 %v386, 16
      %v475 = vor.u32 %v472, %v473
      %v477 = vshrl.u32 %v387, 16
      %v479 = vrot.slane %v477, 7
      %v480 = vshll.u32 %v387, 16
      %v482 = vor.u32 %v479, %v480
      %v484 = vshrl.u32 %v388, 16
      %v486 = vrot.slane %v484, 7
      %v487 = vshll.u32 %v388, 16
      %v489 = vor.u32 %v486, %v487
      %v491 = vshrl.u32 %v389, 16
      %v493 = vrot.slane %v491, 7
      %v494 = vshll.u32 %v389, 16
      %v496 = vor.u32 %v493, %v494
      %v498 = vshrl.u32 %v390, 16
      %v500 = vrot.slane %v498, 7
      %v501 = vshll.u32 %v390, 16
      %v503 = vor.u32 %v500, %v501
      %v505 = vshrl.u32 %v391, 16
      %v507 = vrot.slane %v505, 7
      %v508 = vshll.u32 %v391, 16
      %v510 = vor.u32 %v507, %v508
      %vm545 = vcmask 1040384
      %vm546 = vsmask.f32 256
      %vm547 = vmand %vm545, %vm546
      %v548 = vsel %vm547, 0, %v398
      %v549 = vsel %vm547, 0, %v405
      %v550 = vsel %vm547, 0, %v412
      %v551 = vsel %vm547, 0, %v419
      %v552 = vsel %vm547, 0, %v426
      %v553 = vsel %vm547, 0, %v433
      %v554 = vsel %vm547, 0, %v440
      %v555 = vsel %vm547, 0, %v447
      %v556 = vsel %vm547, 0, %v454
      %v557 = vsel %vm547, 0, %v461
      %v558 = vsel %vm547, 0, %v468
      %v559 = vsel %vm547, 0, %v475
      %v560 = vsel %vm547, 0, %v482
      %v561 = vsel %vm547, 0, %v489
      %v562 = vsel %vm547, 0, %v496
      %v563 = vsel %vm547, 0, %v503
      %v564 = vsel %vm547, 0, %v510
      %v565 = vsel %vm547, %v395, 0
      %v566 = vsel %vm547, %v402, 0
      %v567 = vsel %vm547, %v409, 0
      %v568 = vsel %vm547, %v416, 0
      %v569 = vsel %vm547, %v423, 0
      %v570 = vsel %vm547, %v430, 0
      %v571 = vsel %vm547, %v437, 0
      %v572 = vsel %vm547, %v444, 0
      %v573 = vsel %vm547, %v451, 0
      %v574 = vsel %vm547, %v458, 0
      %v575 = vsel %vm547, %v465, 0
      %v576 = vsel %vm547, %v472, 0
      %v577 = vsel %vm547, %v479, 0
      %v578 = vsel %vm547, %v486, 0
      %v579 = vsel %vm547, %v493, 0
      %v580 = vsel %vm547, %v500, 0
      %v581 = vsel %vm547, %v507, 0
      %vm582 = vsmask.f32 7424
      %v584 = vshrl.u32 %v548, 16
      %v586 = vshll.u32 %v548, 16
      %v588 = vrot.slane %v586, 1
      %v589 = vor.u32 %v584, %v588
      %v591 = vshll.u32 %v565, 16
      %v593 = vrot.slane %v591, 1
      %v594 = vsel %vm582, %v589, %v593
      %v596 = vshrl.u32 %v549, 16
      %v598 = vshll.u32 %v549, 16
      %v600 = vrot.slane %v598, 1
      %v601 = vor.u32 %v596, %v600
      %v603 = vshll.u32 %v566, 16
      %v605 = vrot.slane %v603, 1
      %v606 = vsel %vm582, %v601, %v605
      %v608 = vshrl.u32 %v550, 16
      %v610 = vshll.u32 %v550, 16
      %v612 = vrot.slane %v610, 1
      %v613 = vor.u32 %v608, %v612
      %v615 = vshll.u32 %v567, 16
      %v617 = vrot.slane %v615, 1
      %v618 = vsel %vm582, %v613, %v617
      %v620 = vshrl.u32 %v551, 16
      %v622 = vshll.u32 %v551, 16
      %v624 = vrot.slane %v622, 1
      %v625 = vor.u32 %v620, %v624
      %v627 = vshll.u32 %v568, 16
      %v629 = vrot.slane %v627, 1
      %v630 = vsel %vm582, %v625, %v629
      %v632 = vshrl.u32 %v552, 16
      %v634 = vshll.u32 %v552, 16
      %v636 = vrot.slane %v634, 1
      %v637 = vor.u32 %v632, %v636
      %v639 = vshll.u32 %v569, 16
      %v641 = vrot.slane %v639, 1
      %v642 = vsel %vm582, %v637, %v641
      %v644 = vshrl.u32 %v553, 16
      %v646 = vshll.u32 %v553, 16
      %v648 = vrot.slane %v646, 1
      %v649 = vor.u32 %v644, %v648
      %v651 = vshll.u32 %v570, 16
      %v653 = vrot.slane %v651, 1
      %v654 = vsel %vm582, %v649, %v653
      %v656 = vshrl.u32 %v554, 16
      %v658 = vshll.u32 %v554, 16
      %v660 = vrot.slane %v658, 1
      %v661 = vor.u32 %v656, %v660
      %v663 = vshll.u32 %v571, 16
      %v665 = vrot.slane %v663, 1
      %v666 = vsel %vm582, %v661, %v665
      %v668 = vshrl.u32 %v555, 16
      %v670 = vshll.u32 %v555, 16
      %v672 = vrot.slane %v670, 1
      %v673 = vor.u32 %v668, %v672
      %v675 = vshll.u32 %v572, 16
      %v677 = vrot.slane %v675, 1
      %v678 = vsel %vm582, %v673, %v677
      %v680 = vshrl.u32 %v556, 16
      %v682 = vshll.u32 %v556, 16
      %v684 = vrot.slane %v682, 1
      %v685 = vor.u32 %v680, %v684
      %v687 = vshll.u32 %v573, 16
      %v689 = vrot.slane %v687, 1
      %v690 = vsel %vm582, %v685, %v689
      %v692 = vshrl.u32 %v557, 16
      %v694 = vshll.u32 %v557, 16
      %v696 = vrot.slane %v694, 1
      %v697 = vor.u32 %v692, %v696
      %v699 = vshll.u32 %v574, 16
      %v701 = vrot.slane %v699, 1
      %v702 = vsel %vm582, %v697, %v701
      %v704 = vshrl.u32 %v558, 16
      %v706 = vshll.u32 %v558, 16
      %v708 = vrot.slane %v706, 1
      %v709 = vor.u32 %v704, %v708
      %v711 = vshll.u32 %v575, 16
      %v713 = vrot.slane %v711, 1
      %v714 = vsel %vm582, %v709, %v713
      %v716 = vshrl.u32 %v559, 16
      %v718 = vshll.u32 %v559, 16
      %v720 = vrot.slane %v718, 1
      %v721 = vor.u32 %v716, %v720
      %v723 = vshll.u32 %v576, 16
      %v725 = vrot.slane %v723, 1
      %v726 = vsel %vm582, %v721, %v725
      %v728 = vshrl.u32 %v560, 16
      %v730 = vshll.u32 %v560, 16
      %v732 = vrot.slane %v730, 1
      %v733 = vor.u32 %v728, %v732
      %v735 = vshll.u32 %v577, 16
      %v737 = vrot.slane %v735, 1
      %v738 = vsel %vm582, %v733, %v737
      %v740 = vshrl.u32 %v561, 16
      %v742 = vshll.u32 %v561, 16
      %v744 = vrot.slane %v742, 1
      %v745 = vor.u32 %v740, %v744
      %v747 = vshll.u32 %v578, 16
      %v749 = vrot.slane %v747, 1
      %v750 = vsel %vm582, %v745, %v749
      %v752 = vshrl.u32 %v562, 16
      %v754 = vshll.u32 %v562, 16
      %v756 = vrot.slane %v754, 1
      %v757 = vor.u32 %v752, %v756
      %v759 = vshll.u32 %v579, 16
      %v761 = vrot.slane %v759, 1
      %v762 = vsel %vm582, %v757, %v761
      %v764 = vshrl.u32 %v563, 16
      %v766 = vshll.u32 %v563, 16
      %v768 = vrot.slane %v766, 1
      %v769 = vor.u32 %v764, %v768
      %v771 = vshll.u32 %v580, 16
      %v773 = vrot.slane %v771, 1
      %v774 = vsel %vm582, %v769, %v773
      %vm807 = vcmask 1046528
      %v808 = vrot.slane %v548, 1
      %v809 = vrot.slane %v565, 1
      %v810 = vsel %vm807, %v808, %v809
      %v811 = vrot.slane %v549, 1
      %v812 = vrot.slane %v566, 1
      %v813 = vsel %vm807, %v811, %v812
      %v814 = vrot.slane %v550, 1
      %v815 = vrot.slane %v567, 1
      %v816 = vsel %vm807, %v814, %v815
      %v817 = vrot.slane %v551, 1
      %v818 = vrot.slane %v568, 1
      %v819 = vsel %vm807, %v817, %v818
      %v820 = vrot.slane %v552, 1
      %v821 = vrot.slane %v569, 1
      %v822 = vsel %vm807, %v820, %v821
      %v823 = vrot.slane %v553, 1
      %v824 = vrot.slane %v570, 1
      %v825 = vsel %vm807, %v823, %v824
      %v826 = vrot.slane %v554, 1
      %v827 = vrot.slane %v571, 1
      %v828 = vsel %vm807, %v826, %v827
      %v829 = vrot.slane %v555, 1
      %v830 = vrot.slane %v572, 1
      %v831 = vsel %vm807, %v829, %v830
      %v832 = vrot.slane %v556, 1
      %v833 = vrot.slane %v573, 1
      %v834 = vsel %vm807, %v832, %v833
      %v835 = vrot.slane %v557, 1
      %v836 = vrot.slane %v574, 1
      %v837 = vsel %vm807, %v835, %v836
      %v838 = vrot.slane %v558, 1
      %v839 = vrot.slane %v575, 1
      %v840 = vsel %vm807, %v838, %v839
      %v841 = vrot.slane %v559, 1
      %v842 = vrot.slane %v576, 1
      %v843 = vsel %vm807, %v841, %v842
      %v844 = vrot.slane %v560, 1
      %v845 = vrot.slane %v577, 1
      %v846 = vsel %vm807, %v844, %v845
      %v847 = vrot.slane %v561, 1
      %v848 = vrot.slane %v578, 1
      %v849 = vsel %vm807, %v847, %v848
      %v850 = vrot.slane %v562, 1
      %v851 = vrot.slane %v579, 1
      %v852 = vsel %vm807, %v850, %v851
      %v853 = vrot.slane %v563, 1
      %v854 = vrot.slane %v580, 1
      %v855 = vsel %vm807, %v853, %v854
      %v857 = vshrl.u32 %v564, 16
      %v859 = vshll.u32 %v564, 16
      %v861 = vrot.slane %v859, 1
      %v862 = vor.u32 %v857, %v861
      %v864 = vshll.u32 %v581, 16
      %v866 = vrot.slane %v864, 1
      %v867 = vsel %vm582, %v862, %v866
      %v870 = vrot.slane %v564, 1
      %v871 = vrot.slane %v581, 1
      %v872 = vsel %vm807, %v870, %v871
      %873 = vrot.lane.b32.xlu0 %v594, 32
      %v874 = vpop.permute.xlu0 %873
      %875 = vrot.lane.b32.xlu0 %v606, 32
      %v876 = vpop.permute.xlu0 %875
      %877 = vrot.lane.b32.xlu0 %v618, 32
      %v878 = vpop.permute.xlu0 %877
      %879 = vrot.lane.b32.xlu0 %v630, 32
      %v880 = vpop.permute.xlu0 %879
      %881 = vrot.lane.b32.xlu0 %v642, 32
      %v882 = vpop.permute.xlu0 %881
      %883 = vrot.lane.b32.xlu0 %v654, 32
      %v884 = vpop.permute.xlu0 %883
      %885 = vrot.lane.b32.xlu0 %v666, 32
      %v886 = vpop.permute.xlu0 %885
      %887 = vrot.lane.b32.xlu0 %v678, 32
      %v888 = vpop.permute.xlu0 %887
      %889 = vrot.lane.b32.xlu0 %v690, 32
      %v890 = vpop.permute.xlu0 %889
      %891 = vrot.lane.b32.xlu0 %v702, 32
      %v892 = vpop.permute.xlu0 %891
      %893 = vrot.lane.b32.xlu0 %v714, 32
      %v894 = vpop.permute.xlu0 %893
      %895 = vrot.lane.b32.xlu0 %v726, 32
      %v896 = vpop.permute.xlu0 %895
      %897 = vrot.lane.b32.xlu0 %v738, 32
      %v898 = vpop.permute.xlu0 %897
      %899 = vrot.lane.b32.xlu0 %v750, 32
      %v900 = vpop.permute.xlu0 %899
      %901 = vrot.lane.b32.xlu0 %v762, 32
      %v902 = vpop.permute.xlu0 %901
      %903 = vrot.lane.b32.xlu0 %v774, 32
      %v904 = vpop.permute.xlu0 %903
      %905 = vrot.lane.b32.xlu0 %v810, 64
      %v906 = vpop.permute.xlu0 %905
      %907 = vrot.lane.b32.xlu0 %v813, 64
      %v908 = vpop.permute.xlu0 %907
      %909 = vrot.lane.b32.xlu0 %v816, 64
      %v910 = vpop.permute.xlu0 %909
      %911 = vrot.lane.b32.xlu0 %v819, 64
      %v912 = vpop.permute.xlu0 %911
      %913 = vrot.lane.b32.xlu0 %v822, 64
      %v914 = vpop.permute.xlu0 %913
      %915 = vrot.lane.b32.xlu0 %v825, 64
      %v916 = vpop.permute.xlu0 %915
      %917 = vrot.lane.b32.xlu0 %v828, 64
      %v918 = vpop.permute.xlu0 %917
      %919 = vrot.lane.b32.xlu0 %v831, 64
      %v920 = vpop.permute.xlu0 %919
      %921 = vrot.lane.b32.xlu0 %v834, 64
      %v922 = vpop.permute.xlu0 %921
      %923 = vrot.lane.b32.xlu0 %v837, 64
      %v924 = vpop.permute.xlu0 %923
      %925 = vrot.lane.b32.xlu0 %v840, 64
      %v926 = vpop.permute.xlu0 %925
      %927 = vrot.lane.b32.xlu0 %v843, 64
      %v928 = vpop.permute.xlu0 %927
      %929 = vrot.lane.b32.xlu0 %v846, 64
      %v930 = vpop.permute.xlu0 %929
      %931 = vrot.lane.b32.xlu0 %v849, 64
      %v932 = vpop.permute.xlu0 %931
      %933 = vrot.lane.b32.xlu0 %v852, 64
      %v934 = vpop.permute.xlu0 %933
      %935 = vrot.lane.b32.xlu0 %v855, 64
      %v936 = vpop.permute.xlu0 %935
      %937 = vrot.lane.b32.xlu0 %v549, 96
      %v938 = vpop.permute.xlu0 %937
      %939 = vrot.lane.b32.xlu0 %v550, 96
      %v940 = vpop.permute.xlu0 %939
      %941 = vrot.lane.b32.xlu0 %v551, 96
      %v942 = vpop.permute.xlu0 %941
      %943 = vrot.lane.b32.xlu0 %v552, 96
      %v944 = vpop.permute.xlu0 %943
      %945 = vrot.lane.b32.xlu0 %v553, 96
      %v946 = vpop.permute.xlu0 %945
      %947 = vrot.lane.b32.xlu0 %v554, 96
      %v948 = vpop.permute.xlu0 %947
      %949 = vrot.lane.b32.xlu0 %v555, 96
      %v950 = vpop.permute.xlu0 %949
      %951 = vrot.lane.b32.xlu0 %v556, 96
      %v952 = vpop.permute.xlu0 %951
      %953 = vrot.lane.b32.xlu0 %v557, 96
      %v954 = vpop.permute.xlu0 %953
      %955 = vrot.lane.b32.xlu0 %v558, 96
      %v956 = vpop.permute.xlu0 %955
      %957 = vrot.lane.b32.xlu0 %v559, 96
      %v958 = vpop.permute.xlu0 %957
      %959 = vrot.lane.b32.xlu0 %v560, 96
      %v960 = vpop.permute.xlu0 %959
      %961 = vrot.lane.b32.xlu0 %v561, 96
      %v962 = vpop.permute.xlu0 %961
      %963 = vrot.lane.b32.xlu0 %v562, 96
      %v964 = vpop.permute.xlu0 %963
      %965 = vrot.lane.b32.xlu0 %v563, 96
      %v966 = vpop.permute.xlu0 %965
      %967 = vrot.lane.b32.xlu0 %v564, 96
      %v968 = vpop.permute.xlu0 %967
      %969 = vrot.lane.b32.xlu0 %v813, 32
      %v970 = vpop.permute.xlu0 %969
      %971 = vrot.lane.b32.xlu0 %v816, 32
      %v972 = vpop.permute.xlu0 %971
      %973 = vrot.lane.b32.xlu0 %v819, 32
      %v974 = vpop.permute.xlu0 %973
      %975 = vrot.lane.b32.xlu0 %v822, 32
      %v976 = vpop.permute.xlu0 %975
      %977 = vrot.lane.b32.xlu0 %v825, 32
      %v978 = vpop.permute.xlu0 %977
      %979 = vrot.lane.b32.xlu0 %v828, 32
      %v980 = vpop.permute.xlu0 %979
      %981 = vrot.lane.b32.xlu0 %v831, 32
      %v982 = vpop.permute.xlu0 %981
      %983 = vrot.lane.b32.xlu0 %v834, 32
      %v984 = vpop.permute.xlu0 %983
      %985 = vrot.lane.b32.xlu0 %v837, 32
      %v986 = vpop.permute.xlu0 %985
      %987 = vrot.lane.b32.xlu0 %v840, 32
      %v988 = vpop.permute.xlu0 %987
      %989 = vrot.lane.b32.xlu0 %v843, 32
      %v990 = vpop.permute.xlu0 %989
      %991 = vrot.lane.b32.xlu0 %v846, 32
      %v992 = vpop.permute.xlu0 %991
      %993 = vrot.lane.b32.xlu0 %v849, 32
      %v994 = vpop.permute.xlu0 %993
      %995 = vrot.lane.b32.xlu0 %v852, 32
      %v996 = vpop.permute.xlu0 %995
      %997 = vrot.lane.b32.xlu0 %v855, 32
      %v998 = vpop.permute.xlu0 %997
      %999 = vrot.lane.b32.xlu0 %v872, 32
      %v1000 = vpop.permute.xlu0 %999
      %vm1001 = vcmask 261120
      %v1003 = vsel %vm1001, %v548, %v874
      %v1005 = vsel %vm1001, %v549, %v876
      %v1007 = vsel %vm1001, %v550, %v878
      %v1009 = vsel %vm1001, %v551, %v880
      %v1011 = vsel %vm1001, %v552, %v882
      %v1013 = vsel %vm1001, %v553, %v884
      %v1015 = vsel %vm1001, %v554, %v886
      %v1017 = vsel %vm1001, %v555, %v888
      %v1019 = vsel %vm1001, %v556, %v890
      %v1021 = vsel %vm1001, %v557, %v892
      %v1023 = vsel %vm1001, %v558, %v894
      %v1025 = vsel %vm1001, %v559, %v896
      %v1027 = vsel %vm1001, %v560, %v898
      %v1029 = vsel %vm1001, %v561, %v900
      %v1031 = vsel %vm1001, %v562, %v902
      %v1033 = vsel %vm1001, %v563, %v904
      %vm1034 = vcmask 523264
      %v1036 = vsel %vm1034, %v1003, %v906
      %v1038 = vsel %vm1034, %v1005, %v908
      %v1040 = vsel %vm1034, %v1007, %v910
      %v1042 = vsel %vm1034, %v1009, %v912
      %v1044 = vsel %vm1034, %v1011, %v914
      %v1046 = vsel %vm1034, %v1013, %v916
      %v1048 = vsel %vm1034, %v1015, %v918
      %v1050 = vsel %vm1034, %v1017, %v920
      %v1052 = vsel %vm1034, %v1019, %v922
      %v1054 = vsel %vm1034, %v1021, %v924
      %v1056 = vsel %vm1034, %v1023, %v926
      %v1058 = vsel %vm1034, %v1025, %v928
      %v1060 = vsel %vm1034, %v1027, %v930
      %v1062 = vsel %vm1034, %v1029, %v932
      %v1064 = vsel %vm1034, %v1031, %v934
      %v1066 = vsel %vm1034, %v1033, %v936
      %vm1067 = vcmask 785408
      %v1069 = vsel %vm1067, %v1036, %v938
      %v1072 = vsel %vm1067, %v1038, %v940
      %v1075 = vsel %vm1067, %v1040, %v942
      %v1078 = vsel %vm1067, %v1042, %v944
      %v1081 = vsel %vm1067, %v1044, %v946
      %v1084 = vsel %vm1067, %v1046, %v948
      %v1087 = vsel %vm1067, %v1048, %v950
      %v1090 = vsel %vm1067, %v1050, %v952
      %v1093 = vsel %vm1067, %v1052, %v954
      %v1096 = vsel %vm1067, %v1054, %v956
      %v1099 = vsel %vm1067, %v1056, %v958
      %v1102 = vsel %vm1067, %v1058, %v960
      %v1105 = vsel %vm1067, %v1060, %v962
      %v1108 = vsel %vm1067, %v1062, %v964
      %v1111 = vsel %vm1067, %v1064, %v966
      %v1114 = vsel %vm1067, %v1066, %v968
      %v1118 = vsel %vm1001, %v606, %v970
      %v1121 = vsel %vm1001, %v618, %v972
      %v1124 = vsel %vm1001, %v630, %v974
      %v1127 = vsel %vm1001, %v642, %v976
      %v1130 = vsel %vm1001, %v654, %v978
      %v1133 = vsel %vm1001, %v666, %v980
      %v1136 = vsel %vm1001, %v678, %v982
      %v1139 = vsel %vm1001, %v690, %v984
      %v1142 = vsel %vm1001, %v702, %v986
      %v1145 = vsel %vm1001, %v714, %v988
      %v1148 = vsel %vm1001, %v726, %v990
      %v1151 = vsel %vm1001, %v738, %v992
      %v1154 = vsel %vm1001, %v750, %v994
      %v1157 = vsel %vm1001, %v762, %v996
      %v1160 = vsel %vm1001, %v774, %v998
      %v1163 = vsel %vm1001, %v867, %v1000
      %1164 = vrot.lane.b32.xlu0 %v405, 96
      %v1165 = vpop.permute.xlu0 %1164
      %1166 = vrot.lane.b32.xlu0 %v402, 96
      %v1167 = vpop.permute.xlu0 %1166
      %1168 = vrot.lane.b32.xlu0 %v412, 96
      %v1169 = vpop.permute.xlu0 %1168
      %1170 = vrot.lane.b32.xlu0 %v409, 96
      %v1171 = vpop.permute.xlu0 %1170
      %1172 = vrot.lane.b32.xlu0 %v419, 96
      %v1173 = vpop.permute.xlu0 %1172
      %1174 = vrot.lane.b32.xlu0 %v416, 96
      %v1175 = vpop.permute.xlu0 %1174
      %1176 = vrot.lane.b32.xlu0 %v426, 96
      %v1177 = vpop.permute.xlu0 %1176
      %1178 = vrot.lane.b32.xlu0 %v423, 96
      %v1179 = vpop.permute.xlu0 %1178
      %1180 = vrot.lane.b32.xlu0 %v433, 96
      %v1181 = vpop.permute.xlu0 %1180
      %1182 = vrot.lane.b32.xlu0 %v430, 96
      %v1183 = vpop.permute.xlu0 %1182
      %1184 = vrot.lane.b32.xlu0 %v440, 96
      %v1185 = vpop.permute.xlu0 %1184
      %1186 = vrot.lane.b32.xlu0 %v437, 96
      %v1187 = vpop.permute.xlu0 %1186
      %1188 = vrot.lane.b32.xlu0 %v447, 96
      %v1189 = vpop.permute.xlu0 %1188
      %1190 = vrot.lane.b32.xlu0 %v444, 96
      %v1191 = vpop.permute.xlu0 %1190
      %1192 = vrot.lane.b32.xlu0 %v454, 96
      %v1193 = vpop.permute.xlu0 %1192
      %1194 = vrot.lane.b32.xlu0 %v451, 96
      %v1195 = vpop.permute.xlu0 %1194
      %1196 = vrot.lane.b32.xlu0 %v461, 96
      %v1197 = vpop.permute.xlu0 %1196
      %1198 = vrot.lane.b32.xlu0 %v458, 96
      %v1199 = vpop.permute.xlu0 %1198
      %1200 = vrot.lane.b32.xlu0 %v468, 96
      %v1201 = vpop.permute.xlu0 %1200
      %1202 = vrot.lane.b32.xlu0 %v465, 96
      %v1203 = vpop.permute.xlu0 %1202
      %1204 = vrot.lane.b32.xlu0 %v475, 96
      %v1205 = vpop.permute.xlu0 %1204
      %1206 = vrot.lane.b32.xlu0 %v472, 96
      %v1207 = vpop.permute.xlu0 %1206
      %1208 = vrot.lane.b32.xlu0 %v482, 96
      %v1209 = vpop.permute.xlu0 %1208
      %1210 = vrot.lane.b32.xlu0 %v479, 96
      %v1211 = vpop.permute.xlu0 %1210
      %1212 = vrot.lane.b32.xlu0 %v489, 96
      %v1213 = vpop.permute.xlu0 %1212
      %1214 = vrot.lane.b32.xlu0 %v486, 96
      %v1215 = vpop.permute.xlu0 %1214
      %1216 = vrot.lane.b32.xlu0 %v496, 96
      %v1217 = vpop.permute.xlu0 %1216
      %1218 = vrot.lane.b32.xlu0 %v493, 96
      %v1219 = vpop.permute.xlu0 %1218
      %1220 = vrot.lane.b32.xlu0 %v503, 96
      %v1221 = vpop.permute.xlu0 %1220
      %1222 = vrot.lane.b32.xlu0 %v500, 96
      %v1223 = vpop.permute.xlu0 %1222
      %1224 = vrot.lane.b32.xlu0 %v510, 96
      %v1225 = vpop.permute.xlu0 %1224
      %1226 = vrot.lane.b32.xlu0 %v507, 96
      %v1227 = vpop.permute.xlu0 %1226
      %v1244 = vsel %vm547, 0, %v1165
      %v1245 = vsel %vm547, 0, %v1169
      %v1246 = vsel %vm547, 0, %v1173
      %v1247 = vsel %vm547, 0, %v1177
      %v1248 = vsel %vm547, 0, %v1181
      %v1249 = vsel %vm547, 0, %v1185
      %v1250 = vsel %vm547, 0, %v1189
      %v1251 = vsel %vm547, 0, %v1193
      %v1252 = vsel %vm547, 0, %v1197
      %v1253 = vsel %vm547, 0, %v1201
      %v1254 = vsel %vm547, 0, %v1205
      %v1255 = vsel %vm547, 0, %v1209
      %v1256 = vsel %vm547, 0, %v1213
      %v1257 = vsel %vm547, 0, %v1217
      %v1258 = vsel %vm547, 0, %v1221
      %v1259 = vsel %vm547, 0, %v1225
      %v1261 = vshrl.u32 %v1244, 16
      %v1263 = vshll.u32 %v1244, 16
      %v1265 = vrot.slane %v1263, 1
      %v1266 = vor.u32 %v1261, %v1265
      %v1268 = vshll.u32 %v1167, 16
      %v1270 = vrot.slane %v1268, 1
      %v1271 = vsel %vm582, %v1266, %v1270
      %v1273 = vshrl.u32 %v1245, 16
      %v1275 = vshll.u32 %v1245, 16
      %v1277 = vrot.slane %v1275, 1
      %v1278 = vor.u32 %v1273, %v1277
      %v1280 = vshll.u32 %v1171, 16
      %v1282 = vrot.slane %v1280, 1
      %v1283 = vsel %vm582, %v1278, %v1282
      %v1285 = vshrl.u32 %v1246, 16
      %v1287 = vshll.u32 %v1246, 16
      %v1289 = vrot.slane %v1287, 1
      %v1290 = vor.u32 %v1285, %v1289
      %v1292 = vshll.u32 %v1175, 16
      %v1294 = vrot.slane %v1292, 1
      %v1295 = vsel %vm582, %v1290, %v1294
      %v1297 = vshrl.u32 %v1247, 16
      %v1299 = vshll.u32 %v1247, 16
      %v1301 = vrot.slane %v1299, 1
      %v1302 = vor.u32 %v1297, %v1301
      %v1304 = vshll.u32 %v1179, 16
      %v1306 = vrot.slane %v1304, 1
      %v1307 = vsel %vm582, %v1302, %v1306
      %v1309 = vshrl.u32 %v1248, 16
      %v1311 = vshll.u32 %v1248, 16
      %v1313 = vrot.slane %v1311, 1
      %v1314 = vor.u32 %v1309, %v1313
      %v1316 = vshll.u32 %v1183, 16
      %v1318 = vrot.slane %v1316, 1
      %v1319 = vsel %vm582, %v1314, %v1318
      %v1321 = vshrl.u32 %v1249, 16
      %v1323 = vshll.u32 %v1249, 16
      %v1325 = vrot.slane %v1323, 1
      %v1326 = vor.u32 %v1321, %v1325
      %v1328 = vshll.u32 %v1187, 16
      %v1330 = vrot.slane %v1328, 1
      %v1331 = vsel %vm582, %v1326, %v1330
      %v1333 = vshrl.u32 %v1250, 16
      %v1335 = vshll.u32 %v1250, 16
      %v1337 = vrot.slane %v1335, 1
      %v1338 = vor.u32 %v1333, %v1337
      %v1340 = vshll.u32 %v1191, 16
      %v1342 = vrot.slane %v1340, 1
      %v1343 = vsel %vm582, %v1338, %v1342
      %v1345 = vshrl.u32 %v1251, 16
      %v1347 = vshll.u32 %v1251, 16
      %v1349 = vrot.slane %v1347, 1
      %v1350 = vor.u32 %v1345, %v1349
      %v1352 = vshll.u32 %v1195, 16
      %v1354 = vrot.slane %v1352, 1
      %v1355 = vsel %vm582, %v1350, %v1354
      %v1357 = vshrl.u32 %v1252, 16
      %v1359 = vshll.u32 %v1252, 16
      %v1361 = vrot.slane %v1359, 1
      %v1362 = vor.u32 %v1357, %v1361
      %v1364 = vshll.u32 %v1199, 16
      %v1366 = vrot.slane %v1364, 1
      %v1367 = vsel %vm582, %v1362, %v1366
      %v1369 = vshrl.u32 %v1253, 16
      %v1371 = vshll.u32 %v1253, 16
      %v1373 = vrot.slane %v1371, 1
      %v1374 = vor.u32 %v1369, %v1373
      %v1376 = vshll.u32 %v1203, 16
      %v1378 = vrot.slane %v1376, 1
      %v1379 = vsel %vm582, %v1374, %v1378
      %v1381 = vshrl.u32 %v1254, 16
      %v1383 = vshll.u32 %v1254, 16
      %v1385 = vrot.slane %v1383, 1
      %v1386 = vor.u32 %v1381, %v1385
      %v1388 = vshll.u32 %v1207, 16
      %v1390 = vrot.slane %v1388, 1
      %v1391 = vsel %vm582, %v1386, %v1390
      %v1393 = vshrl.u32 %v1255, 16
      %v1395 = vshll.u32 %v1255, 16
      %v1397 = vrot.slane %v1395, 1
      %v1398 = vor.u32 %v1393, %v1397
      %v1400 = vshll.u32 %v1211, 16
      %v1402 = vrot.slane %v1400, 1
      %v1403 = vsel %vm582, %v1398, %v1402
      %v1405 = vshrl.u32 %v1256, 16
      %v1407 = vshll.u32 %v1256, 16
      %v1409 = vrot.slane %v1407, 1
      %v1410 = vor.u32 %v1405, %v1409
      %v1412 = vshll.u32 %v1215, 16
      %v1414 = vrot.slane %v1412, 1
      %v1415 = vsel %vm582, %v1410, %v1414
      %v1417 = vshrl.u32 %v1257, 16
      %v1419 = vshll.u32 %v1257, 16
      %v1421 = vrot.slane %v1419, 1
      %v1422 = vor.u32 %v1417, %v1421
      %v1424 = vshll.u32 %v1219, 16
      %v1426 = vrot.slane %v1424, 1
      %v1427 = vsel %vm582, %v1422, %v1426
      %v1429 = vshrl.u32 %v1258, 16
      %v1431 = vshll.u32 %v1258, 16
      %v1433 = vrot.slane %v1431, 1
      %v1434 = vor.u32 %v1429, %v1433
      %v1436 = vshll.u32 %v1223, 16
      %v1438 = vrot.slane %v1436, 1
      %v1439 = vsel %vm582, %v1434, %v1438
      %v1441 = vshrl.u32 %v1259, 16
      %v1443 = vshll.u32 %v1259, 16
      %v1445 = vrot.slane %v1443, 1
      %v1446 = vor.u32 %v1441, %v1445
      %v1448 = vshll.u32 %v1227, 16
      %v1450 = vrot.slane %v1448, 1
      %v1451 = vsel %vm582, %v1446, %v1450
      %1452 = vrot.lane.b32.xlu0 %v1271, 32
      %v1453 = vpop.permute.xlu0 %1452
      %1454 = vrot.lane.b32.xlu0 %v1283, 32
      %v1455 = vpop.permute.xlu0 %1454
      %1456 = vrot.lane.b32.xlu0 %v1295, 32
      %v1457 = vpop.permute.xlu0 %1456
      %1458 = vrot.lane.b32.xlu0 %v1307, 32
      %v1459 = vpop.permute.xlu0 %1458
      %1460 = vrot.lane.b32.xlu0 %v1319, 32
      %v1461 = vpop.permute.xlu0 %1460
      %1462 = vrot.lane.b32.xlu0 %v1331, 32
      %v1463 = vpop.permute.xlu0 %1462
      %1464 = vrot.lane.b32.xlu0 %v1343, 32
      %v1465 = vpop.permute.xlu0 %1464
      %1466 = vrot.lane.b32.xlu0 %v1355, 32
      %v1467 = vpop.permute.xlu0 %1466
      %1468 = vrot.lane.b32.xlu0 %v1367, 32
      %v1469 = vpop.permute.xlu0 %1468
      %1470 = vrot.lane.b32.xlu0 %v1379, 32
      %v1471 = vpop.permute.xlu0 %1470
      %1472 = vrot.lane.b32.xlu0 %v1391, 32
      %v1473 = vpop.permute.xlu0 %1472
      %1474 = vrot.lane.b32.xlu0 %v1403, 32
      %v1475 = vpop.permute.xlu0 %1474
      %1476 = vrot.lane.b32.xlu0 %v1415, 32
      %v1477 = vpop.permute.xlu0 %1476
      %1478 = vrot.lane.b32.xlu0 %v1427, 32
      %v1479 = vpop.permute.xlu0 %1478
      %1480 = vrot.lane.b32.xlu0 %v1439, 32
      %v1481 = vpop.permute.xlu0 %1480
      %1482 = vrot.lane.b32.xlu0 %v1451, 32
      %v1483 = vpop.permute.xlu0 %1482
      %v1485 = vsel %vm1001, %v1244, %v1453
      %v1487 = vsel %vm1001, %v1245, %v1455
      %v1489 = vsel %vm1001, %v1246, %v1457
      %v1491 = vsel %vm1001, %v1247, %v1459
      %v1493 = vsel %vm1001, %v1248, %v1461
      %v1495 = vsel %vm1001, %v1249, %v1463
      %v1497 = vsel %vm1001, %v1250, %v1465
      %v1499 = vsel %vm1001, %v1251, %v1467
      %v1501 = vsel %vm1001, %v1252, %v1469
      %v1503 = vsel %vm1001, %v1253, %v1471
      %v1505 = vsel %vm1001, %v1254, %v1473
      %v1507 = vsel %vm1001, %v1255, %v1475
      %v1509 = vsel %vm1001, %v1256, %v1477
      %v1511 = vsel %vm1001, %v1257, %v1479
      %v1513 = vsel %vm1001, %v1258, %v1481
      %v1515 = vsel %vm1001, %v1259, %v1483
      %v1516 = vld [vmem:[%s1] sm:$0xf]
      %v1517 = vld [vmem:[%s1 + $0x4] sm:$0xf]
      %v1518 = vld [vmem:[%s1 + $0x8] sm:$0xf]
      %v1519 = vld [vmem:[%s1 + $0xc] sm:$0xf]
      %v1520 = vld [vmem:[%s1 + $0x10] sm:$0xf]
      %v1521 = vld [vmem:[%s1 + $0x14] sm:$0xf]
      %v1522 = vld [vmem:[%s1 + $0x18] sm:$0xf]
      %v1523 = vld [vmem:[%s1 + $0x1c] sm:$0xf]
      %v1524 = vld [vmem:[%s1 + $0x20] sm:$0xf]
      %v1525 = vld [vmem:[%s1 + $0x24] sm:$0xf]
      %v1526 = vld [vmem:[%s1 + $0x28] sm:$0xf]
      %v1527 = vld [vmem:[%s1 + $0x2c] sm:$0xf]
      %v1528 = vld [vmem:[%s1 + $0x30] sm:$0xf]
      %v1529 = vld [vmem:[%s1 + $0x34] sm:$0xf]
      %v1530 = vld [vmem:[%s1 + $0x38] sm:$0xf]
      %v1531 = vld [vmem:[%s1 + $0x3c] sm:$0xf]
      %v1532 = vld [vmem:[%s1 + $0x40] sm:$0xf]
      %v1533 = vld [vmem:[%s1 + $0x44] sm:$0xf]
      %v1534 = vld [vmem:[%s1 + $0x48] sm:$0xf]
      %v1535 = vld [vmem:[%s1 + $0x4c] sm:$0xf]
      %v1536 = vld [vmem:[%s1 + $0x50] sm:$0xf]
      %v1537 = vld [vmem:[%s1 + $0x54] sm:$0xf]
      %v1538 = vld [vmem:[%s1 + $0x58] sm:$0xf]
      %v1539 = vld [vmem:[%s1 + $0x5c] sm:$0xf]
      %v1540 = vld [vmem:[%s2] sm:$0x1]
      %v1542 = vlaneseq
      %v1543 = vshrl.u32 %v1542, 7
      %v1544 = vsub.s32 0, %v1543
      %v1545 = vrot.slane %v1540, %v1544
      %v1571 = vunpack.c.l.b16 %v1516
      %v1572 = vunpack.c.l.b16 %v1517
      %v1573 = vunpack.c.l.b16 %v1518
      %v1574 = vunpack.c.l.b16 %v1519
      %v1575 = vunpack.c.l.b16 %v1520
      %v1576 = vunpack.c.l.b16 %v1521
      %v1577 = vunpack.c.l.b16 %v1522
      %v1578 = vunpack.c.l.b16 %v1523
      %v1579 = vunpack.c.l.b16 %v1524
      %v1580 = vunpack.c.l.b16 %v1525
      %v1581 = vunpack.c.l.b16 %v1526
      %v1582 = vunpack.c.l.b16 %v1527
      %v1583 = vunpack.c.l.b16 %v1528
      %v1584 = vunpack.c.l.b16 %v1529
      %v1585 = vunpack.c.l.b16 %v1530
      %v1586 = vunpack.c.l.b16 %v1531
      %v1587 = vunpack.c.l.b16 %v1532
      %v1588 = vunpack.c.l.b16 %v1533
      %v1589 = vunpack.c.l.b16 %v1534
      %v1590 = vunpack.c.l.b16 %v1535
      %v1591 = vunpack.c.l.b16 %v1536
      %v1592 = vunpack.c.l.b16 %v1537
      %v1593 = vunpack.c.l.b16 %v1538
      %v1594 = vunpack.c.l.b16 %v1539
      %v1595 = vpack.c.b16 %v1572, %v1571
      %v1596 = vpack.c.b16 %v1574, %v1573
      %v1597 = vpack.c.b16 %v1576, %v1575
      %v1598 = vpack.c.b16 %v1578, %v1577
      %v1599 = vpack.c.b16 %v1580, %v1579
      %v1600 = vpack.c.b16 %v1582, %v1581
      %v1601 = vpack.c.b16 %v1584, %v1583
      %v1602 = vpack.c.b16 %v1586, %v1585
      %v1603 = vpack.c.b16 %v1588, %v1587
      %v1604 = vpack.c.b16 %v1590, %v1589
      %v1605 = vpack.c.b16 %v1592, %v1591
      %v1606 = vpack.c.b16 %v1594, %v1593
      %v1619 = vsel %vm1034, %v1118, 0
      %v1621 = vsel %vm1034, %v1121, 0
      %v1623 = vsel %vm1034, %v1124, 0
      %v1625 = vsel %vm1034, %v1127, 0
      %v1627 = vsel %vm1034, %v1130, 0
      %v1629 = vsel %vm1034, %v1133, 0
      %v1631 = vsel %vm1034, %v1136, 0
      %v1633 = vsel %vm1034, %v1139, 0
      %v1635 = vsel %vm1034, %v1142, 0
      %v1637 = vsel %vm1034, %v1145, 0
      %v1639 = vsel %vm1034, %v1148, 0
      %v1641 = vsel %vm1034, %v1151, 0
      %v1643 = vsel %vm1034, %v1154, 0
      %v1645 = vsel %vm1034, %v1157, 0
      %v1647 = vsel %vm1034, %v1160, 0
      %v1649 = vsel %vm1034, %v1163, 0
      %1651 = vmatprep.subr.bf16.mxu0 0
      %1652 = vmatpush1.bf16.msra.mxu0 %v1602
      %1653 = vmatprep.subr.bf16.mxu0 0
      %1654 = vmatpush1.bf16.msra.mxu0 %v1601
      %1655 = vmatprep.subr.bf16.mxu0 0
      %1656 = vmatpush1.bf16.msra.mxu0 %v1600
      %1657 = vmatprep.subr.bf16.mxu0 0
      %1658 = vmatpush1.bf16.msra.mxu0 %v1599
      %1659 = vmatprep.subr.bf16.mxu0 0
      %1660 = vmatpush1.bf16.msra.mxu0 %v1598
      %1661 = vmatprep.subr.bf16.mxu0 0
      %1662 = vmatpush1.bf16.msra.mxu0 %v1597
      %1663 = vmatprep.subr.bf16.mxu0 0
      %1664 = vmatpush1.bf16.msra.mxu0 %v1596
      %1665 = vmatprep.subr.bf16.mxu0 0
      %1666 = vmatpush1.bf16.msra.mxu0 %v1595
      %1667 = vmatprep.subr.bf16.mxu0 0
      %1668 = vmatpush2.bf16.msra.mxu0 0
      %1669 = vmatprep.subr.bf16.mxu0 0
      %1670 = vmatpush2.bf16.msra.mxu0 0
      %1671 = vmatprep.subr.bf16.mxu0 0
      %1672 = vmatpush2.bf16.msra.mxu0 0
      %1673 = vmatprep.subr.bf16.mxu0 0
      %1674 = vmatpush2.bf16.msra.mxu0 0
      %1675 = vmatprep.subr.bf16.mxu0 0
      %1676 = vmatpush2.bf16.msra.mxu0 %v1606
      %1677 = vmatprep.subr.bf16.mxu0 0
      %1678 = vmatpush2.bf16.msra.mxu0 %v1605
      %1679 = vmatprep.subr.bf16.mxu0 0
      %1680 = vmatpush2.bf16.msra.mxu0 %v1604
      %1681 = vmatprep.subr.bf16.mxu0 0
      %1682 = vmatpush2.bf16.msra.mxu0 %v1603
      %1683 = vmatprep.mubr.bf16.mxu0 %v1619
      %1684 = vmatmul.mubr.bf16.gmra.mxu0 %v1069
      %v1685 = vpop.f32.mrf.mxu0
      %v1686 = vadd.f32 %v1545, %v1685
      %v1687 = vpop.f32.mrf.mxu0
      %v1688 = vpop.f32.mrf.mxu0
      %v1689 = vadd.f32 %v1545, %v1688
      %v1690 = vpop.f32.mrf.mxu0
      %1691 = vmatprep.mubr.bf16.mxu0 %v1621
      %1692 = vmatmul.mubr.bf16.gmra.mxu0 %v1072
      %v1693 = vpop.f32.mrf.mxu0
      %v1694 = vadd.f32 %v1545, %v1693
      %v1695 = vpop.f32.mrf.mxu0
      %v1696 = vpop.f32.mrf.mxu0
      %v1697 = vadd.f32 %v1545, %v1696
      %v1698 = vpop.f32.mrf.mxu0
      %1699 = vmatprep.mubr.bf16.mxu0 %v1623
      %1700 = vmatmul.mubr.bf16.gmra.mxu0 %v1075
      %v1701 = vpop.f32.mrf.mxu0
      %v1702 = vadd.f32 %v1545, %v1701
      %v1703 = vpop.f32.mrf.mxu0
      %v1704 = vpop.f32.mrf.mxu0
      %v1705 = vadd.f32 %v1545, %v1704
      %v1706 = vpop.f32.mrf.mxu0
      %1707 = vmatprep.mubr.bf16.mxu0 %v1625
      %1708 = vmatmul.mubr.bf16.gmra.mxu0 %v1078
      %v1709 = vpop.f32.mrf.mxu0
      %v1710 = vadd.f32 %v1545, %v1709
      %v1711 = vpop.f32.mrf.mxu0
      %v1712 = vpop.f32.mrf.mxu0
      %v1713 = vadd.f32 %v1545, %v1712
      %v1714 = vpop.f32.mrf.mxu0
      %1715 = vmatprep.mubr.bf16.mxu0 %v1627
      %1716 = vmatmul.mubr.bf16.gmra.mxu0 %v1081
      %v1717 = vpop.f32.mrf.mxu0
      %v1718 = vadd.f32 %v1545, %v1717
      %v1719 = vpop.f32.mrf.mxu0
      %v1720 = vpop.f32.mrf.mxu0
      %v1721 = vadd.f32 %v1545, %v1720
      %v1722 = vpop.f32.mrf.mxu0
      %1723 = vmatprep.mubr.bf16.mxu0 %v1629
      %1724 = vmatmul.mubr.bf16.gmra.mxu0 %v1084
      %v1725 = vpop.f32.mrf.mxu0
      %v1726 = vadd.f32 %v1545, %v1725
      %v1727 = vpop.f32.mrf.mxu0
      %v1728 = vpop.f32.mrf.mxu0
      %v1729 = vadd.f32 %v1545, %v1728
      %v1730 = vpop.f32.mrf.mxu0
      %1731 = vmatprep.mubr.bf16.mxu0 %v1631
      %1732 = vmatmul.mubr.bf16.gmra.mxu0 %v1087
      %v1733 = vpop.f32.mrf.mxu0
      %v1734 = vadd.f32 %v1545, %v1733
      %v1735 = vpop.f32.mrf.mxu0
      %v1736 = vpop.f32.mrf.mxu0
      %v1737 = vadd.f32 %v1545, %v1736
      %v1738 = vpop.f32.mrf.mxu0
      %1739 = vmatprep.mubr.bf16.mxu0 %v1633
      %1740 = vmatmul.mubr.bf16.gmra.mxu0 %v1090
      %v1741 = vpop.f32.mrf.mxu0
      %v1742 = vadd.f32 %v1545, %v1741
      %v1743 = vpop.f32.mrf.mxu0
      %v1744 = vpop.f32.mrf.mxu0
      %v1745 = vadd.f32 %v1545, %v1744
      %v1746 = vpop.f32.mrf.mxu0
      %1747 = vmatprep.mubr.bf16.mxu0 %v1635
      %1748 = vmatmul.mubr.bf16.gmra.mxu0 %v1093
      %v1749 = vpop.f32.mrf.mxu0
      %v1750 = vadd.f32 %v1545, %v1749
      %v1751 = vpop.f32.mrf.mxu0
      %v1752 = vpop.f32.mrf.mxu0
      %v1753 = vadd.f32 %v1545, %v1752
      %v1754 = vpop.f32.mrf.mxu0
      %1755 = vmatprep.mubr.bf16.mxu0 %v1637
      %1756 = vmatmul.mubr.bf16.gmra.mxu0 %v1096
      %v1757 = vpop.f32.mrf.mxu0
      %v1758 = vadd.f32 %v1545, %v1757
      %v1759 = vpop.f32.mrf.mxu0
      %v1760 = vpop.f32.mrf.mxu0
      %v1761 = vadd.f32 %v1545, %v1760
      %v1762 = vpop.f32.mrf.mxu0
      %1763 = vmatprep.mubr.bf16.mxu0 %v1639
      %1764 = vmatmul.mubr.bf16.gmra.mxu0 %v1099
      %v1765 = vpop.f32.mrf.mxu0
      %v1766 = vadd.f32 %v1545, %v1765
      %v1767 = vpop.f32.mrf.mxu0
      %v1768 = vpop.f32.mrf.mxu0
      %v1769 = vadd.f32 %v1545, %v1768
      %v1770 = vpop.f32.mrf.mxu0
      %1771 = vmatprep.mubr.bf16.mxu0 %v1641
      %1772 = vmatmul.mubr.bf16.gmra.mxu0 %v1102
      %v1773 = vpop.f32.mrf.mxu0
      %v1774 = vadd.f32 %v1545, %v1773
      %v1775 = vpop.f32.mrf.mxu0
      %v1776 = vpop.f32.mrf.mxu0
      %v1777 = vadd.f32 %v1545, %v1776
      %v1778 = vpop.f32.mrf.mxu0
      %1779 = vmatprep.mubr.bf16.mxu0 %v1643
      %1780 = vmatmul.mubr.bf16.gmra.mxu0 %v1105
      %v1781 = vpop.f32.mrf.mxu0
      %v1782 = vadd.f32 %v1545, %v1781
      %v1783 = vpop.f32.mrf.mxu0
      %v1784 = vpop.f32.mrf.mxu0
      %v1785 = vadd.f32 %v1545, %v1784
      %v1786 = vpop.f32.mrf.mxu0
      %1787 = vmatprep.mubr.bf16.mxu0 %v1645
      %1788 = vmatmul.mubr.bf16.gmra.mxu0 %v1108
      %v1789 = vpop.f32.mrf.mxu0
      %v1790 = vadd.f32 %v1545, %v1789
      %v1791 = vpop.f32.mrf.mxu0
      %v1792 = vpop.f32.mrf.mxu0
      %v1793 = vadd.f32 %v1545, %v1792
      %v1794 = vpop.f32.mrf.mxu0
      %1795 = vmatprep.mubr.bf16.mxu0 %v1647
      %1796 = vmatmul.mubr.bf16.gmra.mxu0 %v1111
      %v1797 = vpop.f32.mrf.mxu0
      %v1798 = vadd.f32 %v1545, %v1797
      %v1799 = vpop.f32.mrf.mxu0
      %v1800 = vpop.f32.mrf.mxu0
      %v1801 = vadd.f32 %v1545, %v1800
      %v1802 = vpop.f32.mrf.mxu0
      %1803 = vmatprep.mubr.bf16.mxu0 %v1649
      %1804 = vmatmul.mubr.bf16.gmra.mxu0 %v1114
      %v1805 = vpop.f32.mrf.mxu0
      %v1806 = vadd.f32 %v1545, %v1805
      %v1807 = vpop.f32.mrf.mxu0
      %v1808 = vpop.f32.mrf.mxu0
      %v1809 = vadd.f32 %v1545, %v1808
      %v1810 = vpop.f32.mrf.mxu0
      %1811 = vdwg.mxu0
      %v1812 = vld [vmem:[%s3] sm:$0xf]
      %v1813 = vld [vmem:[%s3 + $0x4] sm:$0xf]
      %v1814 = vld [vmem:[%s3 + $0x8] sm:$0xf]
      %v1815 = vld [vmem:[%s3 + $0xc] sm:$0xf]
      %v1816 = vld [vmem:[%s3 + $0x10] sm:$0xf]
      %v1817 = vld [vmem:[%s3 + $0x14] sm:$0xf]
      %v1818 = vld [vmem:[%s3 + $0x18] sm:$0xf]
      %v1819 = vld [vmem:[%s3 + $0x1c] sm:$0xf]
      %v1820 = vld [vmem:[%s4] sm:$0x1]
      %v1822 = vlaneseq
      %v1823 = vshrl.u32 %v1822, 7
      %v1824 = vsub.s32 0, %v1823
      %v1825 = vrot.slane %v1820, %v1824
      %v1835 = vunpack.c.l.b16 %v1812
      %v1836 = vunpack.c.l.b16 %v1813
      %v1837 = vunpack.c.l.b16 %v1814
      %v1838 = vunpack.c.l.b16 %v1815
      %v1839 = vunpack.c.l.b16 %v1816
      %v1840 = vunpack.c.l.b16 %v1817
      %v1841 = vunpack.c.l.b16 %v1818
      %v1842 = vunpack.c.l.b16 %v1819
      %v1843 = vpack.c.b16 %v1836, %v1835
      %v1844 = vpack.c.b16 %v1838, %v1837
      %v1845 = vpack.c.b16 %v1840, %v1839
      %v1846 = vpack.c.b16 %v1842, %v1841
      %v1851 = vsel %vm1034, %v1485, 0
      %v1853 = vsel %vm1034, %v1487, 0
      %v1855 = vsel %vm1034, %v1489, 0
      %v1857 = vsel %vm1034, %v1491, 0
      %v1859 = vsel %vm1034, %v1493, 0
      %v1861 = vsel %vm1034, %v1495, 0
      %v1863 = vsel %vm1034, %v1497, 0
      %v1865 = vsel %vm1034, %v1499, 0
      %v1867 = vsel %vm1034, %v1501, 0
      %v1869 = vsel %vm1034, %v1503, 0
      %v1871 = vsel %vm1034, %v1505, 0
      %v1873 = vsel %vm1034, %v1507, 0
      %v1875 = vsel %vm1034, %v1509, 0
      %v1877 = vsel %vm1034, %v1511, 0
      %v1879 = vsel %vm1034, %v1513, 0
      %v1881 = vsel %vm1034, %v1515, 0
      %1883 = vmatprep.subr.bf16.mxu0 0
      %1884 = vmatpush1.bf16.msra.mxu0 0
      %1885 = vmatprep.subr.bf16.mxu0 0
      %1886 = vmatpush1.bf16.msra.mxu0 0
      %1887 = vmatprep.subr.bf16.mxu0 0
      %1888 = vmatpush1.bf16.msra.mxu0 0
      %1889 = vmatprep.subr.bf16.mxu0 0
      %1890 = vmatpush1.bf16.msra.mxu0 0
      %1891 = vmatprep.subr.bf16.mxu0 0
      %1892 = vmatpush1.bf16.msra.mxu0 %v1846
      %1893 = vmatprep.subr.bf16.mxu0 0
      %1894 = vmatpush1.bf16.msra.mxu0 %v1845
      %1895 = vmatprep.subr.bf16.mxu0 0
      %1896 = vmatpush1.bf16.msra.mxu0 %v1844
      %1897 = vmatprep.subr.bf16.mxu0 0
      %1898 = vmatpush1.bf16.msra.mxu0 %v1843
      %1899 = vmatprep.subr.bf16.mxu0 0
      %1900 = vmatpush2.bf16.msra.mxu0 0
      %1901 = vmatprep.subr.bf16.mxu0 0
      %1902 = vmatpush2.bf16.msra.mxu0 0
      %1903 = vmatprep.subr.bf16.mxu0 0
      %1904 = vmatpush2.bf16.msra.mxu0 0
      %1905 = vmatprep.subr.bf16.mxu0 0
      %1906 = vmatpush2.bf16.msra.mxu0 0
      %1907 = vmatprep.subr.bf16.mxu0 0
      %1908 = vmatpush2.bf16.msra.mxu0 0
      %1909 = vmatprep.subr.bf16.mxu0 0
      %1910 = vmatpush2.bf16.msra.mxu0 0
      %1911 = vmatprep.subr.bf16.mxu0 0
      %1912 = vmatpush2.bf16.msra.mxu0 0
      %1913 = vmatprep.subr.bf16.mxu0 0
      %1914 = vmatpush2.bf16.msra.mxu0 0
      %1915 = vmatprep.mubr.bf16.mxu0 0
      %1916 = vmatmul.mubr.bf16.gmra.mxu0 %v1851
      %v1917 = vpop.f32.mrf.mxu0
      %v1918 = vadd.f32 %v1825, %v1917
      %v1919 = vpop.f32.mrf.mxu0
      %v1920 = vpop.f32.mrf.mxu0
      %v1921 = vadd.f32 %v1825, %v1920
      %v1922 = vpop.f32.mrf.mxu0
      %1923 = vmatprep.mubr.bf16.mxu0 0
      %1924 = vmatmul.mubr.bf16.gmra.mxu0 %v1853
      %v1925 = vpop.f32.mrf.mxu0
      %v1926 = vadd.f32 %v1825, %v1925
      %v1927 = vpop.f32.mrf.mxu0
      %v1928 = vpop.f32.mrf.mxu0
      %v1929 = vadd.f32 %v1825, %v1928
      %v1930 = vpop.f32.mrf.mxu0
      %1931 = vmatprep.mubr.bf16.mxu0 0
      %1932 = vmatmul.mubr.bf16.gmra.mxu0 %v1855
      %v1933 = vpop.f32.mrf.mxu0
      %v1934 = vadd.f32 %v1825, %v1933
      %v1935 = vpop.f32.mrf.mxu0
      %v1936 = vpop.f32.mrf.mxu0
      %v1937 = vadd.f32 %v1825, %v1936
      %v1938 = vpop.f32.mrf.mxu0
      %1939 = vmatprep.mubr.bf16.mxu0 0
      %1940 = vmatmul.mubr.bf16.gmra.mxu0 %v1857
      %v1941 = vpop.f32.mrf.mxu0
      %v1942 = vadd.f32 %v1825, %v1941
      %v1943 = vpop.f32.mrf.mxu0
      %v1944 = vpop.f32.mrf.mxu0
      %v1945 = vadd.f32 %v1825, %v1944
      %v1946 = vpop.f32.mrf.mxu0
      %1947 = vmatprep.mubr.bf16.mxu0 0
      %1948 = vmatmul.mubr.bf16.gmra.mxu0 %v1859
      %v1949 = vpop.f32.mrf.mxu0
      %v1950 = vadd.f32 %v1825, %v1949
      %v1951 = vpop.f32.mrf.mxu0
      %v1952 = vpop.f32.mrf.mxu0
      %v1953 = vadd.f32 %v1825, %v1952
      %v1954 = vpop.f32.mrf.mxu0
      %1955 = vmatprep.mubr.bf16.mxu0 0
      %1956 = vmatmul.mubr.bf16.gmra.mxu0 %v1861
      %v1957 = vpop.f32.mrf.mxu0
      %v1958 = vadd.f32 %v1825, %v1957
      %v1959 = vpop.f32.mrf.mxu0
      %v1960 = vpop.f32.mrf.mxu0
      %v1961 = vadd.f32 %v1825, %v1960
      %v1962 = vpop.f32.mrf.mxu0
      %1963 = vmatprep.mubr.bf16.mxu0 0
      %1964 = vmatmul.mubr.bf16.gmra.mxu0 %v1863
      %v1965 = vpop.f32.mrf.mxu0
      %v1966 = vadd.f32 %v1825, %v1965
      %v1967 = vpop.f32.mrf.mxu0
      %v1968 = vpop.f32.mrf.mxu0
      %v1969 = vadd.f32 %v1825, %v1968
      %v1970 = vpop.f32.mrf.mxu0
      %1971 = vmatprep.mubr.bf16.mxu0 0
      %1972 = vmatmul.mubr.bf16.gmra.mxu0 %v1865
      %v1973 = vpop.f32.mrf.mxu0
      %v1974 = vadd.f32 %v1825, %v1973
      %v1975 = vpop.f32.mrf.mxu0
      %v1976 = vpop.f32.mrf.mxu0
      %v1977 = vadd.f32 %v1825, %v1976
      %v1978 = vpop.f32.mrf.mxu0
      %1979 = vmatprep.mubr.bf16.mxu0 0
      %1980 = vmatmul.mubr.bf16.gmra.mxu0 %v1867
      %v1981 = vpop.f32.mrf.mxu0
      %v1982 = vadd.f32 %v1825, %v1981
      %v1983 = vpop.f32.mrf.mxu0
      %v1984 = vpop.f32.mrf.mxu0
      %v1985 = vadd.f32 %v1825, %v1984
      %v1986 = vpop.f32.mrf.mxu0
      %1987 = vmatprep.mubr.bf16.mxu0 0
      %1988 = vmatmul.mubr.bf16.gmra.mxu0 %v1869
      %v1989 = vpop.f32.mrf.mxu0
      %v1990 = vadd.f32 %v1825, %v1989
      %v1991 = vpop.f32.mrf.mxu0
      %v1992 = vpop.f32.mrf.mxu0
      %v1993 = vadd.f32 %v1825, %v1992
      %v1994 = vpop.f32.mrf.mxu0
      %1995 = vmatprep.mubr.bf16.mxu0 0
      %1996 = vmatmul.mubr.bf16.gmra.mxu0 %v1871
      %v1997 = vpop.f32.mrf.mxu0
      %v1998 = vadd.f32 %v1825, %v1997
      %v1999 = vpop.f32.mrf.mxu0
      %v2000 = vpop.f32.mrf.mxu0
      %v2001 = vadd.f32 %v1825, %v2000
      %v2002 = vpop.f32.mrf.mxu0
      %2003 = vmatprep.mubr.bf16.mxu0 0
      %2004 = vmatmul.mubr.bf16.gmra.mxu0 %v1873
      %v2005 = vpop.f32.mrf.mxu0
      %v2006 = vadd.f32 %v1825, %v2005
      %v2007 = vpop.f32.mrf.mxu0
      %v2008 = vpop.f32.mrf.mxu0
      %v2009 = vadd.f32 %v1825, %v2008
      %v2010 = vpop.f32.mrf.mxu0
      %2011 = vmatprep.mubr.bf16.mxu0 0
      %2012 = vmatmul.mubr.bf16.gmra.mxu0 %v1875
      %v2013 = vpop.f32.mrf.mxu0
      %v2014 = vadd.f32 %v1825, %v2013
      %v2015 = vpop.f32.mrf.mxu0
      %v2016 = vpop.f32.mrf.mxu0
      %v2017 = vadd.f32 %v1825, %v2016
      %v2018 = vpop.f32.mrf.mxu0
      %2019 = vmatprep.mubr.bf16.mxu0 0
      %2020 = vmatmul.mubr.bf16.gmra.mxu0 %v1877
      %v2021 = vpop.f32.mrf.mxu0
      %v2022 = vadd.f32 %v1825, %v2021
      %v2023 = vpop.f32.mrf.mxu0
      %v2024 = vpop.f32.mrf.mxu0
      %v2025 = vadd.f32 %v1825, %v2024
      %v2026 = vpop.f32.mrf.mxu0
      %2027 = vmatprep.mubr.bf16.mxu0 0
      %2028 = vmatmul.mubr.bf16.gmra.mxu0 %v1879
      %v2029 = vpop.f32.mrf.mxu0
      %v2030 = vadd.f32 %v1825, %v2029
      %v2031 = vpop.f32.mrf.mxu0
      %v2032 = vpop.f32.mrf.mxu0
      %v2033 = vadd.f32 %v1825, %v2032
      %v2034 = vpop.f32.mrf.mxu0
      %2035 = vmatprep.mubr.bf16.mxu0 0
      %2036 = vmatmul.mubr.bf16.gmra.mxu0 %v1881
      %v2037 = vpop.f32.mrf.mxu0
      %v2038 = vadd.f32 %v1825, %v2037
      %v2039 = vpop.f32.mrf.mxu0
      %v2040 = vpop.f32.mrf.mxu0
      %v2041 = vadd.f32 %v1825, %v2040
      %v2042 = vpop.f32.mrf.mxu0
      %2043 = vdwg.mxu0
      %v2044 = vtanh.pop %v1686
      %v2045 = vtanh.pop %v1689
      %v2046 = vtanh.pop %v1694
      %v2047 = vtanh.pop %v1697
      %v2048 = vtanh.pop %v1702
      %v2049 = vtanh.pop %v1705
      %v2050 = vtanh.pop %v1710
      %v2051 = vtanh.pop %v1713
      %v2052 = vtanh.pop %v1718
      %v2053 = vtanh.pop %v1721
      %v2054 = vtanh.pop %v1726
      %v2055 = vtanh.pop %v1729
      %v2056 = vtanh.pop %v1734
      %v2057 = vtanh.pop %v1737
      %v2058 = vtanh.pop %v1742
      %v2059 = vtanh.pop %v1745
      %v2060 = vtanh.pop %v1750
      %v2061 = vtanh.pop %v1753
      %v2062 = vtanh.pop %v1758
      %v2063 = vtanh.pop %v1761
      %v2064 = vtanh.pop %v1766
      %v2065 = vtanh.pop %v1769
      %v2066 = vtanh.pop %v1774
      %v2067 = vtanh.pop %v1777
      %v2068 = vtanh.pop %v1782
      %v2069 = vtanh.pop %v1785
      %v2070 = vtanh.pop %v1790
      %v2071 = vtanh.pop %v1793
      %v2072 = vtanh.pop %v1798
      %v2073 = vtanh.pop %v1801
      %v2074 = vtanh.pop %v1806
      %v2075 = vtanh.pop %v1809
      %v2076 = vxor.u32 %v1686, 2147483648
      %v2077 = vxor.u32 %v1689, 2147483648
      %v2078 = vxor.u32 %v1694, 2147483648
      %v2079 = vxor.u32 %v1697, 2147483648
      %v2080 = vxor.u32 %v1702, 2147483648
      %v2081 = vxor.u32 %v1705, 2147483648
      %v2082 = vxor.u32 %v1710, 2147483648
      %v2083 = vxor.u32 %v1713, 2147483648
      %v2084 = vxor.u32 %v1718, 2147483648
      %v2085 = vxor.u32 %v1721, 2147483648
      %v2086 = vxor.u32 %v1726, 2147483648
      %v2087 = vxor.u32 %v1729, 2147483648
      %v2088 = vxor.u32 %v1734, 2147483648
      %v2089 = vxor.u32 %v1737, 2147483648
      %v2090 = vxor.u32 %v1742, 2147483648
      %v2091 = vxor.u32 %v1745, 2147483648
      %v2092 = vxor.u32 %v1750, 2147483648
      %v2093 = vxor.u32 %v1753, 2147483648
      %v2094 = vxor.u32 %v1758, 2147483648
      %v2095 = vxor.u32 %v1761, 2147483648
      %v2096 = vxor.u32 %v1766, 2147483648
      %v2097 = vxor.u32 %v1769, 2147483648
      %v2098 = vxor.u32 %v1774, 2147483648
      %v2099 = vxor.u32 %v1777, 2147483648
      %v2100 = vxor.u32 %v1782, 2147483648
      %v2101 = vxor.u32 %v1785, 2147483648
      %v2102 = vxor.u32 %v1790, 2147483648
      %v2103 = vxor.u32 %v1793, 2147483648
      %v2104 = vxor.u32 %v1798, 2147483648
      %v2105 = vxor.u32 %v1801, 2147483648
      %v2106 = vxor.u32 %v1806, 2147483648
      %v2107 = vxor.u32 %v1809, 2147483648
      %v2108 = vmul.f32 %v2076, 1.442695
      %v2109 = vpow.pop %v2108
      %v2110 = vmul.f32 %v2077, 1.442695
      %v2111 = vpow.pop %v2110
      %v2112 = vmul.f32 %v2078, 1.442695
      %v2113 = vpow.pop %v2112
      %v2114 = vmul.f32 %v2079, 1.442695
      %v2115 = vpow.pop %v2114
      %v2116 = vmul.f32 %v2080, 1.442695
      %v2117 = vpow.pop %v2116
      %v2118 = vmul.f32 %v2081, 1.442695
      %v2119 = vpow.pop %v2118
      %v2120 = vmul.f32 %v2082, 1.442695
      %v2121 = vpow.pop %v2120
      %v2122 = vmul.f32 %v2083, 1.442695
      %v2123 = vpow.pop %v2122
      %v2124 = vmul.f32 %v2084, 1.442695
      %v2125 = vpow.pop %v2124
      %v2126 = vmul.f32 %v2085, 1.442695
      %v2127 = vpow.pop %v2126
      %v2128 = vmul.f32 %v2086, 1.442695
      %v2129 = vpow.pop %v2128
      %v2130 = vmul.f32 %v2087, 1.442695
      %v2131 = vpow.pop %v2130
      %v2132 = vmul.f32 %v2088, 1.442695
      %v2133 = vpow.pop %v2132
      %v2134 = vmul.f32 %v2089, 1.442695
      %v2135 = vpow.pop %v2134
      %v2136 = vmul.f32 %v2090, 1.442695
      %v2137 = vpow.pop %v2136
      %v2138 = vmul.f32 %v2091, 1.442695
      %v2139 = vpow.pop %v2138
      %v2140 = vmul.f32 %v2092, 1.442695
      %v2141 = vpow.pop %v2140
      %v2142 = vmul.f32 %v2093, 1.442695
      %v2143 = vpow.pop %v2142
      %v2144 = vmul.f32 %v2094, 1.442695
      %v2145 = vpow.pop %v2144
      %v2146 = vmul.f32 %v2095, 1.442695
      %v2147 = vpow.pop %v2146
      %v2148 = vmul.f32 %v2096, 1.442695
      %v2149 = vpow.pop %v2148
      %v2150 = vmul.f32 %v2097, 1.442695
      %v2151 = vpow.pop %v2150
      %v2152 = vmul.f32 %v2098, 1.442695
      %v2153 = vpow.pop %v2152
      %v2154 = vmul.f32 %v2099, 1.442695
      %v2155 = vpow.pop %v2154
      %v2156 = vmul.f32 %v2100, 1.442695
      %v2157 = vpow.pop %v2156
      %v2158 = vmul.f32 %v2101, 1.442695
      %v2159 = vpow.pop %v2158
      %v2160 = vmul.f32 %v2102, 1.442695
      %v2161 = vpow.pop %v2160
      %v2162 = vmul.f32 %v2103, 1.442695
      %v2163 = vpow.pop %v2162
      %v2164 = vmul.f32 %v2104, 1.442695
      %v2165 = vpow.pop %v2164
      %v2166 = vmul.f32 %v2105, 1.442695
      %v2167 = vpow.pop %v2166
      %v2168 = vmul.f32 %v2106, 1.442695
      %v2169 = vpow.pop %v2168
      %v2170 = vmul.f32 %v2107, 1.442695
      %v2171 = vpow.pop %v2170
      %v2172 = vadd.f32 %v2109, 1.0
      %v2173 = vadd.f32 %v2111, 1.0
      %v2174 = vadd.f32 %v2113, 1.0
      %v2175 = vadd.f32 %v2115, 1.0
      %v2176 = vadd.f32 %v2117, 1.0
      %v2177 = vadd.f32 %v2119, 1.0
      %v2178 = vadd.f32 %v2121, 1.0
      %v2179 = vadd.f32 %v2123, 1.0
      %v2180 = vadd.f32 %v2125, 1.0
      %v2181 = vadd.f32 %v2127, 1.0
      %v2182 = vadd.f32 %v2129, 1.0
      %v2183 = vadd.f32 %v2131, 1.0
      %v2184 = vadd.f32 %v2133, 1.0
      %v2185 = vadd.f32 %v2135, 1.0
      %v2186 = vadd.f32 %v2137, 1.0
      %v2187 = vadd.f32 %v2139, 1.0
      %v2188 = vadd.f32 %v2141, 1.0
      %v2189 = vadd.f32 %v2143, 1.0
      %v2190 = vadd.f32 %v2145, 1.0
      %v2191 = vadd.f32 %v2147, 1.0
      %v2192 = vadd.f32 %v2149, 1.0
      %v2193 = vadd.f32 %v2151, 1.0
      %v2194 = vadd.f32 %v2153, 1.0
      %v2195 = vadd.f32 %v2155, 1.0
      %v2196 = vadd.f32 %v2157, 1.0
      %v2197 = vadd.f32 %v2159, 1.0
      %v2198 = vadd.f32 %v2161, 1.0
      %v2199 = vadd.f32 %v2163, 1.0
      %v2200 = vadd.f32 %v2165, 1.0
      %v2201 = vadd.f32 %v2167, 1.0
      %v2202 = vadd.f32 %v2169, 1.0
      %v2203 = vadd.f32 %v2171, 1.0
      %v2204 = vrcp.pop %v2172
      %v2205 = vmul.f32 1.0, %v2204
      %v2206 = vrcp.pop %v2173
      %v2207 = vmul.f32 1.0, %v2206
      %v2208 = vrcp.pop %v2174
      %v2209 = vmul.f32 1.0, %v2208
      %v2210 = vrcp.pop %v2175
      %v2211 = vmul.f32 1.0, %v2210
      %v2212 = vrcp.pop %v2176
      %v2213 = vmul.f32 1.0, %v2212
      %v2214 = vrcp.pop %v2177
      %v2215 = vmul.f32 1.0, %v2214
      %v2216 = vrcp.pop %v2178
      %v2217 = vmul.f32 1.0, %v2216
      %v2218 = vrcp.pop %v2179
      %v2219 = vmul.f32 1.0, %v2218
      %v2220 = vrcp.pop %v2180
      %v2221 = vmul.f32 1.0, %v2220
      %v2222 = vrcp.pop %v2181
      %v2223 = vmul.f32 1.0, %v2222
      %v2224 = vrcp.pop %v2182
      %v2225 = vmul.f32 1.0, %v2224
      %v2226 = vrcp.pop %v2183
      %v2227 = vmul.f32 1.0, %v2226
      %v2228 = vrcp.pop %v2184
      %v2229 = vmul.f32 1.0, %v2228
      %v2230 = vrcp.pop %v2185
      %v2231 = vmul.f32 1.0, %v2230
      %v2232 = vrcp.pop %v2186
      %v2233 = vmul.f32 1.0, %v2232
      %v2234 = vrcp.pop %v2187
      %v2235 = vmul.f32 1.0, %v2234
      %v2236 = vrcp.pop %v2188
      %v2237 = vmul.f32 1.0, %v2236
      %v2238 = vrcp.pop %v2189
      %v2239 = vmul.f32 1.0, %v2238
      %v2240 = vrcp.pop %v2190
      %v2241 = vmul.f32 1.0, %v2240
      %v2242 = vrcp.pop %v2191
      %v2243 = vmul.f32 1.0, %v2242
      %v2244 = vrcp.pop %v2192
      %v2245 = vmul.f32 1.0, %v2244
      %v2246 = vrcp.pop %v2193
      %v2247 = vmul.f32 1.0, %v2246
      %v2248 = vrcp.pop %v2194
      %v2249 = vmul.f32 1.0, %v2248
      %v2250 = vrcp.pop %v2195
      %v2251 = vmul.f32 1.0, %v2250
      %v2252 = vrcp.pop %v2196
      %v2253 = vmul.f32 1.0, %v2252
      %v2254 = vrcp.pop %v2197
      %v2255 = vmul.f32 1.0, %v2254
      %v2256 = vrcp.pop %v2198
      %v2257 = vmul.f32 1.0, %v2256
      %v2258 = vrcp.pop %v2199
      %v2259 = vmul.f32 1.0, %v2258
      %v2260 = vrcp.pop %v2200
      %v2261 = vmul.f32 1.0, %v2260
      %v2262 = vrcp.pop %v2201
      %v2263 = vmul.f32 1.0, %v2262
      %v2264 = vrcp.pop %v2202
      %v2265 = vmul.f32 1.0, %v2264
      %v2266 = vrcp.pop %v2203
      %v2267 = vmul.f32 1.0, %v2266
      %2300 = vrot.lane.b32.xlu0 %v2205, 96
      %v2301 = vpop.permute.xlu0 %2300
      %2302 = vrot.lane.b32.xlu0 %v2207, 96
      %v2303 = vpop.permute.xlu0 %2302
      %2304 = vrot.lane.b32.xlu0 %v2209, 96
      %v2305 = vpop.permute.xlu0 %2304
      %2306 = vrot.lane.b32.xlu0 %v2211, 96
      %v2307 = vpop.permute.xlu0 %2306
      %2308 = vrot.lane.b32.xlu0 %v2213, 96
      %v2309 = vpop.permute.xlu0 %2308
      %2310 = vrot.lane.b32.xlu0 %v2215, 96
      %v2311 = vpop.permute.xlu0 %2310
      %2312 = vrot.lane.b32.xlu0 %v2217, 96
      %v2313 = vpop.permute.xlu0 %2312
      %2314 = vrot.lane.b32.xlu0 %v2219, 96
      %v2315 = vpop.permute.xlu0 %2314
      %2316 = vrot.lane.b32.xlu0 %v2221, 96
      %v2317 = vpop.permute.xlu0 %2316
      %2318 = vrot.lane.b32.xlu0 %v2223, 96
      %v2319 = vpop.permute.xlu0 %2318
      %2320 = vrot.lane.b32.xlu0 %v2225, 96
      %v2321 = vpop.permute.xlu0 %2320
      %2322 = vrot.lane.b32.xlu0 %v2227, 96
      %v2323 = vpop.permute.xlu0 %2322
      %2324 = vrot.lane.b32.xlu0 %v2229, 96
      %v2325 = vpop.permute.xlu0 %2324
      %2326 = vrot.lane.b32.xlu0 %v2231, 96
      %v2327 = vpop.permute.xlu0 %2326
      %2328 = vrot.lane.b32.xlu0 %v2233, 96
      %v2329 = vpop.permute.xlu0 %2328
      %2330 = vrot.lane.b32.xlu0 %v2235, 96
      %v2331 = vpop.permute.xlu0 %2330
      %2332 = vrot.lane.b32.xlu0 %v2237, 96
      %v2333 = vpop.permute.xlu0 %2332
      %2334 = vrot.lane.b32.xlu0 %v2239, 96
      %v2335 = vpop.permute.xlu0 %2334
      %2336 = vrot.lane.b32.xlu0 %v2241, 96
      %v2337 = vpop.permute.xlu0 %2336
      %2338 = vrot.lane.b32.xlu0 %v2243, 96
      %v2339 = vpop.permute.xlu0 %2338
      %2340 = vrot.lane.b32.xlu0 %v2245, 96
      %v2341 = vpop.permute.xlu0 %2340
      %2342 = vrot.lane.b32.xlu0 %v2247, 96
      %v2343 = vpop.permute.xlu0 %2342
      %2344 = vrot.lane.b32.xlu0 %v2249, 96
      %v2345 = vpop.permute.xlu0 %2344
      %2346 = vrot.lane.b32.xlu0 %v2251, 96
      %v2347 = vpop.permute.xlu0 %2346
      %2348 = vrot.lane.b32.xlu0 %v2253, 96
      %v2349 = vpop.permute.xlu0 %2348
      %2350 = vrot.lane.b32.xlu0 %v2255, 96
      %v2351 = vpop.permute.xlu0 %2350
      %2352 = vrot.lane.b32.xlu0 %v2257, 96
      %v2353 = vpop.permute.xlu0 %2352
      %2354 = vrot.lane.b32.xlu0 %v2259, 96
      %v2355 = vpop.permute.xlu0 %2354
      %2356 = vrot.lane.b32.xlu0 %v2261, 96
      %v2357 = vpop.permute.xlu0 %2356
      %2358 = vrot.lane.b32.xlu0 %v2263, 96
      %v2359 = vpop.permute.xlu0 %2358
      %2360 = vrot.lane.b32.xlu0 %v2265, 96
      %v2361 = vpop.permute.xlu0 %2360
      %2362 = vrot.lane.b32.xlu0 %v2267, 96
      %v2363 = vpop.permute.xlu0 %2362
      %v2396 = vmul.f32 %v2044, %v2301
      %v2397 = vmul.f32 %v2045, %v2303
      %v2398 = vmul.f32 %v2046, %v2305
      %v2399 = vmul.f32 %v2047, %v2307
      %v2400 = vmul.f32 %v2048, %v2309
      %v2401 = vmul.f32 %v2049, %v2311
      %v2402 = vmul.f32 %v2050, %v2313
      %v2403 = vmul.f32 %v2051, %v2315
      %v2404 = vmul.f32 %v2052, %v2317
      %v2405 = vmul.f32 %v2053, %v2319
      %v2406 = vmul.f32 %v2054, %v2321
      %v2407 = vmul.f32 %v2055, %v2323
      %v2408 = vmul.f32 %v2056, %v2325
      %v2409 = vmul.f32 %v2057, %v2327
      %v2410 = vmul.f32 %v2058, %v2329
      %v2411 = vmul.f32 %v2059, %v2331
      %v2412 = vmul.f32 %v2060, %v2333
      %v2413 = vmul.f32 %v2061, %v2335
      %v2414 = vmul.f32 %v2062, %v2337
      %v2415 = vmul.f32 %v2063, %v2339
      %v2416 = vmul.f32 %v2064, %v2341
      %v2417 = vmul.f32 %v2065, %v2343
      %v2418 = vmul.f32 %v2066, %v2345
      %v2419 = vmul.f32 %v2067, %v2347
      %v2420 = vmul.f32 %v2068, %v2349
      %v2421 = vmul.f32 %v2069, %v2351
      %v2422 = vmul.f32 %v2070, %v2353
      %v2423 = vmul.f32 %v2071, %v2355
      %v2424 = vmul.f32 %v2072, %v2357
      %v2425 = vmul.f32 %v2073, %v2359
      %v2426 = vmul.f32 %v2074, %v2361
      %v2427 = vmul.f32 %v2075, %v2363
      %2460 = vrot.lane.b32.xlu0 %v1918, 64
      %v2461 = vpop.permute.xlu0 %2460
      %2462 = vrot.lane.b32.xlu0 %v1921, 64
      %v2463 = vpop.permute.xlu0 %2462
      %2464 = vrot.lane.b32.xlu0 %v1926, 64
      %v2465 = vpop.permute.xlu0 %2464
      %2466 = vrot.lane.b32.xlu0 %v1929, 64
      %v2467 = vpop.permute.xlu0 %2466
      %2468 = vrot.lane.b32.xlu0 %v1934, 64
      %v2469 = vpop.permute.xlu0 %2468
      %2470 = vrot.lane.b32.xlu0 %v1937, 64
      %v2471 = vpop.permute.xlu0 %2470
      %2472 = vrot.lane.b32.xlu0 %v1942, 64
      %v2473 = vpop.permute.xlu0 %2472
      %2474 = vrot.lane.b32.xlu0 %v1945, 64
      %v2475 = vpop.permute.xlu0 %2474
      %2476 = vrot.lane.b32.xlu0 %v1950, 64
      %v2477 = vpop.permute.xlu0 %2476
      %2478 = vrot.lane.b32.xlu0 %v1953, 64
      %v2479 = vpop.permute.xlu0 %2478
      %2480 = vrot.lane.b32.xlu0 %v1958, 64
      %v2481 = vpop.permute.xlu0 %2480
      %2482 = vrot.lane.b32.xlu0 %v1961, 64
      %v2483 = vpop.permute.xlu0 %2482
      %2484 = vrot.lane.b32.xlu0 %v1966, 64
      %v2485 = vpop.permute.xlu0 %2484
      %2486 = vrot.lane.b32.xlu0 %v1969, 64
      %v2487 = vpop.permute.xlu0 %2486
      %2488 = vrot.lane.b32.xlu0 %v1974, 64
      %v2489 = vpop.permute.xlu0 %2488
      %2490 = vrot.lane.b32.xlu0 %v1977, 64
      %v2491 = vpop.permute.xlu0 %2490
      %2492 = vrot.lane.b32.xlu0 %v1982, 64
      %v2493 = vpop.permute.xlu0 %2492
      %2494 = vrot.lane.b32.xlu0 %v1985, 64
      %v2495 = vpop.permute.xlu0 %2494
      %2496 = vrot.lane.b32.xlu0 %v1990, 64
      %v2497 = vpop.permute.xlu0 %2496
      %2498 = vrot.lane.b32.xlu0 %v1993, 64
      %v2499 = vpop.permute.xlu0 %2498
      %2500 = vrot.lane.b32.xlu0 %v1998, 64
      %v2501 = vpop.permute.xlu0 %2500
      %2502 = vrot.lane.b32.xlu0 %v2001, 64
      %v2503 = vpop.permute.xlu0 %2502
      %2504 = vrot.lane.b32.xlu0 %v2006, 64
      %v2505 = vpop.permute.xlu0 %2504
      %2506 = vrot.lane.b32.xlu0 %v2009, 64
      %v2507 = vpop.permute.xlu0 %2506
      %2508 = vrot.lane.b32.xlu0 %v2014, 64
      %v2509 = vpop.permute.xlu0 %2508
      %2510 = vrot.lane.b32.xlu0 %v2017, 64
      %v2511 = vpop.permute.xlu0 %2510
      %2512 = vrot.lane.b32.xlu0 %v2022, 64
      %v2513 = vpop.permute.xlu0 %2512
      %2514 = vrot.lane.b32.xlu0 %v2025, 64
      %v2515 = vpop.permute.xlu0 %2514
      %2516 = vrot.lane.b32.xlu0 %v2030, 64
      %v2517 = vpop.permute.xlu0 %2516
      %2518 = vrot.lane.b32.xlu0 %v2033, 64
      %v2519 = vpop.permute.xlu0 %2518
      %2520 = vrot.lane.b32.xlu0 %v2038, 64
      %v2521 = vpop.permute.xlu0 %2520
      %2522 = vrot.lane.b32.xlu0 %v2041, 64
      %v2523 = vpop.permute.xlu0 %2522
      %v2556 = vadd.f32 %v1686, %v2461
      %v2557 = vadd.f32 %v1689, %v2463
      %v2558 = vadd.f32 %v1694, %v2465
      %v2559 = vadd.f32 %v1697, %v2467
      %v2560 = vadd.f32 %v1702, %v2469
      %v2561 = vadd.f32 %v1705, %v2471
      %v2562 = vadd.f32 %v1710, %v2473
      %v2563 = vadd.f32 %v1713, %v2475
      %v2564 = vadd.f32 %v1718, %v2477
      %v2565 = vadd.f32 %v1721, %v2479
      %v2566 = vadd.f32 %v1726, %v2481
      %v2567 = vadd.f32 %v1729, %v2483
      %v2568 = vadd.f32 %v1734, %v2485
      %v2569 = vadd.f32 %v1737, %v2487
      %v2570 = vadd.f32 %v1742, %v2489
      %v2571 = vadd.f32 %v1745, %v2491
      %v2572 = vadd.f32 %v1750, %v2493
      %v2573 = vadd.f32 %v1753, %v2495
      %v2574 = vadd.f32 %v1758, %v2497
      %v2575 = vadd.f32 %v1761, %v2499
      %v2576 = vadd.f32 %v1766, %v2501
      %v2577 = vadd.f32 %v1769, %v2503
      %v2578 = vadd.f32 %v1774, %v2505
      %v2579 = vadd.f32 %v1777, %v2507
      %v2580 = vadd.f32 %v1782, %v2509
      %v2581 = vadd.f32 %v1785, %v2511
      %v2582 = vadd.f32 %v1790, %v2513
      %v2583 = vadd.f32 %v1793, %v2515
      %v2584 = vadd.f32 %v1798, %v2517
      %v2585 = vadd.f32 %v1801, %v2519
      %v2586 = vadd.f32 %v1806, %v2521
      %v2587 = vadd.f32 %v1809, %v2523
      %v2588 = vtanh.pop %v2556
      %v2589 = vtanh.pop %v2557
      %v2590 = vtanh.pop %v2558
      %v2591 = vtanh.pop %v2559
      %v2592 = vtanh.pop %v2560
      %v2593 = vtanh.pop %v2561
      %v2594 = vtanh.pop %v2562
      %v2595 = vtanh.pop %v2563
      %v2596 = vtanh.pop %v2564
      %v2597 = vtanh.pop %v2565
      %v2598 = vtanh.pop %v2566
      %v2599 = vtanh.pop %v2567
      %v2600 = vtanh.pop %v2568
      %v2601 = vtanh.pop %v2569
      %v2602 = vtanh.pop %v2570
      %v2603 = vtanh.pop %v2571
      %v2604 = vtanh.pop %v2572
      %v2605 = vtanh.pop %v2573
      %v2606 = vtanh.pop %v2574
      %v2607 = vtanh.pop %v2575
      %v2608 = vtanh.pop %v2576
      %v2609 = vtanh.pop %v2577
      %v2610 = vtanh.pop %v2578
      %v2611 = vtanh.pop %v2579
      %v2612 = vtanh.pop %v2580
      %v2613 = vtanh.pop %v2581
      %v2614 = vtanh.pop %v2582
      %v2615 = vtanh.pop %v2583
      %v2616 = vtanh.pop %v2584
      %v2617 = vtanh.pop %v2585
      %v2618 = vtanh.pop %v2586
      %v2619 = vtanh.pop %v2587
      %v2620 = vxor.u32 %v2556, 2147483648
      %v2621 = vxor.u32 %v2557, 2147483648
      %v2622 = vxor.u32 %v2558, 2147483648
      %v2623 = vxor.u32 %v2559, 2147483648
      %v2624 = vxor.u32 %v2560, 2147483648
      %v2625 = vxor.u32 %v2561, 2147483648
      %v2626 = vxor.u32 %v2562, 2147483648
      %v2627 = vxor.u32 %v2563, 2147483648
      %v2628 = vxor.u32 %v2564, 2147483648
      %v2629 = vxor.u32 %v2565, 2147483648
      %v2630 = vxor.u32 %v2566, 2147483648
      %v2631 = vxor.u32 %v2567, 2147483648
      %v2632 = vxor.u32 %v2568, 2147483648
      %v2633 = vxor.u32 %v2569, 2147483648
      %v2634 = vxor.u32 %v2570, 2147483648
      %v2635 = vxor.u32 %v2571, 2147483648
      %v2636 = vxor.u32 %v2572, 2147483648
      %v2637 = vxor.u32 %v2573, 2147483648
      %v2638 = vxor.u32 %v2574, 2147483648
      %v2639 = vxor.u32 %v2575, 2147483648
      %v2640 = vxor.u32 %v2576, 2147483648
      %v2641 = vxor.u32 %v2577, 2147483648
      %v2642 = vxor.u32 %v2578, 2147483648
      %v2643 = vxor.u32 %v2579, 2147483648
      %v2644 = vxor.u32 %v2580, 2147483648
      %v2645 = vxor.u32 %v2581, 2147483648
      %v2646 = vxor.u32 %v2582, 2147483648
      %v2647 = vxor.u32 %v2583, 2147483648
      %v2648 = vxor.u32 %v2584, 2147483648
      %v2649 = vxor.u32 %v2585, 2147483648
      %v2650 = vxor.u32 %v2586, 2147483648
      %v2651 = vxor.u32 %v2587, 2147483648
      %v2652 = vmul.f32 %v2620, 1.442695
      %v2653 = vpow.pop %v2652
      %v2654 = vmul.f32 %v2621, 1.442695
      %v2655 = vpow.pop %v2654
      %v2656 = vmul.f32 %v2622, 1.442695
      %v2657 = vpow.pop %v2656
      %v2658 = vmul.f32 %v2623, 1.442695
      %v2659 = vpow.pop %v2658
      %v2660 = vmul.f32 %v2624, 1.442695
      %v2661 = vpow.pop %v2660
      %v2662 = vmul.f32 %v2625, 1.442695
      %v2663 = vpow.pop %v2662
      %v2664 = vmul.f32 %v2626, 1.442695
      %v2665 = vpow.pop %v2664
      %v2666 = vmul.f32 %v2627, 1.442695
      %v2667 = vpow.pop %v2666
      %v2668 = vmul.f32 %v2628, 1.442695
      %v2669 = vpow.pop %v2668
      %v2670 = vmul.f32 %v2629, 1.442695
      %v2671 = vpow.pop %v2670
      %v2672 = vmul.f32 %v2630, 1.442695
      %v2673 = vpow.pop %v2672
      %v2674 = vmul.f32 %v2631, 1.442695
      %v2675 = vpow.pop %v2674
      %v2676 = vmul.f32 %v2632, 1.442695
      %v2677 = vpow.pop %v2676
      %v2678 = vmul.f32 %v2633, 1.442695
      %v2679 = vpow.pop %v2678
      %v2680 = vmul.f32 %v2634, 1.442695
      %v2681 = vpow.pop %v2680
      %v2682 = vmul.f32 %v2635, 1.442695
      %v2683 = vpow.pop %v2682
      %v2684 = vmul.f32 %v2636, 1.442695
      %v2685 = vpow.pop %v2684
      %v2686 = vmul.f32 %v2637, 1.442695
      %v2687 = vpow.pop %v2686
      %v2688 = vmul.f32 %v2638, 1.442695
      %v2689 = vpow.pop %v2688
      %v2690 = vmul.f32 %v2639, 1.442695
      %v2691 = vpow.pop %v2690
      %v2692 = vmul.f32 %v2640, 1.442695
      %v2693 = vpow.pop %v2692
      %v2694 = vmul.f32 %v2641, 1.442695
      %v2695 = vpow.pop %v2694
      %v2696 = vmul.f32 %v2642, 1.442695
      %v2697 = vpow.pop %v2696
      %v2698 = vmul.f32 %v2643, 1.442695
      %v2699 = vpow.pop %v2698
      %v2700 = vmul.f32 %v2644, 1.442695
      %v2701 = vpow.pop %v2700
      %v2702 = vmul.f32 %v2645, 1.442695
      %v2703 = vpow.pop %v2702
      %v2704 = vmul.f32 %v2646, 1.442695
      %v2705 = vpow.pop %v2704
      %v2706 = vmul.f32 %v2647, 1.442695
      %v2707 = vpow.pop %v2706
      %v2708 = vmul.f32 %v2648, 1.442695
      %v2709 = vpow.pop %v2708
      %v2710 = vmul.f32 %v2649, 1.442695
      %v2711 = vpow.pop %v2710
      %v2712 = vmul.f32 %v2650, 1.442695
      %v2713 = vpow.pop %v2712
      %v2714 = vmul.f32 %v2651, 1.442695
      %v2715 = vpow.pop %v2714
      %v2716 = vadd.f32 %v2653, 1.0
      %v2717 = vadd.f32 %v2655, 1.0
      %v2718 = vadd.f32 %v2657, 1.0
      %v2719 = vadd.f32 %v2659, 1.0
      %v2720 = vadd.f32 %v2661, 1.0
      %v2721 = vadd.f32 %v2663, 1.0
      %v2722 = vadd.f32 %v2665, 1.0
      %v2723 = vadd.f32 %v2667, 1.0
      %v2724 = vadd.f32 %v2669, 1.0
      %v2725 = vadd.f32 %v2671, 1.0
      %v2726 = vadd.f32 %v2673, 1.0
      %v2727 = vadd.f32 %v2675, 1.0
      %v2728 = vadd.f32 %v2677, 1.0
      %v2729 = vadd.f32 %v2679, 1.0
      %v2730 = vadd.f32 %v2681, 1.0
      %v2731 = vadd.f32 %v2683, 1.0
      %v2732 = vadd.f32 %v2685, 1.0
      %v2733 = vadd.f32 %v2687, 1.0
      %v2734 = vadd.f32 %v2689, 1.0
      %v2735 = vadd.f32 %v2691, 1.0
      %v2736 = vadd.f32 %v2693, 1.0
      %v2737 = vadd.f32 %v2695, 1.0
      %v2738 = vadd.f32 %v2697, 1.0
      %v2739 = vadd.f32 %v2699, 1.0
      %v2740 = vadd.f32 %v2701, 1.0
      %v2741 = vadd.f32 %v2703, 1.0
      %v2742 = vadd.f32 %v2705, 1.0
      %v2743 = vadd.f32 %v2707, 1.0
      %v2744 = vadd.f32 %v2709, 1.0
      %v2745 = vadd.f32 %v2711, 1.0
      %v2746 = vadd.f32 %v2713, 1.0
      %v2747 = vadd.f32 %v2715, 1.0
      %v2748 = vrcp.pop %v2716
      %v2749 = vmul.f32 1.0, %v2748
      %v2750 = vrcp.pop %v2717
      %v2751 = vmul.f32 1.0, %v2750
      %v2752 = vrcp.pop %v2718
      %v2753 = vmul.f32 1.0, %v2752
      %v2754 = vrcp.pop %v2719
      %v2755 = vmul.f32 1.0, %v2754
      %v2756 = vrcp.pop %v2720
      %v2757 = vmul.f32 1.0, %v2756
      %v2758 = vrcp.pop %v2721
      %v2759 = vmul.f32 1.0, %v2758
      %v2760 = vrcp.pop %v2722
      %v2761 = vmul.f32 1.0, %v2760
      %v2762 = vrcp.pop %v2723
      %v2763 = vmul.f32 1.0, %v2762
      %v2764 = vrcp.pop %v2724
      %v2765 = vmul.f32 1.0, %v2764
      %v2766 = vrcp.pop %v2725
      %v2767 = vmul.f32 1.0, %v2766
      %v2768 = vrcp.pop %v2726
      %v2769 = vmul.f32 1.0, %v2768
      %v2770 = vrcp.pop %v2727
      %v2771 = vmul.f32 1.0, %v2770
      %v2772 = vrcp.pop %v2728
      %v2773 = vmul.f32 1.0, %v2772
      %v2774 = vrcp.pop %v2729
      %v2775 = vmul.f32 1.0, %v2774
      %v2776 = vrcp.pop %v2730
      %v2777 = vmul.f32 1.0, %v2776
      %v2778 = vrcp.pop %v2731
      %v2779 = vmul.f32 1.0, %v2778
      %v2780 = vrcp.pop %v2732
      %v2781 = vmul.f32 1.0, %v2780
      %v2782 = vrcp.pop %v2733
      %v2783 = vmul.f32 1.0, %v2782
      %v2784 = vrcp.pop %v2734
      %v2785 = vmul.f32 1.0, %v2784
      %v2786 = vrcp.pop %v2735
      %v2787 = vmul.f32 1.0, %v2786
      %v2788 = vrcp.pop %v2736
      %v2789 = vmul.f32 1.0, %v2788
      %v2790 = vrcp.pop %v2737
      %v2791 = vmul.f32 1.0, %v2790
      %v2792 = vrcp.pop %v2738
      %v2793 = vmul.f32 1.0, %v2792
      %v2794 = vrcp.pop %v2739
      %v2795 = vmul.f32 1.0, %v2794
      %v2796 = vrcp.pop %v2740
      %v2797 = vmul.f32 1.0, %v2796
      %v2798 = vrcp.pop %v2741
      %v2799 = vmul.f32 1.0, %v2798
      %v2800 = vrcp.pop %v2742
      %v2801 = vmul.f32 1.0, %v2800
      %v2802 = vrcp.pop %v2743
      %v2803 = vmul.f32 1.0, %v2802
      %v2804 = vrcp.pop %v2744
      %v2805 = vmul.f32 1.0, %v2804
      %v2806 = vrcp.pop %v2745
      %v2807 = vmul.f32 1.0, %v2806
      %v2808 = vrcp.pop %v2746
      %v2809 = vmul.f32 1.0, %v2808
      %v2810 = vrcp.pop %v2747
      %v2811 = vmul.f32 1.0, %v2810
      %2844 = vrot.lane.b32.xlu0 %v2749, 96
      %v2845 = vpop.permute.xlu0 %2844
      %2846 = vrot.lane.b32.xlu0 %v2751, 96
      %v2847 = vpop.permute.xlu0 %2846
      %2848 = vrot.lane.b32.xlu0 %v2753, 96
      %v2849 = vpop.permute.xlu0 %2848
      %2850 = vrot.lane.b32.xlu0 %v2755, 96
      %v2851 = vpop.permute.xlu0 %2850
      %2852 = vrot.lane.b32.xlu0 %v2757, 96
      %v2853 = vpop.permute.xlu0 %2852
      %2854 = vrot.lane.b32.xlu0 %v2759, 96
      %v2855 = vpop.permute.xlu0 %2854
      %2856 = vrot.lane.b32.xlu0 %v2761, 96
      %v2857 = vpop.permute.xlu0 %2856
      %2858 = vrot.lane.b32.xlu0 %v2763, 96
      %v2859 = vpop.permute.xlu0 %2858
      %2860 = vrot.lane.b32.xlu0 %v2765, 96
      %v2861 = vpop.permute.xlu0 %2860
      %2862 = vrot.lane.b32.xlu0 %v2767, 96
      %v2863 = vpop.permute.xlu0 %2862
      %2864 = vrot.lane.b32.xlu0 %v2769, 96
      %v2865 = vpop.permute.xlu0 %2864
      %2866 = vrot.lane.b32.xlu0 %v2771, 96
      %v2867 = vpop.permute.xlu0 %2866
      %2868 = vrot.lane.b32.xlu0 %v2773, 96
      %v2869 = vpop.permute.xlu0 %2868
      %2870 = vrot.lane.b32.xlu0 %v2775, 96
      %v2871 = vpop.permute.xlu0 %2870
      %2872 = vrot.lane.b32.xlu0 %v2777, 96
      %v2873 = vpop.permute.xlu0 %2872
      %2874 = vrot.lane.b32.xlu0 %v2779, 96
      %v2875 = vpop.permute.xlu0 %2874
      %2876 = vrot.lane.b32.xlu0 %v2781, 96
      %v2877 = vpop.permute.xlu0 %2876
      %2878 = vrot.lane.b32.xlu0 %v2783, 96
      %v2879 = vpop.permute.xlu0 %2878
      %2880 = vrot.lane.b32.xlu0 %v2785, 96
      %v2881 = vpop.permute.xlu0 %2880
      %2882 = vrot.lane.b32.xlu0 %v2787, 96
      %v2883 = vpop.permute.xlu0 %2882
      %2884 = vrot.lane.b32.xlu0 %v2789, 96
      %v2885 = vpop.permute.xlu0 %2884
      %2886 = vrot.lane.b32.xlu0 %v2791, 96
      %v2887 = vpop.permute.xlu0 %2886
      %2888 = vrot.lane.b32.xlu0 %v2793, 96
      %v2889 = vpop.permute.xlu0 %2888
      %2890 = vrot.lane.b32.xlu0 %v2795, 96
      %v2891 = vpop.permute.xlu0 %2890
      %2892 = vrot.lane.b32.xlu0 %v2797, 96
      %v2893 = vpop.permute.xlu0 %2892
      %2894 = vrot.lane.b32.xlu0 %v2799, 96
      %v2895 = vpop.permute.xlu0 %2894
      %2896 = vrot.lane.b32.xlu0 %v2801, 96
      %v2897 = vpop.permute.xlu0 %2896
      %2898 = vrot.lane.b32.xlu0 %v2803, 96
      %v2899 = vpop.permute.xlu0 %2898
      %2900 = vrot.lane.b32.xlu0 %v2805, 96
      %v2901 = vpop.permute.xlu0 %2900
      %2902 = vrot.lane.b32.xlu0 %v2807, 96
      %v2903 = vpop.permute.xlu0 %2902
      %2904 = vrot.lane.b32.xlu0 %v2809, 96
      %v2905 = vpop.permute.xlu0 %2904
      %2906 = vrot.lane.b32.xlu0 %v2811, 96
      %v2907 = vpop.permute.xlu0 %2906
      %v2940 = vmul.f32 %v2588, %v2845
      %v2941 = vmul.f32 %v2589, %v2847
      %v2942 = vmul.f32 %v2590, %v2849
      %v2943 = vmul.f32 %v2591, %v2851
      %v2944 = vmul.f32 %v2592, %v2853
      %v2945 = vmul.f32 %v2593, %v2855
      %v2946 = vmul.f32 %v2594, %v2857
      %v2947 = vmul.f32 %v2595, %v2859
      %v2948 = vmul.f32 %v2596, %v2861
      %v2949 = vmul.f32 %v2597, %v2863
      %v2950 = vmul.f32 %v2598, %v2865
      %v2951 = vmul.f32 %v2599, %v2867
      %v2952 = vmul.f32 %v2600, %v2869
      %v2953 = vmul.f32 %v2601, %v2871
      %v2954 = vmul.f32 %v2602, %v2873
      %v2955 = vmul.f32 %v2603, %v2875
      %v2956 = vmul.f32 %v2604, %v2877
      %v2957 = vmul.f32 %v2605, %v2879
      %v2958 = vmul.f32 %v2606, %v2881
      %v2959 = vmul.f32 %v2607, %v2883
      %v2960 = vmul.f32 %v2608, %v2885
      %v2961 = vmul.f32 %v2609, %v2887
      %v2962 = vmul.f32 %v2610, %v2889
      %v2963 = vmul.f32 %v2611, %v2891
      %v2964 = vmul.f32 %v2612, %v2893
      %v2965 = vmul.f32 %v2613, %v2895
      %v2966 = vmul.f32 %v2614, %v2897
      %v2967 = vmul.f32 %v2615, %v2899
      %v2968 = vmul.f32 %v2616, %v2901
      %v2969 = vmul.f32 %v2617, %v2903
      %v2970 = vmul.f32 %v2618, %v2905
      %v2971 = vmul.f32 %v2619, %v2907
      %v2972 = vpack.c.bf16 %v2941, %v2940
      %v2973 = vpack.c.bf16 %v2943, %v2942
      %v2974 = vpack.c.bf16 %v2945, %v2944
      %v2975 = vpack.c.bf16 %v2947, %v2946
      %v2976 = vpack.c.bf16 %v2949, %v2948
      %v2977 = vpack.c.bf16 %v2951, %v2950
      %v2978 = vpack.c.bf16 %v2953, %v2952
      %v2979 = vpack.c.bf16 %v2955, %v2954
      %v2980 = vpack.c.bf16 %v2957, %v2956
      %v2981 = vpack.c.bf16 %v2959, %v2958
      %v2982 = vpack.c.bf16 %v2961, %v2960
      %v2983 = vpack.c.bf16 %v2963, %v2962
      %v2984 = vpack.c.bf16 %v2965, %v2964
      %v2985 = vpack.c.bf16 %v2967, %v2966
      %v2986 = vpack.c.bf16 %v2969, %v2968
      %v2987 = vpack.c.bf16 %v2971, %v2970
      %v2988 = vld [vmem:[%s5] sm:$0xf]
      %v2989 = vld [vmem:[%s5 + $0x4] sm:$0xf]
      %v2990 = vld [vmem:[%s5 + $0x8] sm:$0xf]
      %v2991 = vld [vmem:[%s5 + $0xc] sm:$0xf]
      %v2992 = vld [vmem:[%s6] sm:$0x1]
      %v2994 = vlaneseq
      %v2995 = vshrl.u32 %v2994, 7
      %v2996 = vsub.s32 0, %v2995
      %v2997 = vrot.slane %v2992, %v2996
      %3015 = vrot.lane.b32.xlu0 %v2972, 64
      %v3016 = vpop.permute.xlu0 %3015
      %3017 = vrot.lane.b32.xlu0 %v2973, 64
      %v3018 = vpop.permute.xlu0 %3017
      %3019 = vrot.lane.b32.xlu0 %v2974, 64
      %v3020 = vpop.permute.xlu0 %3019
      %3021 = vrot.lane.b32.xlu0 %v2975, 64
      %v3022 = vpop.permute.xlu0 %3021
      %3023 = vrot.lane.b32.xlu0 %v2976, 64
      %v3024 = vpop.permute.xlu0 %3023
      %3025 = vrot.lane.b32.xlu0 %v2977, 64
      %v3026 = vpop.permute.xlu0 %3025
      %3027 = vrot.lane.b32.xlu0 %v2978, 64
      %v3028 = vpop.permute.xlu0 %3027
      %3029 = vrot.lane.b32.xlu0 %v2979, 64
      %v3030 = vpop.permute.xlu0 %3029
      %3031 = vrot.lane.b32.xlu0 %v2980, 64
      %v3032 = vpop.permute.xlu0 %3031
      %3033 = vrot.lane.b32.xlu0 %v2981, 64
      %v3034 = vpop.permute.xlu0 %3033
      %3035 = vrot.lane.b32.xlu0 %v2982, 64
      %v3036 = vpop.permute.xlu0 %3035
      %3037 = vrot.lane.b32.xlu0 %v2983, 64
      %v3038 = vpop.permute.xlu0 %3037
      %3039 = vrot.lane.b32.xlu0 %v2984, 64
      %v3040 = vpop.permute.xlu0 %3039
      %3041 = vrot.lane.b32.xlu0 %v2985, 64
      %v3042 = vpop.permute.xlu0 %3041
      %3043 = vrot.lane.b32.xlu0 %v2986, 64
      %v3044 = vpop.permute.xlu0 %3043
      %3045 = vrot.lane.b32.xlu0 %v2987, 64
      %v3046 = vpop.permute.xlu0 %3045
      %v3051 = vunpack.c.l.b16 %v2988
      %v3052 = vunpack.c.l.b16 %v2989
      %v3053 = vunpack.c.l.b16 %v2990
      %v3054 = vunpack.c.l.b16 %v2991
      %v3055 = vpack.c.b16 %v3052, %v3051
      %v3056 = vpack.c.b16 %v3054, %v3053
      %v3060 = vsel %vm1001, %v3016, 0
      %v3063 = vsel %vm1001, %v3018, 0
      %v3066 = vsel %vm1001, %v3020, 0
      %v3069 = vsel %vm1001, %v3022, 0
      %v3072 = vsel %vm1001, %v3024, 0
      %v3075 = vsel %vm1001, %v3026, 0
      %v3078 = vsel %vm1001, %v3028, 0
      %v3081 = vsel %vm1001, %v3030, 0
      %v3084 = vsel %vm1001, %v3032, 0
      %v3087 = vsel %vm1001, %v3034, 0
      %v3090 = vsel %vm1001, %v3036, 0
      %v3093 = vsel %vm1001, %v3038, 0
      %v3096 = vsel %vm1001, %v3040, 0
      %v3099 = vsel %vm1001, %v3042, 0
      %v3102 = vsel %vm1001, %v3044, 0
      %v3105 = vsel %vm1001, %v3046, 0
      %3107 = vmatprep.subr.bf16.mxu0 0
      %3108 = vmatpush1.bf16.msra.mxu0 0
      %3109 = vmatprep.subr.bf16.mxu0 0
      %3110 = vmatpush1.bf16.msra.mxu0 0
      %3111 = vmatprep.subr.bf16.mxu0 0
      %3112 = vmatpush1.bf16.msra.mxu0 0
      %3113 = vmatprep.subr.bf16.mxu0 0
      %3114 = vmatpush1.bf16.msra.mxu0 0
      %3115 = vmatprep.subr.bf16.mxu0 0
      %3116 = vmatpush1.bf16.msra.mxu0 0
      %3117 = vmatprep.subr.bf16.mxu0 0
      %3118 = vmatpush1.bf16.msra.mxu0 0
      %3119 = vmatprep.subr.bf16.mxu0 0
      %3120 = vmatpush1.bf16.msra.mxu0 %v3056
      %3121 = vmatprep.subr.bf16.mxu0 0
      %3122 = vmatpush1.bf16.msra.mxu0 %v3055
      %3123 = vmatprep.subr.bf16.mxu0 0
      %3124 = vmatpush2.bf16.msra.mxu0 0
      %3125 = vmatprep.subr.bf16.mxu0 0
      %3126 = vmatpush2.bf16.msra.mxu0 0
      %3127 = vmatprep.subr.bf16.mxu0 0
      %3128 = vmatpush2.bf16.msra.mxu0 0
      %3129 = vmatprep.subr.bf16.mxu0 0
      %3130 = vmatpush2.bf16.msra.mxu0 0
      %3131 = vmatprep.subr.bf16.mxu0 0
      %3132 = vmatpush2.bf16.msra.mxu0 0
      %3133 = vmatprep.subr.bf16.mxu0 0
      %3134 = vmatpush2.bf16.msra.mxu0 0
      %3135 = vmatprep.subr.bf16.mxu0 0
      %3136 = vmatpush2.bf16.msra.mxu0 0
      %3137 = vmatprep.subr.bf16.mxu0 0
      %3138 = vmatpush2.bf16.msra.mxu0 0
      %3139 = vmatprep.mubr.bf16.mxu0 0
      %3140 = vmatmul.mubr.bf16.gmra.mxu0 %v3060
      %v3141 = vpop.f32.mrf.mxu0
      %v3142 = vadd.f32 %v2997, %v3141
      %v3143 = vpop.f32.mrf.mxu0
      %v3144 = vpop.f32.mrf.mxu0
      %v3145 = vadd.f32 %v2997, %v3144
      %v3146 = vpop.f32.mrf.mxu0
      %3147 = vmatprep.mubr.bf16.mxu0 0
      %3148 = vmatmul.mubr.bf16.gmra.mxu0 %v3063
      %v3149 = vpop.f32.mrf.mxu0
      %v3150 = vadd.f32 %v2997, %v3149
      %v3151 = vpop.f32.mrf.mxu0
      %v3152 = vpop.f32.mrf.mxu0
      %v3153 = vadd.f32 %v2997, %v3152
      %v3154 = vpop.f32.mrf.mxu0
      %3155 = vmatprep.mubr.bf16.mxu0 0
      %3156 = vmatmul.mubr.bf16.gmra.mxu0 %v3066
      %v3157 = vpop.f32.mrf.mxu0
      %v3158 = vadd.f32 %v2997, %v3157
      %v3159 = vpop.f32.mrf.mxu0
      %v3160 = vpop.f32.mrf.mxu0
      %v3161 = vadd.f32 %v2997, %v3160
      %v3162 = vpop.f32.mrf.mxu0
      %3163 = vmatprep.mubr.bf16.mxu0 0
      %3164 = vmatmul.mubr.bf16.gmra.mxu0 %v3069
      %v3165 = vpop.f32.mrf.mxu0
      %v3166 = vadd.f32 %v2997, %v3165
      %v3167 = vpop.f32.mrf.mxu0
      %v3168 = vpop.f32.mrf.mxu0
      %v3169 = vadd.f32 %v2997, %v3168
      %v3170 = vpop.f32.mrf.mxu0
      %3171 = vmatprep.mubr.bf16.mxu0 0
      %3172 = vmatmul.mubr.bf16.gmra.mxu0 %v3072
      %v3173 = vpop.f32.mrf.mxu0
      %v3174 = vadd.f32 %v2997, %v3173
      %v3175 = vpop.f32.mrf.mxu0
      %v3176 = vpop.f32.mrf.mxu0
      %v3177 = vadd.f32 %v2997, %v3176
      %v3178 = vpop.f32.mrf.mxu0
      %3179 = vmatprep.mubr.bf16.mxu0 0
      %3180 = vmatmul.mubr.bf16.gmra.mxu0 %v3075
      %v3181 = vpop.f32.mrf.mxu0
      %v3182 = vadd.f32 %v2997, %v3181
      %v3183 = vpop.f32.mrf.mxu0
      %v3184 = vpop.f32.mrf.mxu0
      %v3185 = vadd.f32 %v2997, %v3184
      %v3186 = vpop.f32.mrf.mxu0
      %3187 = vmatprep.mubr.bf16.mxu0 0
      %3188 = vmatmul.mubr.bf16.gmra.mxu0 %v3078
      %v3189 = vpop.f32.mrf.mxu0
      %v3190 = vadd.f32 %v2997, %v3189
      %v3191 = vpop.f32.mrf.mxu0
      %v3192 = vpop.f32.mrf.mxu0
      %v3193 = vadd.f32 %v2997, %v3192
      %v3194 = vpop.f32.mrf.mxu0
      %3195 = vmatprep.mubr.bf16.mxu0 0
      %3196 = vmatmul.mubr.bf16.gmra.mxu0 %v3081
      %v3197 = vpop.f32.mrf.mxu0
      %v3198 = vadd.f32 %v2997, %v3197
      %v3199 = vpop.f32.mrf.mxu0
      %v3200 = vpop.f32.mrf.mxu0
      %v3201 = vadd.f32 %v2997, %v3200
      %v3202 = vpop.f32.mrf.mxu0
      %3203 = vmatprep.mubr.bf16.mxu0 0
      %3204 = vmatmul.mubr.bf16.gmra.mxu0 %v3084
      %v3205 = vpop.f32.mrf.mxu0
      %v3206 = vadd.f32 %v2997, %v3205
      %v3207 = vpop.f32.mrf.mxu0
      %v3208 = vpop.f32.mrf.mxu0
      %v3209 = vadd.f32 %v2997, %v3208
      %v3210 = vpop.f32.mrf.mxu0
      %3211 = vmatprep.mubr.bf16.mxu0 0
      %3212 = vmatmul.mubr.bf16.gmra.mxu0 %v3087
      %v3213 = vpop.f32.mrf.mxu0
      %v3214 = vadd.f32 %v2997, %v3213
      %v3215 = vpop.f32.mrf.mxu0
      %v3216 = vpop.f32.mrf.mxu0
      %v3217 = vadd.f32 %v2997, %v3216
      %v3218 = vpop.f32.mrf.mxu0
      %3219 = vmatprep.mubr.bf16.mxu0 0
      %3220 = vmatmul.mubr.bf16.gmra.mxu0 %v3090
      %v3221 = vpop.f32.mrf.mxu0
      %v3222 = vadd.f32 %v2997, %v3221
      %v3223 = vpop.f32.mrf.mxu0
      %v3224 = vpop.f32.mrf.mxu0
      %v3225 = vadd.f32 %v2997, %v3224
      %v3226 = vpop.f32.mrf.mxu0
      %3227 = vmatprep.mubr.bf16.mxu0 0
      %3228 = vmatmul.mubr.bf16.gmra.mxu0 %v3093
      %v3229 = vpop.f32.mrf.mxu0
      %v3230 = vadd.f32 %v2997, %v3229
      %v3231 = vpop.f32.mrf.mxu0
      %v3232 = vpop.f32.mrf.mxu0
      %v3233 = vadd.f32 %v2997, %v3232
      %v3234 = vpop.f32.mrf.mxu0
      %3235 = vmatprep.mubr.bf16.mxu0 0
      %3236 = vmatmul.mubr.bf16.gmra.mxu0 %v3096
      %v3237 = vpop.f32.mrf.mxu0
      %v3238 = vadd.f32 %v2997, %v3237
      %v3239 = vpop.f32.mrf.mxu0
      %v3240 = vpop.f32.mrf.mxu0
      %v3241 = vadd.f32 %v2997, %v3240
      %v3242 = vpop.f32.mrf.mxu0
      %3243 = vmatprep.mubr.bf16.mxu0 0
      %3244 = vmatmul.mubr.bf16.gmra.mxu0 %v3099
      %v3245 = vpop.f32.mrf.mxu0
      %v3246 = vadd.f32 %v2997, %v3245
      %v3247 = vpop.f32.mrf.mxu0
      %v3248 = vpop.f32.mrf.mxu0
      %v3249 = vadd.f32 %v2997, %v3248
      %v3250 = vpop.f32.mrf.mxu0
      %3251 = vmatprep.mubr.bf16.mxu0 0
      %3252 = vmatmul.mubr.bf16.gmra.mxu0 %v3102
      %v3253 = vpop.f32.mrf.mxu0
      %v3254 = vadd.f32 %v2997, %v3253
      %v3255 = vpop.f32.mrf.mxu0
      %v3256 = vpop.f32.mrf.mxu0
      %v3257 = vadd.f32 %v2997, %v3256
      %v3258 = vpop.f32.mrf.mxu0
      %3259 = vmatprep.mubr.bf16.mxu0 0
      %3260 = vmatmul.mubr.bf16.gmra.mxu0 %v3105
      %v3261 = vpop.f32.mrf.mxu0
      %v3262 = vadd.f32 %v2997, %v3261
      %v3263 = vpop.f32.mrf.mxu0
      %v3264 = vpop.f32.mrf.mxu0
      %v3265 = vadd.f32 %v2997, %v3264
      %v3266 = vpop.f32.mrf.mxu0
      %3267 = vdwg.mxu0
      %v3268 = vunpack.c.l.bf16 %v280
      %v3269 = vunpack.c.l.bf16 %v281
      %v3270 = vunpack.c.l.bf16 %v282
      %v3271 = vunpack.c.l.bf16 %v283
      %v3272 = vunpack.c.l.bf16 %v284
      %v3273 = vunpack.c.l.bf16 %v285
      %v3274 = vunpack.c.l.bf16 %v286
      %v3275 = vunpack.c.l.bf16 %v287
      %v3276 = vunpack.c.l.bf16 %v288
      %v3277 = vunpack.c.l.bf16 %v289
      %v3278 = vunpack.c.l.bf16 %v290
      %v3279 = vunpack.c.l.bf16 %v291
      %v3280 = vunpack.c.l.bf16 %v292
      %v3281 = vunpack.c.l.bf16 %v293
      %v3282 = vunpack.c.l.bf16 %v294
      %v3283 = vunpack.c.l.bf16 %v295
      %v3284 = vunpack.c.l.bf16 %v296
      %v3285 = vunpack.c.l.bf16 %v297
      %v3286 = vunpack.c.l.bf16 %v298
      %v3287 = vunpack.c.l.bf16 %v299
      %v3288 = vunpack.c.l.bf16 %v300
      %v3289 = vunpack.c.l.bf16 %v301
      %v3290 = vunpack.c.l.bf16 %v302
      %v3291 = vunpack.c.l.bf16 %v303
      %v3292 = vunpack.c.l.bf16 %v304
      %v3293 = vunpack.c.l.bf16 %v305
      %v3294 = vunpack.c.l.bf16 %v306
      %v3295 = vunpack.c.l.bf16 %v307
      %v3296 = vunpack.c.l.bf16 %v308
      %v3297 = vunpack.c.l.bf16 %v309
      %v3298 = vunpack.c.l.bf16 %v310
      %v3299 = vunpack.c.l.bf16 %v311
      %3332 = vrot.lane.b32.xlu0 %v3268, 96
      %v3333 = vpop.permute.xlu0 %3332
      %3334 = vrot.lane.b32.xlu0 %v3269, 96
      %v3335 = vpop.permute.xlu0 %3334
      %3336 = vrot.lane.b32.xlu0 %v3270, 96
      %v3337 = vpop.permute.xlu0 %3336
      %3338 = vrot.lane.b32.xlu0 %v3271, 96
      %v3339 = vpop.permute.xlu0 %3338
      %3340 = vrot.lane.b32.xlu0 %v3272, 96
      %v3341 = vpop.permute.xlu0 %3340
      %3342 = vrot.lane.b32.xlu0 %v3273, 96
      %v3343 = vpop.permute.xlu0 %3342
      %3344 = vrot.lane.b32.xlu0 %v3274, 96
      %v3345 = vpop.permute.xlu0 %3344
      %3346 = vrot.lane.b32.xlu0 %v3275, 96
      %v3347 = vpop.permute.xlu0 %3346
      %3348 = vrot.lane.b32.xlu0 %v3276, 96
      %v3349 = vpop.permute.xlu0 %3348
      %3350 = vrot.lane.b32.xlu0 %v3277, 96
      %v3351 = vpop.permute.xlu0 %3350
      %3352 = vrot.lane.b32.xlu0 %v3278, 96
      %v3353 = vpop.permute.xlu0 %3352
      %3354 = vrot.lane.b32.xlu0 %v3279, 96
      %v3355 = vpop.permute.xlu0 %3354
      %3356 = vrot.lane.b32.xlu0 %v3280, 96
      %v3357 = vpop.permute.xlu0 %3356
      %3358 = vrot.lane.b32.xlu0 %v3281, 96
      %v3359 = vpop.permute.xlu0 %3358
      %3360 = vrot.lane.b32.xlu0 %v3282, 96
      %v3361 = vpop.permute.xlu0 %3360
      %3362 = vrot.lane.b32.xlu0 %v3283, 96
      %v3363 = vpop.permute.xlu0 %3362
      %3364 = vrot.lane.b32.xlu0 %v3284, 96
      %v3365 = vpop.permute.xlu0 %3364
      %3366 = vrot.lane.b32.xlu0 %v3285, 96
      %v3367 = vpop.permute.xlu0 %3366
      %3368 = vrot.lane.b32.xlu0 %v3286, 96
      %v3369 = vpop.permute.xlu0 %3368
      %3370 = vrot.lane.b32.xlu0 %v3287, 96
      %v3371 = vpop.permute.xlu0 %3370
      %3372 = vrot.lane.b32.xlu0 %v3288, 96
      %v3373 = vpop.permute.xlu0 %3372
      %3374 = vrot.lane.b32.xlu0 %v3289, 96
      %v3375 = vpop.permute.xlu0 %3374
      %3376 = vrot.lane.b32.xlu0 %v3290, 96
      %v3377 = vpop.permute.xlu0 %3376
      %3378 = vrot.lane.b32.xlu0 %v3291, 96
      %v3379 = vpop.permute.xlu0 %3378
      %3380 = vrot.lane.b32.xlu0 %v3292, 96
      %v3381 = vpop.permute.xlu0 %3380
      %3382 = vrot.lane.b32.xlu0 %v3293, 96
      %v3383 = vpop.permute.xlu0 %3382
      %3384 = vrot.lane.b32.xlu0 %v3294, 96
      %v3385 = vpop.permute.xlu0 %3384
      %3386 = vrot.lane.b32.xlu0 %v3295, 96
      %v3387 = vpop.permute.xlu0 %3386
      %3388 = vrot.lane.b32.xlu0 %v3296, 96
      %v3389 = vpop.permute.xlu0 %3388
      %3390 = vrot.lane.b32.xlu0 %v3297, 96
      %v3391 = vpop.permute.xlu0 %3390
      %3392 = vrot.lane.b32.xlu0 %v3298, 96
      %v3393 = vpop.permute.xlu0 %3392
      %3394 = vrot.lane.b32.xlu0 %v3299, 96
      %v3395 = vpop.permute.xlu0 %3394
      %v3428 = vadd.f32 %v3142, %v3333
      %v3429 = vadd.f32 %v3145, %v3335
      %v3430 = vadd.f32 %v3150, %v3337
      %v3431 = vadd.f32 %v3153, %v3339
      %v3432 = vadd.f32 %v3158, %v3341
      %v3433 = vadd.f32 %v3161, %v3343
      %v3434 = vadd.f32 %v3166, %v3345
      %v3435 = vadd.f32 %v3169, %v3347
      %v3436 = vadd.f32 %v3174, %v3349
      %v3437 = vadd.f32 %v3177, %v3351
      %v3438 = vadd.f32 %v3182, %v3353
      %v3439 = vadd.f32 %v3185, %v3355
      %v3440 = vadd.f32 %v3190, %v3357
      %v3441 = vadd.f32 %v3193, %v3359
      %v3442 = vadd.f32 %v3198, %v3361
      %v3443 = vadd.f32 %v3201, %v3363
      %v3444 = vadd.f32 %v3206, %v3365
      %v3445 = vadd.f32 %v3209, %v3367
      %v3446 = vadd.f32 %v3214, %v3369
      %v3447 = vadd.f32 %v3217, %v3371
      %v3448 = vadd.f32 %v3222, %v3373
      %v3449 = vadd.f32 %v3225, %v3375
      %v3450 = vadd.f32 %v3230, %v3377
      %v3451 = vadd.f32 %v3233, %v3379
      %v3452 = vadd.f32 %v3238, %v3381
      %v3453 = vadd.f32 %v3241, %v3383
      %v3454 = vadd.f32 %v3246, %v3385
      %v3455 = vadd.f32 %v3249, %v3387
      %v3456 = vadd.f32 %v3254, %v3389
      %v3457 = vadd.f32 %v3257, %v3391
      %v3458 = vadd.f32 %v3262, %v3393
      %v3459 = vadd.f32 %v3265, %v3395
      %3492 = vrot.lane.b32.xlu0 %v3428, 32
      %v3493 = vpop.permute.xlu0 %3492
      %3494 = vrot.lane.b32.xlu0 %v3429, 32
      %v3495 = vpop.permute.xlu0 %3494
      %3496 = vrot.lane.b32.xlu0 %v3430, 32
      %v3497 = vpop.permute.xlu0 %3496
      %3498 = vrot.lane.b32.xlu0 %v3431, 32
      %v3499 = vpop.permute.xlu0 %3498
      %3500 = vrot.lane.b32.xlu0 %v3432, 32
      %v3501 = vpop.permute.xlu0 %3500
      %3502 = vrot.lane.b32.xlu0 %v3433, 32
      %v3503 = vpop.permute.xlu0 %3502
      %3504 = vrot.lane.b32.xlu0 %v3434, 32
      %v3505 = vpop.permute.xlu0 %3504
      %3506 = vrot.lane.b32.xlu0 %v3435, 32
      %v3507 = vpop.permute.xlu0 %3506
      %3508 = vrot.lane.b32.xlu0 %v3436, 32
      %v3509 = vpop.permute.xlu0 %3508
      %3510 = vrot.lane.b32.xlu0 %v3437, 32
      %v3511 = vpop.permute.xlu0 %3510
      %3512 = vrot.lane.b32.xlu0 %v3438, 32
      %v3513 = vpop.permute.xlu0 %3512
      %3514 = vrot.lane.b32.xlu0 %v3439, 32
      %v3515 = vpop.permute.xlu0 %3514
      %3516 = vrot.lane.b32.xlu0 %v3440, 32
      %v3517 = vpop.permute.xlu0 %3516
      %3518 = vrot.lane.b32.xlu0 %v3441, 32
      %v3519 = vpop.permute.xlu0 %3518
      %3520 = vrot.lane.b32.xlu0 %v3442, 32
      %v3521 = vpop.permute.xlu0 %3520
      %3522 = vrot.lane.b32.xlu0 %v3443, 32
      %v3523 = vpop.permute.xlu0 %3522
      %3524 = vrot.lane.b32.xlu0 %v3444, 32
      %v3525 = vpop.permute.xlu0 %3524
      %3526 = vrot.lane.b32.xlu0 %v3445, 32
      %v3527 = vpop.permute.xlu0 %3526
      %3528 = vrot.lane.b32.xlu0 %v3446, 32
      %v3529 = vpop.permute.xlu0 %3528
      %3530 = vrot.lane.b32.xlu0 %v3447, 32
      %v3531 = vpop.permute.xlu0 %3530
      %3532 = vrot.lane.b32.xlu0 %v3448, 32
      %v3533 = vpop.permute.xlu0 %3532
      %3534 = vrot.lane.b32.xlu0 %v3449, 32
      %v3535 = vpop.permute.xlu0 %3534
      %3536 = vrot.lane.b32.xlu0 %v3450, 32
      %v3537 = vpop.permute.xlu0 %3536
      %3538 = vrot.lane.b32.xlu0 %v3451, 32
      %v3539 = vpop.permute.xlu0 %3538
      %3540 = vrot.lane.b32.xlu0 %v3452, 32
      %v3541 = vpop.permute.xlu0 %3540
      %3542 = vrot.lane.b32.xlu0 %v3453, 32
      %v3543 = vpop.permute.xlu0 %3542
      %3544 = vrot.lane.b32.xlu0 %v3454, 32
      %v3545 = vpop.permute.xlu0 %3544
      %3546 = vrot.lane.b32.xlu0 %v3455, 32
      %v3547 = vpop.permute.xlu0 %3546
      %3548 = vrot.lane.b32.xlu0 %v3456, 32
      %v3549 = vpop.permute.xlu0 %3548
      %3550 = vrot.lane.b32.xlu0 %v3457, 32
      %v3551 = vpop.permute.xlu0 %3550
      %3552 = vrot.lane.b32.xlu0 %v3458, 32
      %v3553 = vpop.permute.xlu0 %3552
      %3554 = vrot.lane.b32.xlu0 %v3459, 32
      %v3555 = vpop.permute.xlu0 %3554
      %v3588 = vsel %vm1001, %v2396, %v3493
      %v3589 = vsel %vm1001, %v2397, %v3495
      %v3590 = vsel %vm1001, %v2398, %v3497
      %v3591 = vsel %vm1001, %v2399, %v3499
      %v3592 = vsel %vm1001, %v2400, %v3501
      %v3593 = vsel %vm1001, %v2401, %v3503
      %v3594 = vsel %vm1001, %v2402, %v3505
      %v3595 = vsel %vm1001, %v2403, %v3507
      %v3596 = vsel %vm1001, %v2404, %v3509
      %v3597 = vsel %vm1001, %v2405, %v3511
      %v3598 = vsel %vm1001, %v2406, %v3513
      %v3599 = vsel %vm1001, %v2407, %v3515
      %v3600 = vsel %vm1001, %v2408, %v3517
      %v3601 = vsel %vm1001, %v2409, %v3519
      %v3602 = vsel %vm1001, %v2410, %v3521
      %v3603 = vsel %vm1001, %v2411, %v3523
      %v3604 = vsel %vm1001, %v2412, %v3525
      %v3605 = vsel %vm1001, %v2413, %v3527
      %v3606 = vsel %vm1001, %v2414, %v3529
      %v3607 = vsel %vm1001, %v2415, %v3531
      %v3608 = vsel %vm1001, %v2416, %v3533
      %v3609 = vsel %vm1001, %v2417, %v3535
      %v3610 = vsel %vm1001, %v2418, %v3537
      %v3611 = vsel %vm1001, %v2419, %v3539
      %v3612 = vsel %vm1001, %v2420, %v3541
      %v3613 = vsel %vm1001, %v2421, %v3543
      %v3614 = vsel %vm1001, %v2422, %v3545
      %v3615 = vsel %vm1001, %v2423, %v3547
      %v3616 = vsel %vm1001, %v2424, %v3549
      %v3617 = vsel %vm1001, %v2425, %v3551
      %v3618 = vsel %vm1001, %v2426, %v3553
      %v3619 = vsel %vm1001, %v2427, %v3555
      %v3620 = vpack.c.bf16 %v3589, %v3588
      %v3621 = vpack.c.bf16 %v3591, %v3590
      %v3622 = vpack.c.bf16 %v3593, %v3592
      %v3623 = vpack.c.bf16 %v3595, %v3594
      %v3624 = vpack.c.bf16 %v3597, %v3596
      %v3625 = vpack.c.bf16 %v3599, %v3598
      %v3626 = vpack.c.bf16 %v3601, %v3600
      %v3627 = vpack.c.bf16 %v3603, %v3602
      %v3628 = vpack.c.bf16 %v3605, %v3604
      %v3629 = vpack.c.bf16 %v3607, %v3606
      %v3630 = vpack.c.bf16 %v3609, %v3608
      %v3631 = vpack.c.bf16 %v3611, %v3610
      %v3632 = vpack.c.bf16 %v3613, %v3612
      %v3633 = vpack.c.bf16 %v3615, %v3614
      %v3634 = vpack.c.bf16 %v3617, %v3616
      %v3635 = vpack.c.bf16 %v3619, %v3618
      %v3652 = vunpack.c.l.b16 %v3620
      %v3653 = vunpack.c.h.b16 %v3620
      %v3654 = vunpack.c.l.b16 %v3621
      %v3655 = vunpack.c.h.b16 %v3621
      %v3656 = vunpack.c.l.b16 %v3622
      %v3657 = vunpack.c.h.b16 %v3622
      %v3658 = vunpack.c.l.b16 %v3623
      %v3659 = vunpack.c.h.b16 %v3623
      %v3660 = vunpack.c.l.b16 %v3624
      %v3661 = vunpack.c.h.b16 %v3624
      %v3662 = vunpack.c.l.b16 %v3625
      %v3663 = vunpack.c.h.b16 %v3625
      %v3664 = vunpack.c.l.b16 %v3626
      %v3665 = vunpack.c.h.b16 %v3626
      %v3666 = vunpack.c.l.b16 %v3627
      %v3667 = vunpack.c.h.b16 %v3627
      %v3668 = vunpack.c.l.b16 %v3628
      %v3669 = vunpack.c.h.b16 %v3628
      %v3670 = vunpack.c.l.b16 %v3629
      %v3671 = vunpack.c.h.b16 %v3629
      %v3672 = vunpack.c.l.b16 %v3630
      %v3673 = vunpack.c.h.b16 %v3630
      %v3674 = vunpack.c.l.b16 %v3631
      %v3675 = vunpack.c.h.b16 %v3631
      %v3676 = vunpack.c.l.b16 %v3632
      %v3677 = vunpack.c.h.b16 %v3632
      %v3678 = vunpack.c.l.b16 %v3633
      %v3679 = vunpack.c.h.b16 %v3633
      %v3680 = vunpack.c.l.b16 %v3634
      %v3681 = vunpack.c.h.b16 %v3634
      %v3682 = vunpack.c.l.b16 %v3635
      %v3683 = vunpack.c.h.b16 %v3635
      %v3684 = vpack.c.b16 %v3652, %v3652
      %v3685 = vpack.c.b16 %v3653, %v3653
      %v3686 = vpack.c.b16 %v3654, %v3654
      %v3687 = vpack.c.b16 %v3655, %v3655
      %v3688 = vpack.c.b16 %v3656, %v3656
      %v3689 = vpack.c.b16 %v3657, %v3657
      %v3690 = vpack.c.b16 %v3658, %v3658
      %v3691 = vpack.c.b16 %v3659, %v3659
      %v3692 = vpack.c.b16 %v3660, %v3660
      %v3693 = vpack.c.b16 %v3661, %v3661
      %v3694 = vpack.c.b16 %v3662, %v3662
      %v3695 = vpack.c.b16 %v3663, %v3663
      %v3696 = vpack.c.b16 %v3664, %v3664
      %v3697 = vpack.c.b16 %v3665, %v3665
      %v3698 = vpack.c.b16 %v3666, %v3666
      %v3699 = vpack.c.b16 %v3667, %v3667
      %v3700 = vpack.c.b16 %v3668, %v3668
      %v3701 = vpack.c.b16 %v3669, %v3669
      %v3702 = vpack.c.b16 %v3670, %v3670
      %v3703 = vpack.c.b16 %v3671, %v3671
      %v3704 = vpack.c.b16 %v3672, %v3672
      %v3705 = vpack.c.b16 %v3673, %v3673
      %v3706 = vpack.c.b16 %v3674, %v3674
      %v3707 = vpack.c.b16 %v3675, %v3675
      %v3708 = vpack.c.b16 %v3676, %v3676
      %v3709 = vpack.c.b16 %v3677, %v3677
      %v3710 = vpack.c.b16 %v3678, %v3678
      %v3711 = vpack.c.b16 %v3679, %v3679
      %v3712 = vpack.c.b16 %v3680, %v3680
      %v3713 = vpack.c.b16 %v3681, %v3681
      %v3714 = vpack.c.b16 %v3682, %v3682
      %v3715 = vpack.c.b16 %v3683, %v3683
      %vm3748 = vcmask 519168
      %3749 = vst.msk [vmem:[%s278] sm:$0xf] %vm3748, %v3684
      %3750 = vst.msk [vmem:[%s278 + $0x4] sm:$0xf] %vm3748, %v3685
      %3751 = vst.msk [vmem:[%s278 + $0x8] sm:$0xf] %vm3748, %v3686
      %3752 = vst.msk [vmem:[%s278 + $0xc] sm:$0xf] %vm3748, %v3687
      %3753 = vst.msk [vmem:[%s278 + $0x10] sm:$0xf] %vm3748, %v3688
      %3754 = vst.msk [vmem:[%s278 + $0x14] sm:$0xf] %vm3748, %v3689
      %3755 = vst.msk [vmem:[%s278 + $0x18] sm:$0xf] %vm3748, %v3690
      %3756 = vst.msk [vmem:[%s278 + $0x1c] sm:$0xf] %vm3748, %v3691
      %3757 = vst.msk [vmem:[%s278 + $0x20] sm:$0xf] %vm3748, %v3692
      %3758 = vst.msk [vmem:[%s278 + $0x24] sm:$0xf] %vm3748, %v3693
      %3759 = vst.msk [vmem:[%s278 + $0x28] sm:$0xf] %vm3748, %v3694
      %3760 = vst.msk [vmem:[%s278 + $0x2c] sm:$0xf] %vm3748, %v3695
      %3761 = vst.msk [vmem:[%s278 + $0x30] sm:$0xf] %vm3748, %v3696
      %3762 = vst.msk [vmem:[%s278 + $0x34] sm:$0xf] %vm3748, %v3697
      %3763 = vst.msk [vmem:[%s278 + $0x38] sm:$0xf] %vm3748, %v3698
      %3764 = vst.msk [vmem:[%s278 + $0x3c] sm:$0xf] %vm3748, %v3699
      %3765 = vst.msk [vmem:[%s278 + $0x40] sm:$0xf] %vm3748, %v3700
      %3766 = vst.msk [vmem:[%s278 + $0x44] sm:$0xf] %vm3748, %v3701
      %3767 = vst.msk [vmem:[%s278 + $0x48] sm:$0xf] %vm3748, %v3702
      %3768 = vst.msk [vmem:[%s278 + $0x4c] sm:$0xf] %vm3748, %v3703
      %3769 = vst.msk [vmem:[%s278 + $0x50] sm:$0xf] %vm3748, %v3704
      %3770 = vst.msk [vmem:[%s278 + $0x54] sm:$0xf] %vm3748, %v3705
      %3771 = vst.msk [vmem:[%s278 + $0x58] sm:$0xf] %vm3748, %v3706
      %3772 = vst.msk [vmem:[%s278 + $0x5c] sm:$0xf] %vm3748, %v3707
      %3773 = vst.msk [vmem:[%s278 + $0x60] sm:$0xf] %vm3748, %v3708
      %3774 = vst.msk [vmem:[%s278 + $0x64] sm:$0xf] %vm3748, %v3709
      %3775 = vst.msk [vmem:[%s278 + $0x68] sm:$0xf] %vm3748, %v3710
      %3776 = vst.msk [vmem:[%s278 + $0x6c] sm:$0xf] %vm3748, %v3711
      %3777 = vst.msk [vmem:[%s278 + $0x70] sm:$0xf] %vm3748, %v3712
      %3778 = vst.msk [vmem:[%s278 + $0x74] sm:$0xf] %vm3748, %v3713
      %3779 = vst.msk [vmem:[%s278 + $0x78] sm:$0xf] %vm3748, %v3714
      %3780 = vst.msk [vmem:[%s278 + $0x7c] sm:$0xf] %vm3748, %v3715
      %p3781 = scmp.lt.s32.totalorder %s18, 1
      %s3782 = scalar_select %p3781, %s18, 1
      %s3783 = smul.addr %s3782, 32
      %s3784 = smul.addr %s3783, 4
      %s3785 = scalar_lea.vmem %s7, %s3784
      // Predicated region
      $region49: #{gated_pixelcnn_forward.4} parent=47 // pred_check
        %p3786 = pneg %p188
      $region50: #{gated_pixelcnn_forward.4} parent=47 // pred_check_branch
        %3788 = sbr.rel (%p3786) target = $region52
      $region51: #{gated_pixelcnn_forward.4} parent=47 // pred_region
        _
      $region52: #{gated_pixelcnn_forward.4} parent=47 // pred_fallthru
        _
    $region48: #{gated_pixelcnn_forward.4} parent=5 // pred_fallthru
      _
    %p3789 = scmp.le.s32.totalorder 2, %s13
    // Predicated region
    $region53: #{gated_pixelcnn_forward.4} parent=5 // pred_check
      %p3790 = pneg %p3789
    $region54: #{gated_pixelcnn_forward.4} parent=5 // pred_check_branch
      %3792 = sbr.rel (%p3790) target = $region56
    $region55: #{gated_pixelcnn_forward.4} parent=5 // pred_region
      %s3793 = ssub.s32 %s13, 2
      // Predicated region
      $region57: #{gated_pixelcnn_forward.4} parent=55 // pred_check
        %p3794 = pneg %p194
      $region58: #{gated_pixelcnn_forward.4} parent=55 // pred_check_branch
        %3796 = sbr.rel (%p3794) target = $region60
      $region59: #{gated_pixelcnn_forward.4} parent=55 // pred_region
        %p3797 = scmp.lt.s32.totalorder %s19, 1
        %s3798 = scalar_select %p3797, %s19, 1
        %s3799 = smul.addr %s3798, 32
        %s3800 = smul.addr %s3799, 4
        %s3801 = scalar_lea.vmem %s7, %s3800
      $region60: #{gated_pixelcnn_forward.4} parent=55 // pred_fallthru
        _
    $region56: #{gated_pixelcnn_forward.4} parent=5 // pred_fallthru
      _
  $region6: #{gated_pixelcnn_forward.4} parent=0 // loop_footer
    %s17 = sadd.s32 1, %s13
  $region7: #{gated_pixelcnn_forward.4} parent=0 // loop_footer_branch
    %12 = sbr.rel target = $region3
  $region8: #{gated_pixelcnn_forward.4} parent=0 // loop_exit
    _

// kernel: gated_pixelcnn_forward.5
$region0: #{gated_pixelcnn_forward.5}
  #allocation0 [shape = 'u32[]', space=smem, size = 0x4, offset = 0x4, fixed_abs, tag = 'smem constant byte address 0x4 - core index']
  #allocation1 [shape = 'u32[144,128]{1,0:T(1,128)}', space=vmem, size = 0x12000, scoped, tag = 'internal scratch']
  %s0 = inlined_call_operand.vmem [shape: bf16[2,16,16,64], index: 0, kind: input, shape index: {}]
  %s1 = inlined_call_operand.vmem [shape: bf16[192,64], index: 1, kind: input, shape index: {}]
  %s2 = inlined_call_operand.vmem [shape: f32[1,64], index: 2, kind: input, shape index: {}]
  %s3 = inlined_call_operand.vmem [shape: bf16[64,64], index: 3, kind: input, shape index: {}]
  %s4 = inlined_call_operand.vmem [shape: f32[1,64], index: 4, kind: input, shape index: {}]
  %s5 = inlined_call_operand.vmem [shape: bf16[32,32], index: 5, kind: input, shape index: {}]
  %s6 = inlined_call_operand.vmem [shape: f32[1,32], index: 6, kind: input, shape index: {}]
  %s7 = inlined_call_operand.vmem [shape: bf16[32,32], index: 7, kind: input, shape index: {}]
  %s8 = inlined_call_operand.vmem [shape: f32[1,32], index: 8, kind: input, shape index: {}]
  %s9 = inlined_call_operand.vmem [shape: bf16[32,128], index: 9, kind: input, shape index: {}]
  %s10 = inlined_call_operand.vmem [shape: f32[1,128], index: 10, kind: input, shape index: {}]
  %s11 = inlined_call_operand.vmem [shape: f32[2,16,16,128], index: 11, kind: output, shape index: {}]
  %s12 = sld [smem:[#allocation0]]
  $region77: #{gated_pixelcnn_forward.5} parent=0
    _
  %s14 = ssub.s32 1, %s12
  %s15 = scalar_select 0, %s14, %s12
  loop: start=0, step=1, limit=4
  $region2: #{gated_pixelcnn_forward.5} parent=0 // loop_pre_header
    _
  $region3: #{gated_pixelcnn_forward.5} parent=0 // loop_header
    %s17 = sphi 0, %s21
    %p18 = scmp.ge.s32.totalorder %s17, 4
    %s27 = sphi 0, %s29
    %s30 = sphi 0, %s27
    %s31 = sphi 0, %s30
    %s47 = sphi 0, %s31
    %s51 = sphi 0, %s51
    %s53 = sphi 0, %s51
    %s54 = sphi 0, %s53
    %s68 = sphi 0, %s54
    %s72 = sphi 0, %s72
    %s74 = sphi 0, %s72
    %s75 = sphi 0, %s74
    %s89 = sphi 0, %s75
    %s93 = sphi 0, %s93
    %s95 = sphi 0, %s93
    %s96 = sphi 0, %s95
    %s110 = sphi 0, %s96
    %s114 = sphi 0, %s114
    %s116 = sphi 0, %s114
    %s117 = sphi 0, %s116
    %s131 = sphi 0, %s117
    %s135 = sphi 0, %s135
    %s137 = sphi 0, %s135
    %s138 = sphi 0, %s137
    %s152 = sphi 0, %s138
    %s156 = sphi 0, %s156
    %s158 = sphi 0, %s156
    %s159 = sphi 0, %s158
    %s173 = sphi 0, %s159
    %s177 = sphi 0, %s177
    %s179 = sphi 0, %s177
    %s180 = sphi 0, %s179
    %s194 = sphi 0, %s180
    %s198 = sphi 0, %s198
    %s200 = sphi 0, %s198
    %s201 = sphi 0, %s200
    %s215 = sphi 0, %s201
    %s219 = sphi 0, %s219
    %s221 = sphi 0, %s219
    %s222 = sphi 0, %s221
    %s236 = sphi 0, %s222
    %s240 = sphi 0, %s240
    %s242 = sphi 0, %s240
    %s243 = sphi 0, %s242
    %s257 = sphi 0, %s243
    %s263 = sphi 0, %s265
    %s266 = sphi 0, %s263
    %s267 = sphi 0, %s266
    %s283 = sphi 0, %s267
  $region4: #{gated_pixelcnn_forward.5} parent=0 // loop_header_branch
    %20 = sbr.rel (%p18) target = $region8
  $region5: #{gated_pixelcnn_forward.5} parent=0 // loop_body
    %s22 = ssub.s32 %s17, 1
    %s23 = ssub.s32 %s17, 2
    %s24 = sadd.s32 %s17, 1
    %s25 = ssub.s32 %s17, %s24
    %p26 = scmp.eq.s32.totalorder %s25, 0
    %s28 = sadd.s32 %s27, 1
    %s29 = scalar_select %p26, %s27, %s28
    %p32 = pneg %p26
    %p33 = scmp.eq.s32.totalorder %s17, 1
    %p34 = por %p32, %p33
    %p35 = scmp.ne.s32.totalorder %s27, %s30
    %p36 = scmp.eq.s32.totalorder %s17, 0
    %p37 = por %p35, %p36
    %p38 = scmp.ne.s32.totalorder %s27, %s30
    %p39 = scmp.eq.s32.totalorder %s22, 1
    %p40 = por %p38, %p39
    %p41 = scmp.ne.s32.totalorder %s30, %s31
    %p42 = scmp.eq.s32.totalorder %s22, 0
    %p43 = por %p41, %p42
    %p44 = scmp.ne.s32.totalorder %s30, %s31
    %p45 = scmp.eq.s32.totalorder %s23, 1
    %p46 = por %p44, %p45
    %p48 = scmp.ne.s32.totalorder %s31, %s47
    %p49 = scmp.eq.s32.totalorder %s23, 0
    %p50 = por %p48, %p49
    %s52 = sadd.s32 %s51, 1
    %p55 = scmp.eq.s32.totalorder %s17, 1
    %p56 = scmp.ne.s32.totalorder %s51, %s53
    %p57 = scmp.eq.s32.totalorder %s17, 0
    %p58 = por %p56, %p57
    %p59 = scmp.ne.s32.totalorder %s51, %s53
    %p60 = scmp.eq.s32.totalorder %s22, 1
    %p61 = por %p59, %p60
    %p62 = scmp.ne.s32.totalorder %s53, %s54
    %p63 = scmp.eq.s32.totalorder %s22, 0
    %p64 = por %p62, %p63
    %p65 = scmp.ne.s32.totalorder %s53, %s54
    %p66 = scmp.eq.s32.totalorder %s23, 1
    %p67 = por %p65, %p66
    %p69 = scmp.ne.s32.totalorder %s54, %s68
    %p70 = scmp.eq.s32.totalorder %s23, 0
    %p71 = por %p69, %p70
    %s73 = sadd.s32 %s72, 1
    %p76 = scmp.eq.s32.totalorder %s17, 1
    %p77 = scmp.ne.s32.totalorder %s72, %s74
    %p78 = scmp.eq.s32.totalorder %s17, 0
    %p79 = por %p77, %p78
    %p80 = scmp.ne.s32.totalorder %s72, %s74
    %p81 = scmp.eq.s32.totalorder %s22, 1
    %p82 = por %p80, %p81
    %p83 = scmp.ne.s32.totalorder %s74, %s75
    %p84 = scmp.eq.s32.totalorder %s22, 0
    %p85 = por %p83, %p84
    %p86 = scmp.ne.s32.totalorder %s74, %s75
    %p87 = scmp.eq.s32.totalorder %s23, 1
    %p88 = por %p86, %p87
    %p90 = scmp.ne.s32.totalorder %s75, %s89
    %p91 = scmp.eq.s32.totalorder %s23, 0
    %p92 = por %p90, %p91
    %s94 = sadd.s32 %s93, 1
    %p97 = scmp.eq.s32.totalorder %s17, 1
    %p98 = scmp.ne.s32.totalorder %s93, %s95
    %p99 = scmp.eq.s32.totalorder %s17, 0
    %p100 = por %p98, %p99
    %p101 = scmp.ne.s32.totalorder %s93, %s95
    %p102 = scmp.eq.s32.totalorder %s22, 1
    %p103 = por %p101, %p102
    %p104 = scmp.ne.s32.totalorder %s95, %s96
    %p105 = scmp.eq.s32.totalorder %s22, 0
    %p106 = por %p104, %p105
    %p107 = scmp.ne.s32.totalorder %s95, %s96
    %p108 = scmp.eq.s32.totalorder %s23, 1
    %p109 = por %p107, %p108
    %p111 = scmp.ne.s32.totalorder %s96, %s110
    %p112 = scmp.eq.s32.totalorder %s23, 0
    %p113 = por %p111, %p112
    %s115 = sadd.s32 %s114, 1
    %p118 = scmp.eq.s32.totalorder %s17, 1
    %p119 = scmp.ne.s32.totalorder %s114, %s116
    %p120 = scmp.eq.s32.totalorder %s17, 0
    %p121 = por %p119, %p120
    %p122 = scmp.ne.s32.totalorder %s114, %s116
    %p123 = scmp.eq.s32.totalorder %s22, 1
    %p124 = por %p122, %p123
    %p125 = scmp.ne.s32.totalorder %s116, %s117
    %p126 = scmp.eq.s32.totalorder %s22, 0
    %p127 = por %p125, %p126
    %p128 = scmp.ne.s32.totalorder %s116, %s117
    %p129 = scmp.eq.s32.totalorder %s23, 1
    %p130 = por %p128, %p129
    %p132 = scmp.ne.s32.totalorder %s117, %s131
    %p133 = scmp.eq.s32.totalorder %s23, 0
    %p134 = por %p132, %p133
    %s136 = sadd.s32 %s135, 1
    %p139 = scmp.eq.s32.totalorder %s17, 1
    %p140 = scmp.ne.s32.totalorder %s135, %s137
    %p141 = scmp.eq.s32.totalorder %s17, 0
    %p142 = por %p140, %p141
    %p143 = scmp.ne.s32.totalorder %s135, %s137
    %p144 = scmp.eq.s32.totalorder %s22, 1
    %p145 = por %p143, %p144
    %p146 = scmp.ne.s32.totalorder %s137, %s138
    %p147 = scmp.eq.s32.totalorder %s22, 0
    %p148 = por %p146, %p147
    %p149 = scmp.ne.s32.totalorder %s137, %s138
    %p150 = scmp.eq.s32.totalorder %s23, 1
    %p151 = por %p149, %p150
    %p153 = scmp.ne.s32.totalorder %s138, %s152
    %p154 = scmp.eq.s32.totalorder %s23, 0
    %p155 = por %p153, %p154
    %s157 = sadd.s32 %s156, 1
    %p160 = scmp.eq.s32.totalorder %s17, 1
    %p161 = scmp.ne.s32.totalorder %s156, %s158
    %p162 = scmp.eq.s32.totalorder %s17, 0
    %p163 = por %p161, %p162
    %p164 = scmp.ne.s32.totalorder %s156, %s158
    %p165 = scmp.eq.s32.totalorder %s22, 1
    %p166 = por %p164, %p165
    %p167 = scmp.ne.s32.totalorder %s158, %s159
    %p168 = scmp.eq.s32.totalorder %s22, 0
    %p169 = por %p167, %p168
    %p170 = scmp.ne.s32.totalorder %s158, %s159
    %p171 = scmp.eq.s32.totalorder %s23, 1
    %p172 = por %p170, %p171
    %p174 = scmp.ne.s32.totalorder %s159, %s173
    %p175 = scmp.eq.s32.totalorder %s23, 0
    %p176 = por %p174, %p175
    %s178 = sadd.s32 %s177, 1
    %p181 = scmp.eq.s32.totalorder %s17, 1
    %p182 = scmp.ne.s32.totalorder %s177, %s179
    %p183 = scmp.eq.s32.totalorder %s17, 0
    %p184 = por %p182, %p183
    %p185 = scmp.ne.s32.totalorder %s177, %s179
    %p186 = scmp.eq.s32.totalorder %s22, 1
    %p187 = por %p185, %p186
    %p188 = scmp.ne.s32.totalorder %s179, %s180
    %p189 = scmp.eq.s32.totalorder %s22, 0
    %p190 = por %p188, %p189
    %p191 = scmp.ne.s32.totalorder %s179, %s180
    %p192 = scmp.eq.s32.totalorder %s23, 1
    %p193 = por %p191, %p192
    %p195 = scmp.ne.s32.totalorder %s180, %s194
    %p196 = scmp.eq.s32.totalorder %s23, 0
    %p197 = por %p195, %p196
    %s199 = sadd.s32 %s198, 1
    %p202 = scmp.eq.s32.totalorder %s17, 1
    %p203 = scmp.ne.s32.totalorder %s198, %s200
    %p204 = scmp.eq.s32.totalorder %s17, 0
    %p205 = por %p203, %p204
    %p206 = scmp.ne.s32.totalorder %s198, %s200
    %p207 = scmp.eq.s32.totalorder %s22, 1
    %p208 = por %p206, %p207
    %p209 = scmp.ne.s32.totalorder %s200, %s201
    %p210 = scmp.eq.s32.totalorder %s22, 0
    %p211 = por %p209, %p210
    %p212 = scmp.ne.s32.totalorder %s200, %s201
    %p213 = scmp.eq.s32.totalorder %s23, 1
    %p214 = por %p212, %p213
    %p216 = scmp.ne.s32.totalorder %s201, %s215
    %p217 = scmp.eq.s32.totalorder %s23, 0
    %p218 = por %p216, %p217
    %s220 = sadd.s32 %s219, 1
    %p223 = scmp.eq.s32.totalorder %s17, 1
    %p224 = scmp.ne.s32.totalorder %s219, %s221
    %p225 = scmp.eq.s32.totalorder %s17, 0
    %p226 = por %p224, %p225
    %p227 = scmp.ne.s32.totalorder %s219, %s221
    %p228 = scmp.eq.s32.totalorder %s22, 1
    %p229 = por %p227, %p228
    %p230 = scmp.ne.s32.totalorder %s221, %s222
    %p231 = scmp.eq.s32.totalorder %s22, 0
    %p232 = por %p230, %p231
    %p233 = scmp.ne.s32.totalorder %s221, %s222
    %p234 = scmp.eq.s32.totalorder %s23, 1
    %p235 = por %p233, %p234
    %p237 = scmp.ne.s32.totalorder %s222, %s236
    %p238 = scmp.eq.s32.totalorder %s23, 0
    %p239 = por %p237, %p238
    %s241 = sadd.s32 %s240, 1
    %p244 = scmp.eq.s32.totalorder %s17, 1
    %p245 = scmp.ne.s32.totalorder %s240, %s242
    %p246 = scmp.eq.s32.totalorder %s17, 0
    %p247 = por %p245, %p246
    %p248 = scmp.ne.s32.totalorder %s240, %s242
    %p249 = scmp.eq.s32.totalorder %s22, 1
    %p250 = por %p248, %p249
    %p251 = scmp.ne.s32.totalorder %s242, %s243
    %p252 = scmp.eq.s32.totalorder %s22, 0
    %p253 = por %p251, %p252
    %p254 = scmp.ne.s32.totalorder %s242, %s243
    %p255 = scmp.eq.s32.totalorder %s23, 1
    %p256 = por %p254, %p255
    %p258 = scmp.ne.s32.totalorder %s243, %s257
    %p259 = scmp.eq.s32.totalorder %s23, 0
    %p260 = por %p258, %p259
    %s261 = ssub.s32 %s17, %s24
    %p262 = scmp.eq.s32.totalorder %s261, 0
    %s264 = sadd.s32 %s263, 1
    %s265 = scalar_select %p262, %s263, %s264
    %p268 = pneg %p262
    %p269 = scmp.eq.s32.totalorder %s17, 1
    %p270 = por %p268, %p269
    %p271 = scmp.ne.s32.totalorder %s263, %s266
    %p272 = scmp.eq.s32.totalorder %s17, 0
    %p273 = por %p271, %p272
    %p274 = scmp.ne.s32.totalorder %s263, %s266
    %p275 = scmp.eq.s32.totalorder %s22, 1
    %p276 = por %p274, %p275
    %p277 = scmp.ne.s32.totalorder %s266, %s267
    %p278 = scmp.eq.s32.totalorder %s22, 0
    %p279 = por %p277, %p278
    %p280 = scmp.ne.s32.totalorder %s266, %s267
    %p281 = scmp.eq.s32.totalorder %s23, 1
    %p282 = por %p280, %p281
    %p284 = scmp.ne.s32.totalorder %s267, %s283
    %p285 = scmp.eq.s32.totalorder %s23, 0
    %p286 = por %p284, %p285
    %p287 = scmp.le.s32.totalorder 1, %s17
    %p288 = scmp.lt.s32.totalorder %s17, 3
    %p289 = pnand %p287, %p288
    %p290 = pneg %p289
    // Predicated region
    $region9: #{gated_pixelcnn_forward.5} parent=5 // pred_check
      _
    $region10: #{gated_pixelcnn_forward.5} parent=5 // pred_check_branch
      %292 = sbr.rel (%p289) target = $region12
    $region11: #{gated_pixelcnn_forward.5} parent=5 // pred_region
      %s293 = ssub.s32 %s17, 1
      // Predicated region
      $region13: #{gated_pixelcnn_forward.5} parent=11 // pred_check
        %p294 = pneg %p64
      $region14: #{gated_pixelcnn_forward.5} parent=11 // pred_check_branch
        %296 = sbr.rel (%p294) target = $region16
      $region15: #{gated_pixelcnn_forward.5} parent=11 // pred_region
        _
      $region16: #{gated_pixelcnn_forward.5} parent=11 // pred_fallthru
        _
      // Predicated region
      $region17: #{gated_pixelcnn_forward.5} parent=11 // pred_check
        %p297 = pneg %p85
      $region18: #{gated_pixelcnn_forward.5} parent=11 // pred_check_branch
        %299 = sbr.rel (%p297) target = $region20
      $region19: #{gated_pixelcnn_forward.5} parent=11 // pred_region
        _
      $region20: #{gated_pixelcnn_forward.5} parent=11 // pred_fallthru
        _
      // Predicated region
      $region21: #{gated_pixelcnn_forward.5} parent=11 // pred_check
        %p300 = pneg %p106
      $region22: #{gated_pixelcnn_forward.5} parent=11 // pred_check_branch
        %302 = sbr.rel (%p300) target = $region24
      $region23: #{gated_pixelcnn_forward.5} parent=11 // pred_region
        _
      $region24: #{gated_pixelcnn_forward.5} parent=11 // pred_fallthru
        _
      // Predicated region
      $region25: #{gated_pixelcnn_forward.5} parent=11 // pred_check
        %p303 = pneg %p127
      $region26: #{gated_pixelcnn_forward.5} parent=11 // pred_check_branch
        %305 = sbr.rel (%p303) target = $region28
      $region27: #{gated_pixelcnn_forward.5} parent=11 // pred_region
        _
      $region28: #{gated_pixelcnn_forward.5} parent=11 // pred_fallthru
        _
      // Predicated region
      $region29: #{gated_pixelcnn_forward.5} parent=11 // pred_check
        %p306 = pneg %p148
      $region30: #{gated_pixelcnn_forward.5} parent=11 // pred_check_branch
        %308 = sbr.rel (%p306) target = $region32
      $region31: #{gated_pixelcnn_forward.5} parent=11 // pred_region
        _
      $region32: #{gated_pixelcnn_forward.5} parent=11 // pred_fallthru
        _
      // Predicated region
      $region33: #{gated_pixelcnn_forward.5} parent=11 // pred_check
        %p309 = pneg %p169
      $region34: #{gated_pixelcnn_forward.5} parent=11 // pred_check_branch
        %311 = sbr.rel (%p309) target = $region36
      $region35: #{gated_pixelcnn_forward.5} parent=11 // pred_region
        _
      $region36: #{gated_pixelcnn_forward.5} parent=11 // pred_fallthru
        _
      // Predicated region
      $region37: #{gated_pixelcnn_forward.5} parent=11 // pred_check
        %p312 = pneg %p190
      $region38: #{gated_pixelcnn_forward.5} parent=11 // pred_check_branch
        %314 = sbr.rel (%p312) target = $region40
      $region39: #{gated_pixelcnn_forward.5} parent=11 // pred_region
        _
      $region40: #{gated_pixelcnn_forward.5} parent=11 // pred_fallthru
        _
      // Predicated region
      $region41: #{gated_pixelcnn_forward.5} parent=11 // pred_check
        %p315 = pneg %p211
      $region42: #{gated_pixelcnn_forward.5} parent=11 // pred_check_branch
        %317 = sbr.rel (%p315) target = $region44
      $region43: #{gated_pixelcnn_forward.5} parent=11 // pred_region
        _
      $region44: #{gated_pixelcnn_forward.5} parent=11 // pred_fallthru
        _
      // Predicated region
      $region45: #{gated_pixelcnn_forward.5} parent=11 // pred_check
        %p318 = pneg %p232
      $region46: #{gated_pixelcnn_forward.5} parent=11 // pred_check_branch
        %320 = sbr.rel (%p318) target = $region48
      $region47: #{gated_pixelcnn_forward.5} parent=11 // pred_region
        _
      $region48: #{gated_pixelcnn_forward.5} parent=11 // pred_fallthru
        _
      // Predicated region
      $region49: #{gated_pixelcnn_forward.5} parent=11 // pred_check
        %p321 = pneg %p253
      $region50: #{gated_pixelcnn_forward.5} parent=11 // pred_check_branch
        %323 = sbr.rel (%p321) target = $region52
      $region51: #{gated_pixelcnn_forward.5} parent=11 // pred_region
        _
      $region52: #{gated_pixelcnn_forward.5} parent=11 // pred_fallthru
        _
    $region12: #{gated_pixelcnn_forward.5} parent=5 // pred_fallthru
      _
    %p324 = scmp.lt.s32.totalorder %s17, 2
    // Predicated region
    $region53: #{gated_pixelcnn_forward.5} parent=5 // pred_check
      %p325 = pneg %p324
    $region54: #{gated_pixelcnn_forward.5} parent=5 // pred_check_branch
      %327 = sbr.rel (%p325) target = $region56
    $region55: #{gated_pixelcnn_forward.5} parent=5 // pred_region
      // Predicated region
      $region57: #{gated_pixelcnn_forward.5} parent=55 // pred_check
        %p328 = pneg %p37
      $region58: #{gated_pixelcnn_forward.5} parent=55 // pred_check_branch
        %330 = sbr.rel (%p328) target = $region60
      $region59: #{gated_pixelcnn_forward.5} parent=55 // pred_region
        %p331 = scmp.lt.s32.totalorder %s17, 1
        %s332 = scalar_select %p331, %s17, 1
        %s333 = smul.addr %s332, 32
        %s334 = smul.addr %s333, 4
        %s335 = scalar_lea.vmem %s0, %s334
      $region60: #{gated_pixelcnn_forward.5} parent=55 // pred_fallthru
        _
    $region56: #{gated_pixelcnn_forward.5} parent=5 // pred_fallthru
      _
    %p336 = scmp.le.s32.totalorder 1, %s17
    %p337 = scmp.lt.s32.totalorder %s17, 3
    %p338 = pnand %p336, %p337
    %p339 = pneg %p338
    // Predicated region
    $region61: #{gated_pixelcnn_forward.5} parent=5 // pred_check
      _
    $region62: #{gated_pixelcnn_forward.5} parent=5 // pred_check_branch
      %341 = sbr.rel (%p338) target = $region64
    $region63: #{gated_pixelcnn_forward.5} parent=5 // pred_region
      %s342 = ssub.s32 %s17, 1
      %p343 = scmp.lt.s32.totalorder %s22, 1
      %s344 = scalar_select %p343, %s22, 1
      %s345 = smul.addr %s344, 32
      %s346 = smul.addr %s345, 4
      %s347 = scalar_lea.vmem %s0, %s346
      %p348 = pneg %p43
      %p349 = pneg %p40
      %p350 = pneg %p64
      %p351 = pneg %p61
      %p352 = pneg %p85
      %p353 = pneg %p82
      %p354 = pneg %p106
      %p355 = pneg %p103
      %p356 = pneg %p127
      %p357 = pneg %p124
      %p358 = pneg %p148
      %p359 = pneg %p145
      %p360 = pneg %p169
      %p361 = pneg %p166
      %p362 = pneg %p190
      %p363 = pneg %p187
      %p364 = pneg %p211
      %p365 = pneg %p208
      %p366 = pneg %p232
      %p367 = pneg %p229
      %p368 = pneg %p253
      %p369 = pneg %p250
      %p370 = pneg %p279
      %p371 = pneg %p276
      %p372 = scmp.lt.s32.totalorder %s22, 1
      %s373 = scalar_select %p372, %s22, 1
      %s374 = smul.addr %s373, 32
      %s375 = smul.addr %s374, 8
      %s376 = scalar_lea.vmem %s11, %s375
      %p377 = scmp.lt.s32.totalorder %s22, 1
      %s378 = scalar_select %p377, %s22, 1
      %s379 = smul.addr %s378, 32
      %s380 = smul.addr %s379, 4
      %s381 = scalar_lea.vmem %s0, %s380
      %p382 = scmp.lt.s32.totalorder %s22, 1
      %s383 = scalar_select %p382, %s22, 1
      %s384 = smul.addr %s383, 32
      %s385 = smul.addr %s384, 8
      %s386 = scalar_lea.vmem %s11, %s385
      %v388 = vld [vmem:[%s381] sm:$0xf]
      %v389 = vld [vmem:[%s381 + $0x4] sm:$0xf]
      %v390 = vld [vmem:[%s381 + $0x8] sm:$0xf]
      %v391 = vld [vmem:[%s381 + $0xc] sm:$0xf]
      %v392 = vld [vmem:[%s381 + $0x10] sm:$0xf]
      %v393 = vld [vmem:[%s381 + $0x14] sm:$0xf]
      %v394 = vld [vmem:[%s381 + $0x18] sm:$0xf]
      %v395 = vld [vmem:[%s381 + $0x1c] sm:$0xf]
      %v396 = vld [vmem:[%s381 + $0x20] sm:$0xf]
      %v397 = vld [vmem:[%s381 + $0x24] sm:$0xf]
      %v398 = vld [vmem:[%s381 + $0x28] sm:$0xf]
      %v399 = vld [vmem:[%s381 + $0x2c] sm:$0xf]
      %v400 = vld [vmem:[%s381 + $0x30] sm:$0xf]
      %v401 = vld [vmem:[%s381 + $0x34] sm:$0xf]
      %v402 = vld [vmem:[%s381 + $0x38] sm:$0xf]
      %v403 = vld [vmem:[%s381 + $0x3c] sm:$0xf]
      %v404 = vld [vmem:[%s381 + $0x40] sm:$0xf]
      %v405 = vld [vmem:[%s381 + $0x44] sm:$0xf]
      %v406 = vld [vmem:[%s381 + $0x48] sm:$0xf]
      %v407 = vld [vmem:[%s381 + $0x4c] sm:$0xf]
      %v408 = vld [vmem:[%s381 + $0x50] sm:$0xf]
      %v409 = vld [vmem:[%s381 + $0x54] sm:$0xf]
      %v410 = vld [vmem:[%s381 + $0x58] sm:$0xf]
      %v411 = vld [vmem:[%s381 + $0x5c] sm:$0xf]
      %v412 = vld [vmem:[%s381 + $0x60] sm:$0xf]
      %v413 = vld [vmem:[%s381 + $0x64] sm:$0xf]
      %v414 = vld [vmem:[%s381 + $0x68] sm:$0xf]
      %v415 = vld [vmem:[%s381 + $0x6c] sm:$0xf]
      %v416 = vld [vmem:[%s381 + $0x70] sm:$0xf]
      %v417 = vld [vmem:[%s381 + $0x74] sm:$0xf]
      %v418 = vld [vmem:[%s381 + $0x78] sm:$0xf]
      %v419 = vld [vmem:[%s381 + $0x7c] sm:$0xf]
      %v452 = vunpack.c.l.b16 %v388
      %v453 = vunpack.c.l.b16 %v389
      %v454 = vunpack.c.l.b16 %v390
      %v455 = vunpack.c.l.b16 %v391
      %v456 = vunpack.c.l.b16 %v392
      %v457 = vunpack.c.l.b16 %v393
      %v458 = vunpack.c.l.b16 %v394
      %v459 = vunpack.c.l.b16 %v395
      %v460 = vunpack.c.l.b16 %v396
      %v461 = vunpack.c.l.b16 %v397
      %v462 = vunpack.c.l.b16 %v398
      %v463 = vunpack.c.l.b16 %v399
      %v464 = vunpack.c.l.b16 %v400
      %v465 = vunpack.c.l.b16 %v401
      %v466 = vunpack.c.l.b16 %v402
      %v467 = vunpack.c.l.b16 %v403
      %v468 = vunpack.c.l.b16 %v404
      %v469 = vunpack.c.l.b16 %v405
      %v470 = vunpack.c.l.b16 %v406
      %v471 = vunpack.c.l.b16 %v407
      %v472 = vunpack.c.l.b16 %v408
      %v473 = vunpack.c.l.b16 %v409
      %v474 = vunpack.c.l.b16 %v410
      %v475 = vunpack.c.l.b16 %v411
      %v476 = vunpack.c.l.b16 %v412
      %v477 = vunpack.c.l.b16 %v413
      %v478 = vunpack.c.l.b16 %v414
      %v479 = vunpack.c.l.b16 %v415
      %v480 = vunpack.c.l.b16 %v416
      %v481 = vunpack.c.l.b16 %v417
      %v482 = vunpack.c.l.b16 %v418
      %v483 = vunpack.c.l.b16 %v419
      %v484 = vpack.c.b16 %v453, %v452
      %v485 = vpack.c.b16 %v455, %v454
      %v486 = vpack.c.b16 %v457, %v456
      %v487 = vpack.c.b16 %v459, %v458
      %v488 = vpack.c.b16 %v461, %v460
      %v489 = vpack.c.b16 %v463, %v462
      %v490 = vpack.c.b16 %v465, %v464
      %v491 = vpack.c.b16 %v467, %v466
      %v492 = vpack.c.b16 %v469, %v468
      %v493 = vpack.c.b16 %v471, %v470
      %v494 = vpack.c.b16 %v473, %v472
      %v495 = vpack.c.b16 %v475, %v474
      %v496 = vpack.c.b16 %v477, %v476
      %v497 = vpack.c.b16 %v479, %v478
      %v498 = vpack.c.b16 %v481, %v480
      %v499 = vpack.c.b16 %v483, %v482
      %v501 = vshrl.u32 0, 16
      %v503 = vrot.slane %v501, 7
      %v504 = vshll.u32 0, 16
      %v506 = vor.u32 %v503, %v504
      %v508 = vshrl.u32 %v484, 16
      %v510 = vrot.slane %v508, 7
      %v511 = vshll.u32 %v484, 16
      %v513 = vor.u32 %v510, %v511
      %v515 = vshrl.u32 %v485, 16
      %v517 = vrot.slane %v515, 7
      %v518 = vshll.u32 %v485, 16
      %v520 = vor.u32 %v517, %v518
      %v522 = vshrl.u32 %v486, 16
      %v524 = vrot.slane %v522, 7
      %v525 = vshll.u32 %v486, 16
      %v527 = vor.u32 %v524, %v525
      %v529 = vshrl.u32 %v487, 16
      %v531 = vrot.slane %v529, 7
      %v532 = vshll.u32 %v487, 16
      %v534 = vor.u32 %v531, %v532
      %v536 = vshrl.u32 %v488, 16
      %v538 = vrot.slane %v536, 7
      %v539 = vshll.u32 %v488, 16
      %v541 = vor.u32 %v538, %v539
      %v543 = vshrl.u32 %v489, 16
      %v545 = vrot.slane %v543, 7
      %v546 = vshll.u32 %v489, 16
      %v548 = vor.u32 %v545, %v546
      %v550 = vshrl.u32 %v490, 16
      %v552 = vrot.slane %v550, 7
      %v553 = vshll.u32 %v490, 16
      %v555 = vor.u32 %v552, %v553
      %v557 = vshrl.u32 %v491, 16
      %v559 = vrot.slane %v557, 7
      %v560 = vshll.u32 %v491, 16
      %v562 = vor.u32 %v559, %v560
      %v564 = vshrl.u32 %v492, 16
      %v566 = vrot.slane %v564, 7
      %v567 = vshll.u32 %v492, 16
      %v569 = vor.u32 %v566, %v567
      %v571 = vshrl.u32 %v493, 16
      %v573 = vrot.slane %v571, 7
      %v574 = vshll.u32 %v493, 16
      %v576 = vor.u32 %v573, %v574
      %v578 = vshrl.u32 %v494, 16
      %v580 = vrot.slane %v578, 7
      %v581 = vshll.u32 %v494, 16
      %v583 = vor.u32 %v580, %v581
      %v585 = vshrl.u32 %v495, 16
      %v587 = vrot.slane %v585, 7
      %v588 = vshll.u32 %v495, 16
      %v590 = vor.u32 %v587, %v588
      %v592 = vshrl.u32 %v496, 16
      %v594 = vrot.slane %v592, 7
      %v595 = vshll.u32 %v496, 16
      %v597 = vor.u32 %v594, %v595
      %v599 = vshrl.u32 %v497, 16
      %v601 = vrot.slane %v599, 7
      %v602 = vshll.u32 %v497, 16
      %v604 = vor.u32 %v601, %v602
      %v606 = vshrl.u32 %v498, 16
      %v608 = vrot.slane %v606, 7
      %v609 = vshll.u32 %v498, 16
      %v611 = vor.u32 %v608, %v609
      %v613 = vshrl.u32 %v499, 16
      %v615 = vrot.slane %v613, 7
      %v616 = vshll.u32 %v499, 16
      %v618 = vor.u32 %v615, %v616
      %vm653 = vcmask 1040384
      %vm654 = vsmask.f32 256
      %vm655 = vmand %vm653, %vm654
      %v656 = vsel %vm655, 0, %v506
      %v657 = vsel %vm655, 0, %v513
      %v658 = vsel %vm655, 0, %v520
      %v659 = vsel %vm655, 0, %v527
      %v660 = vsel %vm655, 0, %v534
      %v661 = vsel %vm655, 0, %v541
      %v662 = vsel %vm655, 0, %v548
      %v663 = vsel %vm655, 0, %v555
      %v664 = vsel %vm655, 0, %v562
      %v665 = vsel %vm655, 0, %v569
      %v666 = vsel %vm655, 0, %v576
      %v667 = vsel %vm655, 0, %v583
      %v668 = vsel %vm655, 0, %v590
      %v669 = vsel %vm655, 0, %v597
      %v670 = vsel %vm655, 0, %v604
      %v671 = vsel %vm655, 0, %v611
      %v672 = vsel %vm655, 0, %v618
      %v673 = vsel %vm655, %v503, 0
      %v674 = vsel %vm655, %v510, 0
      %v675 = vsel %vm655, %v517, 0
      %v676 = vsel %vm655, %v524, 0
      %v677 = vsel %vm655, %v531, 0
      %v678 = vsel %vm655, %v538, 0
      %v679 = vsel %vm655, %v545, 0
      %v680 = vsel %vm655, %v552, 0
      %v681 = vsel %vm655, %v559, 0
      %v682 = vsel %vm655, %v566, 0
      %v683 = vsel %vm655, %v573, 0
      %v684 = vsel %vm655, %v580, 0
      %v685 = vsel %vm655, %v587, 0
      %v686 = vsel %vm655, %v594, 0
      %v687 = vsel %vm655, %v601, 0
      %v688 = vsel %vm655, %v608, 0
      %v689 = vsel %vm655, %v615, 0
      %vm690 = vsmask.f32 7424
      %v692 = vshrl.u32 %v656, 16
      %v694 = vshll.u32 %v656, 16
      %v696 = vrot.slane %v694, 1
      %v697 = vor.u32 %v692, %v696
      %v699 = vshll.u32 %v673, 16
      %v701 = vrot.slane %v699, 1
      %v702 = vsel %vm690, %v697, %v701
      %v704 = vshrl.u32 %v657, 16
      %v706 = vshll.u32 %v657, 16
      %v708 = vrot.slane %v706, 1
      %v709 = vor.u32 %v704, %v708
      %v711 = vshll.u32 %v674, 16
      %v713 = vrot.slane %v711, 1
      %v714 = vsel %vm690, %v709, %v713
      %v716 = vshrl.u32 %v658, 16
      %v718 = vshll.u32 %v658, 16
      %v720 = vrot.slane %v718, 1
      %v721 = vor.u32 %v716, %v720
      %v723 = vshll.u32 %v675, 16
      %v725 = vrot.slane %v723, 1
      %v726 = vsel %vm690, %v721, %v725
      %v728 = vshrl.u32 %v659, 16
      %v730 = vshll.u32 %v659, 16
      %v732 = vrot.slane %v730, 1
      %v733 = vor.u32 %v728, %v732
      %v735 = vshll.u32 %v676, 16
      %v737 = vrot.slane %v735, 1
      %v738 = vsel %vm690, %v733, %v737
      %v740 = vshrl.u32 %v660, 16
      %v742 = vshll.u32 %v660, 16
      %v744 = vrot.slane %v742, 1
      %v745 = vor.u32 %v740, %v744
      %v747 = vshll.u32 %v677, 16
      %v749 = vrot.slane %v747, 1
      %v750 = vsel %vm690, %v745, %v749
      %v752 = vshrl.u32 %v661, 16
      %v754 = vshll.u32 %v661, 16
      %v756 = vrot.slane %v754, 1
      %v757 = vor.u32 %v752, %v756
      %v759 = vshll.u32 %v678, 16
      %v761 = vrot.slane %v759, 1
      %v762 = vsel %vm690, %v757, %v761
      %v764 = vshrl.u32 %v662, 16
      %v766 = vshll.u32 %v662, 16
      %v768 = vrot.slane %v766, 1
      %v769 = vor.u32 %v764, %v768
      %v771 = vshll.u32 %v679, 16
      %v773 = vrot.slane %v771, 1
      %v774 = vsel %vm690, %v769, %v773
      %v776 = vshrl.u32 %v663, 16
      %v778 = vshll.u32 %v663, 16
      %v780 = vrot.slane %v778, 1
      %v781 = vor.u32 %v776, %v780
      %v783 = vshll.u32 %v680, 16
      %v785 = vrot.slane %v783, 1
      %v786 = vsel %vm690, %v781, %v785
      %v788 = vshrl.u32 %v664, 16
      %v790 = vshll.u32 %v664, 16
      %v792 = vrot.slane %v790, 1
      %v793 = vor.u32 %v788, %v792
      %v795 = vshll.u32 %v681, 16
      %v797 = vrot.slane %v795, 1
      %v798 = vsel %vm690, %v793, %v797
      %v800 = vshrl.u32 %v665, 16
      %v802 = vshll.u32 %v665, 16
      %v804 = vrot.slane %v802, 1
      %v805 = vor.u32 %v800, %v804
      %v807 = vshll.u32 %v682, 16
      %v809 = vrot.slane %v807, 1
      %v810 = vsel %vm690, %v805, %v809
      %v812 = vshrl.u32 %v666, 16
      %v814 = vshll.u32 %v666, 16
      %v816 = vrot.slane %v814, 1
      %v817 = vor.u32 %v812, %v816
      %v819 = vshll.u32 %v683, 16
      %v821 = vrot.slane %v819, 1
      %v822 = vsel %vm690, %v817, %v821
      %v824 = vshrl.u32 %v667, 16
      %v826 = vshll.u32 %v667, 16
      %v828 = vrot.slane %v826, 1
      %v829 = vor.u32 %v824, %v828
      %v831 = vshll.u32 %v684, 16
      %v833 = vrot.slane %v831, 1
      %v834 = vsel %vm690, %v829, %v833
      %v836 = vshrl.u32 %v668, 16
      %v838 = vshll.u32 %v668, 16
      %v840 = vrot.slane %v838, 1
      %v841 = vor.u32 %v836, %v840
      %v843 = vshll.u32 %v685, 16
      %v845 = vrot.slane %v843, 1
      %v846 = vsel %vm690, %v841, %v845
      %v848 = vshrl.u32 %v669, 16
      %v850 = vshll.u32 %v669, 16
      %v852 = vrot.slane %v850, 1
      %v853 = vor.u32 %v848, %v852
      %v855 = vshll.u32 %v686, 16
      %v857 = vrot.slane %v855, 1
      %v858 = vsel %vm690, %v853, %v857
      %v860 = vshrl.u32 %v670, 16
      %v862 = vshll.u32 %v670, 16
      %v864 = vrot.slane %v862, 1
      %v865 = vor.u32 %v860, %v864
      %v867 = vshll.u32 %v687, 16
      %v869 = vrot.slane %v867, 1
      %v870 = vsel %vm690, %v865, %v869
      %v872 = vshrl.u32 %v671, 16
      %v874 = vshll.u32 %v671, 16
      %v876 = vrot.slane %v874, 1
      %v877 = vor.u32 %v872, %v876
      %v879 = vshll.u32 %v688, 16
      %v881 = vrot.slane %v879, 1
      %v882 = vsel %vm690, %v877, %v881
      %vm915 = vcmask 1046528
      %v916 = vrot.slane %v656, 1
      %v917 = vrot.slane %v673, 1
      %v918 = vsel %vm915, %v916, %v917
      %v919 = vrot.slane %v657, 1
      %v920 = vrot.slane %v674, 1
      %v921 = vsel %vm915, %v919, %v920
      %v922 = vrot.slane %v658, 1
      %v923 = vrot.slane %v675, 1
      %v924 = vsel %vm915, %v922, %v923
      %v925 = vrot.slane %v659, 1
      %v926 = vrot.slane %v676, 1
      %v927 = vsel %vm915, %v925, %v926
      %v928 = vrot.slane %v660, 1
      %v929 = vrot.slane %v677, 1
      %v930 = vsel %vm915, %v928, %v929
      %v931 = vrot.slane %v661, 1
      %v932 = vrot.slane %v678, 1
      %v933 = vsel %vm915, %v931, %v932
      %v934 = vrot.slane %v662, 1
      %v935 = vrot.slane %v679, 1
      %v936 = vsel %vm915, %v934, %v935
      %v937 = vrot.slane %v663, 1
      %v938 = vrot.slane %v680, 1
      %v939 = vsel %vm915, %v937, %v938
      %v940 = vrot.slane %v664, 1
      %v941 = vrot.slane %v681, 1
      %v942 = vsel %vm915, %v940, %v941
      %v943 = vrot.slane %v665, 1
      %v944 = vrot.slane %v682, 1
      %v945 = vsel %vm915, %v943, %v944
      %v946 = vrot.slane %v666, 1
      %v947 = vrot.slane %v683, 1
      %v948 = vsel %vm915, %v946, %v947
      %v949 = vrot.slane %v667, 1
      %v950 = vrot.slane %v684, 1
      %v951 = vsel %vm915, %v949, %v950
      %v952 = vrot.slane %v668, 1
      %v953 = vrot.slane %v685, 1
      %v954 = vsel %vm915, %v952, %v953
      %v955 = vrot.slane %v669, 1
      %v956 = vrot.slane %v686, 1
      %v957 = vsel %vm915, %v955, %v956
      %v958 = vrot.slane %v670, 1
      %v959 = vrot.slane %v687, 1
      %v960 = vsel %vm915, %v958, %v959
      %v961 = vrot.slane %v671, 1
      %v962 = vrot.slane %v688, 1
      %v963 = vsel %vm915, %v961, %v962
      %v965 = vshrl.u32 %v672, 16
      %v967 = vshll.u32 %v672, 16
      %v969 = vrot.slane %v967, 1
      %v970 = vor.u32 %v965, %v969
      %v972 = vshll.u32 %v689, 16
      %v974 = vrot.slane %v972, 1
      %v975 = vsel %vm690, %v970, %v974
      %v978 = vrot.slane %v672, 1
      %v979 = vrot.slane %v689, 1
      %v980 = vsel %vm915, %v978, %v979
      %981 = vrot.lane.b32.xlu0 %v702, 32
      %v982 = vpop.permute.xlu0 %981
      %983 = vrot.lane.b32.xlu0 %v714, 32
      %v984 = vpop.permute.xlu0 %983
      %985 = vrot.lane.b32.xlu0 %v726, 32
      %v986 = vpop.permute.xlu0 %985
      %987 = vrot.lane.b32.xlu0 %v738, 32
      %v988 = vpop.permute.xlu0 %987
      %989 = vrot.lane.b32.xlu0 %v750, 32
      %v990 = vpop.permute.xlu0 %989
      %991 = vrot.lane.b32.xlu0 %v762, 32
      %v992 = vpop.permute.xlu0 %991
      %993 = vrot.lane.b32.xlu0 %v774, 32
      %v994 = vpop.permute.xlu0 %993
      %995 = vrot.lane.b32.xlu0 %v786, 32
      %v996 = vpop.permute.xlu0 %995
      %997 = vrot.lane.b32.xlu0 %v798, 32
      %v998 = vpop.permute.xlu0 %997
      %999 = vrot.lane.b32.xlu0 %v810, 32
      %v1000 = vpop.permute.xlu0 %999
      %1001 = vrot.lane.b32.xlu0 %v822, 32
      %v1002 = vpop.permute.xlu0 %1001
      %1003 = vrot.lane.b32.xlu0 %v834, 32
      %v1004 = vpop.permute.xlu0 %1003
      %1005 = vrot.lane.b32.xlu0 %v846, 32
      %v1006 = vpop.permute.xlu0 %1005
      %1007 = vrot.lane.b32.xlu0 %v858, 32
      %v1008 = vpop.permute.xlu0 %1007
      %1009 = vrot.lane.b32.xlu0 %v870, 32
      %v1010 = vpop.permute.xlu0 %1009
      %1011 = vrot.lane.b32.xlu0 %v882, 32
      %v1012 = vpop.permute.xlu0 %1011
      %1013 = vrot.lane.b32.xlu0 %v918, 64
      %v1014 = vpop.permute.xlu0 %1013
      %1015 = vrot.lane.b32.xlu0 %v921, 64
      %v1016 = vpop.permute.xlu0 %1015
      %1017 = vrot.lane.b32.xlu0 %v924, 64
      %v1018 = vpop.permute.xlu0 %1017
      %1019 = vrot.lane.b32.xlu0 %v927, 64
      %v1020 = vpop.permute.xlu0 %1019
      %1021 = vrot.lane.b32.xlu0 %v930, 64
      %v1022 = vpop.permute.xlu0 %1021
      %1023 = vrot.lane.b32.xlu0 %v933, 64
      %v1024 = vpop.permute.xlu0 %1023
      %1025 = vrot.lane.b32.xlu0 %v936, 64
      %v1026 = vpop.permute.xlu0 %1025
      %1027 = vrot.lane.b32.xlu0 %v939, 64
      %v1028 = vpop.permute.xlu0 %1027
      %1029 = vrot.lane.b32.xlu0 %v942, 64
      %v1030 = vpop.permute.xlu0 %1029
      %1031 = vrot.lane.b32.xlu0 %v945, 64
      %v1032 = vpop.permute.xlu0 %1031
      %1033 = vrot.lane.b32.xlu0 %v948, 64
      %v1034 = vpop.permute.xlu0 %1033
      %1035 = vrot.lane.b32.xlu0 %v951, 64
      %v1036 = vpop.permute.xlu0 %1035
      %1037 = vrot.lane.b32.xlu0 %v954, 64
      %v1038 = vpop.permute.xlu0 %1037
      %1039 = vrot.lane.b32.xlu0 %v957, 64
      %v1040 = vpop.permute.xlu0 %1039
      %1041 = vrot.lane.b32.xlu0 %v960, 64
      %v1042 = vpop.permute.xlu0 %1041
      %1043 = vrot.lane.b32.xlu0 %v963, 64
      %v1044 = vpop.permute.xlu0 %1043
      %1045 = vrot.lane.b32.xlu0 %v657, 96
      %v1046 = vpop.permute.xlu0 %1045
      %1047 = vrot.lane.b32.xlu0 %v658, 96
      %v1048 = vpop.permute.xlu0 %1047
      %1049 = vrot.lane.b32.xlu0 %v659, 96
      %v1050 = vpop.permute.xlu0 %1049
      %1051 = vrot.lane.b32.xlu0 %v660, 96
      %v1052 = vpop.permute.xlu0 %1051
      %1053 = vrot.lane.b32.xlu0 %v661, 96
      %v1054 = vpop.permute.xlu0 %1053
      %1055 = vrot.lane.b32.xlu0 %v662, 96
      %v1056 = vpop.permute.xlu0 %1055
      %1057 = vrot.lane.b32.xlu0 %v663, 96
      %v1058 = vpop.permute.xlu0 %1057
      %1059 = vrot.lane.b32.xlu0 %v664, 96
      %v1060 = vpop.permute.xlu0 %1059
      %1061 = vrot.lane.b32.xlu0 %v665, 96
      %v1062 = vpop.permute.xlu0 %1061
      %1063 = vrot.lane.b32.xlu0 %v666, 96
      %v1064 = vpop.permute.xlu0 %1063
      %1065 = vrot.lane.b32.xlu0 %v667, 96
      %v1066 = vpop.permute.xlu0 %1065
      %1067 = vrot.lane.b32.xlu0 %v668, 96
      %v1068 = vpop.permute.xlu0 %1067
      %1069 = vrot.lane.b32.xlu0 %v669, 96
      %v1070 = vpop.permute.xlu0 %1069
      %1071 = vrot.lane.b32.xlu0 %v670, 96
      %v1072 = vpop.permute.xlu0 %1071
      %1073 = vrot.lane.b32.xlu0 %v671, 96
      %v1074 = vpop.permute.xlu0 %1073
      %1075 = vrot.lane.b32.xlu0 %v672, 96
      %v1076 = vpop.permute.xlu0 %1075
      %1077 = vrot.lane.b32.xlu0 %v921, 32
      %v1078 = vpop.permute.xlu0 %1077
      %1079 = vrot.lane.b32.xlu0 %v924, 32
      %v1080 = vpop.permute.xlu0 %1079
      %1081 = vrot.lane.b32.xlu0 %v927, 32
      %v1082 = vpop.permute.xlu0 %1081
      %1083 = vrot.lane.b32.xlu0 %v930, 32
      %v1084 = vpop.permute.xlu0 %1083
      %1085 = vrot.lane.b32.xlu0 %v933, 32
      %v1086 = vpop.permute.xlu0 %1085
      %1087 = vrot.lane.b32.xlu0 %v936, 32
      %v1088 = vpop.permute.xlu0 %1087
      %1089 = vrot.lane.b32.xlu0 %v939, 32
      %v1090 = vpop.permute.xlu0 %1089
      %1091 = vrot.lane.b32.xlu0 %v942, 32
      %v1092 = vpop.permute.xlu0 %1091
      %1093 = vrot.lane.b32.xlu0 %v945, 32
      %v1094 = vpop.permute.xlu0 %1093
      %1095 = vrot.lane.b32.xlu0 %v948, 32
      %v1096 = vpop.permute.xlu0 %1095
      %1097 = vrot.lane.b32.xlu0 %v951, 32
      %v1098 = vpop.permute.xlu0 %1097
      %1099 = vrot.lane.b32.xlu0 %v954, 32
      %v1100 = vpop.permute.xlu0 %1099
      %1101 = vrot.lane.b32.xlu0 %v957, 32
      %v1102 = vpop.permute.xlu0 %1101
      %1103 = vrot.lane.b32.xlu0 %v960, 32
      %v1104 = vpop.permute.xlu0 %1103
      %1105 = vrot.lane.b32.xlu0 %v963, 32
      %v1106 = vpop.permute.xlu0 %1105
      %1107 = vrot.lane.b32.xlu0 %v980, 32
      %v1108 = vpop.permute.xlu0 %1107
      %vm1109 = vcmask 261120
      %v1111 = vsel %vm1109, %v656, %v982
      %v1113 = vsel %vm1109, %v657, %v984
      %v1115 = vsel %vm1109, %v658, %v986
      %v1117 = vsel %vm1109, %v659, %v988
      %v1119 = vsel %vm1109, %v660, %v990
      %v1121 = vsel %vm1109, %v661, %v992
      %v1123 = vsel %vm1109, %v662, %v994
      %v1125 = vsel %vm1109, %v663, %v996
      %v1127 = vsel %vm1109, %v664, %v998
      %v1129 = vsel %vm1109, %v665, %v1000
      %v1131 = vsel %vm1109, %v666, %v1002
      %v1133 = vsel %vm1109, %v667, %v1004
      %v1135 = vsel %vm1109, %v668, %v1006
      %v1137 = vsel %vm1109, %v669, %v1008
      %v1139 = vsel %vm1109, %v670, %v1010
      %v1141 = vsel %vm1109, %v671, %v1012
      %vm1142 = vcmask 523264
      %v1144 = vsel %vm1142, %v1111, %v1014
      %v1146 = vsel %vm1142, %v1113, %v1016
      %v1148 = vsel %vm1142, %v1115, %v1018
      %v1150 = vsel %vm1142, %v1117, %v1020
      %v1152 = vsel %vm1142, %v1119, %v1022
      %v1154 = vsel %vm1142, %v1121, %v1024
      %v1156 = vsel %vm1142, %v1123, %v1026
      %v1158 = vsel %vm1142, %v1125, %v1028
      %v1160 = vsel %vm1142, %v1127, %v1030
      %v1162 = vsel %vm1142, %v1129, %v1032
      %v1164 = vsel %vm1142, %v1131, %v1034
      %v1166 = vsel %vm1142, %v1133, %v1036
      %v1168 = vsel %vm1142, %v1135, %v1038
      %v1170 = vsel %vm1142, %v1137, %v1040
      %v1172 = vsel %vm1142, %v1139, %v1042
      %v1174 = vsel %vm1142, %v1141, %v1044
      %vm1175 = vcmask 785408
      %v1177 = vsel %vm1175, %v1144, %v1046
      %v1180 = vsel %vm1175, %v1146, %v1048
      %v1183 = vsel %vm1175, %v1148, %v1050
      %v1186 = vsel %vm1175, %v1150, %v1052
      %v1189 = vsel %vm1175, %v1152, %v1054
      %v1192 = vsel %vm1175, %v1154, %v1056
      %v1195 = vsel %vm1175, %v1156, %v1058
      %v1198 = vsel %vm1175, %v1158, %v1060
      %v1201 = vsel %vm1175, %v1160, %v1062
      %v1204 = vsel %vm1175, %v1162, %v1064
      %v1207 = vsel %vm1175, %v1164, %v1066
      %v1210 = vsel %vm1175, %v1166, %v1068
      %v1213 = vsel %vm1175, %v1168, %v1070
      %v1216 = vsel %vm1175, %v1170, %v1072
      %v1219 = vsel %vm1175, %v1172, %v1074
      %v1222 = vsel %vm1175, %v1174, %v1076
      %v1226 = vsel %vm1109, %v714, %v1078
      %v1229 = vsel %vm1109, %v726, %v1080
      %v1232 = vsel %vm1109, %v738, %v1082
      %v1235 = vsel %vm1109, %v750, %v1084
      %v1238 = vsel %vm1109, %v762, %v1086
      %v1241 = vsel %vm1109, %v774, %v1088
      %v1244 = vsel %vm1109, %v786, %v1090
      %v1247 = vsel %vm1109, %v798, %v1092
      %v1250 = vsel %vm1109, %v810, %v1094
      %v1253 = vsel %vm1109, %v822, %v1096
      %v1256 = vsel %vm1109, %v834, %v1098
      %v1259 = vsel %vm1109, %v846, %v1100
      %v1262 = vsel %vm1109, %v858, %v1102
      %v1265 = vsel %vm1109, %v870, %v1104
      %v1268 = vsel %vm1109, %v882, %v1106
      %v1271 = vsel %vm1109, %v975, %v1108
      %1272 = vrot.lane.b32.xlu0 %v513, 96
      %v1273 = vpop.permute.xlu0 %1272
      %1274 = vrot.lane.b32.xlu0 %v510, 96
      %v1275 = vpop.permute.xlu0 %1274
      %1276 = vrot.lane.b32.xlu0 %v520, 96
      %v1277 = vpop.permute.xlu0 %1276
      %1278 = vrot.lane.b32.xlu0 %v517, 96
      %v1279 = vpop.permute.xlu0 %1278
      %1280 = vrot.lane.b32.xlu0 %v527, 96
      %v1281 = vpop.permute.xlu0 %1280
      %1282 = vrot.lane.b32.xlu0 %v524, 96
      %v1283 = vpop.permute.xlu0 %1282
      %1284 = vrot.lane.b32.xlu0 %v534, 96
      %v1285 = vpop.permute.xlu0 %1284
      %1286 = vrot.lane.b32.xlu0 %v531, 96
      %v1287 = vpop.permute.xlu0 %1286
      %1288 = vrot.lane.b32.xlu0 %v541, 96
      %v1289 = vpop.permute.xlu0 %1288
      %1290 = vrot.lane.b32.xlu0 %v538, 96
      %v1291 = vpop.permute.xlu0 %1290
      %1292 = vrot.lane.b32.xlu0 %v548, 96
      %v1293 = vpop.permute.xlu0 %1292
      %1294 = vrot.lane.b32.xlu0 %v545, 96
      %v1295 = vpop.permute.xlu0 %1294
      %1296 = vrot.lane.b32.xlu0 %v555, 96
      %v1297 = vpop.permute.xlu0 %1296
      %1298 = vrot.lane.b32.xlu0 %v552, 96
      %v1299 = vpop.permute.xlu0 %1298
      %1300 = vrot.lane.b32.xlu0 %v562, 96
      %v1301 = vpop.permute.xlu0 %1300
      %1302 = vrot.lane.b32.xlu0 %v559, 96
      %v1303 = vpop.permute.xlu0 %1302
      %1304 = vrot.lane.b32.xlu0 %v569, 96
      %v1305 = vpop.permute.xlu0 %1304
      %1306 = vrot.lane.b32.xlu0 %v566, 96
      %v1307 = vpop.permute.xlu0 %1306
      %1308 = vrot.lane.b32.xlu0 %v576, 96
      %v1309 = vpop.permute.xlu0 %1308
      %1310 = vrot.lane.b32.xlu0 %v573, 96
      %v1311 = vpop.permute.xlu0 %1310
      %1312 = vrot.lane.b32.xlu0 %v583, 96
      %v1313 = vpop.permute.xlu0 %1312
      %1314 = vrot.lane.b32.xlu0 %v580, 96
      %v1315 = vpop.permute.xlu0 %1314
      %1316 = vrot.lane.b32.xlu0 %v590, 96
      %v1317 = vpop.permute.xlu0 %1316
      %1318 = vrot.lane.b32.xlu0 %v587, 96
      %v1319 = vpop.permute.xlu0 %1318
      %1320 = vrot.lane.b32.xlu0 %v597, 96
      %v1321 = vpop.permute.xlu0 %1320
      %1322 = vrot.lane.b32.xlu0 %v594, 96
      %v1323 = vpop.permute.xlu0 %1322
      %1324 = vrot.lane.b32.xlu0 %v604, 96
      %v1325 = vpop.permute.xlu0 %1324
      %1326 = vrot.lane.b32.xlu0 %v601, 96
      %v1327 = vpop.permute.xlu0 %1326
      %1328 = vrot.lane.b32.xlu0 %v611, 96
      %v1329 = vpop.permute.xlu0 %1328
      %1330 = vrot.lane.b32.xlu0 %v608, 96
      %v1331 = vpop.permute.xlu0 %1330
      %1332 = vrot.lane.b32.xlu0 %v618, 96
      %v1333 = vpop.permute.xlu0 %1332
      %1334 = vrot.lane.b32.xlu0 %v615, 96
      %v1335 = vpop.permute.xlu0 %1334
      %v1352 = vsel %vm655, 0, %v1273
      %v1353 = vsel %vm655, 0, %v1277
      %v1354 = vsel %vm655, 0, %v1281
      %v1355 = vsel %vm655, 0, %v1285
      %v1356 = vsel %vm655, 0, %v1289
      %v1357 = vsel %vm655, 0, %v1293
      %v1358 = vsel %vm655, 0, %v1297
      %v1359 = vsel %vm655, 0, %v1301
      %v1360 = vsel %vm655, 0, %v1305
      %v1361 = vsel %vm655, 0, %v1309
      %v1362 = vsel %vm655, 0, %v1313
      %v1363 = vsel %vm655, 0, %v1317
      %v1364 = vsel %vm655, 0, %v1321
      %v1365 = vsel %vm655, 0, %v1325
      %v1366 = vsel %vm655, 0, %v1329
      %v1367 = vsel %vm655, 0, %v1333
      %v1369 = vshrl.u32 %v1352, 16
      %v1371 = vshll.u32 %v1352, 16
      %v1373 = vrot.slane %v1371, 1
      %v1374 = vor.u32 %v1369, %v1373
      %v1376 = vshll.u32 %v1275, 16
      %v1378 = vrot.slane %v1376, 1
      %v1379 = vsel %vm690, %v1374, %v1378
      %v1381 = vshrl.u32 %v1353, 16
      %v1383 = vshll.u32 %v1353, 16
      %v1385 = vrot.slane %v1383, 1
      %v1386 = vor.u32 %v1381, %v1385
      %v1388 = vshll.u32 %v1279, 16
      %v1390 = vrot.slane %v1388, 1
      %v1391 = vsel %vm690, %v1386, %v1390
      %v1393 = vshrl.u32 %v1354, 16
      %v1395 = vshll.u32 %v1354, 16
      %v1397 = vrot.slane %v1395, 1
      %v1398 = vor.u32 %v1393, %v1397
      %v1400 = vshll.u32 %v1283, 16
      %v1402 = vrot.slane %v1400, 1
      %v1403 = vsel %vm690, %v1398, %v1402
      %v1405 = vshrl.u32 %v1355, 16
      %v1407 = vshll.u32 %v1355, 16
      %v1409 = vrot.slane %v1407, 1
      %v1410 = vor.u32 %v1405, %v1409
      %v1412 = vshll.u32 %v1287, 16
      %v1414 = vrot.slane %v1412, 1
      %v1415 = vsel %vm690, %v1410, %v1414
      %v1417 = vshrl.u32 %v1356, 16
      %v1419 = vshll.u32 %v1356, 16
      %v1421 = vrot.slane %v1419, 1
      %v1422 = vor.u32 %v1417, %v1421
      %v1424 = vshll.u32 %v1291, 16
      %v1426 = vrot.slane %v1424, 1
      %v1427 = vsel %vm690, %v1422, %v1426
      %v1429 = vshrl.u32 %v1357, 16
      %v1431 = vshll.u32 %v1357, 16
      %v1433 = vrot.slane %v1431, 1
      %v1434 = vor.u32 %v1429, %v1433
      %v1436 = vshll.u32 %v1295, 16
      %v1438 = vrot.slane %v1436, 1
      %v1439 = vsel %vm690, %v1434, %v1438
      %v1441 = vshrl.u32 %v1358, 16
      %v1443 = vshll.u32 %v1358, 16
      %v1445 = vrot.slane %v1443, 1
      %v1446 = vor.u32 %v1441, %v1445
      %v1448 = vshll.u32 %v1299, 16
      %v1450 = vrot.slane %v1448, 1
      %v1451 = vsel %vm690, %v1446, %v1450
      %v1453 = vshrl.u32 %v1359, 16
      %v1455 = vshll.u32 %v1359, 16
      %v1457 = vrot.slane %v1455, 1
      %v1458 = vor.u32 %v1453, %v1457
      %v1460 = vshll.u32 %v1303, 16
      %v1462 = vrot.slane %v1460, 1
      %v1463 = vsel %vm690, %v1458, %v1462
      %v1465 = vshrl.u32 %v1360, 16
      %v1467 = vshll.u32 %v1360, 16
      %v1469 = vrot.slane %v1467, 1
      %v1470 = vor.u32 %v1465, %v1469
      %v1472 = vshll.u32 %v1307, 16
      %v1474 = vrot.slane %v1472, 1
      %v1475 = vsel %vm690, %v1470, %v1474
      %v1477 = vshrl.u32 %v1361, 16
      %v1479 = vshll.u32 %v1361, 16
      %v1481 = vrot.slane %v1479, 1
      %v1482 = vor.u32 %v1477, %v1481
      %v1484 = vshll.u32 %v1311, 16
      %v1486 = vrot.slane %v1484, 1
      %v1487 = vsel %vm690, %v1482, %v1486
      %v1489 = vshrl.u32 %v1362, 16
      %v1491 = vshll.u32 %v1362, 16
      %v1493 = vrot.slane %v1491, 1
      %v1494 = vor.u32 %v1489, %v1493
      %v1496 = vshll.u32 %v1315, 16
      %v1498 = vrot.slane %v1496, 1
      %v1499 = vsel %vm690, %v1494, %v1498
      %v1501 = vshrl.u32 %v1363, 16
      %v1503 = vshll.u32 %v1363, 16
      %v1505 = vrot.slane %v1503, 1
      %v1506 = vor.u32 %v1501, %v1505
      %v1508 = vshll.u32 %v1319, 16
      %v1510 = vrot.slane %v1508, 1
      %v1511 = vsel %vm690, %v1506, %v1510
      %v1513 = vshrl.u32 %v1364, 16
      %v1515 = vshll.u32 %v1364, 16
      %v1517 = vrot.slane %v1515, 1
      %v1518 = vor.u32 %v1513, %v1517
      %v1520 = vshll.u32 %v1323, 16
      %v1522 = vrot.slane %v1520, 1
      %v1523 = vsel %vm690, %v1518, %v1522
      %v1525 = vshrl.u32 %v1365, 16
      %v1527 = vshll.u32 %v1365, 16
      %v1529 = vrot.slane %v1527, 1
      %v1530 = vor.u32 %v1525, %v1529
      %v1532 = vshll.u32 %v1327, 16
      %v1534 = vrot.slane %v1532, 1
      %v1535 = vsel %vm690, %v1530, %v1534
      %v1537 = vshrl.u32 %v1366, 16
      %v1539 = vshll.u32 %v1366, 16
      %v1541 = vrot.slane %v1539, 1
      %v1542 = vor.u32 %v1537, %v1541
      %v1544 = vshll.u32 %v1331, 16
      %v1546 = vrot.slane %v1544, 1
      %v1547 = vsel %vm690, %v1542, %v1546
      %v1549 = vshrl.u32 %v1367, 16
      %v1551 = vshll.u32 %v1367, 16
      %v1553 = vrot.slane %v1551, 1
      %v1554 = vor.u32 %v1549, %v1553
      %v1556 = vshll.u32 %v1335, 16
      %v1558 = vrot.slane %v1556, 1
      %v1559 = vsel %vm690, %v1554, %v1558
      %1560 = vrot.lane.b32.xlu0 %v1379, 32
      %v1561 = vpop.permute.xlu0 %1560
      %1562 = vrot.lane.b32.xlu0 %v1391, 32
      %v1563 = vpop.permute.xlu0 %1562
      %1564 = vrot.lane.b32.xlu0 %v1403, 32
      %v1565 = vpop.permute.xlu0 %1564
      %1566 = vrot.lane.b32.xlu0 %v1415, 32
      %v1567 = vpop.permute.xlu0 %1566
      %1568 = vrot.lane.b32.xlu0 %v1427, 32
      %v1569 = vpop.permute.xlu0 %1568
      %1570 = vrot.lane.b32.xlu0 %v1439, 32
      %v1571 = vpop.permute.xlu0 %1570
      %1572 = vrot.lane.b32.xlu0 %v1451, 32
      %v1573 = vpop.permute.xlu0 %1572
      %1574 = vrot.lane.b32.xlu0 %v1463, 32
      %v1575 = vpop.permute.xlu0 %1574
      %1576 = vrot.lane.b32.xlu0 %v1475, 32
      %v1577 = vpop.permute.xlu0 %1576
      %1578 = vrot.lane.b32.xlu0 %v1487, 32
      %v1579 = vpop.permute.xlu0 %1578
      %1580 = vrot.lane.b32.xlu0 %v1499, 32
      %v1581 = vpop.permute.xlu0 %1580
      %1582 = vrot.lane.b32.xlu0 %v1511, 32
      %v1583 = vpop.permute.xlu0 %1582
      %1584 = vrot.lane.b32.xlu0 %v1523, 32
      %v1585 = vpop.permute.xlu0 %1584
      %1586 = vrot.lane.b32.xlu0 %v1535, 32
      %v1587 = vpop.permute.xlu0 %1586
      %1588 = vrot.lane.b32.xlu0 %v1547, 32
      %v1589 = vpop.permute.xlu0 %1588
      %1590 = vrot.lane.b32.xlu0 %v1559, 32
      %v1591 = vpop.permute.xlu0 %1590
      %v1593 = vsel %vm1109, %v1352, %v1561
      %v1595 = vsel %vm1109, %v1353, %v1563
      %v1597 = vsel %vm1109, %v1354, %v1565
      %v1599 = vsel %vm1109, %v1355, %v1567
      %v1601 = vsel %vm1109, %v1356, %v1569
      %v1603 = vsel %vm1109, %v1357, %v1571
      %v1605 = vsel %vm1109, %v1358, %v1573
      %v1607 = vsel %vm1109, %v1359, %v1575
      %v1609 = vsel %vm1109, %v1360, %v1577
      %v1611 = vsel %vm1109, %v1361, %v1579
      %v1613 = vsel %vm1109, %v1362, %v1581
      %v1615 = vsel %vm1109, %v1363, %v1583
      %v1617 = vsel %vm1109, %v1364, %v1585
      %v1619 = vsel %vm1109, %v1365, %v1587
      %v1621 = vsel %vm1109, %v1366, %v1589
      %v1623 = vsel %vm1109, %v1367, %v1591
      %v1624 = vld [vmem:[%s1] sm:$0xf]
      %v1625 = vld [vmem:[%s1 + $0x4] sm:$0xf]
      %v1626 = vld [vmem:[%s1 + $0x8] sm:$0xf]
      %v1627 = vld [vmem:[%s1 + $0xc] sm:$0xf]
      %v1628 = vld [vmem:[%s1 + $0x10] sm:$0xf]
      %v1629 = vld [vmem:[%s1 + $0x14] sm:$0xf]
      %v1630 = vld [vmem:[%s1 + $0x18] sm:$0xf]
      %v1631 = vld [vmem:[%s1 + $0x1c] sm:$0xf]
      %v1632 = vld [vmem:[%s1 + $0x20] sm:$0xf]
      %v1633 = vld [vmem:[%s1 + $0x24] sm:$0xf]
      %v1634 = vld [vmem:[%s1 + $0x28] sm:$0xf]
      %v1635 = vld [vmem:[%s1 + $0x2c] sm:$0xf]
      %v1636 = vld [vmem:[%s1 + $0x30] sm:$0xf]
      %v1637 = vld [vmem:[%s1 + $0x34] sm:$0xf]
      %v1638 = vld [vmem:[%s1 + $0x38] sm:$0xf]
      %v1639 = vld [vmem:[%s1 + $0x3c] sm:$0xf]
      %v1640 = vld [vmem:[%s1 + $0x40] sm:$0xf]
      %v1641 = vld [vmem:[%s1 + $0x44] sm:$0xf]
      %v1642 = vld [vmem:[%s1 + $0x48] sm:$0xf]
      %v1643 = vld [vmem:[%s1 + $0x4c] sm:$0xf]
      %v1644 = vld [vmem:[%s1 + $0x50] sm:$0xf]
      %v1645 = vld [vmem:[%s1 + $0x54] sm:$0xf]
      %v1646 = vld [vmem:[%s1 + $0x58] sm:$0xf]
      %v1647 = vld [vmem:[%s1 + $0x5c] sm:$0xf]
      %v1648 = vld [vmem:[%s2] sm:$0x1]
      %v1650 = vlaneseq
      %v1651 = vshrl.u32 %v1650, 7
      %v1652 = vsub.s32 0, %v1651
      %v1653 = vrot.slane %v1648, %v1652
      %v1679 = vunpack.c.l.b16 %v1624
      %v1680 = vunpack.c.l.b16 %v1625
      %v1681 = vunpack.c.l.b16 %v1626
      %v1682 = vunpack.c.l.b16 %v1627
      %v1683 = vunpack.c.l.b16 %v1628
      %v1684 = vunpack.c.l.b16 %v1629
      %v1685 = vunpack.c.l.b16 %v1630
      %v1686 = vunpack.c.l.b16 %v1631
      %v1687 = vunpack.c.l.b16 %v1632
      %v1688 = vunpack.c.l.b16 %v1633
      %v1689 = vunpack.c.l.b16 %v1634
      %v1690 = vunpack.c.l.b16 %v1635
      %v1691 = vunpack.c.l.b16 %v1636
      %v1692 = vunpack.c.l.b16 %v1637
      %v1693 = vunpack.c.l.b16 %v1638
      %v1694 = vunpack.c.l.b16 %v1639
      %v1695 = vunpack.c.l.b16 %v1640
      %v1696 = vunpack.c.l.b16 %v1641
      %v1697 = vunpack.c.l.b16 %v1642
      %v1698 = vunpack.c.l.b16 %v1643
      %v1699 = vunpack.c.l.b16 %v1644
      %v1700 = vunpack.c.l.b16 %v1645
      %v1701 = vunpack.c.l.b16 %v1646
      %v1702 = vunpack.c.l.b16 %v1647
      %v1703 = vpack.c.b16 %v1680, %v1679
      %v1704 = vpack.c.b16 %v1682, %v1681
      %v1705 = vpack.c.b16 %v1684, %v1683
      %v1706 = vpack.c.b16 %v1686, %v1685
      %v1707 = vpack.c.b16 %v1688, %v1687
      %v1708 = vpack.c.b16 %v1690, %v1689
      %v1709 = vpack.c.b16 %v1692, %v1691
      %v1710 = vpack.c.b16 %v1694, %v1693
      %v1711 = vpack.c.b16 %v1696, %v1695
      %v1712 = vpack.c.b16 %v1698, %v1697
      %v1713 = vpack.c.b16 %v1700, %v1699
      %v1714 = vpack.c.b16 %v1702, %v1701
      %v1727 = vsel %vm1142, %v1226, 0
      %v1729 = vsel %vm1142, %v1229, 0
      %v1731 = vsel %vm1142, %v1232, 0
      %v1733 = vsel %vm1142, %v1235, 0
      %v1735 = vsel %vm1142, %v1238, 0
      %v1737 = vsel %vm1142, %v1241, 0
      %v1739 = vsel %vm1142, %v1244, 0
      %v1741 = vsel %vm1142, %v1247, 0
      %v1743 = vsel %vm1142, %v1250, 0
      %v1745 = vsel %vm1142, %v1253, 0
      %v1747 = vsel %vm1142, %v1256, 0
      %v1749 = vsel %vm1142, %v1259, 0
      %v1751 = vsel %vm1142, %v1262, 0
      %v1753 = vsel %vm1142, %v1265, 0
      %v1755 = vsel %vm1142, %v1268, 0
      %v1757 = vsel %vm1142, %v1271, 0
      %1759 = vmatprep.subr.bf16.mxu0 0
      %1760 = vmatpush1.bf16.msra.mxu0 %v1710
      %1761 = vmatprep.subr.bf16.mxu0 0
      %1762 = vmatpush1.bf16.msra.mxu0 %v1709
      %1763 = vmatprep.subr.bf16.mxu0 0
      %1764 = vmatpush1.bf16.msra.mxu0 %v1708
      %1765 = vmatprep.subr.bf16.mxu0 0
      %1766 = vmatpush1.bf16.msra.mxu0 %v1707
      %1767 = vmatprep.subr.bf16.mxu0 0
      %1768 = vmatpush1.bf16.msra.mxu0 %v1706
      %1769 = vmatprep.subr.bf16.mxu0 0
      %1770 = vmatpush1.bf16.msra.mxu0 %v1705
      %1771 = vmatprep.subr.bf16.mxu0 0
      %1772 = vmatpush1.bf16.msra.mxu0 %v1704
      %1773 = vmatprep.subr.bf16.mxu0 0
      %1774 = vmatpush1.bf16.msra.mxu0 %v1703
      %1775 = vmatprep.subr.bf16.mxu0 0
      %1776 = vmatpush2.bf16.msra.mxu0 0
      %1777 = vmatprep.subr.bf16.mxu0 0
      %1778 = vmatpush2.bf16.msra.mxu0 0
      %1779 = vmatprep.subr.bf16.mxu0 0
      %1780 = vmatpush2.bf16.msra.mxu0 0
      %1781 = vmatprep.subr.bf16.mxu0 0
      %1782 = vmatpush2.bf16.msra.mxu0 0
      %1783 = vmatprep.subr.bf16.mxu0 0
      %1784 = vmatpush2.bf16.msra.mxu0 %v1714
      %1785 = vmatprep.subr.bf16.mxu0 0
      %1786 = vmatpush2.bf16.msra.mxu0 %v1713
      %1787 = vmatprep.subr.bf16.mxu0 0
      %1788 = vmatpush2.bf16.msra.mxu0 %v1712
      %1789 = vmatprep.subr.bf16.mxu0 0
      %1790 = vmatpush2.bf16.msra.mxu0 %v1711
      %1791 = vmatprep.mubr.bf16.mxu0 %v1727
      %1792 = vmatmul.mubr.bf16.gmra.mxu0 %v1177
      %v1793 = vpop.f32.mrf.mxu0
      %v1794 = vadd.f32 %v1653, %v1793
      %v1795 = vpop.f32.mrf.mxu0
      %v1796 = vpop.f32.mrf.mxu0
      %v1797 = vadd.f32 %v1653, %v1796
      %v1798 = vpop.f32.mrf.mxu0
      %1799 = vmatprep.mubr.bf16.mxu0 %v1729
      %1800 = vmatmul.mubr.bf16.gmra.mxu0 %v1180
      %v1801 = vpop.f32.mrf.mxu0
      %v1802 = vadd.f32 %v1653, %v1801
      %v1803 = vpop.f32.mrf.mxu0
      %v1804 = vpop.f32.mrf.mxu0
      %v1805 = vadd.f32 %v1653, %v1804
      %v1806 = vpop.f32.mrf.mxu0
      %1807 = vmatprep.mubr.bf16.mxu0 %v1731
      %1808 = vmatmul.mubr.bf16.gmra.mxu0 %v1183
      %v1809 = vpop.f32.mrf.mxu0
      %v1810 = vadd.f32 %v1653, %v1809
      %v1811 = vpop.f32.mrf.mxu0
      %v1812 = vpop.f32.mrf.mxu0
      %v1813 = vadd.f32 %v1653, %v1812
      %v1814 = vpop.f32.mrf.mxu0
      %1815 = vmatprep.mubr.bf16.mxu0 %v1733
      %1816 = vmatmul.mubr.bf16.gmra.mxu0 %v1186
      %v1817 = vpop.f32.mrf.mxu0
      %v1818 = vadd.f32 %v1653, %v1817
      %v1819 = vpop.f32.mrf.mxu0
      %v1820 = vpop.f32.mrf.mxu0
      %v1821 = vadd.f32 %v1653, %v1820
      %v1822 = vpop.f32.mrf.mxu0
      %1823 = vmatprep.mubr.bf16.mxu0 %v1735
      %1824 = vmatmul.mubr.bf16.gmra.mxu0 %v1189
      %v1825 = vpop.f32.mrf.mxu0
      %v1826 = vadd.f32 %v1653, %v1825
      %v1827 = vpop.f32.mrf.mxu0
      %v1828 = vpop.f32.mrf.mxu0
      %v1829 = vadd.f32 %v1653, %v1828
      %v1830 = vpop.f32.mrf.mxu0
      %1831 = vmatprep.mubr.bf16.mxu0 %v1737
      %1832 = vmatmul.mubr.bf16.gmra.mxu0 %v1192
      %v1833 = vpop.f32.mrf.mxu0
      %v1834 = vadd.f32 %v1653, %v1833
      %v1835 = vpop.f32.mrf.mxu0
      %v1836 = vpop.f32.mrf.mxu0
      %v1837 = vadd.f32 %v1653, %v1836
      %v1838 = vpop.f32.mrf.mxu0
      %1839 = vmatprep.mubr.bf16.mxu0 %v1739
      %1840 = vmatmul.mubr.bf16.gmra.mxu0 %v1195
      %v1841 = vpop.f32.mrf.mxu0
      %v1842 = vadd.f32 %v1653, %v1841
      %v1843 = vpop.f32.mrf.mxu0
      %v1844 = vpop.f32.mrf.mxu0
      %v1845 = vadd.f32 %v1653, %v1844
      %v1846 = vpop.f32.mrf.mxu0
      %1847 = vmatprep.mubr.bf16.mxu0 %v1741
      %1848 = vmatmul.mubr.bf16.gmra.mxu0 %v1198
      %v1849 = vpop.f32.mrf.mxu0
      %v1850 = vadd.f32 %v1653, %v1849
      %v1851 = vpop.f32.mrf.mxu0
      %v1852 = vpop.f32.mrf.mxu0
      %v1853 = vadd.f32 %v1653, %v1852
      %v1854 = vpop.f32.mrf.mxu0
      %1855 = vmatprep.mubr.bf16.mxu0 %v1743
      %1856 = vmatmul.mubr.bf16.gmra.mxu0 %v1201
      %v1857 = vpop.f32.mrf.mxu0
      %v1858 = vadd.f32 %v1653, %v1857
      %v1859 = vpop.f32.mrf.mxu0
      %v1860 = vpop.f32.mrf.mxu0
      %v1861 = vadd.f32 %v1653, %v1860
      %v1862 = vpop.f32.mrf.mxu0
      %1863 = vmatprep.mubr.bf16.mxu0 %v1745
      %1864 = vmatmul.mubr.bf16.gmra.mxu0 %v1204
      %v1865 = vpop.f32.mrf.mxu0
      %v1866 = vadd.f32 %v1653, %v1865
      %v1867 = vpop.f32.mrf.mxu0
      %v1868 = vpop.f32.mrf.mxu0
      %v1869 = vadd.f32 %v1653, %v1868
      %v1870 = vpop.f32.mrf.mxu0
      %1871 = vmatprep.mubr.bf16.mxu0 %v1747
      %1872 = vmatmul.mubr.bf16.gmra.mxu0 %v1207
      %v1873 = vpop.f32.mrf.mxu0
      %v1874 = vadd.f32 %v1653, %v1873
      %v1875 = vpop.f32.mrf.mxu0
      %v1876 = vpop.f32.mrf.mxu0
      %v1877 = vadd.f32 %v1653, %v1876
      %v1878 = vpop.f32.mrf.mxu0
      %1879 = vmatprep.mubr.bf16.mxu0 %v1749
      %1880 = vmatmul.mubr.bf16.gmra.mxu0 %v1210
      %v1881 = vpop.f32.mrf.mxu0
      %v1882 = vadd.f32 %v1653, %v1881
      %v1883 = vpop.f32.mrf.mxu0
      %v1884 = vpop.f32.mrf.mxu0
      %v1885 = vadd.f32 %v1653, %v1884
      %v1886 = vpop.f32.mrf.mxu0
      %1887 = vmatprep.mubr.bf16.mxu0 %v1751
      %1888 = vmatmul.mubr.bf16.gmra.mxu0 %v1213
      %v1889 = vpop.f32.mrf.mxu0
      %v1890 = vadd.f32 %v1653, %v1889
      %v1891 = vpop.f32.mrf.mxu0
      %v1892 = vpop.f32.mrf.mxu0
      %v1893 = vadd.f32 %v1653, %v1892
      %v1894 = vpop.f32.mrf.mxu0
      %1895 = vmatprep.mubr.bf16.mxu0 %v1753
      %1896 = vmatmul.mubr.bf16.gmra.mxu0 %v1216
      %v1897 = vpop.f32.mrf.mxu0
      %v1898 = vadd.f32 %v1653, %v1897
      %v1899 = vpop.f32.mrf.mxu0
      %v1900 = vpop.f32.mrf.mxu0
      %v1901 = vadd.f32 %v1653, %v1900
      %v1902 = vpop.f32.mrf.mxu0
      %1903 = vmatprep.mubr.bf16.mxu0 %v1755
      %1904 = vmatmul.mubr.bf16.gmra.mxu0 %v1219
      %v1905 = vpop.f32.mrf.mxu0
      %v1906 = vadd.f32 %v1653, %v1905
      %v1907 = vpop.f32.mrf.mxu0
      %v1908 = vpop.f32.mrf.mxu0
      %v1909 = vadd.f32 %v1653, %v1908
      %v1910 = vpop.f32.mrf.mxu0
      %1911 = vmatprep.mubr.bf16.mxu0 %v1757
      %1912 = vmatmul.mubr.bf16.gmra.mxu0 %v1222
      %v1913 = vpop.f32.mrf.mxu0
      %v1914 = vadd.f32 %v1653, %v1913
      %v1915 = vpop.f32.mrf.mxu0
      %v1916 = vpop.f32.mrf.mxu0
      %v1917 = vadd.f32 %v1653, %v1916
      %v1918 = vpop.f32.mrf.mxu0
      %1919 = vdwg.mxu0
      %v1920 = vld [vmem:[%s3] sm:$0xf]
      %v1921 = vld [vmem:[%s3 + $0x4] sm:$0xf]
      %v1922 = vld [vmem:[%s3 + $0x8] sm:$0xf]
      %v1923 = vld [vmem:[%s3 + $0xc] sm:$0xf]
      %v1924 = vld [vmem:[%s3 + $0x10] sm:$0xf]
      %v1925 = vld [vmem:[%s3 + $0x14] sm:$0xf]
      %v1926 = vld [vmem:[%s3 + $0x18] sm:$0xf]
      %v1927 = vld [vmem:[%s3 + $0x1c] sm:$0xf]
      %v1928 = vld [vmem:[%s4] sm:$0x1]
      %v1930 = vlaneseq
      %v1931 = vshrl.u32 %v1930, 7
      %v1932 = vsub.s32 0, %v1931
      %v1933 = vrot.slane %v1928, %v1932
      %v1943 = vunpack.c.l.b16 %v1920
      %v1944 = vunpack.c.l.b16 %v1921
      %v1945 = vunpack.c.l.b16 %v1922
      %v1946 = vunpack.c.l.b16 %v1923
      %v1947 = vunpack.c.l.b16 %v1924
      %v1948 = vunpack.c.l.b16 %v1925
      %v1949 = vunpack.c.l.b16 %v1926
      %v1950 = vunpack.c.l.b16 %v1927
      %v1951 = vpack.c.b16 %v1944, %v1943
      %v1952 = vpack.c.b16 %v1946, %v1945
      %v1953 = vpack.c.b16 %v1948, %v1947
      %v1954 = vpack.c.b16 %v1950, %v1949
      %v1959 = vsel %vm1142, %v1593, 0
      %v1961 = vsel %vm1142, %v1595, 0
      %v1963 = vsel %vm1142, %v1597, 0
      %v1965 = vsel %vm1142, %v1599, 0
      %v1967 = vsel %vm1142, %v1601, 0
      %v1969 = vsel %vm1142, %v1603, 0
      %v1971 = vsel %vm1142, %v1605, 0
      %v1973 = vsel %vm1142, %v1607, 0
      %v1975 = vsel %vm1142, %v1609, 0
      %v1977 = vsel %vm1142, %v1611, 0
      %v1979 = vsel %vm1142, %v1613, 0
      %v1981 = vsel %vm1142, %v1615, 0
      %v1983 = vsel %vm1142, %v1617, 0
      %v1985 = vsel %vm1142, %v1619, 0
      %v1987 = vsel %vm1142, %v1621, 0
      %v1989 = vsel %vm1142, %v1623, 0
      %1991 = vmatprep.subr.bf16.mxu0 0
      %1992 = vmatpush1.bf16.msra.mxu0 0
      %1993 = vmatprep.subr.bf16.mxu0 0
      %1994 = vmatpush1.bf16.msra.mxu0 0
      %1995 = vmatprep.subr.bf16.mxu0 0
      %1996 = vmatpush1.bf16.msra.mxu0 0
      %1997 = vmatprep.subr.bf16.mxu0 0
      %1998 = vmatpush1.bf16.msra.mxu0 0
      %1999 = vmatprep.subr.bf16.mxu0 0
      %2000 = vmatpush1.bf16.msra.mxu0 %v1954
      %2001 = vmatprep.subr.bf16.mxu0 0
      %2002 = vmatpush1.bf16.msra.mxu0 %v1953
      %2003 = vmatprep.subr.bf16.mxu0 0
      %2004 = vmatpush1.bf16.msra.mxu0 %v1952
      %2005 = vmatprep.subr.bf16.mxu0 0
      %2006 = vmatpush1.bf16.msra.mxu0 %v1951
      %2007 = vmatprep.subr.bf16.mxu0 0
      %2008 = vmatpush2.bf16.msra.mxu0 0
      %2009 = vmatprep.subr.bf16.mxu0 0
      %2010 = vmatpush2.bf16.msra.mxu0 0
      %2011 = vmatprep.subr.bf16.mxu0 0
      %2012 = vmatpush2.bf16.msra.mxu0 0
      %2013 = vmatprep.subr.bf16.mxu0 0
      %2014 = vmatpush2.bf16.msra.mxu0 0
      %2015 = vmatprep.subr.bf16.mxu0 0
      %2016 = vmatpush2.bf16.msra.mxu0 0
      %2017 = vmatprep.subr.bf16.mxu0 0
      %2018 = vmatpush2.bf16.msra.mxu0 0
      %2019 = vmatprep.subr.bf16.mxu0 0
      %2020 = vmatpush2.bf16.msra.mxu0 0
      %2021 = vmatprep.subr.bf16.mxu0 0
      %2022 = vmatpush2.bf16.msra.mxu0 0
      %2023 = vmatprep.mubr.bf16.mxu0 0
      %2024 = vmatmul.mubr.bf16.gmra.mxu0 %v1959
      %v2025 = vpop.f32.mrf.mxu0
      %v2026 = vadd.f32 %v1933, %v2025
      %v2027 = vpop.f32.mrf.mxu0
      %v2028 = vpop.f32.mrf.mxu0
      %v2029 = vadd.f32 %v1933, %v2028
      %v2030 = vpop.f32.mrf.mxu0
      %2031 = vmatprep.mubr.bf16.mxu0 0
      %2032 = vmatmul.mubr.bf16.gmra.mxu0 %v1961
      %v2033 = vpop.f32.mrf.mxu0
      %v2034 = vadd.f32 %v1933, %v2033
      %v2035 = vpop.f32.mrf.mxu0
      %v2036 = vpop.f32.mrf.mxu0
      %v2037 = vadd.f32 %v1933, %v2036
      %v2038 = vpop.f32.mrf.mxu0
      %2039 = vmatprep.mubr.bf16.mxu0 0
      %2040 = vmatmul.mubr.bf16.gmra.mxu0 %v1963
      %v2041 = vpop.f32.mrf.mxu0
      %v2042 = vadd.f32 %v1933, %v2041
      %v2043 = vpop.f32.mrf.mxu0
      %v2044 = vpop.f32.mrf.mxu0
      %v2045 = vadd.f32 %v1933, %v2044
      %v2046 = vpop.f32.mrf.mxu0
      %2047 = vmatprep.mubr.bf16.mxu0 0
      %2048 = vmatmul.mubr.bf16.gmra.mxu0 %v1965
      %v2049 = vpop.f32.mrf.mxu0
      %v2050 = vadd.f32 %v1933, %v2049
      %v2051 = vpop.f32.mrf.mxu0
      %v2052 = vpop.f32.mrf.mxu0
      %v2053 = vadd.f32 %v1933, %v2052
      %v2054 = vpop.f32.mrf.mxu0
      %2055 = vmatprep.mubr.bf16.mxu0 0
      %2056 = vmatmul.mubr.bf16.gmra.mxu0 %v1967
      %v2057 = vpop.f32.mrf.mxu0
      %v2058 = vadd.f32 %v1933, %v2057
      %v2059 = vpop.f32.mrf.mxu0
      %v2060 = vpop.f32.mrf.mxu0
      %v2061 = vadd.f32 %v1933, %v2060
      %v2062 = vpop.f32.mrf.mxu0
      %2063 = vmatprep.mubr.bf16.mxu0 0
      %2064 = vmatmul.mubr.bf16.gmra.mxu0 %v1969
      %v2065 = vpop.f32.mrf.mxu0
      %v2066 = vadd.f32 %v1933, %v2065
      %v2067 = vpop.f32.mrf.mxu0
      %v2068 = vpop.f32.mrf.mxu0
      %v2069 = vadd.f32 %v1933, %v2068
      %v2070 = vpop.f32.mrf.mxu0
      %2071 = vmatprep.mubr.bf16.mxu0 0
      %2072 = vmatmul.mubr.bf16.gmra.mxu0 %v1971
      %v2073 = vpop.f32.mrf.mxu0
      %v2074 = vadd.f32 %v1933, %v2073
      %v2075 = vpop.f32.mrf.mxu0
      %v2076 = vpop.f32.mrf.mxu0
      %v2077 = vadd.f32 %v1933, %v2076
      %v2078 = vpop.f32.mrf.mxu0
      %2079 = vmatprep.mubr.bf16.mxu0 0
      %2080 = vmatmul.mubr.bf16.gmra.mxu0 %v1973
      %v2081 = vpop.f32.mrf.mxu0
      %v2082 = vadd.f32 %v1933, %v2081
      %v2083 = vpop.f32.mrf.mxu0
      %v2084 = vpop.f32.mrf.mxu0
      %v2085 = vadd.f32 %v1933, %v2084
      %v2086 = vpop.f32.mrf.mxu0
      %2087 = vmatprep.mubr.bf16.mxu0 0
      %2088 = vmatmul.mubr.bf16.gmra.mxu0 %v1975
      %v2089 = vpop.f32.mrf.mxu0
      %v2090 = vadd.f32 %v1933, %v2089
      %v2091 = vpop.f32.mrf.mxu0
      %v2092 = vpop.f32.mrf.mxu0
      %v2093 = vadd.f32 %v1933, %v2092
      %v2094 = vpop.f32.mrf.mxu0
      %2095 = vmatprep.mubr.bf16.mxu0 0
      %2096 = vmatmul.mubr.bf16.gmra.mxu0 %v1977
      %v2097 = vpop.f32.mrf.mxu0
      %v2098 = vadd.f32 %v1933, %v2097
      %v2099 = vpop.f32.mrf.mxu0
      %v2100 = vpop.f32.mrf.mxu0
      %v2101 = vadd.f32 %v1933, %v2100
      %v2102 = vpop.f32.mrf.mxu0
      %2103 = vmatprep.mubr.bf16.mxu0 0
      %2104 = vmatmul.mubr.bf16.gmra.mxu0 %v1979
      %v2105 = vpop.f32.mrf.mxu0
      %v2106 = vadd.f32 %v1933, %v2105
      %v2107 = vpop.f32.mrf.mxu0
      %v2108 = vpop.f32.mrf.mxu0
      %v2109 = vadd.f32 %v1933, %v2108
      %v2110 = vpop.f32.mrf.mxu0
      %2111 = vmatprep.mubr.bf16.mxu0 0
      %2112 = vmatmul.mubr.bf16.gmra.mxu0 %v1981
      %v2113 = vpop.f32.mrf.mxu0
      %v2114 = vadd.f32 %v1933, %v2113
      %v2115 = vpop.f32.mrf.mxu0
      %v2116 = vpop.f32.mrf.mxu0
      %v2117 = vadd.f32 %v1933, %v2116
      %v2118 = vpop.f32.mrf.mxu0
      %2119 = vmatprep.mubr.bf16.mxu0 0
      %2120 = vmatmul.mubr.bf16.gmra.mxu0 %v1983
      %v2121 = vpop.f32.mrf.mxu0
      %v2122 = vadd.f32 %v1933, %v2121
      %v2123 = vpop.f32.mrf.mxu0
      %v2124 = vpop.f32.mrf.mxu0
      %v2125 = vadd.f32 %v1933, %v2124
      %v2126 = vpop.f32.mrf.mxu0
      %2127 = vmatprep.mubr.bf16.mxu0 0
      %2128 = vmatmul.mubr.bf16.gmra.mxu0 %v1985
      %v2129 = vpop.f32.mrf.mxu0
      %v2130 = vadd.f32 %v1933, %v2129
      %v2131 = vpop.f32.mrf.mxu0
      %v2132 = vpop.f32.mrf.mxu0
      %v2133 = vadd.f32 %v1933, %v2132
      %v2134 = vpop.f32.mrf.mxu0
      %2135 = vmatprep.mubr.bf16.mxu0 0
      %2136 = vmatmul.mubr.bf16.gmra.mxu0 %v1987
      %v2137 = vpop.f32.mrf.mxu0
      %v2138 = vadd.f32 %v1933, %v2137
      %v2139 = vpop.f32.mrf.mxu0
      %v2140 = vpop.f32.mrf.mxu0
      %v2141 = vadd.f32 %v1933, %v2140
      %v2142 = vpop.f32.mrf.mxu0
      %2143 = vmatprep.mubr.bf16.mxu0 0
      %2144 = vmatmul.mubr.bf16.gmra.mxu0 %v1989
      %v2145 = vpop.f32.mrf.mxu0
      %v2146 = vadd.f32 %v1933, %v2145
      %v2147 = vpop.f32.mrf.mxu0
      %v2148 = vpop.f32.mrf.mxu0
      %v2149 = vadd.f32 %v1933, %v2148
      %v2150 = vpop.f32.mrf.mxu0
      %2151 = vdwg.mxu0
      %v2152 = vadd.f32 %v1794, %v2026
      %v2153 = vadd.f32 %v1797, %v2029
      %v2154 = vadd.f32 %v1802, %v2034
      %v2155 = vadd.f32 %v1805, %v2037
      %v2156 = vadd.f32 %v1810, %v2042
      %v2157 = vadd.f32 %v1813, %v2045
      %v2158 = vadd.f32 %v1818, %v2050
      %v2159 = vadd.f32 %v1821, %v2053
      %v2160 = vadd.f32 %v1826, %v2058
      %v2161 = vadd.f32 %v1829, %v2061
      %v2162 = vadd.f32 %v1834, %v2066
      %v2163 = vadd.f32 %v1837, %v2069
      %v2164 = vadd.f32 %v1842, %v2074
      %v2165 = vadd.f32 %v1845, %v2077
      %v2166 = vadd.f32 %v1850, %v2082
      %v2167 = vadd.f32 %v1853, %v2085
      %v2168 = vadd.f32 %v1858, %v2090
      %v2169 = vadd.f32 %v1861, %v2093
      %v2170 = vadd.f32 %v1866, %v2098
      %v2171 = vadd.f32 %v1869, %v2101
      %v2172 = vadd.f32 %v1874, %v2106
      %v2173 = vadd.f32 %v1877, %v2109
      %v2174 = vadd.f32 %v1882, %v2114
      %v2175 = vadd.f32 %v1885, %v2117
      %v2176 = vadd.f32 %v1890, %v2122
      %v2177 = vadd.f32 %v1893, %v2125
      %v2178 = vadd.f32 %v1898, %v2130
      %v2179 = vadd.f32 %v1901, %v2133
      %v2180 = vadd.f32 %v1906, %v2138
      %v2181 = vadd.f32 %v1909, %v2141
      %v2182 = vadd.f32 %v1914, %v2146
      %v2183 = vadd.f32 %v1917, %v2149
      %v2184 = vtanh.pop %v2152
      %v2185 = vtanh.pop %v2153
      %v2186 = vtanh.pop %v2154
      %v2187 = vtanh.pop %v2155
      %v2188 = vtanh.pop %v2156
      %v2189 = vtanh.pop %v2157
      %v2190 = vtanh.pop %v2158
      %v2191 = vtanh.pop %v2159
      %v2192 = vtanh.pop %v2160
      %v2193 = vtanh.pop %v2161
      %v2194 = vtanh.pop %v2162
      %v2195 = vtanh.pop %v2163
      %v2196 = vtanh.pop %v2164
      %v2197 = vtanh.pop %v2165
      %v2198 = vtanh.pop %v2166
      %v2199 = vtanh.pop %v2167
      %v2200 = vtanh.pop %v2168
      %v2201 = vtanh.pop %v2169
      %v2202 = vtanh.pop %v2170
      %v2203 = vtanh.pop %v2171
      %v2204 = vtanh.pop %v2172
      %v2205 = vtanh.pop %v2173
      %v2206 = vtanh.pop %v2174
      %v2207 = vtanh.pop %v2175
      %v2208 = vtanh.pop %v2176
      %v2209 = vtanh.pop %v2177
      %v2210 = vtanh.pop %v2178
      %v2211 = vtanh.pop %v2179
      %v2212 = vtanh.pop %v2180
      %v2213 = vtanh.pop %v2181
      %v2214 = vtanh.pop %v2182
      %v2215 = vtanh.pop %v2183
      %v2216 = vxor.u32 %v2152, 2147483648
      %v2217 = vxor.u32 %v2153, 2147483648
      %v2218 = vxor.u32 %v2154, 2147483648
      %v2219 = vxor.u32 %v2155, 2147483648
      %v2220 = vxor.u32 %v2156, 2147483648
      %v2221 = vxor.u32 %v2157, 2147483648
      %v2222 = vxor.u32 %v2158, 2147483648
      %v2223 = vxor.u32 %v2159, 2147483648
      %v2224 = vxor.u32 %v2160, 2147483648
      %v2225 = vxor.u32 %v2161, 2147483648
      %v2226 = vxor.u32 %v2162, 2147483648
      %v2227 = vxor.u32 %v2163, 2147483648
      %v2228 = vxor.u32 %v2164, 2147483648
      %v2229 = vxor.u32 %v2165, 2147483648
      %v2230 = vxor.u32 %v2166, 2147483648
      %v2231 = vxor.u32 %v2167, 2147483648
      %v2232 = vxor.u32 %v2168, 2147483648
      %v2233 = vxor.u32 %v2169, 2147483648
      %v2234 = vxor.u32 %v2170, 2147483648
      %v2235 = vxor.u32 %v2171, 2147483648
      %v2236 = vxor.u32 %v2172, 2147483648
      %v2237 = vxor.u32 %v2173, 2147483648
      %v2238 = vxor.u32 %v2174, 2147483648
      %v2239 = vxor.u32 %v2175, 2147483648
      %v2240 = vxor.u32 %v2176, 2147483648
      %v2241 = vxor.u32 %v2177, 2147483648
      %v2242 = vxor.u32 %v2178, 2147483648
      %v2243 = vxor.u32 %v2179, 2147483648
      %v2244 = vxor.u32 %v2180, 2147483648
      %v2245 = vxor.u32 %v2181, 2147483648
      %v2246 = vxor.u32 %v2182, 2147483648
      %v2247 = vxor.u32 %v2183, 2147483648
      %v2248 = vmul.f32 %v2216, 1.442695
      %v2249 = vpow.pop %v2248
      %v2250 = vmul.f32 %v2217, 1.442695
      %v2251 = vpow.pop %v2250
      %v2252 = vmul.f32 %v2218, 1.442695
      %v2253 = vpow.pop %v2252
      %v2254 = vmul.f32 %v2219, 1.442695
      %v2255 = vpow.pop %v2254
      %v2256 = vmul.f32 %v2220, 1.442695
      %v2257 = vpow.pop %v2256
      %v2258 = vmul.f32 %v2221, 1.442695
      %v2259 = vpow.pop %v2258
      %v2260 = vmul.f32 %v2222, 1.442695
      %v2261 = vpow.pop %v2260
      %v2262 = vmul.f32 %v2223, 1.442695
      %v2263 = vpow.pop %v2262
      %v2264 = vmul.f32 %v2224, 1.442695
      %v2265 = vpow.pop %v2264
      %v2266 = vmul.f32 %v2225, 1.442695
      %v2267 = vpow.pop %v2266
      %v2268 = vmul.f32 %v2226, 1.442695
      %v2269 = vpow.pop %v2268
      %v2270 = vmul.f32 %v2227, 1.442695
      %v2271 = vpow.pop %v2270
      %v2272 = vmul.f32 %v2228, 1.442695
      %v2273 = vpow.pop %v2272
      %v2274 = vmul.f32 %v2229, 1.442695
      %v2275 = vpow.pop %v2274
      %v2276 = vmul.f32 %v2230, 1.442695
      %v2277 = vpow.pop %v2276
      %v2278 = vmul.f32 %v2231, 1.442695
      %v2279 = vpow.pop %v2278
      %v2280 = vmul.f32 %v2232, 1.442695
      %v2281 = vpow.pop %v2280
      %v2282 = vmul.f32 %v2233, 1.442695
      %v2283 = vpow.pop %v2282
      %v2284 = vmul.f32 %v2234, 1.442695
      %v2285 = vpow.pop %v2284
      %v2286 = vmul.f32 %v2235, 1.442695
      %v2287 = vpow.pop %v2286
      %v2288 = vmul.f32 %v2236, 1.442695
      %v2289 = vpow.pop %v2288
      %v2290 = vmul.f32 %v2237, 1.442695
      %v2291 = vpow.pop %v2290
      %v2292 = vmul.f32 %v2238, 1.442695
      %v2293 = vpow.pop %v2292
      %v2294 = vmul.f32 %v2239, 1.442695
      %v2295 = vpow.pop %v2294
      %v2296 = vmul.f32 %v2240, 1.442695
      %v2297 = vpow.pop %v2296
      %v2298 = vmul.f32 %v2241, 1.442695
      %v2299 = vpow.pop %v2298
      %v2300 = vmul.f32 %v2242, 1.442695
      %v2301 = vpow.pop %v2300
      %v2302 = vmul.f32 %v2243, 1.442695
      %v2303 = vpow.pop %v2302
      %v2304 = vmul.f32 %v2244, 1.442695
      %v2305 = vpow.pop %v2304
      %v2306 = vmul.f32 %v2245, 1.442695
      %v2307 = vpow.pop %v2306
      %v2308 = vmul.f32 %v2246, 1.442695
      %v2309 = vpow.pop %v2308
      %v2310 = vmul.f32 %v2247, 1.442695
      %v2311 = vpow.pop %v2310
      %v2312 = vadd.f32 %v2249, 1.0
      %v2313 = vadd.f32 %v2251, 1.0
      %v2314 = vadd.f32 %v2253, 1.0
      %v2315 = vadd.f32 %v2255, 1.0
      %v2316 = vadd.f32 %v2257, 1.0
      %v2317 = vadd.f32 %v2259, 1.0
      %v2318 = vadd.f32 %v2261, 1.0
      %v2319 = vadd.f32 %v2263, 1.0
      %v2320 = vadd.f32 %v2265, 1.0
      %v2321 = vadd.f32 %v2267, 1.0
      %v2322 = vadd.f32 %v2269, 1.0
      %v2323 = vadd.f32 %v2271, 1.0
      %v2324 = vadd.f32 %v2273, 1.0
      %v2325 = vadd.f32 %v2275, 1.0
      %v2326 = vadd.f32 %v2277, 1.0
      %v2327 = vadd.f32 %v2279, 1.0
      %v2328 = vadd.f32 %v2281, 1.0
      %v2329 = vadd.f32 %v2283, 1.0
      %v2330 = vadd.f32 %v2285, 1.0
      %v2331 = vadd.f32 %v2287, 1.0
      %v2332 = vadd.f32 %v2289, 1.0
      %v2333 = vadd.f32 %v2291, 1.0
      %v2334 = vadd.f32 %v2293, 1.0
      %v2335 = vadd.f32 %v2295, 1.0
      %v2336 = vadd.f32 %v2297, 1.0
      %v2337 = vadd.f32 %v2299, 1.0
      %v2338 = vadd.f32 %v2301, 1.0
      %v2339 = vadd.f32 %v2303, 1.0
      %v2340 = vadd.f32 %v2305, 1.0
      %v2341 = vadd.f32 %v2307, 1.0
      %v2342 = vadd.f32 %v2309, 1.0
      %v2343 = vadd.f32 %v2311, 1.0
      %v2344 = vrcp.pop %v2312
      %v2345 = vmul.f32 1.0, %v2344
      %v2346 = vrcp.pop %v2313
      %v2347 = vmul.f32 1.0, %v2346
      %v2348 = vrcp.pop %v2314
      %v2349 = vmul.f32 1.0, %v2348
      %v2350 = vrcp.pop %v2315
      %v2351 = vmul.f32 1.0, %v2350
      %v2352 = vrcp.pop %v2316
      %v2353 = vmul.f32 1.0, %v2352
      %v2354 = vrcp.pop %v2317
      %v2355 = vmul.f32 1.0, %v2354
      %v2356 = vrcp.pop %v2318
      %v2357 = vmul.f32 1.0, %v2356
      %v2358 = vrcp.pop %v2319
      %v2359 = vmul.f32 1.0, %v2358
      %v2360 = vrcp.pop %v2320
      %v2361 = vmul.f32 1.0, %v2360
      %v2362 = vrcp.pop %v2321
      %v2363 = vmul.f32 1.0, %v2362
      %v2364 = vrcp.pop %v2322
      %v2365 = vmul.f32 1.0, %v2364
      %v2366 = vrcp.pop %v2323
      %v2367 = vmul.f32 1.0, %v2366
      %v2368 = vrcp.pop %v2324
      %v2369 = vmul.f32 1.0, %v2368
      %v2370 = vrcp.pop %v2325
      %v2371 = vmul.f32 1.0, %v2370
      %v2372 = vrcp.pop %v2326
      %v2373 = vmul.f32 1.0, %v2372
      %v2374 = vrcp.pop %v2327
      %v2375 = vmul.f32 1.0, %v2374
      %v2376 = vrcp.pop %v2328
      %v2377 = vmul.f32 1.0, %v2376
      %v2378 = vrcp.pop %v2329
      %v2379 = vmul.f32 1.0, %v2378
      %v2380 = vrcp.pop %v2330
      %v2381 = vmul.f32 1.0, %v2380
      %v2382 = vrcp.pop %v2331
      %v2383 = vmul.f32 1.0, %v2382
      %v2384 = vrcp.pop %v2332
      %v2385 = vmul.f32 1.0, %v2384
      %v2386 = vrcp.pop %v2333
      %v2387 = vmul.f32 1.0, %v2386
      %v2388 = vrcp.pop %v2334
      %v2389 = vmul.f32 1.0, %v2388
      %v2390 = vrcp.pop %v2335
      %v2391 = vmul.f32 1.0, %v2390
      %v2392 = vrcp.pop %v2336
      %v2393 = vmul.f32 1.0, %v2392
      %v2394 = vrcp.pop %v2337
      %v2395 = vmul.f32 1.0, %v2394
      %v2396 = vrcp.pop %v2338
      %v2397 = vmul.f32 1.0, %v2396
      %v2398 = vrcp.pop %v2339
      %v2399 = vmul.f32 1.0, %v2398
      %v2400 = vrcp.pop %v2340
      %v2401 = vmul.f32 1.0, %v2400
      %v2402 = vrcp.pop %v2341
      %v2403 = vmul.f32 1.0, %v2402
      %v2404 = vrcp.pop %v2342
      %v2405 = vmul.f32 1.0, %v2404
      %v2406 = vrcp.pop %v2343
      %v2407 = vmul.f32 1.0, %v2406
      %2440 = vrot.lane.b32.xlu0 %v2345, 96
      %v2441 = vpop.permute.xlu0 %2440
      %2442 = vrot.lane.b32.xlu0 %v2347, 96
      %v2443 = vpop.permute.xlu0 %2442
      %2444 = vrot.lane.b32.xlu0 %v2349, 96
      %v2445 = vpop.permute.xlu0 %2444
      %2446 = vrot.lane.b32.xlu0 %v2351, 96
      %v2447 = vpop.permute.xlu0 %2446
      %2448 = vrot.lane.b32.xlu0 %v2353, 96
      %v2449 = vpop.permute.xlu0 %2448
      %2450 = vrot.lane.b32.xlu0 %v2355, 96
      %v2451 = vpop.permute.xlu0 %2450
      %2452 = vrot.lane.b32.xlu0 %v2357, 96
      %v2453 = vpop.permute.xlu0 %2452
      %2454 = vrot.lane.b32.xlu0 %v2359, 96
      %v2455 = vpop.permute.xlu0 %2454
      %2456 = vrot.lane.b32.xlu0 %v2361, 96
      %v2457 = vpop.permute.xlu0 %2456
      %2458 = vrot.lane.b32.xlu0 %v2363, 96
      %v2459 = vpop.permute.xlu0 %2458
      %2460 = vrot.lane.b32.xlu0 %v2365, 96
      %v2461 = vpop.permute.xlu0 %2460
      %2462 = vrot.lane.b32.xlu0 %v2367, 96
      %v2463 = vpop.permute.xlu0 %2462
      %2464 = vrot.lane.b32.xlu0 %v2369, 96
      %v2465 = vpop.permute.xlu0 %2464
      %2466 = vrot.lane.b32.xlu0 %v2371, 96
      %v2467 = vpop.permute.xlu0 %2466
      %2468 = vrot.lane.b32.xlu0 %v2373, 96
      %v2469 = vpop.permute.xlu0 %2468
      %2470 = vrot.lane.b32.xlu0 %v2375, 96
      %v2471 = vpop.permute.xlu0 %2470
      %2472 = vrot.lane.b32.xlu0 %v2377, 96
      %v2473 = vpop.permute.xlu0 %2472
      %2474 = vrot.lane.b32.xlu0 %v2379, 96
      %v2475 = vpop.permute.xlu0 %2474
      %2476 = vrot.lane.b32.xlu0 %v2381, 96
      %v2477 = vpop.permute.xlu0 %2476
      %2478 = vrot.lane.b32.xlu0 %v2383, 96
      %v2479 = vpop.permute.xlu0 %2478
      %2480 = vrot.lane.b32.xlu0 %v2385, 96
      %v2481 = vpop.permute.xlu0 %2480
      %2482 = vrot.lane.b32.xlu0 %v2387, 96
      %v2483 = vpop.permute.xlu0 %2482
      %2484 = vrot.lane.b32.xlu0 %v2389, 96
      %v2485 = vpop.permute.xlu0 %2484
      %2486 = vrot.lane.b32.xlu0 %v2391, 96
      %v2487 = vpop.permute.xlu0 %2486
      %2488 = vrot.lane.b32.xlu0 %v2393, 96
      %v2489 = vpop.permute.xlu0 %2488
      %2490 = vrot.lane.b32.xlu0 %v2395, 96
      %v2491 = vpop.permute.xlu0 %2490
      %2492 = vrot.lane.b32.xlu0 %v2397, 96
      %v2493 = vpop.permute.xlu0 %2492
      %2494 = vrot.lane.b32.xlu0 %v2399, 96
      %v2495 = vpop.permute.xlu0 %2494
      %2496 = vrot.lane.b32.xlu0 %v2401, 96
      %v2497 = vpop.permute.xlu0 %2496
      %2498 = vrot.lane.b32.xlu0 %v2403, 96
      %v2499 = vpop.permute.xlu0 %2498
      %2500 = vrot.lane.b32.xlu0 %v2405, 96
      %v2501 = vpop.permute.xlu0 %2500
      %2502 = vrot.lane.b32.xlu0 %v2407, 96
      %v2503 = vpop.permute.xlu0 %2502
      %v2536 = vmul.f32 %v2184, %v2441
      %v2537 = vmul.f32 %v2185, %v2443
      %v2538 = vmul.f32 %v2186, %v2445
      %v2539 = vmul.f32 %v2187, %v2447
      %v2540 = vmul.f32 %v2188, %v2449
      %v2541 = vmul.f32 %v2189, %v2451
      %v2542 = vmul.f32 %v2190, %v2453
      %v2543 = vmul.f32 %v2191, %v2455
      %v2544 = vmul.f32 %v2192, %v2457
      %v2545 = vmul.f32 %v2193, %v2459
      %v2546 = vmul.f32 %v2194, %v2461
      %v2547 = vmul.f32 %v2195, %v2463
      %v2548 = vmul.f32 %v2196, %v2465
      %v2549 = vmul.f32 %v2197, %v2467
      %v2550 = vmul.f32 %v2198, %v2469
      %v2551 = vmul.f32 %v2199, %v2471
      %v2552 = vmul.f32 %v2200, %v2473
      %v2553 = vmul.f32 %v2201, %v2475
      %v2554 = vmul.f32 %v2202, %v2477
      %v2555 = vmul.f32 %v2203, %v2479
      %v2556 = vmul.f32 %v2204, %v2481
      %v2557 = vmul.f32 %v2205, %v2483
      %v2558 = vmul.f32 %v2206, %v2485
      %v2559 = vmul.f32 %v2207, %v2487
      %v2560 = vmul.f32 %v2208, %v2489
      %v2561 = vmul.f32 %v2209, %v2491
      %v2562 = vmul.f32 %v2210, %v2493
      %v2563 = vmul.f32 %v2211, %v2495
      %v2564 = vmul.f32 %v2212, %v2497
      %v2565 = vmul.f32 %v2213, %v2499
      %v2566 = vmul.f32 %v2214, %v2501
      %v2567 = vmul.f32 %v2215, %v2503
      %v2568 = vpack.c.bf16 %v2537, %v2536
      %v2569 = vpack.c.bf16 %v2539, %v2538
      %v2570 = vpack.c.bf16 %v2541, %v2540
      %v2571 = vpack.c.bf16 %v2543, %v2542
      %v2572 = vpack.c.bf16 %v2545, %v2544
      %v2573 = vpack.c.bf16 %v2547, %v2546
      %v2574 = vpack.c.bf16 %v2549, %v2548
      %v2575 = vpack.c.bf16 %v2551, %v2550
      %v2576 = vpack.c.bf16 %v2553, %v2552
      %v2577 = vpack.c.bf16 %v2555, %v2554
      %v2578 = vpack.c.bf16 %v2557, %v2556
      %v2579 = vpack.c.bf16 %v2559, %v2558
      %v2580 = vpack.c.bf16 %v2561, %v2560
      %v2581 = vpack.c.bf16 %v2563, %v2562
      %v2582 = vpack.c.bf16 %v2565, %v2564
      %v2583 = vpack.c.bf16 %v2567, %v2566
      %v2584 = vld [vmem:[%s5] sm:$0xf]
      %v2585 = vld [vmem:[%s5 + $0x4] sm:$0xf]
      %v2586 = vld [vmem:[%s5 + $0x8] sm:$0xf]
      %v2587 = vld [vmem:[%s5 + $0xc] sm:$0xf]
      %v2588 = vld [vmem:[%s6] sm:$0x1]
      %v2590 = vlaneseq
      %v2591 = vshrl.u32 %v2590, 7
      %v2592 = vsub.s32 0, %v2591
      %v2593 = vrot.slane %v2588, %v2592
      %v2599 = vunpack.c.l.b16 %v2584
      %v2600 = vunpack.c.l.b16 %v2585
      %v2601 = vunpack.c.l.b16 %v2586
      %v2602 = vunpack.c.l.b16 %v2587
      %v2603 = vpack.c.b16 %v2600, %v2599
      %v2604 = vpack.c.b16 %v2602, %v2601
      %v2608 = vsel %vm1109, %v2568, 0
      %v2611 = vsel %vm1109, %v2569, 0
      %v2614 = vsel %vm1109, %v2570, 0
      %v2617 = vsel %vm1109, %v2571, 0
      %v2620 = vsel %vm1109, %v2572, 0
      %v2623 = vsel %vm1109, %v2573, 0
      %v2626 = vsel %vm1109, %v2574, 0
      %v2629 = vsel %vm1109, %v2575, 0
      %v2632 = vsel %vm1109, %v2576, 0
      %v2635 = vsel %vm1109, %v2577, 0
      %v2638 = vsel %vm1109, %v2578, 0
      %v2641 = vsel %vm1109, %v2579, 0
      %v2644 = vsel %vm1109, %v2580, 0
      %v2647 = vsel %vm1109, %v2581, 0
      %v2650 = vsel %vm1109, %v2582, 0
      %v2653 = vsel %vm1109, %v2583, 0
      %2655 = vmatprep.subr.bf16.mxu0 0
      %2656 = vmatpush1.bf16.msra.mxu0 0
      %2657 = vmatprep.subr.bf16.mxu0 0
      %2658 = vmatpush1.bf16.msra.mxu0 0
      %2659 = vmatprep.subr.bf16.mxu0 0
      %2660 = vmatpush1.bf16.msra.mxu0 0
      %2661 = vmatprep.subr.bf16.mxu0 0
      %2662 = vmatpush1.bf16.msra.mxu0 0
      %2663 = vmatprep.subr.bf16.mxu0 0
      %2664 = vmatpush1.bf16.msra.mxu0 0
      %2665 = vmatprep.subr.bf16.mxu0 0
      %2666 = vmatpush1.bf16.msra.mxu0 0
      %2667 = vmatprep.subr.bf16.mxu0 0
      %2668 = vmatpush1.bf16.msra.mxu0 %v2604
      %2669 = vmatprep.subr.bf16.mxu0 0
      %2670 = vmatpush1.bf16.msra.mxu0 %v2603
      %2671 = vmatprep.subr.bf16.mxu0 0
      %2672 = vmatpush2.bf16.msra.mxu0 0
      %2673 = vmatprep.subr.bf16.mxu0 0
      %2674 = vmatpush2.bf16.msra.mxu0 0
      %2675 = vmatprep.subr.bf16.mxu0 0
      %2676 = vmatpush2.bf16.msra.mxu0 0
      %2677 = vmatprep.subr.bf16.mxu0 0
      %2678 = vmatpush2.bf16.msra.mxu0 0
      %2679 = vmatprep.subr.bf16.mxu0 0
      %2680 = vmatpush2.bf16.msra.mxu0 0
      %2681 = vmatprep.subr.bf16.mxu0 0
      %2682 = vmatpush2.bf16.msra.mxu0 0
      %2683 = vmatprep.subr.bf16.mxu0 0
      %2684 = vmatpush2.bf16.msra.mxu0 0
      %2685 = vmatprep.subr.bf16.mxu0 0
      %2686 = vmatpush2.bf16.msra.mxu0 0
      %2687 = vmatprep.mubr.bf16.mxu0 0
      %2688 = vmatmul.mubr.bf16.gmra.mxu0 %v2608
      %v2689 = vpop.f32.mrf.mxu0
      %v2690 = vadd.f32 %v2593, %v2689
      %v2691 = vpop.f32.mrf.mxu0
      %v2692 = vpop.f32.mrf.mxu0
      %v2693 = vadd.f32 %v2593, %v2692
      %v2694 = vpop.f32.mrf.mxu0
      %2695 = vmatprep.mubr.bf16.mxu0 0
      %2696 = vmatmul.mubr.bf16.gmra.mxu0 %v2611
      %v2697 = vpop.f32.mrf.mxu0
      %v2698 = vadd.f32 %v2593, %v2697
      %v2699 = vpop.f32.mrf.mxu0
      %v2700 = vpop.f32.mrf.mxu0
      %v2701 = vadd.f32 %v2593, %v2700
      %v2702 = vpop.f32.mrf.mxu0
      %2703 = vmatprep.mubr.bf16.mxu0 0
      %2704 = vmatmul.mubr.bf16.gmra.mxu0 %v2614
      %v2705 = vpop.f32.mrf.mxu0
      %v2706 = vadd.f32 %v2593, %v2705
      %v2707 = vpop.f32.mrf.mxu0
      %v2708 = vpop.f32.mrf.mxu0
      %v2709 = vadd.f32 %v2593, %v2708
      %v2710 = vpop.f32.mrf.mxu0
      %2711 = vmatprep.mubr.bf16.mxu0 0
      %2712 = vmatmul.mubr.bf16.gmra.mxu0 %v2617
      %v2713 = vpop.f32.mrf.mxu0
      %v2714 = vadd.f32 %v2593, %v2713
      %v2715 = vpop.f32.mrf.mxu0
      %v2716 = vpop.f32.mrf.mxu0
      %v2717 = vadd.f32 %v2593, %v2716
      %v2718 = vpop.f32.mrf.mxu0
      %2719 = vmatprep.mubr.bf16.mxu0 0
      %2720 = vmatmul.mubr.bf16.gmra.mxu0 %v2620
      %v2721 = vpop.f32.mrf.mxu0
      %v2722 = vadd.f32 %v2593, %v2721
      %v2723 = vpop.f32.mrf.mxu0
      %v2724 = vpop.f32.mrf.mxu0
      %v2725 = vadd.f32 %v2593, %v2724
      %v2726 = vpop.f32.mrf.mxu0
      %2727 = vmatprep.mubr.bf16.mxu0 0
      %2728 = vmatmul.mubr.bf16.gmra.mxu0 %v2623
      %v2729 = vpop.f32.mrf.mxu0
      %v2730 = vadd.f32 %v2593, %v2729
      %v2731 = vpop.f32.mrf.mxu0
      %v2732 = vpop.f32.mrf.mxu0
      %v2733 = vadd.f32 %v2593, %v2732
      %v2734 = vpop.f32.mrf.mxu0
      %2735 = vmatprep.mubr.bf16.mxu0 0
      %2736 = vmatmul.mubr.bf16.gmra.mxu0 %v2626
      %v2737 = vpop.f32.mrf.mxu0
      %v2738 = vadd.f32 %v2593, %v2737
      %v2739 = vpop.f32.mrf.mxu0
      %v2740 = vpop.f32.mrf.mxu0
      %v2741 = vadd.f32 %v2593, %v2740
      %v2742 = vpop.f32.mrf.mxu0
      %2743 = vmatprep.mubr.bf16.mxu0 0
      %2744 = vmatmul.mubr.bf16.gmra.mxu0 %v2629
      %v2745 = vpop.f32.mrf.mxu0
      %v2746 = vadd.f32 %v2593, %v2745
      %v2747 = vpop.f32.mrf.mxu0
      %v2748 = vpop.f32.mrf.mxu0
      %v2749 = vadd.f32 %v2593, %v2748
      %v2750 = vpop.f32.mrf.mxu0
      %2751 = vmatprep.mubr.bf16.mxu0 0
      %2752 = vmatmul.mubr.bf16.gmra.mxu0 %v2632
      %v2753 = vpop.f32.mrf.mxu0
      %v2754 = vadd.f32 %v2593, %v2753
      %v2755 = vpop.f32.mrf.mxu0
      %v2756 = vpop.f32.mrf.mxu0
      %v2757 = vadd.f32 %v2593, %v2756
      %v2758 = vpop.f32.mrf.mxu0
      %2759 = vmatprep.mubr.bf16.mxu0 0
      %2760 = vmatmul.mubr.bf16.gmra.mxu0 %v2635
      %v2761 = vpop.f32.mrf.mxu0
      %v2762 = vadd.f32 %v2593, %v2761
      %v2763 = vpop.f32.mrf.mxu0
      %v2764 = vpop.f32.mrf.mxu0
      %v2765 = vadd.f32 %v2593, %v2764
      %v2766 = vpop.f32.mrf.mxu0
      %2767 = vmatprep.mubr.bf16.mxu0 0
      %2768 = vmatmul.mubr.bf16.gmra.mxu0 %v2638
      %v2769 = vpop.f32.mrf.mxu0
      %v2770 = vadd.f32 %v2593, %v2769
      %v2771 = vpop.f32.mrf.mxu0
      %v2772 = vpop.f32.mrf.mxu0
      %v2773 = vadd.f32 %v2593, %v2772
      %v2774 = vpop.f32.mrf.mxu0
      %2775 = vmatprep.mubr.bf16.mxu0 0
      %2776 = vmatmul.mubr.bf16.gmra.mxu0 %v2641
      %v2777 = vpop.f32.mrf.mxu0
      %v2778 = vadd.f32 %v2593, %v2777
      %v2779 = vpop.f32.mrf.mxu0
      %v2780 = vpop.f32.mrf.mxu0
      %v2781 = vadd.f32 %v2593, %v2780
      %v2782 = vpop.f32.mrf.mxu0
      %2783 = vmatprep.mubr.bf16.mxu0 0
      %2784 = vmatmul.mubr.bf16.gmra.mxu0 %v2644
      %v2785 = vpop.f32.mrf.mxu0
      %v2786 = vadd.f32 %v2593, %v2785
      %v2787 = vpop.f32.mrf.mxu0
      %v2788 = vpop.f32.mrf.mxu0
      %v2789 = vadd.f32 %v2593, %v2788
      %v2790 = vpop.f32.mrf.mxu0
      %2791 = vmatprep.mubr.bf16.mxu0 0
      %2792 = vmatmul.mubr.bf16.gmra.mxu0 %v2647
      %v2793 = vpop.f32.mrf.mxu0
      %v2794 = vadd.f32 %v2593, %v2793
      %v2795 = vpop.f32.mrf.mxu0
      %v2796 = vpop.f32.mrf.mxu0
      %v2797 = vadd.f32 %v2593, %v2796
      %v2798 = vpop.f32.mrf.mxu0
      %2799 = vmatprep.mubr.bf16.mxu0 0
      %2800 = vmatmul.mubr.bf16.gmra.mxu0 %v2650
      %v2801 = vpop.f32.mrf.mxu0
      %v2802 = vadd.f32 %v2593, %v2801
      %v2803 = vpop.f32.mrf.mxu0
      %v2804 = vpop.f32.mrf.mxu0
      %v2805 = vadd.f32 %v2593, %v2804
      %v2806 = vpop.f32.mrf.mxu0
      %2807 = vmatprep.mubr.bf16.mxu0 0
      %2808 = vmatmul.mubr.bf16.gmra.mxu0 %v2653
      %v2809 = vpop.f32.mrf.mxu0
      %v2810 = vadd.f32 %v2593, %v2809
      %v2811 = vpop.f32.mrf.mxu0
      %v2812 = vpop.f32.mrf.mxu0
      %v2813 = vadd.f32 %v2593, %v2812
      %v2814 = vpop.f32.mrf.mxu0
      %2815 = vdwg.mxu0
      %v2816 = vunpack.c.l.bf16 %v388
      %v2817 = vunpack.c.l.bf16 %v389
      %v2818 = vunpack.c.l.bf16 %v390
      %v2819 = vunpack.c.l.bf16 %v391
      %v2820 = vunpack.c.l.bf16 %v392
      %v2821 = vunpack.c.l.bf16 %v393
      %v2822 = vunpack.c.l.bf16 %v394
      %v2823 = vunpack.c.l.bf16 %v395
      %v2824 = vunpack.c.l.bf16 %v396
      %v2825 = vunpack.c.l.bf16 %v397
      %v2826 = vunpack.c.l.bf16 %v398
      %v2827 = vunpack.c.l.bf16 %v399
      %v2828 = vunpack.c.l.bf16 %v400
      %v2829 = vunpack.c.l.bf16 %v401
      %v2830 = vunpack.c.l.bf16 %v402
      %v2831 = vunpack.c.l.bf16 %v403
      %v2832 = vunpack.c.l.bf16 %v404
      %v2833 = vunpack.c.l.bf16 %v405
      %v2834 = vunpack.c.l.bf16 %v406
      %v2835 = vunpack.c.l.bf16 %v407
      %v2836 = vunpack.c.l.bf16 %v408
      %v2837 = vunpack.c.l.bf16 %v409
      %v2838 = vunpack.c.l.bf16 %v410
      %v2839 = vunpack.c.l.bf16 %v411
      %v2840 = vunpack.c.l.bf16 %v412
      %v2841 = vunpack.c.l.bf16 %v413
      %v2842 = vunpack.c.l.bf16 %v414
      %v2843 = vunpack.c.l.bf16 %v415
      %v2844 = vunpack.c.l.bf16 %v416
      %v2845 = vunpack.c.l.bf16 %v417
      %v2846 = vunpack.c.l.bf16 %v418
      %v2847 = vunpack.c.l.bf16 %v419
      %2880 = vrot.lane.b32.xlu0 %v2816, 96
      %v2881 = vpop.permute.xlu0 %2880
      %2882 = vrot.lane.b32.xlu0 %v2817, 96
      %v2883 = vpop.permute.xlu0 %2882
      %2884 = vrot.lane.b32.xlu0 %v2818, 96
      %v2885 = vpop.permute.xlu0 %2884
      %2886 = vrot.lane.b32.xlu0 %v2819, 96
      %v2887 = vpop.permute.xlu0 %2886
      %2888 = vrot.lane.b32.xlu0 %v2820, 96
      %v2889 = vpop.permute.xlu0 %2888
      %2890 = vrot.lane.b32.xlu0 %v2821, 96
      %v2891 = vpop.permute.xlu0 %2890
      %2892 = vrot.lane.b32.xlu0 %v2822, 96
      %v2893 = vpop.permute.xlu0 %2892
      %2894 = vrot.lane.b32.xlu0 %v2823, 96
      %v2895 = vpop.permute.xlu0 %2894
      %2896 = vrot.lane.b32.xlu0 %v2824, 96
      %v2897 = vpop.permute.xlu0 %2896
      %2898 = vrot.lane.b32.xlu0 %v2825, 96
      %v2899 = vpop.permute.xlu0 %2898
      %2900 = vrot.lane.b32.xlu0 %v2826, 96
      %v2901 = vpop.permute.xlu0 %2900
      %2902 = vrot.lane.b32.xlu0 %v2827, 96
      %v2903 = vpop.permute.xlu0 %2902
      %2904 = vrot.lane.b32.xlu0 %v2828, 96
      %v2905 = vpop.permute.xlu0 %2904
      %2906 = vrot.lane.b32.xlu0 %v2829, 96
      %v2907 = vpop.permute.xlu0 %2906
      %2908 = vrot.lane.b32.xlu0 %v2830, 96
      %v2909 = vpop.permute.xlu0 %2908
      %2910 = vrot.lane.b32.xlu0 %v2831, 96
      %v2911 = vpop.permute.xlu0 %2910
      %2912 = vrot.lane.b32.xlu0 %v2832, 96
      %v2913 = vpop.permute.xlu0 %2912
      %2914 = vrot.lane.b32.xlu0 %v2833, 96
      %v2915 = vpop.permute.xlu0 %2914
      %2916 = vrot.lane.b32.xlu0 %v2834, 96
      %v2917 = vpop.permute.xlu0 %2916
      %2918 = vrot.lane.b32.xlu0 %v2835, 96
      %v2919 = vpop.permute.xlu0 %2918
      %2920 = vrot.lane.b32.xlu0 %v2836, 96
      %v2921 = vpop.permute.xlu0 %2920
      %2922 = vrot.lane.b32.xlu0 %v2837, 96
      %v2923 = vpop.permute.xlu0 %2922
      %2924 = vrot.lane.b32.xlu0 %v2838, 96
      %v2925 = vpop.permute.xlu0 %2924
      %2926 = vrot.lane.b32.xlu0 %v2839, 96
      %v2927 = vpop.permute.xlu0 %2926
      %2928 = vrot.lane.b32.xlu0 %v2840, 96
      %v2929 = vpop.permute.xlu0 %2928
      %2930 = vrot.lane.b32.xlu0 %v2841, 96
      %v2931 = vpop.permute.xlu0 %2930
      %2932 = vrot.lane.b32.xlu0 %v2842, 96
      %v2933 = vpop.permute.xlu0 %2932
      %2934 = vrot.lane.b32.xlu0 %v2843, 96
      %v2935 = vpop.permute.xlu0 %2934
      %2936 = vrot.lane.b32.xlu0 %v2844, 96
      %v2937 = vpop.permute.xlu0 %2936
      %2938 = vrot.lane.b32.xlu0 %v2845, 96
      %v2939 = vpop.permute.xlu0 %2938
      %2940 = vrot.lane.b32.xlu0 %v2846, 96
      %v2941 = vpop.permute.xlu0 %2940
      %2942 = vrot.lane.b32.xlu0 %v2847, 96
      %v2943 = vpop.permute.xlu0 %2942
      %v2976 = vadd.f32 %v2690, %v2881
      %v2977 = vadd.f32 %v2693, %v2883
      %v2978 = vadd.f32 %v2698, %v2885
      %v2979 = vadd.f32 %v2701, %v2887
      %v2980 = vadd.f32 %v2706, %v2889
      %v2981 = vadd.f32 %v2709, %v2891
      %v2982 = vadd.f32 %v2714, %v2893
      %v2983 = vadd.f32 %v2717, %v2895
      %v2984 = vadd.f32 %v2722, %v2897
      %v2985 = vadd.f32 %v2725, %v2899
      %v2986 = vadd.f32 %v2730, %v2901
      %v2987 = vadd.f32 %v2733, %v2903
      %v2988 = vadd.f32 %v2738, %v2905
      %v2989 = vadd.f32 %v2741, %v2907
      %v2990 = vadd.f32 %v2746, %v2909
      %v2991 = vadd.f32 %v2749, %v2911
      %v2992 = vadd.f32 %v2754, %v2913
      %v2993 = vadd.f32 %v2757, %v2915
      %v2994 = vadd.f32 %v2762, %v2917
      %v2995 = vadd.f32 %v2765, %v2919
      %v2996 = vadd.f32 %v2770, %v2921
      %v2997 = vadd.f32 %v2773, %v2923
      %v2998 = vadd.f32 %v2778, %v2925
      %v2999 = vadd.f32 %v2781, %v2927
      %v3000 = vadd.f32 %v2786, %v2929
      %v3001 = vadd.f32 %v2789, %v2931
      %v3002 = vadd.f32 %v2794, %v2933
      %v3003 = vadd.f32 %v2797, %v2935
      %v3004 = vadd.f32 %v2802, %v2937
      %v3005 = vadd.f32 %v2805, %v2939
      %v3006 = vadd.f32 %v2810, %v2941
      %v3007 = vadd.f32 %v2813, %v2943
      %v3008 = vpack.c.bf16 %v2977, %v2976
      %v3009 = vpack.c.bf16 %v2979, %v2978
      %v3010 = vpack.c.bf16 %v2981, %v2980
      %v3011 = vpack.c.bf16 %v2983, %v2982
      %v3012 = vpack.c.bf16 %v2985, %v2984
      %v3013 = vpack.c.bf16 %v2987, %v2986
      %v3014 = vpack.c.bf16 %v2989, %v2988
      %v3015 = vpack.c.bf16 %v2991, %v2990
      %v3016 = vpack.c.bf16 %v2993, %v2992
      %v3017 = vpack.c.bf16 %v2995, %v2994
      %v3018 = vpack.c.bf16 %v2997, %v2996
      %v3019 = vpack.c.bf16 %v2999, %v2998
      %v3020 = vpack.c.bf16 %v3001, %v3000
      %v3021 = vpack.c.bf16 %v3003, %v3002
      %v3022 = vpack.c.bf16 %v3005, %v3004
      %v3023 = vpack.c.bf16 %v3007, %v3006
      %v3024 = vld [vmem:[%s7] sm:$0xf]
      %v3025 = vld [vmem:[%s7 + $0x4] sm:$0xf]
      %v3026 = vld [vmem:[%s7 + $0x8] sm:$0xf]
      %v3027 = vld [vmem:[%s7 + $0xc] sm:$0xf]
      %v3028 = vld [vmem:[%s8] sm:$0x1]
      %v3030 = vlaneseq
      %v3031 = vshrl.u32 %v3030, 7
      %v3032 = vsub.s32 0, %v3031
      %v3033 = vrot.slane %v3028, %v3032
      %v3039 = vunpack.c.l.b16 %v3024
      %v3040 = vunpack.c.l.b16 %v3025
      %v3041 = vunpack.c.l.b16 %v3026
      %v3042 = vunpack.c.l.b16 %v3027
      %v3043 = vpack.c.b16 %v3040, %v3039
      %v3044 = vpack.c.b16 %v3042, %v3041
      %v3048 = vsel %vm1109, %v3008, 0
      %v3051 = vsel %vm1109, %v3009, 0
      %v3054 = vsel %vm1109, %v3010, 0
      %v3057 = vsel %vm1109, %v3011, 0
      %v3060 = vsel %vm1109, %v3012, 0
      %v3063 = vsel %vm1109, %v3013, 0
      %v3066 = vsel %vm1109, %v3014, 0
      %v3069 = vsel %vm1109, %v3015, 0
      %v3072 = vsel %vm1109, %v3016, 0
      %v3075 = vsel %vm1109, %v3017, 0
      %v3078 = vsel %vm1109, %v3018, 0
      %v3081 = vsel %vm1109, %v3019, 0
      %v3084 = vsel %vm1109, %v3020, 0
      %v3087 = vsel %vm1109, %v3021, 0
      %v3090 = vsel %vm1109, %v3022, 0
      %v3093 = vsel %vm1109, %v3023, 0
      %3095 = vmatprep.subr.bf16.mxu0 0
      %3096 = vmatpush1.bf16.msra.mxu0 0
      %3097 = vmatprep.subr.bf16.mxu0 0
      %3098 = vmatpush1.bf16.msra.mxu0 0
      %3099 = vmatprep.subr.bf16.mxu0 0
      %3100 = vmatpush1.bf16.msra.mxu0 0
      %3101 = vmatprep.subr.bf16.mxu0 0
      %3102 = vmatpush1.bf16.msra.mxu0 0
      %3103 = vmatprep.subr.bf16.mxu0 0
      %3104 = vmatpush1.bf16.msra.mxu0 0
      %3105 = vmatprep.subr.bf16.mxu0 0
      %3106 = vmatpush1.bf16.msra.mxu0 0
      %3107 = vmatprep.subr.bf16.mxu0 0
      %3108 = vmatpush1.bf16.msra.mxu0 %v3044
      %3109 = vmatprep.subr.bf16.mxu0 0
      %3110 = vmatpush1.bf16.msra.mxu0 %v3043
      %3111 = vmatprep.subr.bf16.mxu0 0
      %3112 = vmatpush2.bf16.msra.mxu0 0
      %3113 = vmatprep.subr.bf16.mxu0 0
      %3114 = vmatpush2.bf16.msra.mxu0 0
      %3115 = vmatprep.subr.bf16.mxu0 0
      %3116 = vmatpush2.bf16.msra.mxu0 0
      %3117 = vmatprep.subr.bf16.mxu0 0
      %3118 = vmatpush2.bf16.msra.mxu0 0
      %3119 = vmatprep.subr.bf16.mxu0 0
      %3120 = vmatpush2.bf16.msra.mxu0 0
      %3121 = vmatprep.subr.bf16.mxu0 0
      %3122 = vmatpush2.bf16.msra.mxu0 0
      %3123 = vmatprep.subr.bf16.mxu0 0
      %3124 = vmatpush2.bf16.msra.mxu0 0
      %3125 = vmatprep.subr.bf16.mxu0 0
      %3126 = vmatpush2.bf16.msra.mxu0 0
      %3127 = vmatprep.mubr.bf16.mxu0 0
      %3128 = vmatmul.mubr.bf16.gmra.mxu0 %v3048
      %v3129 = vpop.f32.mrf.mxu0
      %v3130 = vadd.f32 %v3033, %v3129
      %v3131 = vpop.f32.mrf.mxu0
      %v3132 = vpop.f32.mrf.mxu0
      %v3133 = vadd.f32 %v3033, %v3132
      %v3134 = vpop.f32.mrf.mxu0
      %3135 = vmatprep.mubr.bf16.mxu0 0
      %3136 = vmatmul.mubr.bf16.gmra.mxu0 %v3051
      %v3137 = vpop.f32.mrf.mxu0
      %v3138 = vadd.f32 %v3033, %v3137
      %v3139 = vpop.f32.mrf.mxu0
      %v3140 = vpop.f32.mrf.mxu0
      %v3141 = vadd.f32 %v3033, %v3140
      %v3142 = vpop.f32.mrf.mxu0
      %3143 = vmatprep.mubr.bf16.mxu0 0
      %3144 = vmatmul.mubr.bf16.gmra.mxu0 %v3054
      %v3145 = vpop.f32.mrf.mxu0
      %v3146 = vadd.f32 %v3033, %v3145
      %v3147 = vpop.f32.mrf.mxu0
      %v3148 = vpop.f32.mrf.mxu0
      %v3149 = vadd.f32 %v3033, %v3148
      %v3150 = vpop.f32.mrf.mxu0
      %3151 = vmatprep.mubr.bf16.mxu0 0
      %3152 = vmatmul.mubr.bf16.gmra.mxu0 %v3057
      %v3153 = vpop.f32.mrf.mxu0
      %v3154 = vadd.f32 %v3033, %v3153
      %v3155 = vpop.f32.mrf.mxu0
      %v3156 = vpop.f32.mrf.mxu0
      %v3157 = vadd.f32 %v3033, %v3156
      %v3158 = vpop.f32.mrf.mxu0
      %3159 = vmatprep.mubr.bf16.mxu0 0
      %3160 = vmatmul.mubr.bf16.gmra.mxu0 %v3060
      %v3161 = vpop.f32.mrf.mxu0
      %v3162 = vadd.f32 %v3033, %v3161
      %v3163 = vpop.f32.mrf.mxu0
      %v3164 = vpop.f32.mrf.mxu0
      %v3165 = vadd.f32 %v3033, %v3164
      %v3166 = vpop.f32.mrf.mxu0
      %3167 = vmatprep.mubr.bf16.mxu0 0
      %3168 = vmatmul.mubr.bf16.gmra.mxu0 %v3063
      %v3169 = vpop.f32.mrf.mxu0
      %v3170 = vadd.f32 %v3033, %v3169
      %v3171 = vpop.f32.mrf.mxu0
      %v3172 = vpop.f32.mrf.mxu0
      %v3173 = vadd.f32 %v3033, %v3172
      %v3174 = vpop.f32.mrf.mxu0
      %3175 = vmatprep.mubr.bf16.mxu0 0
      %3176 = vmatmul.mubr.bf16.gmra.mxu0 %v3066
      %v3177 = vpop.f32.mrf.mxu0
      %v3178 = vadd.f32 %v3033, %v3177
      %v3179 = vpop.f32.mrf.mxu0
      %v3180 = vpop.f32.mrf.mxu0
      %v3181 = vadd.f32 %v3033, %v3180
      %v3182 = vpop.f32.mrf.mxu0
      %3183 = vmatprep.mubr.bf16.mxu0 0
      %3184 = vmatmul.mubr.bf16.gmra.mxu0 %v3069
      %v3185 = vpop.f32.mrf.mxu0
      %v3186 = vadd.f32 %v3033, %v3185
      %v3187 = vpop.f32.mrf.mxu0
      %v3188 = vpop.f32.mrf.mxu0
      %v3189 = vadd.f32 %v3033, %v3188
      %v3190 = vpop.f32.mrf.mxu0
      %3191 = vmatprep.mubr.bf16.mxu0 0
      %3192 = vmatmul.mubr.bf16.gmra.mxu0 %v3072
      %v3193 = vpop.f32.mrf.mxu0
      %v3194 = vadd.f32 %v3033, %v3193
      %v3195 = vpop.f32.mrf.mxu0
      %v3196 = vpop.f32.mrf.mxu0
      %v3197 = vadd.f32 %v3033, %v3196
      %v3198 = vpop.f32.mrf.mxu0
      %3199 = vmatprep.mubr.bf16.mxu0 0
      %3200 = vmatmul.mubr.bf16.gmra.mxu0 %v3075
      %v3201 = vpop.f32.mrf.mxu0
      %v3202 = vadd.f32 %v3033, %v3201
      %v3203 = vpop.f32.mrf.mxu0
      %v3204 = vpop.f32.mrf.mxu0
      %v3205 = vadd.f32 %v3033, %v3204
      %v3206 = vpop.f32.mrf.mxu0
      %3207 = vmatprep.mubr.bf16.mxu0 0
      %3208 = vmatmul.mubr.bf16.gmra.mxu0 %v3078
      %v3209 = vpop.f32.mrf.mxu0
      %v3210 = vadd.f32 %v3033, %v3209
      %v3211 = vpop.f32.mrf.mxu0
      %v3212 = vpop.f32.mrf.mxu0
      %v3213 = vadd.f32 %v3033, %v3212
      %v3214 = vpop.f32.mrf.mxu0
      %3215 = vmatprep.mubr.bf16.mxu0 0
      %3216 = vmatmul.mubr.bf16.gmra.mxu0 %v3081
      %v3217 = vpop.f32.mrf.mxu0
      %v3218 = vadd.f32 %v3033, %v3217
      %v3219 = vpop.f32.mrf.mxu0
      %v3220 = vpop.f32.mrf.mxu0
      %v3221 = vadd.f32 %v3033, %v3220
      %v3222 = vpop.f32.mrf.mxu0
      %3223 = vmatprep.mubr.bf16.mxu0 0
      %3224 = vmatmul.mubr.bf16.gmra.mxu0 %v3084
      %v3225 = vpop.f32.mrf.mxu0
      %v3226 = vadd.f32 %v3033, %v3225
      %v3227 = vpop.f32.mrf.mxu0
      %v3228 = vpop.f32.mrf.mxu0
      %v3229 = vadd.f32 %v3033, %v3228
      %v3230 = vpop.f32.mrf.mxu0
      %3231 = vmatprep.mubr.bf16.mxu0 0
      %3232 = vmatmul.mubr.bf16.gmra.mxu0 %v3087
      %v3233 = vpop.f32.mrf.mxu0
      %v3234 = vadd.f32 %v3033, %v3233
      %v3235 = vpop.f32.mrf.mxu0
      %v3236 = vpop.f32.mrf.mxu0
      %v3237 = vadd.f32 %v3033, %v3236
      %v3238 = vpop.f32.mrf.mxu0
      %3239 = vmatprep.mubr.bf16.mxu0 0
      %3240 = vmatmul.mubr.bf16.gmra.mxu0 %v3090
      %v3241 = vpop.f32.mrf.mxu0
      %v3242 = vadd.f32 %v3033, %v3241
      %v3243 = vpop.f32.mrf.mxu0
      %v3244 = vpop.f32.mrf.mxu0
      %v3245 = vadd.f32 %v3033, %v3244
      %v3246 = vpop.f32.mrf.mxu0
      %3247 = vmatprep.mubr.bf16.mxu0 0
      %3248 = vmatmul.mubr.bf16.gmra.mxu0 %v3093
      %v3249 = vpop.f32.mrf.mxu0
      %v3250 = vadd.f32 %v3033, %v3249
      %v3251 = vpop.f32.mrf.mxu0
      %v3252 = vpop.f32.mrf.mxu0
      %v3253 = vadd.f32 %v3033, %v3252
      %v3254 = vpop.f32.mrf.mxu0
      %3255 = vdwg.mxu0
      %v3256 = vmax.f32 %v3130, 0.0
      %v3257 = vmax.f32 %v3133, 0.0
      %v3258 = vmax.f32 %v3138, 0.0
      %v3259 = vmax.f32 %v3141, 0.0
      %v3260 = vmax.f32 %v3146, 0.0
      %v3261 = vmax.f32 %v3149, 0.0
      %v3262 = vmax.f32 %v3154, 0.0
      %v3263 = vmax.f32 %v3157, 0.0
      %v3264 = vmax.f32 %v3162, 0.0
      %v3265 = vmax.f32 %v3165, 0.0
      %v3266 = vmax.f32 %v3170, 0.0
      %v3267 = vmax.f32 %v3173, 0.0
      %v3268 = vmax.f32 %v3178, 0.0
      %v3269 = vmax.f32 %v3181, 0.0
      %v3270 = vmax.f32 %v3186, 0.0
      %v3271 = vmax.f32 %v3189, 0.0
      %v3272 = vmax.f32 %v3194, 0.0
      %v3273 = vmax.f32 %v3197, 0.0
      %v3274 = vmax.f32 %v3202, 0.0
      %v3275 = vmax.f32 %v3205, 0.0
      %v3276 = vmax.f32 %v3210, 0.0
      %v3277 = vmax.f32 %v3213, 0.0
      %v3278 = vmax.f32 %v3218, 0.0
      %v3279 = vmax.f32 %v3221, 0.0
      %v3280 = vmax.f32 %v3226, 0.0
      %v3281 = vmax.f32 %v3229, 0.0
      %v3282 = vmax.f32 %v3234, 0.0
      %v3283 = vmax.f32 %v3237, 0.0
      %v3284 = vmax.f32 %v3242, 0.0
      %v3285 = vmax.f32 %v3245, 0.0
      %v3286 = vmax.f32 %v3250, 0.0
      %v3287 = vmax.f32 %v3253, 0.0
      %v3288 = vpack.c.bf16 %v3257, %v3256
      %v3289 = vpack.c.bf16 %v3259, %v3258
      %v3290 = vpack.c.bf16 %v3261, %v3260
      %v3291 = vpack.c.bf16 %v3263, %v3262
      %v3292 = vpack.c.bf16 %v3265, %v3264
      %v3293 = vpack.c.bf16 %v3267, %v3266
      %v3294 = vpack.c.bf16 %v3269, %v3268
      %v3295 = vpack.c.bf16 %v3271, %v3270
      %v3296 = vpack.c.bf16 %v3273, %v3272
      %v3297 = vpack.c.bf16 %v3275, %v3274
      %v3298 = vpack.c.bf16 %v3277, %v3276
      %v3299 = vpack.c.bf16 %v3279, %v3278
      %v3300 = vpack.c.bf16 %v3281, %v3280
      %v3301 = vpack.c.bf16 %v3283, %v3282
      %v3302 = vpack.c.bf16 %v3285, %v3284
      %v3303 = vpack.c.bf16 %v3287, %v3286
      %v3304 = vld [vmem:[%s9] sm:$0xf]
      %v3305 = vld [vmem:[%s9 + $0x4] sm:$0xf]
      %v3306 = vld [vmem:[%s9 + $0x8] sm:$0xf]
      %v3307 = vld [vmem:[%s9 + $0xc] sm:$0xf]
      %v3308 = vld [vmem:[%s10] sm:$0x1]
      %v3310 = vlaneseq
      %v3311 = vshrl.u32 %v3310, 7
      %v3312 = vsub.s32 0, %v3311
      %v3313 = vrot.slane %v3308, %v3312
      %v3319 = vunpack.c.l.b16 %v3304
      %v3320 = vunpack.c.l.b16 %v3305
      %v3321 = vunpack.c.l.b16 %v3306
      %v3322 = vunpack.c.l.b16 %v3307
      %v3323 = vpack.c.b16 %v3320, %v3319
      %v3324 = vpack.c.b16 %v3322, %v3321
      %v3328 = vsel %vm1109, %v3288, 0
      %v3331 = vsel %vm1109, %v3289, 0
      %v3334 = vsel %vm1109, %v3290, 0
      %v3337 = vsel %vm1109, %v3291, 0
      %v3340 = vsel %vm1109, %v3292, 0
      %v3343 = vsel %vm1109, %v3293, 0
      %v3346 = vsel %vm1109, %v3294, 0
      %v3349 = vsel %vm1109, %v3295, 0
      %v3352 = vsel %vm1109, %v3296, 0
      %v3355 = vsel %vm1109, %v3297, 0
      %v3358 = vsel %vm1109, %v3298, 0
      %v3361 = vsel %vm1109, %v3299, 0
      %v3364 = vsel %vm1109, %v3300, 0
      %v3367 = vsel %vm1109, %v3301, 0
      %v3370 = vsel %vm1109, %v3302, 0
      %v3373 = vsel %vm1109, %v3303, 0
      %3375 = vmatprep.subr.bf16.mxu0 0
      %3376 = vmatpush1.bf16.msra.mxu0 0
      %3377 = vmatprep.subr.bf16.mxu0 0
      %3378 = vmatpush1.bf16.msra.mxu0 0
      %3379 = vmatprep.subr.bf16.mxu0 0
      %3380 = vmatpush1.bf16.msra.mxu0 0
      %3381 = vmatprep.subr.bf16.mxu0 0
      %3382 = vmatpush1.bf16.msra.mxu0 0
      %3383 = vmatprep.subr.bf16.mxu0 0
      %3384 = vmatpush1.bf16.msra.mxu0 0
      %3385 = vmatprep.subr.bf16.mxu0 0
      %3386 = vmatpush1.bf16.msra.mxu0 0
      %3387 = vmatprep.subr.bf16.mxu0 0
      %3388 = vmatpush1.bf16.msra.mxu0 %v3324
      %3389 = vmatprep.subr.bf16.mxu0 0
      %3390 = vmatpush1.bf16.msra.mxu0 %v3323
      %3391 = vmatprep.subr.bf16.mxu0 0
      %3392 = vmatpush2.bf16.msra.mxu0 0
      %3393 = vmatprep.subr.bf16.mxu0 0
      %3394 = vmatpush2.bf16.msra.mxu0 0
      %3395 = vmatprep.subr.bf16.mxu0 0
      %3396 = vmatpush2.bf16.msra.mxu0 0
      %3397 = vmatprep.subr.bf16.mxu0 0
      %3398 = vmatpush2.bf16.msra.mxu0 0
      %3399 = vmatprep.subr.bf16.mxu0 0
      %3400 = vmatpush2.bf16.msra.mxu0 0
      %3401 = vmatprep.subr.bf16.mxu0 0
      %3402 = vmatpush2.bf16.msra.mxu0 0
      %3403 = vmatprep.subr.bf16.mxu0 0
      %3404 = vmatpush2.bf16.msra.mxu0 0
      %3405 = vmatprep.subr.bf16.mxu0 0
      %3406 = vmatpush2.bf16.msra.mxu0 0
      %3407 = vmatprep.mubr.bf16.mxu0 0
      %3408 = vmatmul.mubr.bf16.gmra.mxu0 %v3328
      %v3409 = vpop.f32.mrf.mxu0
      %v3410 = vadd.f32 %v3313, %v3409
      %v3411 = vpop.f32.mrf.mxu0
      %v3412 = vpop.f32.mrf.mxu0
      %v3413 = vadd.f32 %v3313, %v3412
      %v3414 = vpop.f32.mrf.mxu0
      %3415 = vmatprep.mubr.bf16.mxu0 0
      %3416 = vmatmul.mubr.bf16.gmra.mxu0 %v3331
      %v3417 = vpop.f32.mrf.mxu0
      %v3418 = vadd.f32 %v3313, %v3417
      %v3419 = vpop.f32.mrf.mxu0
      %v3420 = vpop.f32.mrf.mxu0
      %v3421 = vadd.f32 %v3313, %v3420
      %v3422 = vpop.f32.mrf.mxu0
      %3423 = vmatprep.mubr.bf16.mxu0 0
      %3424 = vmatmul.mubr.bf16.gmra.mxu0 %v3334
      %v3425 = vpop.f32.mrf.mxu0
      %v3426 = vadd.f32 %v3313, %v3425
      %v3427 = vpop.f32.mrf.mxu0
      %v3428 = vpop.f32.mrf.mxu0
      %v3429 = vadd.f32 %v3313, %v3428
      %v3430 = vpop.f32.mrf.mxu0
      %3431 = vmatprep.mubr.bf16.mxu0 0
      %3432 = vmatmul.mubr.bf16.gmra.mxu0 %v3337
      %v3433 = vpop.f32.mrf.mxu0
      %v3434 = vadd.f32 %v3313, %v3433
      %v3435 = vpop.f32.mrf.mxu0
      %v3436 = vpop.f32.mrf.mxu0
      %v3437 = vadd.f32 %v3313, %v3436
      %v3438 = vpop.f32.mrf.mxu0
      %3439 = vmatprep.mubr.bf16.mxu0 0
      %3440 = vmatmul.mubr.bf16.gmra.mxu0 %v3340
      %v3441 = vpop.f32.mrf.mxu0
      %v3442 = vadd.f32 %v3313, %v3441
      %v3443 = vpop.f32.mrf.mxu0
      %v3444 = vpop.f32.mrf.mxu0
      %v3445 = vadd.f32 %v3313, %v3444
      %v3446 = vpop.f32.mrf.mxu0
      %3447 = vmatprep.mubr.bf16.mxu0 0
      %3448 = vmatmul.mubr.bf16.gmra.mxu0 %v3343
      %v3449 = vpop.f32.mrf.mxu0
      %v3450 = vadd.f32 %v3313, %v3449
      %v3451 = vpop.f32.mrf.mxu0
      %v3452 = vpop.f32.mrf.mxu0
      %v3453 = vadd.f32 %v3313, %v3452
      %v3454 = vpop.f32.mrf.mxu0
      %3455 = vmatprep.mubr.bf16.mxu0 0
      %3456 = vmatmul.mubr.bf16.gmra.mxu0 %v3346
      %v3457 = vpop.f32.mrf.mxu0
      %v3458 = vadd.f32 %v3313, %v3457
      %v3459 = vpop.f32.mrf.mxu0
      %v3460 = vpop.f32.mrf.mxu0
      %v3461 = vadd.f32 %v3313, %v3460
      %v3462 = vpop.f32.mrf.mxu0
      %3463 = vmatprep.mubr.bf16.mxu0 0
      %3464 = vmatmul.mubr.bf16.gmra.mxu0 %v3349
      %v3465 = vpop.f32.mrf.mxu0
      %v3466 = vadd.f32 %v3313, %v3465
      %v3467 = vpop.f32.mrf.mxu0
      %v3468 = vpop.f32.mrf.mxu0
      %v3469 = vadd.f32 %v3313, %v3468
      %v3470 = vpop.f32.mrf.mxu0
      %3471 = vmatprep.mubr.bf16.mxu0 0
      %3472 = vmatmul.mubr.bf16.gmra.mxu0 %v3352
      %v3473 = vpop.f32.mrf.mxu0
      %v3474 = vadd.f32 %v3313, %v3473
      %v3475 = vpop.f32.mrf.mxu0
      %v3476 = vpop.f32.mrf.mxu0
      %v3477 = vadd.f32 %v3313, %v3476
      %v3478 = vpop.f32.mrf.mxu0
      %3479 = vmatprep.mubr.bf16.mxu0 0
      %3480 = vmatmul.mubr.bf16.gmra.mxu0 %v3355
      %v3481 = vpop.f32.mrf.mxu0
      %v3482 = vadd.f32 %v3313, %v3481
      %v3483 = vpop.f32.mrf.mxu0
      %v3484 = vpop.f32.mrf.mxu0
      %v3485 = vadd.f32 %v3313, %v3484
      %v3486 = vpop.f32.mrf.mxu0
      %3487 = vmatprep.mubr.bf16.mxu0 0
      %3488 = vmatmul.mubr.bf16.gmra.mxu0 %v3358
      %v3489 = vpop.f32.mrf.mxu0
      %v3490 = vadd.f32 %v3313, %v3489
      %v3491 = vpop.f32.mrf.mxu0
      %v3492 = vpop.f32.mrf.mxu0
      %v3493 = vadd.f32 %v3313, %v3492
      %v3494 = vpop.f32.mrf.mxu0
      %3495 = vmatprep.mubr.bf16.mxu0 0
      %3496 = vmatmul.mubr.bf16.gmra.mxu0 %v3361
      %v3497 = vpop.f32.mrf.mxu0
      %v3498 = vadd.f32 %v3313, %v3497
      %v3499 = vpop.f32.mrf.mxu0
      %v3500 = vpop.f32.mrf.mxu0
      %v3501 = vadd.f32 %v3313, %v3500
      %v3502 = vpop.f32.mrf.mxu0
      %3503 = vmatprep.mubr.bf16.mxu0 0
      %3504 = vmatmul.mubr.bf16.gmra.mxu0 %v3364
      %v3505 = vpop.f32.mrf.mxu0
      %v3506 = vadd.f32 %v3313, %v3505
      %v3507 = vpop.f32.mrf.mxu0
      %v3508 = vpop.f32.mrf.mxu0
      %v3509 = vadd.f32 %v3313, %v3508
      %v3510 = vpop.f32.mrf.mxu0
      %3511 = vmatprep.mubr.bf16.mxu0 0
      %3512 = vmatmul.mubr.bf16.gmra.mxu0 %v3367
      %v3513 = vpop.f32.mrf.mxu0
      %v3514 = vadd.f32 %v3313, %v3513
      %v3515 = vpop.f32.mrf.mxu0
      %v3516 = vpop.f32.mrf.mxu0
      %v3517 = vadd.f32 %v3313, %v3516
      %v3518 = vpop.f32.mrf.mxu0
      %3519 = vmatprep.mubr.bf16.mxu0 0
      %3520 = vmatmul.mubr.bf16.gmra.mxu0 %v3370
      %v3521 = vpop.f32.mrf.mxu0
      %v3522 = vadd.f32 %v3313, %v3521
      %v3523 = vpop.f32.mrf.mxu0
      %v3524 = vpop.f32.mrf.mxu0
      %v3525 = vadd.f32 %v3313, %v3524
      %v3526 = vpop.f32.mrf.mxu0
      %3527 = vmatprep.mubr.bf16.mxu0 0
      %3528 = vmatmul.mubr.bf16.gmra.mxu0 %v3373
      %v3529 = vpop.f32.mrf.mxu0
      %v3530 = vadd.f32 %v3313, %v3529
      %v3531 = vpop.f32.mrf.mxu0
      %v3532 = vpop.f32.mrf.mxu0
      %v3533 = vadd.f32 %v3313, %v3532
      %v3534 = vpop.f32.mrf.mxu0
      %3535 = vdwg.mxu0
      %3536 = vst [vmem:[%s386] sm:$0xff] %v3410
      %3537 = vst [vmem:[%s386 + $0x8] sm:$0xff] %v3413
      %3538 = vst [vmem:[%s386 + $0x10] sm:$0xff] %v3418
      %3539 = vst [vmem:[%s386 + $0x18] sm:$0xff] %v3421
      %3540 = vst [vmem:[%s386 + $0x20] sm:$0xff] %v3426
      %3541 = vst [vmem:[%s386 + $0x28] sm:$0xff] %v3429
      %3542 = vst [vmem:[%s386 + $0x30] sm:$0xff] %v3434
      %3543 = vst [vmem:[%s386 + $0x38] sm:$0xff] %v3437
      %3544 = vst [vmem:[%s386 + $0x40] sm:$0xff] %v3442
      %3545 = vst [vmem:[%s386 + $0x48] sm:$0xff] %v3445
      %3546 = vst [vmem:[%s386 + $0x50] sm:$0xff] %v3450
      %3547 = vst [vmem:[%s386 + $0x58] sm:$0xff] %v3453
      %3548 = vst [vmem:[%s386 + $0x60] sm:$0xff] %v3458
      %3549 = vst [vmem:[%s386 + $0x68] sm:$0xff] %v3461
      %3550 = vst [vmem:[%s386 + $0x70] sm:$0xff] %v3466
      %3551 = vst [vmem:[%s386 + $0x78] sm:$0xff] %v3469
      %3552 = vst [vmem:[%s386 + $0x80] sm:$0xff] %v3474
      %3553 = vst [vmem:[%s386 + $0x88] sm:$0xff] %v3477
      %3554 = vst [vmem:[%s386 + $0x90] sm:$0xff] %v3482
      %3555 = vst [vmem:[%s386 + $0x98] sm:$0xff] %v3485
      %3556 = vst [vmem:[%s386 + $0xa0] sm:$0xff] %v3490
      %3557 = vst [vmem:[%s386 + $0xa8] sm:$0xff] %v3493
      %3558 = vst [vmem:[%s386 + $0xb0] sm:$0xff] %v3498
      %3559 = vst [vmem:[%s386 + $0xb8] sm:$0xff] %v3501
      %3560 = vst [vmem:[%s386 + $0xc0] sm:$0xff] %v3506
      %3561 = vst [vmem:[%s386 + $0xc8] sm:$0xff] %v3509
      %3562 = vst [vmem:[%s386 + $0xd0] sm:$0xff] %v3514
      %3563 = vst [vmem:[%s386 + $0xd8] sm:$0xff] %v3517
      %3564 = vst [vmem:[%s386 + $0xe0] sm:$0xff] %v3522
      %3565 = vst [vmem:[%s386 + $0xe8] sm:$0xff] %v3525
      %3566 = vst [vmem:[%s386 + $0xf0] sm:$0xff] %v3530
      %3567 = vst [vmem:[%s386 + $0xf8] sm:$0xff] %v3533
      %p3568 = scmp.lt.s32.totalorder %s22, 1
      %s3569 = scalar_select %p3568, %s22, 1
      %s3570 = smul.addr %s3569, 32
      %s3571 = smul.addr %s3570, 8
      %s3572 = scalar_lea.vmem %s11, %s3571
      // Predicated region
      $region65: #{gated_pixelcnn_forward.5} parent=63 // pred_check
        %p3573 = pneg %p276
      $region66: #{gated_pixelcnn_forward.5} parent=63 // pred_check_branch
        %3575 = sbr.rel (%p3573) target = $region68
      $region67: #{gated_pixelcnn_forward.5} parent=63 // pred_region
        _
      $region68: #{gated_pixelcnn_forward.5} parent=63 // pred_fallthru
        _
    $region64: #{gated_pixelcnn_forward.5} parent=5 // pred_fallthru
      _
    %p3576 = scmp.le.s32.totalorder 2, %s17
    // Predicated region
    $region69: #{gated_pixelcnn_forward.5} parent=5 // pred_check
      %p3577 = pneg %p3576
    $region70: #{gated_pixelcnn_forward.5} parent=5 // pred_check_branch
      %3579 = sbr.rel (%p3577) target = $region72
    $region71: #{gated_pixelcnn_forward.5} parent=5 // pred_region
      %s3580 = ssub.s32 %s17, 2
      // Predicated region
      $region73: #{gated_pixelcnn_forward.5} parent=71 // pred_check
        %p3581 = pneg %p282
      $region74: #{gated_pixelcnn_forward.5} parent=71 // pred_check_branch
        %3583 = sbr.rel (%p3581) target = $region76
      $region75: #{gated_pixelcnn_forward.5} parent=71 // pred_region
        %p3584 = scmp.lt.s32.totalorder %s23, 1
        %s3585 = scalar_select %p3584, %s23, 1
        %s3586 = smul.addr %s3585, 32
        %s3587 = smul.addr %s3586, 8
        %s3588 = scalar_lea.vmem %s11, %s3587
      $region76: #{gated_pixelcnn_forward.5} parent=71 // pred_fallthru
        _
    $region72: #{gated_pixelcnn_forward.5} parent=5 // pred_fallthru
      _
  $region6: #{gated_pixelcnn_forward.5} parent=0 // loop_footer
    %s21 = sadd.s32 1, %s17
  $region7: #{gated_pixelcnn_forward.5} parent=0 // loop_footer_branch
    %16 = sbr.rel target = $region3
  $region8: #{gated_pixelcnn_forward.5} parent=0 // loop_exit
    _

// kernel: gated_pixelcnn_forward.3
$region0: #{gated_pixelcnn_forward.3}
  #allocation0 [shape = 'u32[]', space=smem, size = 0x4, offset = 0x4, fixed_abs, tag = 'smem constant byte address 0x4 - core index']
  #allocation1 [shape = 'u32[144,128]{1,0:T(1,128)}', space=vmem, size = 0x12000, scoped, tag = 'internal scratch']
  %s0 = inlined_call_operand.vmem [shape: bf16[2,16,16,32], index: 0, kind: input, shape index: {}]
  %s1 = inlined_call_operand.vmem [shape: bf16[672,128], index: 1, kind: input, shape index: {}]
  %s2 = inlined_call_operand.vmem [shape: f32[1,128], index: 2, kind: input, shape index: {}]
  %s3 = inlined_call_operand.vmem [shape: bf16[96,64], index: 3, kind: input, shape index: {}]
  %s4 = inlined_call_operand.vmem [shape: f32[1,64], index: 4, kind: input, shape index: {}]
  %s5 = inlined_call_operand.vmem [shape: bf16[32,32], index: 5, kind: input, shape index: {}]
  %s6 = inlined_call_operand.vmem [shape: f32[1,32], index: 6, kind: input, shape index: {}]
  %s7 = inlined_call_operand.vmem [shape: bf16[2,16,16,64], index: 7, kind: output, shape index: {}]
  %s8 = sld [smem:[#allocation0]]
  $region61: #{gated_pixelcnn_forward.3} parent=0
    _
  %s10 = ssub.s32 1, %s8
  %s11 = scalar_select 0, %s10, %s8
  loop: start=0, step=1, limit=4
  $region2: #{gated_pixelcnn_forward.3} parent=0 // loop_pre_header
    _
  $region3: #{gated_pixelcnn_forward.3} parent=0 // loop_header
    %s13 = sphi 0, %s17
    %p14 = scmp.ge.s32.totalorder %s13, 4
    %s23 = sphi 0, %s25
    %s26 = sphi 0, %s23
    %s27 = sphi 0, %s26
    %s43 = sphi 0, %s27
    %s47 = sphi 0, %s47
    %s49 = sphi 0, %s47
    %s50 = sphi 0, %s49
    %s64 = sphi 0, %s50
    %s68 = sphi 0, %s68
    %s70 = sphi 0, %s68
    %s71 = sphi 0, %s70
    %s85 = sphi 0, %s71
    %s89 = sphi 0, %s89
    %s91 = sphi 0, %s89
    %s92 = sphi 0, %s91
    %s106 = sphi 0, %s92
    %s110 = sphi 0, %s110
    %s112 = sphi 0, %s110
    %s113 = sphi 0, %s112
    %s127 = sphi 0, %s113
    %s131 = sphi 0, %s131
    %s133 = sphi 0, %s131
    %s134 = sphi 0, %s133
    %s148 = sphi 0, %s134
    %s152 = sphi 0, %s152
    %s154 = sphi 0, %s152
    %s155 = sphi 0, %s154
    %s169 = sphi 0, %s155
    %s175 = sphi 0, %s177
    %s178 = sphi 0, %s175
    %s179 = sphi 0, %s178
    %s195 = sphi 0, %s179
  $region4: #{gated_pixelcnn_forward.3} parent=0 // loop_header_branch
    %16 = sbr.rel (%p14) target = $region8
  $region5: #{gated_pixelcnn_forward.3} parent=0 // loop_body
    %s18 = ssub.s32 %s13, 1
    %s19 = ssub.s32 %s13, 2
    %s20 = sadd.s32 %s13, 1
    %s21 = ssub.s32 %s13, %s20
    %p22 = scmp.eq.s32.totalorder %s21, 0
    %s24 = sadd.s32 %s23, 1
    %s25 = scalar_select %p22, %s23, %s24
    %p28 = pneg %p22
    %p29 = scmp.eq.s32.totalorder %s13, 1
    %p30 = por %p28, %p29
    %p31 = scmp.ne.s32.totalorder %s23, %s26
    %p32 = scmp.eq.s32.totalorder %s13, 0
    %p33 = por %p31, %p32
    %p34 = scmp.ne.s32.totalorder %s23, %s26
    %p35 = scmp.eq.s32.totalorder %s18, 1
    %p36 = por %p34, %p35
    %p37 = scmp.ne.s32.totalorder %s26, %s27
    %p38 = scmp.eq.s32.totalorder %s18, 0
    %p39 = por %p37, %p38
    %p40 = scmp.ne.s32.totalorder %s26, %s27
    %p41 = scmp.eq.s32.totalorder %s19, 1
    %p42 = por %p40, %p41
    %p44 = scmp.ne.s32.totalorder %s27, %s43
    %p45 = scmp.eq.s32.totalorder %s19, 0
    %p46 = por %p44, %p45
    %s48 = sadd.s32 %s47, 1
    %p51 = scmp.eq.s32.totalorder %s13, 1
    %p52 = scmp.ne.s32.totalorder %s47, %s49
    %p53 = scmp.eq.s32.totalorder %s13, 0
    %p54 = por %p52, %p53
    %p55 = scmp.ne.s32.totalorder %s47, %s49
    %p56 = scmp.eq.s32.totalorder %s18, 1
    %p57 = por %p55, %p56
    %p58 = scmp.ne.s32.totalorder %s49, %s50
    %p59 = scmp.eq.s32.totalorder %s18, 0
    %p60 = por %p58, %p59
    %p61 = scmp.ne.s32.totalorder %s49, %s50
    %p62 = scmp.eq.s32.totalorder %s19, 1
    %p63 = por %p61, %p62
    %p65 = scmp.ne.s32.totalorder %s50, %s64
    %p66 = scmp.eq.s32.totalorder %s19, 0
    %p67 = por %p65, %p66
    %s69 = sadd.s32 %s68, 1
    %p72 = scmp.eq.s32.totalorder %s13, 1
    %p73 = scmp.ne.s32.totalorder %s68, %s70
    %p74 = scmp.eq.s32.totalorder %s13, 0
    %p75 = por %p73, %p74
    %p76 = scmp.ne.s32.totalorder %s68, %s70
    %p77 = scmp.eq.s32.totalorder %s18, 1
    %p78 = por %p76, %p77
    %p79 = scmp.ne.s32.totalorder %s70, %s71
    %p80 = scmp.eq.s32.totalorder %s18, 0
    %p81 = por %p79, %p80
    %p82 = scmp.ne.s32.totalorder %s70, %s71
    %p83 = scmp.eq.s32.totalorder %s19, 1
    %p84 = por %p82, %p83
    %p86 = scmp.ne.s32.totalorder %s71, %s85
    %p87 = scmp.eq.s32.totalorder %s19, 0
    %p88 = por %p86, %p87
    %s90 = sadd.s32 %s89, 1
    %p93 = scmp.eq.s32.totalorder %s13, 1
    %p94 = scmp.ne.s32.totalorder %s89, %s91
    %p95 = scmp.eq.s32.totalorder %s13, 0
    %p96 = por %p94, %p95
    %p97 = scmp.ne.s32.totalorder %s89, %s91
    %p98 = scmp.eq.s32.totalorder %s18, 1
    %p99 = por %p97, %p98
    %p100 = scmp.ne.s32.totalorder %s91, %s92
    %p101 = scmp.eq.s32.totalorder %s18, 0
    %p102 = por %p100, %p101
    %p103 = scmp.ne.s32.totalorder %s91, %s92
    %p104 = scmp.eq.s32.totalorder %s19, 1
    %p105 = por %p103, %p104
    %p107 = scmp.ne.s32.totalorder %s92, %s106
    %p108 = scmp.eq.s32.totalorder %s19, 0
    %p109 = por %p107, %p108
    %s111 = sadd.s32 %s110, 1
    %p114 = scmp.eq.s32.totalorder %s13, 1
    %p115 = scmp.ne.s32.totalorder %s110, %s112
    %p116 = scmp.eq.s32.totalorder %s13, 0
    %p117 = por %p115, %p116
    %p118 = scmp.ne.s32.totalorder %s110, %s112
    %p119 = scmp.eq.s32.totalorder %s18, 1
    %p120 = por %p118, %p119
    %p121 = scmp.ne.s32.totalorder %s112, %s113
    %p122 = scmp.eq.s32.totalorder %s18, 0
    %p123 = por %p121, %p122
    %p124 = scmp.ne.s32.totalorder %s112, %s113
    %p125 = scmp.eq.s32.totalorder %s19, 1
    %p126 = por %p124, %p125
    %p128 = scmp.ne.s32.totalorder %s113, %s127
    %p129 = scmp.eq.s32.totalorder %s19, 0
    %p130 = por %p128, %p129
    %s132 = sadd.s32 %s131, 1
    %p135 = scmp.eq.s32.totalorder %s13, 1
    %p136 = scmp.ne.s32.totalorder %s131, %s133
    %p137 = scmp.eq.s32.totalorder %s13, 0
    %p138 = por %p136, %p137
    %p139 = scmp.ne.s32.totalorder %s131, %s133
    %p140 = scmp.eq.s32.totalorder %s18, 1
    %p141 = por %p139, %p140
    %p142 = scmp.ne.s32.totalorder %s133, %s134
    %p143 = scmp.eq.s32.totalorder %s18, 0
    %p144 = por %p142, %p143
    %p145 = scmp.ne.s32.totalorder %s133, %s134
    %p146 = scmp.eq.s32.totalorder %s19, 1
    %p147 = por %p145, %p146
    %p149 = scmp.ne.s32.totalorder %s134, %s148
    %p150 = scmp.eq.s32.totalorder %s19, 0
    %p151 = por %p149, %p150
    %s153 = sadd.s32 %s152, 1
    %p156 = scmp.eq.s32.totalorder %s13, 1
    %p157 = scmp.ne.s32.totalorder %s152, %s154
    %p158 = scmp.eq.s32.totalorder %s13, 0
    %p159 = por %p157, %p158
    %p160 = scmp.ne.s32.totalorder %s152, %s154
    %p161 = scmp.eq.s32.totalorder %s18, 1
    %p162 = por %p160, %p161
    %p163 = scmp.ne.s32.totalorder %s154, %s155
    %p164 = scmp.eq.s32.totalorder %s18, 0
    %p165 = por %p163, %p164
    %p166 = scmp.ne.s32.totalorder %s154, %s155
    %p167 = scmp.eq.s32.totalorder %s19, 1
    %p168 = por %p166, %p167
    %p170 = scmp.ne.s32.totalorder %s155, %s169
    %p171 = scmp.eq.s32.totalorder %s19, 0
    %p172 = por %p170, %p171
    %s173 = ssub.s32 %s13, %s20
    %p174 = scmp.eq.s32.totalorder %s173, 0
    %s176 = sadd.s32 %s175, 1
    %s177 = scalar_select %p174, %s175, %s176
    %p180 = pneg %p174
    %p181 = scmp.eq.s32.totalorder %s13, 1
    %p182 = por %p180, %p181
    %p183 = scmp.ne.s32.totalorder %s175, %s178
    %p184 = scmp.eq.s32.totalorder %s13, 0
    %p185 = por %p183, %p184
    %p186 = scmp.ne.s32.totalorder %s175, %s178
    %p187 = scmp.eq.s32.totalorder %s18, 1
    %p188 = por %p186, %p187
    %p189 = scmp.ne.s32.totalorder %s178, %s179
    %p190 = scmp.eq.s32.totalorder %s18, 0
    %p191 = por %p189, %p190
    %p192 = scmp.ne.s32.totalorder %s178, %s179
    %p193 = scmp.eq.s32.totalorder %s19, 1
    %p194 = por %p192, %p193
    %p196 = scmp.ne.s32.totalorder %s179, %s195
    %p197 = scmp.eq.s32.totalorder %s19, 0
    %p198 = por %p196, %p197
    %p199 = scmp.le.s32.totalorder 1, %s13
    %p200 = scmp.lt.s32.totalorder %s13, 3
    %p201 = pnand %p199, %p200
    %p202 = pneg %p201
    // Predicated region
    $region9: #{gated_pixelcnn_forward.3} parent=5 // pred_check
      _
    $region10: #{gated_pixelcnn_forward.3} parent=5 // pred_check_branch
      %204 = sbr.rel (%p201) target = $region12
    $region11: #{gated_pixelcnn_forward.3} parent=5 // pred_region
      %s205 = ssub.s32 %s13, 1
      // Predicated region
      $region13: #{gated_pixelcnn_forward.3} parent=11 // pred_check
        %p206 = pneg %p60
      $region14: #{gated_pixelcnn_forward.3} parent=11 // pred_check_branch
        %208 = sbr.rel (%p206) target = $region16
      $region15: #{gated_pixelcnn_forward.3} parent=11 // pred_region
        _
      $region16: #{gated_pixelcnn_forward.3} parent=11 // pred_fallthru
        _
      // Predicated region
      $region17: #{gated_pixelcnn_forward.3} parent=11 // pred_check
        %p209 = pneg %p81
      $region18: #{gated_pixelcnn_forward.3} parent=11 // pred_check_branch
        %211 = sbr.rel (%p209) target = $region20
      $region19: #{gated_pixelcnn_forward.3} parent=11 // pred_region
        _
      $region20: #{gated_pixelcnn_forward.3} parent=11 // pred_fallthru
        _
      // Predicated region
      $region21: #{gated_pixelcnn_forward.3} parent=11 // pred_check
        %p212 = pneg %p102
      $region22: #{gated_pixelcnn_forward.3} parent=11 // pred_check_branch
        %214 = sbr.rel (%p212) target = $region24
      $region23: #{gated_pixelcnn_forward.3} parent=11 // pred_region
        _
      $region24: #{gated_pixelcnn_forward.3} parent=11 // pred_fallthru
        _
      // Predicated region
      $region25: #{gated_pixelcnn_forward.3} parent=11 // pred_check
        %p215 = pneg %p123
      $region26: #{gated_pixelcnn_forward.3} parent=11 // pred_check_branch
        %217 = sbr.rel (%p215) target = $region28
      $region27: #{gated_pixelcnn_forward.3} parent=11 // pred_region
        _
      $region28: #{gated_pixelcnn_forward.3} parent=11 // pred_fallthru
        _
      // Predicated region
      $region29: #{gated_pixelcnn_forward.3} parent=11 // pred_check
        %p218 = pneg %p144
      $region30: #{gated_pixelcnn_forward.3} parent=11 // pred_check_branch
        %220 = sbr.rel (%p218) target = $region32
      $region31: #{gated_pixelcnn_forward.3} parent=11 // pred_region
        _
      $region32: #{gated_pixelcnn_forward.3} parent=11 // pred_fallthru
        _
      // Predicated region
      $region33: #{gated_pixelcnn_forward.3} parent=11 // pred_check
        %p221 = pneg %p165
      $region34: #{gated_pixelcnn_forward.3} parent=11 // pred_check_branch
        %223 = sbr.rel (%p221) target = $region36
      $region35: #{gated_pixelcnn_forward.3} parent=11 // pred_region
        _
      $region36: #{gated_pixelcnn_forward.3} parent=11 // pred_fallthru
        _
    $region12: #{gated_pixelcnn_forward.3} parent=5 // pred_fallthru
      _
    %p224 = scmp.lt.s32.totalorder %s13, 2
    // Predicated region
    $region37: #{gated_pixelcnn_forward.3} parent=5 // pred_check
      %p225 = pneg %p224
    $region38: #{gated_pixelcnn_forward.3} parent=5 // pred_check_branch
      %227 = sbr.rel (%p225) target = $region40
    $region39: #{gated_pixelcnn_forward.3} parent=5 // pred_region
      // Predicated region
      $region41: #{gated_pixelcnn_forward.3} parent=39 // pred_check
        %p228 = pneg %p33
      $region42: #{gated_pixelcnn_forward.3} parent=39 // pred_check_branch
        %230 = sbr.rel (%p228) target = $region44
      $region43: #{gated_pixelcnn_forward.3} parent=39 // pred_region
        %p231 = scmp.lt.s32.totalorder %s13, 1
        %s232 = scalar_select %p231, %s13, 1
        %s233 = smul.addr %s232, 32
        %s234 = smul.addr %s233, 4
        %s235 = scalar_lea.vmem %s0, %s234
      $region44: #{gated_pixelcnn_forward.3} parent=39 // pred_fallthru
        _
    $region40: #{gated_pixelcnn_forward.3} parent=5 // pred_fallthru
      _
    %p236 = scmp.le.s32.totalorder 1, %s13
    %p237 = scmp.lt.s32.totalorder %s13, 3
    %p238 = pnand %p236, %p237
    %p239 = pneg %p238
    // Predicated region
    $region45: #{gated_pixelcnn_forward.3} parent=5 // pred_check
      _
    $region46: #{gated_pixelcnn_forward.3} parent=5 // pred_check_branch
      %241 = sbr.rel (%p238) target = $region48
    $region47: #{gated_pixelcnn_forward.3} parent=5 // pred_region
      %s242 = ssub.s32 %s13, 1
      %p243 = scmp.lt.s32.totalorder %s18, 1
      %s244 = scalar_select %p243, %s18, 1
      %s245 = smul.addr %s244, 32
      %s246 = smul.addr %s245, 4
      %s247 = scalar_lea.vmem %s0, %s246
      %p248 = pneg %p39
      %p249 = pneg %p36
      %p250 = pneg %p60
      %p251 = pneg %p57
      %p252 = pneg %p81
      %p253 = pneg %p78
      %p254 = pneg %p102
      %p255 = pneg %p99
      %p256 = pneg %p123
      %p257 = pneg %p120
      %p258 = pneg %p144
      %p259 = pneg %p141
      %p260 = pneg %p165
      %p261 = pneg %p162
      %p262 = pneg %p191
      %p263 = pneg %p188
      %p264 = scmp.lt.s32.totalorder %s18, 1
      %s265 = scalar_select %p264, %s18, 1
      %s266 = smul.addr %s265, 32
      %s267 = smul.addr %s266, 4
      %s268 = scalar_lea.vmem %s7, %s267
      %p269 = scmp.lt.s32.totalorder %s18, 1
      %s270 = scalar_select %p269, %s18, 1
      %s271 = smul.addr %s270, 32
      %s272 = smul.addr %s271, 4
      %s273 = scalar_lea.vmem %s0, %s272
      %p274 = scmp.lt.s32.totalorder %s18, 1
      %s275 = scalar_select %p274, %s18, 1
      %s276 = smul.addr %s275, 32
      %s277 = smul.addr %s276, 4
      %s278 = scalar_lea.vmem %s7, %s277
      %v280 = vld [vmem:[%s273] sm:$0xf]
      %v281 = vld [vmem:[%s273 + $0x4] sm:$0xf]
      %v282 = vld [vmem:[%s273 + $0x8] sm:$0xf]
      %v283 = vld [vmem:[%s273 + $0xc] sm:$0xf]
      %v284 = vld [vmem:[%s273 + $0x10] sm:$0xf]
      %v285 = vld [vmem:[%s273 + $0x14] sm:$0xf]
      %v286 = vld [vmem:[%s273 + $0x18] sm:$0xf]
      %v287 = vld [vmem:[%s273 + $0x1c] sm:$0xf]
      %v288 = vld [vmem:[%s273 + $0x20] sm:$0xf]
      %v289 = vld [vmem:[%s273 + $0x24] sm:$0xf]
      %v290 = vld [vmem:[%s273 + $0x28] sm:$0xf]
      %v291 = vld [vmem:[%s273 + $0x2c] sm:$0xf]
      %v292 = vld [vmem:[%s273 + $0x30] sm:$0xf]
      %v293 = vld [vmem:[%s273 + $0x34] sm:$0xf]
      %v294 = vld [vmem:[%s273 + $0x38] sm:$0xf]
      %v295 = vld [vmem:[%s273 + $0x3c] sm:$0xf]
      %v296 = vld [vmem:[%s273 + $0x40] sm:$0xf]
      %v297 = vld [vmem:[%s273 + $0x44] sm:$0xf]
      %v298 = vld [vmem:[%s273 + $0x48] sm:$0xf]
      %v299 = vld [vmem:[%s273 + $0x4c] sm:$0xf]
      %v300 = vld [vmem:[%s273 + $0x50] sm:$0xf]
      %v301 = vld [vmem:[%s273 + $0x54] sm:$0xf]
      %v302 = vld [vmem:[%s273 + $0x58] sm:$0xf]
      %v303 = vld [vmem:[%s273 + $0x5c] sm:$0xf]
      %v304 = vld [vmem:[%s273 + $0x60] sm:$0xf]
      %v305 = vld [vmem:[%s273 + $0x64] sm:$0xf]
      %v306 = vld [vmem:[%s273 + $0x68] sm:$0xf]
      %v307 = vld [vmem:[%s273 + $0x6c] sm:$0xf]
      %v308 = vld [vmem:[%s273 + $0x70] sm:$0xf]
      %v309 = vld [vmem:[%s273 + $0x74] sm:$0xf]
      %v310 = vld [vmem:[%s273 + $0x78] sm:$0xf]
      %v311 = vld [vmem:[%s273 + $0x7c] sm:$0xf]
      %v342 = vunpack.c.l.b16 %v280
      %v343 = vunpack.c.l.b16 %v281
      %v344 = vunpack.c.l.b16 %v282
      %v345 = vunpack.c.l.b16 %v283
      %v346 = vunpack.c.l.b16 %v284
      %v347 = vunpack.c.l.b16 %v285
      %v348 = vunpack.c.l.b16 %v286
      %v349 = vunpack.c.l.b16 %v287
      %v350 = vunpack.c.l.b16 %v288
      %v351 = vunpack.c.l.b16 %v289
      %v352 = vunpack.c.l.b16 %v290
      %v353 = vunpack.c.l.b16 %v291
      %v354 = vunpack.c.l.b16 %v292
      %v355 = vunpack.c.l.b16 %v293
      %v356 = vunpack.c.l.b16 %v294
      %v357 = vunpack.c.l.b16 %v295
      %v358 = vunpack.c.l.b16 %v296
      %v359 = vunpack.c.l.b16 %v297
      %v360 = vunpack.c.l.b16 %v298
      %v361 = vunpack.c.l.b16 %v299
      %v362 = vunpack.c.l.b16 %v300
      %v363 = vunpack.c.l.b16 %v301
      %v364 = vunpack.c.l.b16 %v302
      %v365 = vunpack.c.l.b16 %v303
      %v366 = vunpack.c.l.b16 %v304
      %v367 = vunpack.c.l.b16 %v305
      %v368 = vunpack.c.l.b16 %v306
      %v369 = vunpack.c.l.b16 %v307
      %v370 = vunpack.c.l.b16 %v308
      %v371 = vunpack.c.l.b16 %v309
      %v372 = vpack.c.b16 %v343, %v342
      %v373 = vpack.c.b16 %v345, %v344
      %v374 = vpack.c.b16 %v347, %v346
      %v375 = vpack.c.b16 %v349, %v348
      %v376 = vpack.c.b16 %v351, %v350
      %v377 = vpack.c.b16 %v353, %v352
      %v378 = vpack.c.b16 %v355, %v354
      %v379 = vpack.c.b16 %v357, %v356
      %v380 = vpack.c.b16 %v359, %v358
      %v381 = vpack.c.b16 %v361, %v360
      %v382 = vpack.c.b16 %v363, %v362
      %v383 = vpack.c.b16 %v365, %v364
      %v384 = vpack.c.b16 %v367, %v366
      %v385 = vpack.c.b16 %v369, %v368
      %v386 = vpack.c.b16 %v371, %v370
      %v388 = vshrl.u32 0, 16
      %v390 = vrot.slane %v388, 6
      %v391 = vshll.u32 0, 16
      %v393 = vrot.slane %v391, 7
      %v394 = vor.u32 %v390, %v393
      %v396 = vshrl.u32 %v372, 16
      %v398 = vrot.slane %v396, 6
      %v399 = vshll.u32 %v372, 16
      %v401 = vrot.slane %v399, 7
      %v402 = vor.u32 %v398, %v401
      %v404 = vshrl.u32 %v373, 16
      %v406 = vrot.slane %v404, 6
      %v407 = vshll.u32 %v373, 16
      %v409 = vrot.slane %v407, 7
      %v410 = vor.u32 %v406, %v409
      %v412 = vshrl.u32 %v374, 16
      %v414 = vrot.slane %v412, 6
      %v415 = vshll.u32 %v374, 16
      %v417 = vrot.slane %v415, 7
      %v418 = vor.u32 %v414, %v417
      %v420 = vshrl.u32 %v375, 16
      %v422 = vrot.slane %v420, 6
      %v423 = vshll.u32 %v375, 16
      %v425 = vrot.slane %v423, 7
      %v426 = vor.u32 %v422, %v425
      %v428 = vshrl.u32 %v376, 16
      %v430 = vrot.slane %v428, 6
      %v431 = vshll.u32 %v376, 16
      %v433 = vrot.slane %v431, 7
      %v434 = vor.u32 %v430, %v433
      %v436 = vshrl.u32 %v377, 16
      %v438 = vrot.slane %v436, 6
      %v439 = vshll.u32 %v377, 16
      %v441 = vrot.slane %v439, 7
      %v442 = vor.u32 %v438, %v441
      %v444 = vshrl.u32 %v378, 16
      %v446 = vrot.slane %v444, 6
      %v447 = vshll.u32 %v378, 16
      %v449 = vrot.slane %v447, 7
      %v450 = vor.u32 %v446, %v449
      %v452 = vshrl.u32 %v379, 16
      %v454 = vrot.slane %v452, 6
      %v455 = vshll.u32 %v379, 16
      %v457 = vrot.slane %v455, 7
      %v458 = vor.u32 %v454, %v457
      %v460 = vshrl.u32 %v380, 16
      %v462 = vrot.slane %v460, 6
      %v463 = vshll.u32 %v380, 16
      %v465 = vrot.slane %v463, 7
      %v466 = vor.u32 %v462, %v465
      %v468 = vshrl.u32 %v381, 16
      %v470 = vrot.slane %v468, 6
      %v471 = vshll.u32 %v381, 16
      %v473 = vrot.slane %v471, 7
      %v474 = vor.u32 %v470, %v473
      %v476 = vshrl.u32 %v382, 16
      %v478 = vrot.slane %v476, 6
      %v479 = vshll.u32 %v382, 16
      %v481 = vrot.slane %v479, 7
      %v482 = vor.u32 %v478, %v481
      %v484 = vshrl.u32 %v383, 16
      %v486 = vrot.slane %v484, 6
      %v487 = vshll.u32 %v383, 16
      %v489 = vrot.slane %v487, 7
      %v490 = vor.u32 %v486, %v489
      %v492 = vshrl.u32 %v384, 16
      %v494 = vrot.slane %v492, 6
      %v495 = vshll.u32 %v384, 16
      %v497 = vrot.slane %v495, 7
      %v498 = vor.u32 %v494, %v497
      %v500 = vshrl.u32 %v385, 16
      %v502 = vrot.slane %v500, 6
      %v503 = vshll.u32 %v385, 16
      %v505 = vrot.slane %v503, 7
      %v506 = vor.u32 %v502, %v505
      %v508 = vshrl.u32 %v386, 16
      %v510 = vrot.slane %v508, 6
      %v511 = vshll.u32 %v386, 16
      %v513 = vrot.slane %v511, 7
      %v514 = vor.u32 %v510, %v513
      %vm531 = vcmask 1041408
      %vm532 = vsmask.f32 1280
      %vm533 = vmand %vm531, %vm532
      %v534 = vsel %vm533, 0, %v394
      %v535 = vsel %vm533, 0, %v402
      %v536 = vsel %vm533, 0, %v410
      %v537 = vsel %vm533, 0, %v418
      %v538 = vsel %vm533, 0, %v426
      %v539 = vsel %vm533, 0, %v434
      %v540 = vsel %vm533, 0, %v442
      %v541 = vsel %vm533, 0, %v450
      %v542 = vsel %vm533, 0, %v458
      %v543 = vsel %vm533, 0, %v466
      %v544 = vsel %vm533, 0, %v474
      %v545 = vsel %vm533, 0, %v482
      %v546 = vsel %vm533, 0, %v490
      %v547 = vsel %vm533, 0, %v498
      %v548 = vsel %vm533, 0, %v506
      %v549 = vsel %vm533, 0, %v514
      %v550 = vsel %vm533, %v394, 0
      %v551 = vsel %vm533, %v402, 0
      %v552 = vsel %vm533, %v410, 0
      %v553 = vsel %vm533, %v418, 0
      %v554 = vsel %vm533, %v426, 0
      %v555 = vsel %vm533, %v434, 0
      %v556 = vsel %vm533, %v442, 0
      %v557 = vsel %vm533, %v450, 0
      %v558 = vsel %vm533, %v458, 0
      %v559 = vsel %vm533, %v466, 0
      %v560 = vsel %vm533, %v474, 0
      %v561 = vsel %vm533, %v482, 0
      %v562 = vsel %vm533, %v490, 0
      %v563 = vsel %vm533, %v498, 0
      %v564 = vsel %vm533, %v506, 0
      %v565 = vsel %vm533, %v514, 0
      %vm566 = vsmask.f32 7424
      %v568 = vshrl.u32 %v534, 16
      %v570 = vshll.u32 %v534, 16
      %v572 = vrot.slane %v570, 1
      %v573 = vor.u32 %v568, %v572
      %v575 = vshll.u32 %v550, 16
      %v577 = vrot.slane %v575, 1
      %v578 = vsel %vm566, %v573, %v577
      %v580 = vshrl.u32 %v535, 16
      %v582 = vshll.u32 %v535, 16
      %v584 = vrot.slane %v582, 1
      %v585 = vor.u32 %v580, %v584
      %v587 = vshll.u32 %v551, 16
      %v589 = vrot.slane %v587, 1
      %v590 = vsel %vm566, %v585, %v589
      %v592 = vshrl.u32 %v536, 16
      %v594 = vshll.u32 %v536, 16
      %v596 = vrot.slane %v594, 1
      %v597 = vor.u32 %v592, %v596
      %v599 = vshll.u32 %v552, 16
      %v601 = vrot.slane %v599, 1
      %v602 = vsel %vm566, %v597, %v601
      %v604 = vshrl.u32 %v537, 16
      %v606 = vshll.u32 %v537, 16
      %v608 = vrot.slane %v606, 1
      %v609 = vor.u32 %v604, %v608
      %v611 = vshll.u32 %v553, 16
      %v613 = vrot.slane %v611, 1
      %v614 = vsel %vm566, %v609, %v613
      %v616 = vshrl.u32 %v538, 16
      %v618 = vshll.u32 %v538, 16
      %v620 = vrot.slane %v618, 1
      %v621 = vor.u32 %v616, %v620
      %v623 = vshll.u32 %v554, 16
      %v625 = vrot.slane %v623, 1
      %v626 = vsel %vm566, %v621, %v625
      %v628 = vshrl.u32 %v539, 16
      %v630 = vshll.u32 %v539, 16
      %v632 = vrot.slane %v630, 1
      %v633 = vor.u32 %v628, %v632
      %v635 = vshll.u32 %v555, 16
      %v637 = vrot.slane %v635, 1
      %v638 = vsel %vm566, %v633, %v637
      %v640 = vshrl.u32 %v540, 16
      %v642 = vshll.u32 %v540, 16
      %v644 = vrot.slane %v642, 1
      %v645 = vor.u32 %v640, %v644
      %v647 = vshll.u32 %v556, 16
      %v649 = vrot.slane %v647, 1
      %v650 = vsel %vm566, %v645, %v649
      %v652 = vshrl.u32 %v541, 16
      %v654 = vshll.u32 %v541, 16
      %v656 = vrot.slane %v654, 1
      %v657 = vor.u32 %v652, %v656
      %v659 = vshll.u32 %v557, 16
      %v661 = vrot.slane %v659, 1
      %v662 = vsel %vm566, %v657, %v661
      %v664 = vshrl.u32 %v542, 16
      %v666 = vshll.u32 %v542, 16
      %v668 = vrot.slane %v666, 1
      %v669 = vor.u32 %v664, %v668
      %v671 = vshll.u32 %v558, 16
      %v673 = vrot.slane %v671, 1
      %v674 = vsel %vm566, %v669, %v673
      %v676 = vshrl.u32 %v543, 16
      %v678 = vshll.u32 %v543, 16
      %v680 = vrot.slane %v678, 1
      %v681 = vor.u32 %v676, %v680
      %v683 = vshll.u32 %v559, 16
      %v685 = vrot.slane %v683, 1
      %v686 = vsel %vm566, %v681, %v685
      %v688 = vshrl.u32 %v544, 16
      %v690 = vshll.u32 %v544, 16
      %v692 = vrot.slane %v690, 1
      %v693 = vor.u32 %v688, %v692
      %v695 = vshll.u32 %v560, 16
      %v697 = vrot.slane %v695, 1
      %v698 = vsel %vm566, %v693, %v697
      %v700 = vshrl.u32 %v545, 16
      %v702 = vshll.u32 %v545, 16
      %v704 = vrot.slane %v702, 1
      %v705 = vor.u32 %v700, %v704
      %v707 = vshll.u32 %v561, 16
      %v709 = vrot.slane %v707, 1
      %v710 = vsel %vm566, %v705, %v709
      %v712 = vshrl.u32 %v546, 16
      %v714 = vshll.u32 %v546, 16
      %v716 = vrot.slane %v714, 1
      %v717 = vor.u32 %v712, %v716
      %v719 = vshll.u32 %v562, 16
      %v721 = vrot.slane %v719, 1
      %v722 = vsel %vm566, %v717, %v721
      %v724 = vshrl.u32 %v547, 16
      %v726 = vshll.u32 %v547, 16
      %v728 = vrot.slane %v726, 1
      %v729 = vor.u32 %v724, %v728
      %v731 = vshll.u32 %v563, 16
      %v733 = vrot.slane %v731, 1
      %v734 = vsel %vm566, %v729, %v733
      %vm763 = vcmask 1046528
      %v764 = vrot.slane %v534, 1
      %v765 = vrot.slane %v550, 1
      %v766 = vsel %vm763, %v764, %v765
      %v767 = vrot.slane %v535, 1
      %v768 = vrot.slane %v551, 1
      %v769 = vsel %vm763, %v767, %v768
      %v770 = vrot.slane %v536, 1
      %v771 = vrot.slane %v552, 1
      %v772 = vsel %vm763, %v770, %v771
      %v773 = vrot.slane %v537, 1
      %v774 = vrot.slane %v553, 1
      %v775 = vsel %vm763, %v773, %v774
      %v776 = vrot.slane %v538, 1
      %v777 = vrot.slane %v554, 1
      %v778 = vsel %vm763, %v776, %v777
      %v779 = vrot.slane %v539, 1
      %v780 = vrot.slane %v555, 1
      %v781 = vsel %vm763, %v779, %v780
      %v782 = vrot.slane %v540, 1
      %v783 = vrot.slane %v556, 1
      %v784 = vsel %vm763, %v782, %v783
      %v785 = vrot.slane %v541, 1
      %v786 = vrot.slane %v557, 1
      %v787 = vsel %vm763, %v785, %v786
      %v788 = vrot.slane %v542, 1
      %v789 = vrot.slane %v558, 1
      %v790 = vsel %vm763, %v788, %v789
      %v791 = vrot.slane %v543, 1
      %v792 = vrot.slane %v559, 1
      %v793 = vsel %vm763, %v791, %v792
      %v794 = vrot.slane %v544, 1
      %v795 = vrot.slane %v560, 1
      %v796 = vsel %vm763, %v794, %v795
      %v797 = vrot.slane %v545, 1
      %v798 = vrot.slane %v561, 1
      %v799 = vsel %vm763, %v797, %v798
      %v800 = vrot.slane %v546, 1
      %v801 = vrot.slane %v562, 1
      %v802 = vsel %vm763, %v800, %v801
      %v803 = vrot.slane %v547, 1
      %v804 = vrot.slane %v563, 1
      %v805 = vsel %vm763, %v803, %v804
      %vm806 = vsmask.f32 6400
      %v807 = vrot.slane %v568, 1
      %v808 = vrot.slane %v570, 2
      %v809 = vor.u32 %v807, %v808
      %v810 = vshrl.u32 %v550, 16
      %v812 = vrot.slane %v810, 1
      %v813 = vrot.slane %v575, 2
      %v814 = vor.u32 %v812, %v813
      %v815 = vsel %vm806, %v809, %v814
      %v816 = vrot.slane %v580, 1
      %v817 = vrot.slane %v582, 2
      %v818 = vor.u32 %v816, %v817
      %v819 = vshrl.u32 %v551, 16
      %v821 = vrot.slane %v819, 1
      %v822 = vrot.slane %v587, 2
      %v823 = vor.u32 %v821, %v822
      %v824 = vsel %vm806, %v818, %v823
      %v825 = vrot.slane %v592, 1
      %v826 = vrot.slane %v594, 2
      %v827 = vor.u32 %v825, %v826
      %v828 = vshrl.u32 %v552, 16
      %v830 = vrot.slane %v828, 1
      %v831 = vrot.slane %v599, 2
      %v832 = vor.u32 %v830, %v831
      %v833 = vsel %vm806, %v827, %v832
      %v834 = vrot.slane %v604, 1
      %v835 = vrot.slane %v606, 2
      %v836 = vor.u32 %v834, %v835
      %v837 = vshrl.u32 %v553, 16
      %v839 = vrot.slane %v837, 1
      %v840 = vrot.slane %v611, 2
      %v841 = vor.u32 %v839, %v840
      %v842 = vsel %vm806, %v836, %v841
      %v843 = vrot.slane %v616, 1
      %v844 = vrot.slane %v618, 2
      %v845 = vor.u32 %v843, %v844
      %v846 = vshrl.u32 %v554, 16
      %v848 = vrot.slane %v846, 1
      %v849 = vrot.slane %v623, 2
      %v850 = vor.u32 %v848, %v849
      %v851 = vsel %vm806, %v845, %v850
      %v852 = vrot.slane %v628, 1
      %v853 = vrot.slane %v630, 2
      %v854 = vor.u32 %v852, %v853
      %v855 = vshrl.u32 %v555, 16
      %v857 = vrot.slane %v855, 1
      %v858 = vrot.slane %v635, 2
      %v859 = vor.u32 %v857, %v858
      %v860 = vsel %vm806, %v854, %v859
      %v861 = vrot.slane %v640, 1
      %v862 = vrot.slane %v642, 2
      %v863 = vor.u32 %v861, %v862
      %v864 = vshrl.u32 %v556, 16
      %v866 = vrot.slane %v864, 1
      %v867 = vrot.slane %v647, 2
      %v868 = vor.u32 %v866, %v867
      %v869 = vsel %vm806, %v863, %v868
      %v870 = vrot.slane %v652, 1
      %v871 = vrot.slane %v654, 2
      %v872 = vor.u32 %v870, %v871
      %v873 = vshrl.u32 %v557, 16
      %v875 = vrot.slane %v873, 1
      %v876 = vrot.slane %v659, 2
      %v877 = vor.u32 %v875, %v876
      %v878 = vsel %vm806, %v872, %v877
      %v879 = vrot.slane %v664, 1
      %v880 = vrot.slane %v666, 2
      %v881 = vor.u32 %v879, %v880
      %v882 = vshrl.u32 %v558, 16
      %v884 = vrot.slane %v882, 1
      %v885 = vrot.slane %v671, 2
      %v886 = vor.u32 %v884, %v885
      %v887 = vsel %vm806, %v881, %v886
      %v888 = vrot.slane %v676, 1
      %v889 = vrot.slane %v678, 2
      %v890 = vor.u32 %v888, %v889
      %v891 = vshrl.u32 %v559, 16
      %v893 = vrot.slane %v891, 1
      %v894 = vrot.slane %v683, 2
      %v895 = vor.u32 %v893, %v894
      %v896 = vsel %vm806, %v890, %v895
      %v897 = vrot.slane %v688, 1
      %v898 = vrot.slane %v690, 2
      %v899 = vor.u32 %v897, %v898
      %v900 = vshrl.u32 %v560, 16
      %v902 = vrot.slane %v900, 1
      %v903 = vrot.slane %v695, 2
      %v904 = vor.u32 %v902, %v903
      %v905 = vsel %vm806, %v899, %v904
      %v906 = vrot.slane %v700, 1
      %v907 = vrot.slane %v702, 2
      %v908 = vor.u32 %v906, %v907
      %v909 = vshrl.u32 %v561, 16
      %v911 = vrot.slane %v909, 1
      %v912 = vrot.slane %v707, 2
      %v913 = vor.u32 %v911, %v912
      %v914 = vsel %vm806, %v908, %v913
      %v915 = vrot.slane %v712, 1
      %v916 = vrot.slane %v714, 2
      %v917 = vor.u32 %v915, %v916
      %v918 = vshrl.u32 %v562, 16
      %v920 = vrot.slane %v918, 1
      %v921 = vrot.slane %v719, 2
      %v922 = vor.u32 %v920, %v921
      %v923 = vsel %vm806, %v917, %v922
      %v924 = vrot.slane %v724, 1
      %v925 = vrot.slane %v726, 2
      %v926 = vor.u32 %v924, %v925
      %v927 = vshrl.u32 %v563, 16
      %v929 = vrot.slane %v927, 1
      %v930 = vrot.slane %v731, 2
      %v931 = vor.u32 %v929, %v930
      %v932 = vsel %vm806, %v926, %v931
      %vm933 = vcmask 1045504
      %v934 = vrot.slane %v534, 2
      %v935 = vrot.slane %v550, 2
      %v936 = vsel %vm933, %v934, %v935
      %v937 = vrot.slane %v535, 2
      %v938 = vrot.slane %v551, 2
      %v939 = vsel %vm933, %v937, %v938
      %v940 = vrot.slane %v536, 2
      %v941 = vrot.slane %v552, 2
      %v942 = vsel %vm933, %v940, %v941
      %v943 = vrot.slane %v537, 2
      %v944 = vrot.slane %v553, 2
      %v945 = vsel %vm933, %v943, %v944
      %v946 = vrot.slane %v538, 2
      %v947 = vrot.slane %v554, 2
      %v948 = vsel %vm933, %v946, %v947
      %v949 = vrot.slane %v539, 2
      %v950 = vrot.slane %v555, 2
      %v951 = vsel %vm933, %v949, %v950
      %v952 = vrot.slane %v540, 2
      %v953 = vrot.slane %v556, 2
      %v954 = vsel %vm933, %v952, %v953
      %v955 = vrot.slane %v541, 2
      %v956 = vrot.slane %v557, 2
      %v957 = vsel %vm933, %v955, %v956
      %v958 = vrot.slane %v542, 2
      %v959 = vrot.slane %v558, 2
      %v960 = vsel %vm933, %v958, %v959
      %v961 = vrot.slane %v543, 2
      %v962 = vrot.slane %v559, 2
      %v963 = vsel %vm933, %v961, %v962
      %v964 = vrot.slane %v544, 2
      %v965 = vrot.slane %v560, 2
      %v966 = vsel %vm933, %v964, %v965
      %v967 = vrot.slane %v545, 2
      %v968 = vrot.slane %v561, 2
      %v969 = vsel %vm933, %v967, %v968
      %v970 = vrot.slane %v546, 2
      %v971 = vrot.slane %v562, 2
      %v972 = vsel %vm933, %v970, %v971
      %v973 = vrot.slane %v547, 2
      %v974 = vrot.slane %v563, 2
      %v975 = vsel %vm933, %v973, %v974
      %vm976 = vsmask.f32 5376
      %v977 = vrot.slane %v568, 2
      %v978 = vrot.slane %v570, 3
      %v979 = vor.u32 %v977, %v978
      %v980 = vrot.slane %v810, 2
      %v981 = vrot.slane %v575, 3
      %v982 = vor.u32 %v980, %v981
      %v983 = vsel %vm976, %v979, %v982
      %v984 = vrot.slane %v580, 2
      %v985 = vrot.slane %v582, 3
      %v986 = vor.u32 %v984, %v985
      %v987 = vrot.slane %v819, 2
      %v988 = vrot.slane %v587, 3
      %v989 = vor.u32 %v987, %v988
      %v990 = vsel %vm976, %v986, %v989
      %v991 = vrot.slane %v592, 2
      %v992 = vrot.slane %v594, 3
      %v993 = vor.u32 %v991, %v992
      %v994 = vrot.slane %v828, 2
      %v995 = vrot.slane %v599, 3
      %v996 = vor.u32 %v994, %v995
      %v997 = vsel %vm976, %v993, %v996
      %v998 = vrot.slane %v604, 2
      %v999 = vrot.slane %v606, 3
      %v1000 = vor.u32 %v998, %v999
      %v1001 = vrot.slane %v837, 2
      %v1002 = vrot.slane %v611, 3
      %v1003 = vor.u32 %v1001, %v1002
      %v1004 = vsel %vm976, %v1000, %v1003
      %v1005 = vrot.slane %v616, 2
      %v1006 = vrot.slane %v618, 3
      %v1007 = vor.u32 %v1005, %v1006
      %v1008 = vrot.slane %v846, 2
      %v1009 = vrot.slane %v623, 3
      %v1010 = vor.u32 %v1008, %v1009
      %v1011 = vsel %vm976, %v1007, %v1010
      %v1012 = vrot.slane %v628, 2
      %v1013 = vrot.slane %v630, 3
      %v1014 = vor.u32 %v1012, %v1013
      %v1015 = vrot.slane %v855, 2
      %v1016 = vrot.slane %v635, 3
      %v1017 = vor.u32 %v1015, %v1016
      %v1018 = vsel %vm976, %v1014, %v1017
      %v1019 = vrot.slane %v640, 2
      %v1020 = vrot.slane %v642, 3
      %v1021 = vor.u32 %v1019, %v1020
      %v1022 = vrot.slane %v864, 2
      %v1023 = vrot.slane %v647, 3
      %v1024 = vor.u32 %v1022, %v1023
      %v1025 = vsel %vm976, %v1021, %v1024
      %v1026 = vrot.slane %v652, 2
      %v1027 = vrot.slane %v654, 3
      %v1028 = vor.u32 %v1026, %v1027
      %v1029 = vrot.slane %v873, 2
      %v1030 = vrot.slane %v659, 3
      %v1031 = vor.u32 %v1029, %v1030
      %v1032 = vsel %vm976, %v1028, %v1031
      %v1033 = vrot.slane %v664, 2
      %v1034 = vrot.slane %v666, 3
      %v1035 = vor.u32 %v1033, %v1034
      %v1036 = vrot.slane %v882, 2
      %v1037 = vrot.slane %v671, 3
      %v1038 = vor.u32 %v1036, %v1037
      %v1039 = vsel %vm976, %v1035, %v1038
      %v1040 = vrot.slane %v676, 2
      %v1041 = vrot.slane %v678, 3
      %v1042 = vor.u32 %v1040, %v1041
      %v1043 = vrot.slane %v891, 2
      %v1044 = vrot.slane %v683, 3
      %v1045 = vor.u32 %v1043, %v1044
      %v1046 = vsel %vm976, %v1042, %v1045
      %v1047 = vrot.slane %v688, 2
      %v1048 = vrot.slane %v690, 3
      %v1049 = vor.u32 %v1047, %v1048
      %v1050 = vrot.slane %v900, 2
      %v1051 = vrot.slane %v695, 3
      %v1052 = vor.u32 %v1050, %v1051
      %v1053 = vsel %vm976, %v1049, %v1052
      %v1054 = vrot.slane %v700, 2
      %v1055 = vrot.slane %v702, 3
      %v1056 = vor.u32 %v1054, %v1055
      %v1057 = vrot.slane %v909, 2
      %v1058 = vrot.slane %v707, 3
      %v1059 = vor.u32 %v1057, %v1058
      %v1060 = vsel %vm976, %v1056, %v1059
      %v1061 = vrot.slane %v712, 2
      %v1062 = vrot.slane %v714, 3
      %v1063 = vor.u32 %v1061, %v1062
      %v1064 = vrot.slane %v918, 2
      %v1065 = vrot.slane %v719, 3
      %v1066 = vor.u32 %v1064, %v1065
      %v1067 = vsel %vm976, %v1063, %v1066
      %v1068 = vrot.slane %v724, 2
      %v1069 = vrot.slane %v726, 3
      %v1070 = vor.u32 %v1068, %v1069
      %v1071 = vrot.slane %v927, 2
      %v1072 = vrot.slane %v731, 3
      %v1073 = vor.u32 %v1071, %v1072
      %v1074 = vsel %vm976, %v1070, %v1073
      %vm1075 = vcmask 1044480
      %v1076 = vrot.slane %v534, 3
      %v1077 = vrot.slane %v550, 3
      %v1078 = vsel %vm1075, %v1076, %v1077
      %v1079 = vrot.slane %v535, 3
      %v1080 = vrot.slane %v551, 3
      %v1081 = vsel %vm1075, %v1079, %v1080
      %v1082 = vrot.slane %v536, 3
      %v1083 = vrot.slane %v552, 3
      %v1084 = vsel %vm1075, %v1082, %v1083
      %v1085 = vrot.slane %v537, 3
      %v1086 = vrot.slane %v553, 3
      %v1087 = vsel %vm1075, %v1085, %v1086
      %v1088 = vrot.slane %v538, 3
      %v1089 = vrot.slane %v554, 3
      %v1090 = vsel %vm1075, %v1088, %v1089
      %v1091 = vrot.slane %v539, 3
      %v1092 = vrot.slane %v555, 3
      %v1093 = vsel %vm1075, %v1091, %v1092
      %v1094 = vrot.slane %v540, 3
      %v1095 = vrot.slane %v556, 3
      %v1096 = vsel %vm1075, %v1094, %v1095
      %v1097 = vrot.slane %v541, 3
      %v1098 = vrot.slane %v557, 3
      %v1099 = vsel %vm1075, %v1097, %v1098
      %v1100 = vrot.slane %v542, 3
      %v1101 = vrot.slane %v558, 3
      %v1102 = vsel %vm1075, %v1100, %v1101
      %v1103 = vrot.slane %v543, 3
      %v1104 = vrot.slane %v559, 3
      %v1105 = vsel %vm1075, %v1103, %v1104
      %v1106 = vrot.slane %v544, 3
      %v1107 = vrot.slane %v560, 3
      %v1108 = vsel %vm1075, %v1106, %v1107
      %v1109 = vrot.slane %v545, 3
      %v1110 = vrot.slane %v561, 3
      %v1111 = vsel %vm1075, %v1109, %v1110
      %v1112 = vrot.slane %v546, 3
      %v1113 = vrot.slane %v562, 3
      %v1114 = vsel %vm1075, %v1112, %v1113
      %v1115 = vrot.slane %v547, 3
      %v1116 = vrot.slane %v563, 3
      %v1117 = vsel %vm1075, %v1115, %v1116
      %v1119 = vshrl.u32 %v548, 16
      %v1121 = vshll.u32 %v548, 16
      %v1123 = vrot.slane %v1121, 1
      %v1124 = vor.u32 %v1119, %v1123
      %v1126 = vshll.u32 %v564, 16
      %v1128 = vrot.slane %v1126, 1
      %v1129 = vsel %vm566, %v1124, %v1128
      %v1132 = vrot.slane %v548, 1
      %v1133 = vrot.slane %v564, 1
      %v1134 = vsel %vm763, %v1132, %v1133
      %v1135 = vrot.slane %v1119, 1
      %v1136 = vrot.slane %v1121, 2
      %v1137 = vor.u32 %v1135, %v1136
      %v1138 = vshrl.u32 %v564, 16
      %v1140 = vrot.slane %v1138, 1
      %v1141 = vrot.slane %v1126, 2
      %v1142 = vor.u32 %v1140, %v1141
      %v1143 = vsel %vm806, %v1137, %v1142
      %v1144 = vrot.slane %v548, 2
      %v1145 = vrot.slane %v564, 2
      %v1146 = vsel %vm933, %v1144, %v1145
      %v1147 = vrot.slane %v1119, 2
      %v1148 = vrot.slane %v1121, 3
      %v1149 = vor.u32 %v1147, %v1148
      %v1150 = vrot.slane %v1138, 2
      %v1151 = vrot.slane %v1126, 3
      %v1152 = vor.u32 %v1150, %v1151
      %v1153 = vsel %vm976, %v1149, %v1152
      %v1154 = vrot.slane %v548, 3
      %v1155 = vrot.slane %v564, 3
      %v1156 = vsel %vm1075, %v1154, %v1155
      %v1158 = vshrl.u32 %v549, 16
      %v1160 = vshll.u32 %v549, 16
      %v1162 = vrot.slane %v1160, 1
      %v1163 = vor.u32 %v1158, %v1162
      %v1165 = vshll.u32 %v565, 16
      %v1167 = vrot.slane %v1165, 1
      %v1168 = vsel %vm566, %v1163, %v1167
      %v1171 = vrot.slane %v549, 1
      %v1172 = vrot.slane %v565, 1
      %v1173 = vsel %vm763, %v1171, %v1172
      %v1174 = vrot.slane %v1158, 1
      %v1175 = vrot.slane %v1160, 2
      %v1176 = vor.u32 %v1174, %v1175
      %v1177 = vshrl.u32 %v565, 16
      %v1179 = vrot.slane %v1177, 1
      %v1180 = vrot.slane %v1165, 2
      %v1181 = vor.u32 %v1179, %v1180
      %v1182 = vsel %vm806, %v1176, %v1181
      %v1183 = vrot.slane %v549, 2
      %v1184 = vrot.slane %v565, 2
      %v1185 = vsel %vm933, %v1183, %v1184
      %v1186 = vrot.slane %v1158, 2
      %v1187 = vrot.slane %v1160, 3
      %v1188 = vor.u32 %v1186, %v1187
      %v1189 = vrot.slane %v1177, 2
      %v1190 = vrot.slane %v1165, 3
      %v1191 = vor.u32 %v1189, %v1190
      %v1192 = vsel %vm976, %v1188, %v1191
      %v1193 = vrot.slane %v549, 3
      %v1194 = vrot.slane %v565, 3
      %v1195 = vsel %vm1075, %v1193, %v1194
      %1196 = vrot.lane.b32.xlu0 %v578, 32
      %v1197 = vpop.permute.xlu0 %1196
      %1198 = vrot.lane.b32.xlu0 %v590, 32
      %v1199 = vpop.permute.xlu0 %1198
      %1200 = vrot.lane.b32.xlu0 %v602, 32
      %v1201 = vpop.permute.xlu0 %1200
      %1202 = vrot.lane.b32.xlu0 %v614, 32
      %v1203 = vpop.permute.xlu0 %1202
      %1204 = vrot.lane.b32.xlu0 %v626, 32
      %v1205 = vpop.permute.xlu0 %1204
      %1206 = vrot.lane.b32.xlu0 %v638, 32
      %v1207 = vpop.permute.xlu0 %1206
      %1208 = vrot.lane.b32.xlu0 %v650, 32
      %v1209 = vpop.permute.xlu0 %1208
      %1210 = vrot.lane.b32.xlu0 %v662, 32
      %v1211 = vpop.permute.xlu0 %1210
      %1212 = vrot.lane.b32.xlu0 %v674, 32
      %v1213 = vpop.permute.xlu0 %1212
      %1214 = vrot.lane.b32.xlu0 %v686, 32
      %v1215 = vpop.permute.xlu0 %1214
      %1216 = vrot.lane.b32.xlu0 %v698, 32
      %v1217 = vpop.permute.xlu0 %1216
      %1218 = vrot.lane.b32.xlu0 %v710, 32
      %v1219 = vpop.permute.xlu0 %1218
      %1220 = vrot.lane.b32.xlu0 %v722, 32
      %v1221 = vpop.permute.xlu0 %1220
      %1222 = vrot.lane.b32.xlu0 %v734, 32
      %v1223 = vpop.permute.xlu0 %1222
      %1224 = vrot.lane.b32.xlu0 %v766, 64
      %v1225 = vpop.permute.xlu0 %1224
      %1226 = vrot.lane.b32.xlu0 %v769, 64
      %v1227 = vpop.permute.xlu0 %1226
      %1228 = vrot.lane.b32.xlu0 %v772, 64
      %v1229 = vpop.permute.xlu0 %1228
      %1230 = vrot.lane.b32.xlu0 %v775, 64
      %v1231 = vpop.permute.xlu0 %1230
      %1232 = vrot.lane.b32.xlu0 %v778, 64
      %v1233 = vpop.permute.xlu0 %1232
      %1234 = vrot.lane.b32.xlu0 %v781, 64
      %v1235 = vpop.permute.xlu0 %1234
      %1236 = vrot.lane.b32.xlu0 %v784, 64
      %v1237 = vpop.permute.xlu0 %1236
      %1238 = vrot.lane.b32.xlu0 %v787, 64
      %v1239 = vpop.permute.xlu0 %1238
      %1240 = vrot.lane.b32.xlu0 %v790, 64
      %v1241 = vpop.permute.xlu0 %1240
      %1242 = vrot.lane.b32.xlu0 %v793, 64
      %v1243 = vpop.permute.xlu0 %1242
      %1244 = vrot.lane.b32.xlu0 %v796, 64
      %v1245 = vpop.permute.xlu0 %1244
      %1246 = vrot.lane.b32.xlu0 %v799, 64
      %v1247 = vpop.permute.xlu0 %1246
      %1248 = vrot.lane.b32.xlu0 %v802, 64
      %v1249 = vpop.permute.xlu0 %1248
      %1250 = vrot.lane.b32.xlu0 %v805, 64
      %v1251 = vpop.permute.xlu0 %1250
      %1252 = vrot.lane.b32.xlu0 %v815, 96
      %v1253 = vpop.permute.xlu0 %1252
      %1254 = vrot.lane.b32.xlu0 %v824, 96
      %v1255 = vpop.permute.xlu0 %1254
      %1256 = vrot.lane.b32.xlu0 %v833, 96
      %v1257 = vpop.permute.xlu0 %1256
      %1258 = vrot.lane.b32.xlu0 %v842, 96
      %v1259 = vpop.permute.xlu0 %1258
      %1260 = vrot.lane.b32.xlu0 %v851, 96
      %v1261 = vpop.permute.xlu0 %1260
      %1262 = vrot.lane.b32.xlu0 %v860, 96
      %v1263 = vpop.permute.xlu0 %1262
      %1264 = vrot.lane.b32.xlu0 %v869, 96
      %v1265 = vpop.permute.xlu0 %1264
      %1266 = vrot.lane.b32.xlu0 %v878, 96
      %v1267 = vpop.permute.xlu0 %1266
      %1268 = vrot.lane.b32.xlu0 %v887, 96
      %v1269 = vpop.permute.xlu0 %1268
      %1270 = vrot.lane.b32.xlu0 %v896, 96
      %v1271 = vpop.permute.xlu0 %1270
      %1272 = vrot.lane.b32.xlu0 %v905, 96
      %v1273 = vpop.permute.xlu0 %1272
      %1274 = vrot.lane.b32.xlu0 %v914, 96
      %v1275 = vpop.permute.xlu0 %1274
      %1276 = vrot.lane.b32.xlu0 %v923, 96
      %v1277 = vpop.permute.xlu0 %1276
      %1278 = vrot.lane.b32.xlu0 %v932, 96
      %v1279 = vpop.permute.xlu0 %1278
      %1280 = vrot.lane.b32.xlu0 %v983, 32
      %v1281 = vpop.permute.xlu0 %1280
      %1282 = vrot.lane.b32.xlu0 %v990, 32
      %v1283 = vpop.permute.xlu0 %1282
      %1284 = vrot.lane.b32.xlu0 %v997, 32
      %v1285 = vpop.permute.xlu0 %1284
      %1286 = vrot.lane.b32.xlu0 %v1004, 32
      %v1287 = vpop.permute.xlu0 %1286
      %1288 = vrot.lane.b32.xlu0 %v1011, 32
      %v1289 = vpop.permute.xlu0 %1288
      %1290 = vrot.lane.b32.xlu0 %v1018, 32
      %v1291 = vpop.permute.xlu0 %1290
      %1292 = vrot.lane.b32.xlu0 %v1025, 32
      %v1293 = vpop.permute.xlu0 %1292
      %1294 = vrot.lane.b32.xlu0 %v1032, 32
      %v1295 = vpop.permute.xlu0 %1294
      %1296 = vrot.lane.b32.xlu0 %v1039, 32
      %v1297 = vpop.permute.xlu0 %1296
      %1298 = vrot.lane.b32.xlu0 %v1046, 32
      %v1299 = vpop.permute.xlu0 %1298
      %1300 = vrot.lane.b32.xlu0 %v1053, 32
      %v1301 = vpop.permute.xlu0 %1300
      %1302 = vrot.lane.b32.xlu0 %v1060, 32
      %v1303 = vpop.permute.xlu0 %1302
      %1304 = vrot.lane.b32.xlu0 %v1067, 32
      %v1305 = vpop.permute.xlu0 %1304
      %1306 = vrot.lane.b32.xlu0 %v1074, 32
      %v1307 = vpop.permute.xlu0 %1306
      %1308 = vrot.lane.b32.xlu0 %v1078, 64
      %v1309 = vpop.permute.xlu0 %1308
      %1310 = vrot.lane.b32.xlu0 %v1081, 64
      %v1311 = vpop.permute.xlu0 %1310
      %1312 = vrot.lane.b32.xlu0 %v1084, 64
      %v1313 = vpop.permute.xlu0 %1312
      %1314 = vrot.lane.b32.xlu0 %v1087, 64
      %v1315 = vpop.permute.xlu0 %1314
      %1316 = vrot.lane.b32.xlu0 %v1090, 64
      %v1317 = vpop.permute.xlu0 %1316
      %1318 = vrot.lane.b32.xlu0 %v1093, 64
      %v1319 = vpop.permute.xlu0 %1318
      %1320 = vrot.lane.b32.xlu0 %v1096, 64
      %v1321 = vpop.permute.xlu0 %1320
      %1322 = vrot.lane.b32.xlu0 %v1099, 64
      %v1323 = vpop.permute.xlu0 %1322
      %1324 = vrot.lane.b32.xlu0 %v1102, 64
      %v1325 = vpop.permute.xlu0 %1324
      %1326 = vrot.lane.b32.xlu0 %v1105, 64
      %v1327 = vpop.permute.xlu0 %1326
      %1328 = vrot.lane.b32.xlu0 %v1108, 64
      %v1329 = vpop.permute.xlu0 %1328
      %1330 = vrot.lane.b32.xlu0 %v1111, 64
      %v1331 = vpop.permute.xlu0 %1330
      %1332 = vrot.lane.b32.xlu0 %v1114, 64
      %v1333 = vpop.permute.xlu0 %1332
      %1334 = vrot.lane.b32.xlu0 %v1117, 64
      %v1335 = vpop.permute.xlu0 %1334
      %1336 = vrot.lane.b32.xlu0 %v534, 96
      %v1337 = vpop.permute.xlu0 %1336
      %1338 = vrot.lane.b32.xlu0 %v535, 96
      %v1339 = vpop.permute.xlu0 %1338
      %1340 = vrot.lane.b32.xlu0 %v536, 96
      %v1341 = vpop.permute.xlu0 %1340
      %1342 = vrot.lane.b32.xlu0 %v537, 96
      %v1343 = vpop.permute.xlu0 %1342
      %1344 = vrot.lane.b32.xlu0 %v538, 96
      %v1345 = vpop.permute.xlu0 %1344
      %1346 = vrot.lane.b32.xlu0 %v539, 96
      %v1347 = vpop.permute.xlu0 %1346
      %1348 = vrot.lane.b32.xlu0 %v540, 96
      %v1349 = vpop.permute.xlu0 %1348
      %1350 = vrot.lane.b32.xlu0 %v541, 96
      %v1351 = vpop.permute.xlu0 %1350
      %1352 = vrot.lane.b32.xlu0 %v542, 96
      %v1353 = vpop.permute.xlu0 %1352
      %1354 = vrot.lane.b32.xlu0 %v543, 96
      %v1355 = vpop.permute.xlu0 %1354
      %1356 = vrot.lane.b32.xlu0 %v544, 96
      %v1357 = vpop.permute.xlu0 %1356
      %1358 = vrot.lane.b32.xlu0 %v545, 96
      %v1359 = vpop.permute.xlu0 %1358
      %1360 = vrot.lane.b32.xlu0 %v546, 96
      %v1361 = vpop.permute.xlu0 %1360
      %1362 = vrot.lane.b32.xlu0 %v547, 96
      %v1363 = vpop.permute.xlu0 %1362
      %1364 = vrot.lane.b32.xlu0 %v548, 96
      %v1365 = vpop.permute.xlu0 %1364
      %1366 = vrot.lane.b32.xlu0 %v766, 32
      %v1367 = vpop.permute.xlu0 %1366
      %1368 = vrot.lane.b32.xlu0 %v769, 32
      %v1369 = vpop.permute.xlu0 %1368
      %1370 = vrot.lane.b32.xlu0 %v772, 32
      %v1371 = vpop.permute.xlu0 %1370
      %1372 = vrot.lane.b32.xlu0 %v775, 32
      %v1373 = vpop.permute.xlu0 %1372
      %1374 = vrot.lane.b32.xlu0 %v778, 32
      %v1375 = vpop.permute.xlu0 %1374
      %1376 = vrot.lane.b32.xlu0 %v781, 32
      %v1377 = vpop.permute.xlu0 %1376
      %1378 = vrot.lane.b32.xlu0 %v784, 32
      %v1379 = vpop.permute.xlu0 %1378
      %1380 = vrot.lane.b32.xlu0 %v787, 32
      %v1381 = vpop.permute.xlu0 %1380
      %1382 = vrot.lane.b32.xlu0 %v790, 32
      %v1383 = vpop.permute.xlu0 %1382
      %1384 = vrot.lane.b32.xlu0 %v793, 32
      %v1385 = vpop.permute.xlu0 %1384
      %1386 = vrot.lane.b32.xlu0 %v796, 32
      %v1387 = vpop.permute.xlu0 %1386
      %1388 = vrot.lane.b32.xlu0 %v799, 32
      %v1389 = vpop.permute.xlu0 %1388
      %1390 = vrot.lane.b32.xlu0 %v802, 32
      %v1391 = vpop.permute.xlu0 %1390
      %1392 = vrot.lane.b32.xlu0 %v805, 32
      %v1393 = vpop.permute.xlu0 %1392
      %1394 = vrot.lane.b32.xlu0 %v1134, 32
      %v1395 = vpop.permute.xlu0 %1394
      %1396 = vrot.lane.b32.xlu0 %v815, 64
      %v1397 = vpop.permute.xlu0 %1396
      %1398 = vrot.lane.b32.xlu0 %v824, 64
      %v1399 = vpop.permute.xlu0 %1398
      %1400 = vrot.lane.b32.xlu0 %v833, 64
      %v1401 = vpop.permute.xlu0 %1400
      %1402 = vrot.lane.b32.xlu0 %v842, 64
      %v1403 = vpop.permute.xlu0 %1402
      %1404 = vrot.lane.b32.xlu0 %v851, 64
      %v1405 = vpop.permute.xlu0 %1404
      %1406 = vrot.lane.b32.xlu0 %v860, 64
      %v1407 = vpop.permute.xlu0 %1406
      %1408 = vrot.lane.b32.xlu0 %v869, 64
      %v1409 = vpop.permute.xlu0 %1408
      %1410 = vrot.lane.b32.xlu0 %v878, 64
      %v1411 = vpop.permute.xlu0 %1410
      %1412 = vrot.lane.b32.xlu0 %v887, 64
      %v1413 = vpop.permute.xlu0 %1412
      %1414 = vrot.lane.b32.xlu0 %v896, 64
      %v1415 = vpop.permute.xlu0 %1414
      %1416 = vrot.lane.b32.xlu0 %v905, 64
      %v1417 = vpop.permute.xlu0 %1416
      %1418 = vrot.lane.b32.xlu0 %v914, 64
      %v1419 = vpop.permute.xlu0 %1418
      %1420 = vrot.lane.b32.xlu0 %v923, 64
      %v1421 = vpop.permute.xlu0 %1420
      %1422 = vrot.lane.b32.xlu0 %v932, 64
      %v1423 = vpop.permute.xlu0 %1422
      %1424 = vrot.lane.b32.xlu0 %v1143, 64
      %v1425 = vpop.permute.xlu0 %1424
      %1426 = vrot.lane.b32.xlu0 %v936, 96
      %v1427 = vpop.permute.xlu0 %1426
      %1428 = vrot.lane.b32.xlu0 %v939, 96
      %v1429 = vpop.permute.xlu0 %1428
      %1430 = vrot.lane.b32.xlu0 %v942, 96
      %v1431 = vpop.permute.xlu0 %1430
      %1432 = vrot.lane.b32.xlu0 %v945, 96
      %v1433 = vpop.permute.xlu0 %1432
      %1434 = vrot.lane.b32.xlu0 %v948, 96
      %v1435 = vpop.permute.xlu0 %1434
      %1436 = vrot.lane.b32.xlu0 %v951, 96
      %v1437 = vpop.permute.xlu0 %1436
      %1438 = vrot.lane.b32.xlu0 %v954, 96
      %v1439 = vpop.permute.xlu0 %1438
      %1440 = vrot.lane.b32.xlu0 %v957, 96
      %v1441 = vpop.permute.xlu0 %1440
      %1442 = vrot.lane.b32.xlu0 %v960, 96
      %v1443 = vpop.permute.xlu0 %1442
      %1444 = vrot.lane.b32.xlu0 %v963, 96
      %v1445 = vpop.permute.xlu0 %1444
      %1446 = vrot.lane.b32.xlu0 %v966, 96
      %v1447 = vpop.permute.xlu0 %1446
      %1448 = vrot.lane.b32.xlu0 %v969, 96
      %v1449 = vpop.permute.xlu0 %1448
      %1450 = vrot.lane.b32.xlu0 %v972, 96
      %v1451 = vpop.permute.xlu0 %1450
      %1452 = vrot.lane.b32.xlu0 %v975, 96
      %v1453 = vpop.permute.xlu0 %1452
      %1454 = vrot.lane.b32.xlu0 %v1146, 96
      %v1455 = vpop.permute.xlu0 %1454
      %1456 = vrot.lane.b32.xlu0 %v1078, 32
      %v1457 = vpop.permute.xlu0 %1456
      %1458 = vrot.lane.b32.xlu0 %v1081, 32
      %v1459 = vpop.permute.xlu0 %1458
      %1460 = vrot.lane.b32.xlu0 %v1084, 32
      %v1461 = vpop.permute.xlu0 %1460
      %1462 = vrot.lane.b32.xlu0 %v1087, 32
      %v1463 = vpop.permute.xlu0 %1462
      %1464 = vrot.lane.b32.xlu0 %v1090, 32
      %v1465 = vpop.permute.xlu0 %1464
      %1466 = vrot.lane.b32.xlu0 %v1093, 32
      %v1467 = vpop.permute.xlu0 %1466
      %1468 = vrot.lane.b32.xlu0 %v1096, 32
      %v1469 = vpop.permute.xlu0 %1468
      %1470 = vrot.lane.b32.xlu0 %v1099, 32
      %v1471 = vpop.permute.xlu0 %1470
      %1472 = vrot.lane.b32.xlu0 %v1102, 32
      %v1473 = vpop.permute.xlu0 %1472
      %1474 = vrot.lane.b32.xlu0 %v1105, 32
      %v1475 = vpop.permute.xlu0 %1474
      %1476 = vrot.lane.b32.xlu0 %v1108, 32
      %v1477 = vpop.permute.xlu0 %1476
      %1478 = vrot.lane.b32.xlu0 %v1111, 32
      %v1479 = vpop.permute.xlu0 %1478
      %1480 = vrot.lane.b32.xlu0 %v1114, 32
      %v1481 = vpop.permute.xlu0 %1480
      %1482 = vrot.lane.b32.xlu0 %v1117, 32
      %v1483 = vpop.permute.xlu0 %1482
      %1484 = vrot.lane.b32.xlu0 %v1156, 32
      %v1485 = vpop.permute.xlu0 %1484
      %1486 = vrot.lane.b32.xlu0 %v534, 64
      %v1487 = vpop.permute.xlu0 %1486
      %1488 = vrot.lane.b32.xlu0 %v535, 64
      %v1489 = vpop.permute.xlu0 %1488
      %1490 = vrot.lane.b32.xlu0 %v536, 64
      %v1491 = vpop.permute.xlu0 %1490
      %1492 = vrot.lane.b32.xlu0 %v537, 64
      %v1493 = vpop.permute.xlu0 %1492
      %1494 = vrot.lane.b32.xlu0 %v538, 64
      %v1495 = vpop.permute.xlu0 %1494
      %1496 = vrot.lane.b32.xlu0 %v539, 64
      %v1497 = vpop.permute.xlu0 %1496
      %1498 = vrot.lane.b32.xlu0 %v540, 64
      %v1499 = vpop.permute.xlu0 %1498
      %1500 = vrot.lane.b32.xlu0 %v541, 64
      %v1501 = vpop.permute.xlu0 %1500
      %1502 = vrot.lane.b32.xlu0 %v542, 64
      %v1503 = vpop.permute.xlu0 %1502
      %1504 = vrot.lane.b32.xlu0 %v543, 64
      %v1505 = vpop.permute.xlu0 %1504
      %1506 = vrot.lane.b32.xlu0 %v544, 64
      %v1507 = vpop.permute.xlu0 %1506
      %1508 = vrot.lane.b32.xlu0 %v545, 64
      %v1509 = vpop.permute.xlu0 %1508
      %1510 = vrot.lane.b32.xlu0 %v546, 64
      %v1511 = vpop.permute.xlu0 %1510
      %1512 = vrot.lane.b32.xlu0 %v547, 64
      %v1513 = vpop.permute.xlu0 %1512
      %1514 = vrot.lane.b32.xlu0 %v548, 64
      %v1515 = vpop.permute.xlu0 %1514
      %1516 = vrot.lane.b32.xlu0 %v549, 64
      %v1517 = vpop.permute.xlu0 %1516
      %1518 = vrot.lane.b32.xlu0 %v578, 96
      %v1519 = vpop.permute.xlu0 %1518
      %1520 = vrot.lane.b32.xlu0 %v590, 96
      %v1521 = vpop.permute.xlu0 %1520
      %1522 = vrot.lane.b32.xlu0 %v602, 96
      %v1523 = vpop.permute.xlu0 %1522
      %1524 = vrot.lane.b32.xlu0 %v614, 96
      %v1525 = vpop.permute.xlu0 %1524
      %1526 = vrot.lane.b32.xlu0 %v626, 96
      %v1527 = vpop.permute.xlu0 %1526
      %1528 = vrot.lane.b32.xlu0 %v638, 96
      %v1529 = vpop.permute.xlu0 %1528
      %1530 = vrot.lane.b32.xlu0 %v650, 96
      %v1531 = vpop.permute.xlu0 %1530
      %1532 = vrot.lane.b32.xlu0 %v662, 96
      %v1533 = vpop.permute.xlu0 %1532
      %1534 = vrot.lane.b32.xlu0 %v674, 96
      %v1535 = vpop.permute.xlu0 %1534
      %1536 = vrot.lane.b32.xlu0 %v686, 96
      %v1537 = vpop.permute.xlu0 %1536
      %1538 = vrot.lane.b32.xlu0 %v698, 96
      %v1539 = vpop.permute.xlu0 %1538
      %1540 = vrot.lane.b32.xlu0 %v710, 96
      %v1541 = vpop.permute.xlu0 %1540
      %1542 = vrot.lane.b32.xlu0 %v722, 96
      %v1543 = vpop.permute.xlu0 %1542
      %1544 = vrot.lane.b32.xlu0 %v734, 96
      %v1545 = vpop.permute.xlu0 %1544
      %1546 = vrot.lane.b32.xlu0 %v1129, 96
      %v1547 = vpop.permute.xlu0 %1546
      %1548 = vrot.lane.b32.xlu0 %v1168, 96
      %v1549 = vpop.permute.xlu0 %1548
      %vm1550 = vcmask 261120
      %v1552 = vsel %vm1550, %v534, %v1197
      %v1554 = vsel %vm1550, %v535, %v1199
      %v1556 = vsel %vm1550, %v536, %v1201
      %v1558 = vsel %vm1550, %v537, %v1203
      %v1560 = vsel %vm1550, %v538, %v1205
      %v1562 = vsel %vm1550, %v539, %v1207
      %v1564 = vsel %vm1550, %v540, %v1209
      %v1566 = vsel %vm1550, %v541, %v1211
      %v1568 = vsel %vm1550, %v542, %v1213
      %v1570 = vsel %vm1550, %v543, %v1215
      %v1572 = vsel %vm1550, %v544, %v1217
      %v1574 = vsel %vm1550, %v545, %v1219
      %v1576 = vsel %vm1550, %v546, %v1221
      %v1578 = vsel %vm1550, %v547, %v1223
      %vm1579 = vcmask 523264
      %v1581 = vsel %vm1579, %v1552, %v1225
      %v1583 = vsel %vm1579, %v1554, %v1227
      %v1585 = vsel %vm1579, %v1556, %v1229
      %v1587 = vsel %vm1579, %v1558, %v1231
      %v1589 = vsel %vm1579, %v1560, %v1233
      %v1591 = vsel %vm1579, %v1562, %v1235
      %v1593 = vsel %vm1579, %v1564, %v1237
      %v1595 = vsel %vm1579, %v1566, %v1239
      %v1597 = vsel %vm1579, %v1568, %v1241
      %v1599 = vsel %vm1579, %v1570, %v1243
      %v1601 = vsel %vm1579, %v1572, %v1245
      %v1603 = vsel %vm1579, %v1574, %v1247
      %v1605 = vsel %vm1579, %v1576, %v1249
      %v1607 = vsel %vm1579, %v1578, %v1251
      %vm1608 = vcmask 785408
      %v1610 = vsel %vm1608, %v1581, %v1253
      %v1613 = vsel %vm1608, %v1583, %v1255
      %v1616 = vsel %vm1608, %v1585, %v1257
      %v1619 = vsel %vm1608, %v1587, %v1259
      %v1622 = vsel %vm1608, %v1589, %v1261
      %v1625 = vsel %vm1608, %v1591, %v1263
      %v1628 = vsel %vm1608, %v1593, %v1265
      %v1631 = vsel %vm1608, %v1595, %v1267
      %v1634 = vsel %vm1608, %v1597, %v1269
      %v1637 = vsel %vm1608, %v1599, %v1271
      %v1640 = vsel %vm1608, %v1601, %v1273
      %v1643 = vsel %vm1608, %v1603, %v1275
      %v1646 = vsel %vm1608, %v1605, %v1277
      %v1649 = vsel %vm1608, %v1607, %v1279
      %v1653 = vsel %vm1550, %v936, %v1281
      %v1656 = vsel %vm1550, %v939, %v1283
      %v1659 = vsel %vm1550, %v942, %v1285
      %v1662 = vsel %vm1550, %v945, %v1287
      %v1665 = vsel %vm1550, %v948, %v1289
      %v1668 = vsel %vm1550, %v951, %v1291
      %v1671 = vsel %vm1550, %v954, %v1293
      %v1674 = vsel %vm1550, %v957, %v1295
      %v1677 = vsel %vm1550, %v960, %v1297
      %v1680 = vsel %vm1550, %v963, %v1299
      %v1683 = vsel %vm1550, %v966, %v1301
      %v1686 = vsel %vm1550, %v969, %v1303
      %v1689 = vsel %vm1550, %v972, %v1305
      %v1692 = vsel %vm1550, %v975, %v1307
      %v1694 = vsel %vm1579, %v1653, %v1309
      %v1696 = vsel %vm1579, %v1656, %v1311
      %v1698 = vsel %vm1579, %v1659, %v1313
      %v1700 = vsel %vm1579, %v1662, %v1315
      %v1702 = vsel %vm1579, %v1665, %v1317
      %v1704 = vsel %vm1579, %v1668, %v1319
      %v1706 = vsel %vm1579, %v1671, %v1321
      %v1708 = vsel %vm1579, %v1674, %v1323
      %v1710 = vsel %vm1579, %v1677, %v1325
      %v1712 = vsel %vm1579, %v1680, %v1327
      %v1714 = vsel %vm1579, %v1683, %v1329
      %v1716 = vsel %vm1579, %v1686, %v1331
      %v1718 = vsel %vm1579, %v1689, %v1333
      %v1720 = vsel %vm1579, %v1692, %v1335
      %v1722 = vsel %vm1608, %v1694, %v1337
      %v1725 = vsel %vm1608, %v1694, %v1339
      %v1728 = vsel %vm1608, %v1696, %v1341
      %v1731 = vsel %vm1608, %v1698, %v1343
      %v1734 = vsel %vm1608, %v1700, %v1345
      %v1737 = vsel %vm1608, %v1702, %v1347
      %v1740 = vsel %vm1608, %v1704, %v1349
      %v1743 = vsel %vm1608, %v1706, %v1351
      %v1746 = vsel %vm1608, %v1708, %v1353
      %v1749 = vsel %vm1608, %v1710, %v1355
      %v1752 = vsel %vm1608, %v1712, %v1357
      %v1755 = vsel %vm1608, %v1714, %v1359
      %v1758 = vsel %vm1608, %v1716, %v1361
      %v1761 = vsel %vm1608, %v1718, %v1363
      %v1764 = vsel %vm1608, %v1720, %v1365
      %v1768 = vsel %vm1550, %v578, %v1367
      %v1771 = vsel %vm1550, %v590, %v1369
      %v1774 = vsel %vm1550, %v602, %v1371
      %v1777 = vsel %vm1550, %v614, %v1373
      %v1780 = vsel %vm1550, %v626, %v1375
      %v1783 = vsel %vm1550, %v638, %v1377
      %v1786 = vsel %vm1550, %v650, %v1379
      %v1789 = vsel %vm1550, %v662, %v1381
      %v1792 = vsel %vm1550, %v674, %v1383
      %v1795 = vsel %vm1550, %v686, %v1385
      %v1798 = vsel %vm1550, %v698, %v1387
      %v1801 = vsel %vm1550, %v710, %v1389
      %v1804 = vsel %vm1550, %v722, %v1391
      %v1807 = vsel %vm1550, %v734, %v1393
      %v1810 = vsel %vm1550, %v1129, %v1395
      %v1812 = vsel %vm1579, %v1768, %v1397
      %v1814 = vsel %vm1579, %v1771, %v1399
      %v1816 = vsel %vm1579, %v1774, %v1401
      %v1818 = vsel %vm1579, %v1777, %v1403
      %v1820 = vsel %vm1579, %v1780, %v1405
      %v1822 = vsel %vm1579, %v1783, %v1407
      %v1824 = vsel %vm1579, %v1786, %v1409
      %v1826 = vsel %vm1579, %v1789, %v1411
      %v1828 = vsel %vm1579, %v1792, %v1413
      %v1830 = vsel %vm1579, %v1795, %v1415
      %v1832 = vsel %vm1579, %v1798, %v1417
      %v1834 = vsel %vm1579, %v1801, %v1419
      %v1836 = vsel %vm1579, %v1804, %v1421
      %v1838 = vsel %vm1579, %v1807, %v1423
      %v1840 = vsel %vm1579, %v1810, %v1425
      %v1842 = vsel %vm1608, %v1812, %v1427
      %v1845 = vsel %vm1608, %v1814, %v1429
      %v1848 = vsel %vm1608, %v1816, %v1431
      %v1851 = vsel %vm1608, %v1818, %v1433
      %v1854 = vsel %vm1608, %v1820, %v1435
      %v1857 = vsel %vm1608, %v1822, %v1437
      %v1860 = vsel %vm1608, %v1824, %v1439
      %v1863 = vsel %vm1608, %v1826, %v1441
      %v1866 = vsel %vm1608, %v1828, %v1443
      %v1869 = vsel %vm1608, %v1830, %v1445
      %v1872 = vsel %vm1608, %v1832, %v1447
      %v1875 = vsel %vm1608, %v1834, %v1449
      %v1878 = vsel %vm1608, %v1836, %v1451
      %v1881 = vsel %vm1608, %v1838, %v1453
      %v1884 = vsel %vm1608, %v1840, %v1455
      %v1888 = vsel %vm1550, %v983, %v1457
      %v1891 = vsel %vm1550, %v990, %v1459
      %v1894 = vsel %vm1550, %v997, %v1461
      %v1897 = vsel %vm1550, %v1004, %v1463
      %v1900 = vsel %vm1550, %v1011, %v1465
      %v1903 = vsel %vm1550, %v1018, %v1467
      %v1906 = vsel %vm1550, %v1025, %v1469
      %v1909 = vsel %vm1550, %v1032, %v1471
      %v1912 = vsel %vm1550, %v1039, %v1473
      %v1915 = vsel %vm1550, %v1046, %v1475
      %v1918 = vsel %vm1550, %v1053, %v1477
      %v1921 = vsel %vm1550, %v1060, %v1479
      %v1924 = vsel %vm1550, %v1067, %v1481
      %v1927 = vsel %vm1550, %v1074, %v1483
      %v1930 = vsel %vm1550, %v1153, %v1485
      %v1932 = vsel %vm1579, %v1888, %v1487
      %v1934 = vsel %vm1579, %v1888, %v1489
      %v1936 = vsel %vm1579, %v1891, %v1491
      %v1938 = vsel %vm1579, %v1894, %v1493
      %v1940 = vsel %vm1579, %v1897, %v1495
      %v1942 = vsel %vm1579, %v1900, %v1497
      %v1944 = vsel %vm1579, %v1903, %v1499
      %v1946 = vsel %vm1579, %v1906, %v1501
      %v1948 = vsel %vm1579, %v1909, %v1503
      %v1950 = vsel %vm1579, %v1912, %v1505
      %v1952 = vsel %vm1579, %v1915, %v1507
      %v1954 = vsel %vm1579, %v1918, %v1509
      %v1956 = vsel %vm1579, %v1921, %v1511
      %v1958 = vsel %vm1579, %v1924, %v1513
      %v1960 = vsel %vm1579, %v1927, %v1515
      %v1962 = vsel %vm1579, %v1930, %v1517
      %v1964 = vsel %vm1608, %v1932, %v1519
      %v1967 = vsel %vm1608, %v1934, %v1521
      %v1970 = vsel %vm1608, %v1936, %v1523
      %v1973 = vsel %vm1608, %v1938, %v1525
      %v1976 = vsel %vm1608, %v1940, %v1527
      %v1979 = vsel %vm1608, %v1942, %v1529
      %v1982 = vsel %vm1608, %v1944, %v1531
      %v1985 = vsel %vm1608, %v1946, %v1533
      %v1988 = vsel %vm1608, %v1948, %v1535
      %v1991 = vsel %vm1608, %v1950, %v1537
      %v1994 = vsel %vm1608, %v1952, %v1539
      %v1997 = vsel %vm1608, %v1954, %v1541
      %v2000 = vsel %vm1608, %v1956, %v1543
      %v2003 = vsel %vm1608, %v1958, %v1545
      %v2006 = vsel %vm1608, %v1960, %v1547
      %v2009 = vsel %vm1608, %v1962, %v1549
      %2011 = vrot.lane.b32.xlu0 %v815, 32
      %v2012 = vpop.permute.xlu0 %2011
      %2013 = vrot.lane.b32.xlu0 %v824, 32
      %v2014 = vpop.permute.xlu0 %2013
      %2015 = vrot.lane.b32.xlu0 %v833, 32
      %v2016 = vpop.permute.xlu0 %2015
      %2017 = vrot.lane.b32.xlu0 %v842, 32
      %v2018 = vpop.permute.xlu0 %2017
      %2019 = vrot.lane.b32.xlu0 %v851, 32
      %v2020 = vpop.permute.xlu0 %2019
      %2021 = vrot.lane.b32.xlu0 %v860, 32
      %v2022 = vpop.permute.xlu0 %2021
      %2023 = vrot.lane.b32.xlu0 %v869, 32
      %v2024 = vpop.permute.xlu0 %2023
      %2025 = vrot.lane.b32.xlu0 %v878, 32
      %v2026 = vpop.permute.xlu0 %2025
      %2027 = vrot.lane.b32.xlu0 %v887, 32
      %v2028 = vpop.permute.xlu0 %2027
      %2029 = vrot.lane.b32.xlu0 %v896, 32
      %v2030 = vpop.permute.xlu0 %2029
      %2031 = vrot.lane.b32.xlu0 %v905, 32
      %v2032 = vpop.permute.xlu0 %2031
      %2033 = vrot.lane.b32.xlu0 %v914, 32
      %v2034 = vpop.permute.xlu0 %2033
      %2035 = vrot.lane.b32.xlu0 %v923, 32
      %v2036 = vpop.permute.xlu0 %2035
      %2037 = vrot.lane.b32.xlu0 %v932, 32
      %v2038 = vpop.permute.xlu0 %2037
      %2039 = vrot.lane.b32.xlu0 %v1143, 32
      %v2040 = vpop.permute.xlu0 %2039
      %2041 = vrot.lane.b32.xlu0 %v1182, 32
      %v2042 = vpop.permute.xlu0 %2041
      %2043 = vrot.lane.b32.xlu0 %v936, 64
      %v2044 = vpop.permute.xlu0 %2043
      %2045 = vrot.lane.b32.xlu0 %v939, 64
      %v2046 = vpop.permute.xlu0 %2045
      %2047 = vrot.lane.b32.xlu0 %v942, 64
      %v2048 = vpop.permute.xlu0 %2047
      %2049 = vrot.lane.b32.xlu0 %v945, 64
      %v2050 = vpop.permute.xlu0 %2049
      %2051 = vrot.lane.b32.xlu0 %v948, 64
      %v2052 = vpop.permute.xlu0 %2051
      %2053 = vrot.lane.b32.xlu0 %v951, 64
      %v2054 = vpop.permute.xlu0 %2053
      %2055 = vrot.lane.b32.xlu0 %v954, 64
      %v2056 = vpop.permute.xlu0 %2055
      %2057 = vrot.lane.b32.xlu0 %v957, 64
      %v2058 = vpop.permute.xlu0 %2057
      %2059 = vrot.lane.b32.xlu0 %v960, 64
      %v2060 = vpop.permute.xlu0 %2059
      %2061 = vrot.lane.b32.xlu0 %v963, 64
      %v2062 = vpop.permute.xlu0 %2061
      %2063 = vrot.lane.b32.xlu0 %v966, 64
      %v2064 = vpop.permute.xlu0 %2063
      %2065 = vrot.lane.b32.xlu0 %v969, 64
      %v2066 = vpop.permute.xlu0 %2065
      %2067 = vrot.lane.b32.xlu0 %v972, 64
      %v2068 = vpop.permute.xlu0 %2067
      %2069 = vrot.lane.b32.xlu0 %v975, 64
      %v2070 = vpop.permute.xlu0 %2069
      %2071 = vrot.lane.b32.xlu0 %v1146, 64
      %v2072 = vpop.permute.xlu0 %2071
      %2073 = vrot.lane.b32.xlu0 %v1185, 64
      %v2074 = vpop.permute.xlu0 %2073
      %2075 = vrot.lane.b32.xlu0 %v983, 96
      %v2076 = vpop.permute.xlu0 %2075
      %2077 = vrot.lane.b32.xlu0 %v990, 96
      %v2078 = vpop.permute.xlu0 %2077
      %2079 = vrot.lane.b32.xlu0 %v997, 96
      %v2080 = vpop.permute.xlu0 %2079
      %2081 = vrot.lane.b32.xlu0 %v1004, 96
      %v2082 = vpop.permute.xlu0 %2081
      %2083 = vrot.lane.b32.xlu0 %v1011, 96
      %v2084 = vpop.permute.xlu0 %2083
      %2085 = vrot.lane.b32.xlu0 %v1018, 96
      %v2086 = vpop.permute.xlu0 %2085
      %2087 = vrot.lane.b32.xlu0 %v1025, 96
      %v2088 = vpop.permute.xlu0 %2087
      %2089 = vrot.lane.b32.xlu0 %v1032, 96
      %v2090 = vpop.permute.xlu0 %2089
      %2091 = vrot.lane.b32.xlu0 %v1039, 96
      %v2092 = vpop.permute.xlu0 %2091
      %2093 = vrot.lane.b32.xlu0 %v1046, 96
      %v2094 = vpop.permute.xlu0 %2093
      %2095 = vrot.lane.b32.xlu0 %v1053, 96
      %v2096 = vpop.permute.xlu0 %2095
      %2097 = vrot.lane.b32.xlu0 %v1060, 96
      %v2098 = vpop.permute.xlu0 %2097
      %2099 = vrot.lane.b32.xlu0 %v1067, 96
      %v2100 = vpop.permute.xlu0 %2099
      %2101 = vrot.lane.b32.xlu0 %v1074, 96
      %v2102 = vpop.permute.xlu0 %2101
      %2103 = vrot.lane.b32.xlu0 %v1153, 96
      %v2104 = vpop.permute.xlu0 %2103
      %2105 = vrot.lane.b32.xlu0 %v1192, 96
      %v2106 = vpop.permute.xlu0 %2105
      %v2109 = vsel %vm1550, %v766, %v2012
      %v2112 = vsel %vm1550, %v769, %v2014
      %v2115 = vsel %vm1550, %v772, %v2016
      %v2118 = vsel %vm1550, %v775, %v2018
      %v2121 = vsel %vm1550, %v778, %v2020
      %v2124 = vsel %vm1550, %v781, %v2022
      %v2127 = vsel %vm1550, %v784, %v2024
      %v2130 = vsel %vm1550, %v787, %v2026
      %v2133 = vsel %vm1550, %v790, %v2028
      %v2136 = vsel %vm1550, %v793, %v2030
      %v2139 = vsel %vm1550, %v796, %v2032
      %v2142 = vsel %vm1550, %v799, %v2034
      %v2145 = vsel %vm1550, %v802, %v2036
      %v2148 = vsel %vm1550, %v805, %v2038
      %v2151 = vsel %vm1550, %v1134, %v2040
      %v2154 = vsel %vm1550, %v1173, %v2042
      %v2156 = vsel %vm1579, %v2109, %v2044
      %v2158 = vsel %vm1579, %v2112, %v2046
      %v2160 = vsel %vm1579, %v2115, %v2048
      %v2162 = vsel %vm1579, %v2118, %v2050
      %v2164 = vsel %vm1579, %v2121, %v2052
      %v2166 = vsel %vm1579, %v2124, %v2054
      %v2168 = vsel %vm1579, %v2127, %v2056
      %v2170 = vsel %vm1579, %v2130, %v2058
      %v2172 = vsel %vm1579, %v2133, %v2060
      %v2174 = vsel %vm1579, %v2136, %v2062
      %v2176 = vsel %vm1579, %v2139, %v2064
      %v2178 = vsel %vm1579, %v2142, %v2066
      %v2180 = vsel %vm1579, %v2145, %v2068
      %v2182 = vsel %vm1579, %v2148, %v2070
      %v2184 = vsel %vm1579, %v2151, %v2072
      %v2186 = vsel %vm1579, %v2154, %v2074
      %v2188 = vsel %vm1608, %v2156, %v2076
      %v2191 = vsel %vm1608, %v2158, %v2078
      %v2194 = vsel %vm1608, %v2160, %v2080
      %v2197 = vsel %vm1608, %v2162, %v2082
      %v2200 = vsel %vm1608, %v2164, %v2084
      %v2203 = vsel %vm1608, %v2166, %v2086
      %v2206 = vsel %vm1608, %v2168, %v2088
      %v2209 = vsel %vm1608, %v2170, %v2090
      %v2212 = vsel %vm1608, %v2172, %v2092
      %v2215 = vsel %vm1608, %v2174, %v2094
      %v2218 = vsel %vm1608, %v2176, %v2096
      %v2221 = vsel %vm1608, %v2178, %v2098
      %v2224 = vsel %vm1608, %v2180, %v2100
      %v2227 = vsel %vm1608, %v2182, %v2102
      %v2230 = vsel %vm1608, %v2184, %v2104
      %v2233 = vsel %vm1608, %v2186, %v2106
      %v2237 = vunpack.c.l.b16 %v310
      %v2238 = vunpack.c.l.b16 %v311
      %v2239 = vpack.c.b16 %v2238, %v2237
      %v2241 = vshrl.u32 %v2239, 16
      %v2243 = vrot.slane %v2241, 6
      %v2244 = vshll.u32 %v2239, 16
      %v2246 = vrot.slane %v2244, 7
      %v2247 = vor.u32 %v2243, %v2246
      %v2249 = vsel %vm533, 0, %v2247
      %v2251 = vshll.u32 %v402, 16
      %v2253 = vrot.slane %v2251, 1
      %v2254 = vsel %vm566, %v585, %v2253
      %v2256 = vshll.u32 %v410, 16
      %v2258 = vrot.slane %v2256, 1
      %v2259 = vsel %vm566, %v597, %v2258
      %v2261 = vshll.u32 %v418, 16
      %v2263 = vrot.slane %v2261, 1
      %v2264 = vsel %vm566, %v609, %v2263
      %v2266 = vshll.u32 %v426, 16
      %v2268 = vrot.slane %v2266, 1
      %v2269 = vsel %vm566, %v621, %v2268
      %v2271 = vshll.u32 %v434, 16
      %v2273 = vrot.slane %v2271, 1
      %v2274 = vsel %vm566, %v633, %v2273
      %v2276 = vshll.u32 %v442, 16
      %v2278 = vrot.slane %v2276, 1
      %v2279 = vsel %vm566, %v645, %v2278
      %v2281 = vshll.u32 %v450, 16
      %v2283 = vrot.slane %v2281, 1
      %v2284 = vsel %vm566, %v657, %v2283
      %v2286 = vshll.u32 %v458, 16
      %v2288 = vrot.slane %v2286, 1
      %v2289 = vsel %vm566, %v669, %v2288
      %v2291 = vshll.u32 %v466, 16
      %v2293 = vrot.slane %v2291, 1
      %v2294 = vsel %vm566, %v681, %v2293
      %v2296 = vshll.u32 %v474, 16
      %v2298 = vrot.slane %v2296, 1
      %v2299 = vsel %vm566, %v693, %v2298
      %v2301 = vshll.u32 %v482, 16
      %v2303 = vrot.slane %v2301, 1
      %v2304 = vsel %vm566, %v705, %v2303
      %v2306 = vshll.u32 %v490, 16
      %v2308 = vrot.slane %v2306, 1
      %v2309 = vsel %vm566, %v717, %v2308
      %v2311 = vshll.u32 %v498, 16
      %v2313 = vrot.slane %v2311, 1
      %v2314 = vsel %vm566, %v729, %v2313
      %v2316 = vshll.u32 %v506, 16
      %v2318 = vrot.slane %v2316, 1
      %v2319 = vsel %vm566, %v1124, %v2318
      %v2321 = vshll.u32 %v514, 16
      %v2323 = vrot.slane %v2321, 1
      %v2324 = vsel %vm566, %v1163, %v2323
      %v2326 = vshrl.u32 %v2249, 16
      %v2328 = vshll.u32 %v2249, 16
      %v2330 = vrot.slane %v2328, 1
      %v2331 = vor.u32 %v2326, %v2330
      %v2333 = vshll.u32 %v2247, 16
      %v2335 = vrot.slane %v2333, 1
      %v2336 = vsel %vm566, %v2331, %v2335
      %v2338 = vrot.slane %v402, 1
      %v2339 = vsel %vm763, %v767, %v2338
      %v2340 = vrot.slane %v410, 1
      %v2341 = vsel %vm763, %v770, %v2340
      %v2342 = vrot.slane %v418, 1
      %v2343 = vsel %vm763, %v773, %v2342
      %v2344 = vrot.slane %v426, 1
      %v2345 = vsel %vm763, %v776, %v2344
      %v2346 = vrot.slane %v434, 1
      %v2347 = vsel %vm763, %v779, %v2346
      %v2348 = vrot.slane %v442, 1
      %v2349 = vsel %vm763, %v782, %v2348
      %v2350 = vrot.slane %v450, 1
      %v2351 = vsel %vm763, %v785, %v2350
      %v2352 = vrot.slane %v458, 1
      %v2353 = vsel %vm763, %v788, %v2352
      %v2354 = vrot.slane %v466, 1
      %v2355 = vsel %vm763, %v791, %v2354
      %v2356 = vrot.slane %v474, 1
      %v2357 = vsel %vm763, %v794, %v2356
      %v2358 = vrot.slane %v482, 1
      %v2359 = vsel %vm763, %v797, %v2358
      %v2360 = vrot.slane %v490, 1
      %v2361 = vsel %vm763, %v800, %v2360
      %v2362 = vrot.slane %v498, 1
      %v2363 = vsel %vm763, %v803, %v2362
      %v2364 = vrot.slane %v506, 1
      %v2365 = vsel %vm763, %v1132, %v2364
      %v2366 = vrot.slane %v514, 1
      %v2367 = vsel %vm763, %v1171, %v2366
      %v2368 = vrot.slane %v2249, 1
      %v2369 = vrot.slane %v2247, 1
      %v2370 = vsel %vm763, %v2368, %v2369
      %2371 = vrot.lane.b32.xlu0 %v2254, 32
      %v2372 = vpop.permute.xlu0 %2371
      %2373 = vrot.lane.b32.xlu0 %v2259, 32
      %v2374 = vpop.permute.xlu0 %2373
      %2375 = vrot.lane.b32.xlu0 %v2264, 32
      %v2376 = vpop.permute.xlu0 %2375
      %2377 = vrot.lane.b32.xlu0 %v2269, 32
      %v2378 = vpop.permute.xlu0 %2377
      %2379 = vrot.lane.b32.xlu0 %v2274, 32
      %v2380 = vpop.permute.xlu0 %2379
      %2381 = vrot.lane.b32.xlu0 %v2279, 32
      %v2382 = vpop.permute.xlu0 %2381
      %2383 = vrot.lane.b32.xlu0 %v2284, 32
      %v2384 = vpop.permute.xlu0 %2383
      %2385 = vrot.lane.b32.xlu0 %v2289, 32
      %v2386 = vpop.permute.xlu0 %2385
      %2387 = vrot.lane.b32.xlu0 %v2294, 32
      %v2388 = vpop.permute.xlu0 %2387
      %2389 = vrot.lane.b32.xlu0 %v2299, 32
      %v2390 = vpop.permute.xlu0 %2389
      %2391 = vrot.lane.b32.xlu0 %v2304, 32
      %v2392 = vpop.permute.xlu0 %2391
      %2393 = vrot.lane.b32.xlu0 %v2309, 32
      %v2394 = vpop.permute.xlu0 %2393
      %2395 = vrot.lane.b32.xlu0 %v2314, 32
      %v2396 = vpop.permute.xlu0 %2395
      %2397 = vrot.lane.b32.xlu0 %v2319, 32
      %v2398 = vpop.permute.xlu0 %2397
      %2399 = vrot.lane.b32.xlu0 %v2324, 32
      %v2400 = vpop.permute.xlu0 %2399
      %2401 = vrot.lane.b32.xlu0 %v2336, 32
      %v2402 = vpop.permute.xlu0 %2401
      %2403 = vrot.lane.b32.xlu0 %v2339, 64
      %v2404 = vpop.permute.xlu0 %2403
      %2405 = vrot.lane.b32.xlu0 %v2341, 64
      %v2406 = vpop.permute.xlu0 %2405
      %2407 = vrot.lane.b32.xlu0 %v2343, 64
      %v2408 = vpop.permute.xlu0 %2407
      %2409 = vrot.lane.b32.xlu0 %v2345, 64
      %v2410 = vpop.permute.xlu0 %2409
      %2411 = vrot.lane.b32.xlu0 %v2347, 64
      %v2412 = vpop.permute.xlu0 %2411
      %2413 = vrot.lane.b32.xlu0 %v2349, 64
      %v2414 = vpop.permute.xlu0 %2413
      %2415 = vrot.lane.b32.xlu0 %v2351, 64
      %v2416 = vpop.permute.xlu0 %2415
      %2417 = vrot.lane.b32.xlu0 %v2353, 64
      %v2418 = vpop.permute.xlu0 %2417
      %2419 = vrot.lane.b32.xlu0 %v2355, 64
      %v2420 = vpop.permute.xlu0 %2419
      %2421 = vrot.lane.b32.xlu0 %v2357, 64
      %v2422 = vpop.permute.xlu0 %2421
      %2423 = vrot.lane.b32.xlu0 %v2359, 64
      %v2424 = vpop.permute.xlu0 %2423
      %2425 = vrot.lane.b32.xlu0 %v2361, 64
      %v2426 = vpop.permute.xlu0 %2425
      %2427 = vrot.lane.b32.xlu0 %v2363, 64
      %v2428 = vpop.permute.xlu0 %2427
      %2429 = vrot.lane.b32.xlu0 %v2365, 64
      %v2430 = vpop.permute.xlu0 %2429
      %2431 = vrot.lane.b32.xlu0 %v2367, 64
      %v2432 = vpop.permute.xlu0 %2431
      %2433 = vrot.lane.b32.xlu0 %v2370, 64
      %v2434 = vpop.permute.xlu0 %2433
      %v2436 = vsel %vm1550, %v535, %v2372
      %v2438 = vsel %vm1550, %v536, %v2374
      %v2440 = vsel %vm1550, %v537, %v2376
      %v2442 = vsel %vm1550, %v538, %v2378
      %v2444 = vsel %vm1550, %v539, %v2380
      %v2446 = vsel %vm1550, %v540, %v2382
      %v2448 = vsel %vm1550, %v541, %v2384
      %v2450 = vsel %vm1550, %v542, %v2386
      %v2452 = vsel %vm1550, %v543, %v2388
      %v2454 = vsel %vm1550, %v544, %v2390
      %v2456 = vsel %vm1550, %v545, %v2392
      %v2458 = vsel %vm1550, %v546, %v2394
      %v2460 = vsel %vm1550, %v547, %v2396
      %v2462 = vsel %vm1550, %v548, %v2398
      %v2464 = vsel %vm1550, %v549, %v2400
      %v2466 = vsel %vm1550, %v2249, %v2402
      %v2468 = vsel %vm1579, %v2436, %v2404
      %v2470 = vsel %vm1579, %v2438, %v2406
      %v2472 = vsel %vm1579, %v2440, %v2408
      %v2474 = vsel %vm1579, %v2442, %v2410
      %v2476 = vsel %vm1579, %v2444, %v2412
      %v2478 = vsel %vm1579, %v2446, %v2414
      %v2480 = vsel %vm1579, %v2448, %v2416
      %v2482 = vsel %vm1579, %v2450, %v2418
      %v2484 = vsel %vm1579, %v2452, %v2420
      %v2486 = vsel %vm1579, %v2454, %v2422
      %v2488 = vsel %vm1579, %v2456, %v2424
      %v2490 = vsel %vm1579, %v2458, %v2426
      %v2492 = vsel %vm1579, %v2460, %v2428
      %v2494 = vsel %vm1579, %v2462, %v2430
      %v2496 = vsel %vm1579, %v2464, %v2432
      %v2498 = vsel %vm1579, %v2466, %v2434
      %v2499 = vld [vmem:[%s1] sm:$0xf]
      %v2500 = vld [vmem:[%s1 + $0x4] sm:$0xf]
      %v2501 = vld [vmem:[%s1 + $0x8] sm:$0xf]
      %v2502 = vld [vmem:[%s1 + $0xc] sm:$0xf]
      %v2503 = vld [vmem:[%s1 + $0x10] sm:$0xf]
      %v2504 = vld [vmem:[%s1 + $0x14] sm:$0xf]
      %v2505 = vld [vmem:[%s1 + $0x18] sm:$0xf]
      %v2506 = vld [vmem:[%s1 + $0x1c] sm:$0xf]
      %v2507 = vld [vmem:[%s1 + $0x20] sm:$0xf]
      %v2508 = vld [vmem:[%s1 + $0x24] sm:$0xf]
      %v2509 = vld [vmem:[%s1 + $0x28] sm:$0xf]
      %v2510 = vld [vmem:[%s1 + $0x2c] sm:$0xf]
      %v2511 = vld [vmem:[%s1 + $0x30] sm:$0xf]
      %v2512 = vld [vmem:[%s1 + $0x34] sm:$0xf]
      %v2513 = vld [vmem:[%s1 + $0x38] sm:$0xf]
      %v2514 = vld [vmem:[%s1 + $0x3c] sm:$0xf]
      %v2515 = vld [vmem:[%s1 + $0x40] sm:$0xf]
      %v2516 = vld [vmem:[%s1 + $0x44] sm:$0xf]
      %v2517 = vld [vmem:[%s1 + $0x48] sm:$0xf]
      %v2518 = vld [vmem:[%s1 + $0x4c] sm:$0xf]
      %v2519 = vld [vmem:[%s1 + $0x50] sm:$0xf]
      %v2520 = vld [vmem:[%s1 + $0x54] sm:$0xf]
      %v2521 = vld [vmem:[%s1 + $0x58] sm:$0xf]
      %v2522 = vld [vmem:[%s1 + $0x5c] sm:$0xf]
      %v2523 = vld [vmem:[%s1 + $0x60] sm:$0xf]
      %v2524 = vld [vmem:[%s1 + $0x64] sm:$0xf]
      %v2525 = vld [vmem:[%s1 + $0x68] sm:$0xf]
      %v2526 = vld [vmem:[%s1 + $0x6c] sm:$0xf]
      %v2527 = vld [vmem:[%s1 + $0x70] sm:$0xf]
      %v2528 = vld [vmem:[%s1 + $0x74] sm:$0xf]
      %v2529 = vld [vmem:[%s1 + $0x78] sm:$0xf]
      %v2530 = vld [vmem:[%s1 + $0x7c] sm:$0xf]
      %v2531 = vld [vmem:[%s1 + $0x80] sm:$0xf]
      %v2532 = vld [vmem:[%s1 + $0x84] sm:$0xf]
      %v2533 = vld [vmem:[%s1 + $0x88] sm:$0xf]
      %v2534 = vld [vmem:[%s1 + $0x8c] sm:$0xf]
      %v2535 = vld [vmem:[%s1 + $0x90] sm:$0xf]
      %v2536 = vld [vmem:[%s1 + $0x94] sm:$0xf]
      %v2537 = vld [vmem:[%s1 + $0x98] sm:$0xf]
      %v2538 = vld [vmem:[%s1 + $0x9c] sm:$0xf]
      %v2539 = vld [vmem:[%s1 + $0xa0] sm:$0xf]
      %v2540 = vld [vmem:[%s1 + $0xa4] sm:$0xf]
      %v2541 = vld [vmem:[%s1 + $0xa8] sm:$0xf]
      %v2542 = vld [vmem:[%s1 + $0xac] sm:$0xf]
      %v2543 = vld [vmem:[%s1 + $0xb0] sm:$0xf]
      %v2544 = vld [vmem:[%s1 + $0xb4] sm:$0xf]
      %v2545 = vld [vmem:[%s1 + $0xb8] sm:$0xf]
      %v2546 = vld [vmem:[%s1 + $0xbc] sm:$0xf]
      %v2547 = vld [vmem:[%s1 + $0xc0] sm:$0xf]
      %v2548 = vld [vmem:[%s1 + $0xc4] sm:$0xf]
      %v2549 = vld [vmem:[%s1 + $0xc8] sm:$0xf]
      %v2550 = vld [vmem:[%s1 + $0xcc] sm:$0xf]
      %v2551 = vld [vmem:[%s1 + $0xd0] sm:$0xf]
      %v2552 = vld [vmem:[%s1 + $0xd4] sm:$0xf]
      %v2553 = vld [vmem:[%s1 + $0xd8] sm:$0xf]
      %v2554 = vld [vmem:[%s1 + $0xdc] sm:$0xf]
      %v2555 = vld [vmem:[%s1 + $0xe0] sm:$0xf]
      %v2556 = vld [vmem:[%s1 + $0xe4] sm:$0xf]
      %v2557 = vld [vmem:[%s1 + $0xe8] sm:$0xf]
      %v2558 = vld [vmem:[%s1 + $0xec] sm:$0xf]
      %v2559 = vld [vmem:[%s1 + $0xf0] sm:$0xf]
      %v2560 = vld [vmem:[%s1 + $0xf4] sm:$0xf]
      %v2561 = vld [vmem:[%s1 + $0xf8] sm:$0xf]
      %v2562 = vld [vmem:[%s1 + $0xfc] sm:$0xf]
      %v2563 = vld [vmem:[%s1 + $0x100] sm:$0xf]
      %v2564 = vld [vmem:[%s1 + $0x104] sm:$0xf]
      %v2565 = vld [vmem:[%s1 + $0x108] sm:$0xf]
      %v2566 = vld [vmem:[%s1 + $0x10c] sm:$0xf]
      %v2567 = vld [vmem:[%s1 + $0x110] sm:$0xf]
      %v2568 = vld [vmem:[%s1 + $0x114] sm:$0xf]
      %v2569 = vld [vmem:[%s1 + $0x118] sm:$0xf]
      %v2570 = vld [vmem:[%s1 + $0x11c] sm:$0xf]
      %v2571 = vld [vmem:[%s1 + $0x120] sm:$0xf]
      %v2572 = vld [vmem:[%s1 + $0x124] sm:$0xf]
      %v2573 = vld [vmem:[%s1 + $0x128] sm:$0xf]
      %v2574 = vld [vmem:[%s1 + $0x12c] sm:$0xf]
      %v2575 = vld [vmem:[%s1 + $0x130] sm:$0xf]
      %v2576 = vld [vmem:[%s1 + $0x134] sm:$0xf]
      %v2577 = vld [vmem:[%s1 + $0x138] sm:$0xf]
      %v2578 = vld [vmem:[%s1 + $0x13c] sm:$0xf]
      %v2579 = vld [vmem:[%s1 + $0x140] sm:$0xf]
      %v2580 = vld [vmem:[%s1 + $0x144] sm:$0xf]
      %v2581 = vld [vmem:[%s1 + $0x148] sm:$0xf]
      %v2582 = vld [vmem:[%s1 + $0x14c] sm:$0xf]
      %v2583 = vld [vmem:[%s2] sm:$0x1]
      %v2585 = vlaneseq
      %v2586 = vshrl.u32 %v2585, 7
      %v2587 = vsub.s32 0, %v2586
      %v2588 = vrot.slane %v2583, %v2587
      %v2674 = vunpack.c.l.b16 %v2499
      %v2675 = vunpack.c.l.b16 %v2500
      %v2676 = vunpack.c.l.b16 %v2501
      %v2677 = vunpack.c.l.b16 %v2502
      %v2678 = vunpack.c.l.b16 %v2503
      %v2679 = vunpack.c.l.b16 %v2504
      %v2680 = vunpack.c.l.b16 %v2505
      %v2681 = vunpack.c.l.b16 %v2506
      %v2682 = vunpack.c.l.b16 %v2507
      %v2683 = vunpack.c.l.b16 %v2508
      %v2684 = vunpack.c.l.b16 %v2509
      %v2685 = vunpack.c.l.b16 %v2510
      %v2686 = vunpack.c.l.b16 %v2511
      %v2687 = vunpack.c.l.b16 %v2512
      %v2688 = vunpack.c.l.b16 %v2513
      %v2689 = vunpack.c.l.b16 %v2514
      %v2690 = vunpack.c.l.b16 %v2515
      %v2691 = vunpack.c.l.b16 %v2516
      %v2692 = vunpack.c.l.b16 %v2517
      %v2693 = vunpack.c.l.b16 %v2518
      %v2694 = vunpack.c.l.b16 %v2519
      %v2695 = vunpack.c.l.b16 %v2520
      %v2696 = vunpack.c.l.b16 %v2521
      %v2697 = vunpack.c.l.b16 %v2522
      %v2698 = vunpack.c.l.b16 %v2523
      %v2699 = vunpack.c.l.b16 %v2524
      %v2700 = vunpack.c.l.b16 %v2525
      %v2701 = vunpack.c.l.b16 %v2526
      %v2702 = vunpack.c.l.b16 %v2527
      %v2703 = vunpack.c.l.b16 %v2528
      %v2704 = vunpack.c.l.b16 %v2529
      %v2705 = vunpack.c.l.b16 %v2530
      %v2706 = vunpack.c.l.b16 %v2531
      %v2707 = vunpack.c.l.b16 %v2532
      %v2708 = vunpack.c.l.b16 %v2533
      %v2709 = vunpack.c.l.b16 %v2534
      %v2710 = vunpack.c.l.b16 %v2535
      %v2711 = vunpack.c.l.b16 %v2536
      %v2712 = vunpack.c.l.b16 %v2537
      %v2713 = vunpack.c.l.b16 %v2538
      %v2714 = vunpack.c.l.b16 %v2539
      %v2715 = vunpack.c.l.b16 %v2540
      %v2716 = vunpack.c.l.b16 %v2541
      %v2717 = vunpack.c.l.b16 %v2542
      %v2718 = vunpack.c.l.b16 %v2543
      %v2719 = vunpack.c.l.b16 %v2544
      %v2720 = vunpack.c.l.b16 %v2545
      %v2721 = vunpack.c.l.b16 %v2546
      %v2722 = vunpack.c.l.b16 %v2547
      %v2723 = vunpack.c.l.b16 %v2548
      %v2724 = vunpack.c.l.b16 %v2549
      %v2725 = vunpack.c.l.b16 %v2550
      %v2726 = vunpack.c.l.b16 %v2551
      %v2727 = vunpack.c.l.b16 %v2552
      %v2728 = vunpack.c.l.b16 %v2553
      %v2729 = vunpack.c.l.b16 %v2554
      %v2730 = vunpack.c.l.b16 %v2555
      %v2731 = vunpack.c.l.b16 %v2556
      %v2732 = vunpack.c.l.b16 %v2557
      %v2733 = vunpack.c.l.b16 %v2558
      %v2734 = vunpack.c.l.b16 %v2559
      %v2735 = vunpack.c.l.b16 %v2560
      %v2736 = vunpack.c.l.b16 %v2561
      %v2737 = vunpack.c.l.b16 %v2562
      %v2738 = vunpack.c.l.b16 %v2563
      %v2739 = vunpack.c.l.b16 %v2564
      %v2740 = vunpack.c.l.b16 %v2565
      %v2741 = vunpack.c.l.b16 %v2566
      %v2742 = vunpack.c.l.b16 %v2567
      %v2743 = vunpack.c.l.b16 %v2568
      %v2744 = vunpack.c.l.b16 %v2569
      %v2745 = vunpack.c.l.b16 %v2570
      %v2746 = vunpack.c.l.b16 %v2571
      %v2747 = vunpack.c.l.b16 %v2572
      %v2748 = vunpack.c.l.b16 %v2573
      %v2749 = vunpack.c.l.b16 %v2574
      %v2750 = vunpack.c.l.b16 %v2575
      %v2751 = vunpack.c.l.b16 %v2576
      %v2752 = vunpack.c.l.b16 %v2577
      %v2753 = vunpack.c.l.b16 %v2578
      %v2754 = vunpack.c.l.b16 %v2579
      %v2755 = vunpack.c.l.b16 %v2580
      %v2756 = vunpack.c.l.b16 %v2581
      %v2757 = vunpack.c.l.b16 %v2582
      %v2758 = vpack.c.b16 %v2675, %v2674
      %v2759 = vpack.c.b16 %v2677, %v2676
      %v2760 = vpack.c.b16 %v2679, %v2678
      %v2761 = vpack.c.b16 %v2681, %v2680
      %v2762 = vpack.c.b16 %v2683, %v2682
      %v2763 = vpack.c.b16 %v2685, %v2684
      %v2764 = vpack.c.b16 %v2687, %v2686
      %v2765 = vpack.c.b16 %v2689, %v2688
      %v2766 = vpack.c.b16 %v2691, %v2690
      %v2767 = vpack.c.b16 %v2693, %v2692
      %v2768 = vpack.c.b16 %v2695, %v2694
      %v2769 = vpack.c.b16 %v2697, %v2696
      %v2770 = vpack.c.b16 %v2699, %v2698
      %v2771 = vpack.c.b16 %v2701, %v2700
      %v2772 = vpack.c.b16 %v2703, %v2702
      %v2773 = vpack.c.b16 %v2705, %v2704
      %v2774 = vpack.c.b16 %v2707, %v2706
      %v2775 = vpack.c.b16 %v2709, %v2708
      %v2776 = vpack.c.b16 %v2711, %v2710
      %v2777 = vpack.c.b16 %v2713, %v2712
      %v2778 = vpack.c.b16 %v2715, %v2714
      %v2779 = vpack.c.b16 %v2717, %v2716
      %v2780 = vpack.c.b16 %v2719, %v2718
      %v2781 = vpack.c.b16 %v2721, %v2720
      %v2782 = vpack.c.b16 %v2723, %v2722
      %v2783 = vpack.c.b16 %v2725, %v2724
      %v2784 = vpack.c.b16 %v2727, %v2726
      %v2785 = vpack.c.b16 %v2729, %v2728
      %v2786 = vpack.c.b16 %v2731, %v2730
      %v2787 = vpack.c.b16 %v2733, %v2732
      %v2788 = vpack.c.b16 %v2735, %v2734
      %v2789 = vpack.c.b16 %v2737, %v2736
      %v2790 = vpack.c.b16 %v2739, %v2738
      %v2791 = vpack.c.b16 %v2741, %v2740
      %v2792 = vpack.c.b16 %v2743, %v2742
      %v2793 = vpack.c.b16 %v2745, %v2744
      %v2794 = vpack.c.b16 %v2747, %v2746
      %v2795 = vpack.c.b16 %v2749, %v2748
      %v2796 = vpack.c.b16 %v2751, %v2750
      %v2797 = vpack.c.b16 %v2753, %v2752
      %v2798 = vpack.c.b16 %v2755, %v2754
      %v2799 = vpack.c.b16 %v2757, %v2756
      %v2843 = vsel %vm1550, %v1078, 0
      %v2846 = vsel %vm1550, %v1081, 0
      %v2849 = vsel %vm1550, %v1084, 0
      %v2852 = vsel %vm1550, %v1087, 0
      %v2855 = vsel %vm1550, %v1090, 0
      %v2858 = vsel %vm1550, %v1093, 0
      %v2861 = vsel %vm1550, %v1096, 0
      %v2864 = vsel %vm1550, %v1099, 0
      %v2867 = vsel %vm1550, %v1102, 0
      %v2870 = vsel %vm1550, %v1105, 0
      %v2873 = vsel %vm1550, %v1108, 0
      %v2876 = vsel %vm1550, %v1111, 0
      %v2879 = vsel %vm1550, %v1114, 0
      %v2882 = vsel %vm1550, %v1117, 0
      %v2885 = vsel %vm1550, %v1156, 0
      %v2888 = vsel %vm1550, %v1195, 0
      %2890 = vmatprep.subr.bf16.mxu0 0
      %2891 = vmatpush1.bf16.msra.mxu0 %v2765
      %2892 = vmatprep.subr.bf16.mxu0 0
      %2893 = vmatpush1.bf16.msra.mxu0 %v2764
      %2894 = vmatprep.subr.bf16.mxu0 0
      %2895 = vmatpush1.bf16.msra.mxu0 %v2763
      %2896 = vmatprep.subr.bf16.mxu0 0
      %2897 = vmatpush1.bf16.msra.mxu0 %v2762
      %2898 = vmatprep.subr.bf16.mxu0 0
      %2899 = vmatpush1.bf16.msra.mxu0 %v2761
      %2900 = vmatprep.subr.bf16.mxu0 0
      %2901 = vmatpush1.bf16.msra.mxu0 %v2760
      %2902 = vmatprep.subr.bf16.mxu0 0
      %2903 = vmatpush1.bf16.msra.mxu0 %v2759
      %2904 = vmatprep.subr.bf16.mxu0 0
      %2905 = vmatpush1.bf16.msra.mxu0 %v2758
      %2906 = vmatprep.subr.bf16.mxu0 0
      %2907 = vmatpush2.bf16.msra.mxu0 %v2773
      %2908 = vmatprep.subr.bf16.mxu0 0
      %2909 = vmatpush2.bf16.msra.mxu0 %v2772
      %2910 = vmatprep.subr.bf16.mxu0 0
      %2911 = vmatpush2.bf16.msra.mxu0 %v2771
      %2912 = vmatprep.subr.bf16.mxu0 0
      %2913 = vmatpush2.bf16.msra.mxu0 %v2770
      %2914 = vmatprep.subr.bf16.mxu0 0
      %2915 = vmatpush2.bf16.msra.mxu0 %v2769
      %2916 = vmatprep.subr.bf16.mxu0 0
      %2917 = vmatpush2.bf16.msra.mxu0 %v2768
      %2918 = vmatprep.subr.bf16.mxu0 0
      %2919 = vmatpush2.bf16.msra.mxu0 %v2767
      %2920 = vmatprep.subr.bf16.mxu0 0
      %2921 = vmatpush2.bf16.msra.mxu0 %v2766
      %2922 = vmatprep.mubr.bf16.mxu0 %v1722
      %2923 = vmatmul.mubr.bf16.gmra.mxu0 %v1610
      %v2924 = vpop.f32.mrf.mxu0
      %v2925 = vadd.f32 %v2588, %v2924
      %v2926 = vpop.f32.mrf.mxu0
      %v2927 = vpop.f32.mrf.mxu0
      %v2928 = vadd.f32 %v2588, %v2927
      %v2929 = vpop.f32.mrf.mxu0
      %2930 = vmatprep.mubr.bf16.mxu0 %v1722
      %2931 = vmatmul.mubr.bf16.gmra.mxu0 %v1610
      %v2932 = vpop.f32.mrf.mxu0
      %v2933 = vadd.f32 %v2588, %v2932
      %v2934 = vpop.f32.mrf.mxu0
      %v2935 = vpop.f32.mrf.mxu0
      %v2936 = vadd.f32 %v2588, %v2935
      %v2937 = vpop.f32.mrf.mxu0
      %2938 = vmatprep.mubr.bf16.mxu0 %v1725
      %2939 = vmatmul.mubr.bf16.gmra.mxu0 %v1610
      %v2940 = vpop.f32.mrf.mxu0
      %v2941 = vadd.f32 %v2588, %v2940
      %v2942 = vpop.f32.mrf.mxu0
      %v2943 = vpop.f32.mrf.mxu0
      %v2944 = vadd.f32 %v2588, %v2943
      %v2945 = vpop.f32.mrf.mxu0
      %2946 = vmatprep.mubr.bf16.mxu0 %v1728
      %2947 = vmatmul.mubr.bf16.gmra.mxu0 %v1613
      %v2948 = vpop.f32.mrf.mxu0
      %v2949 = vadd.f32 %v2588, %v2948
      %v2950 = vpop.f32.mrf.mxu0
      %v2951 = vpop.f32.mrf.mxu0
      %v2952 = vadd.f32 %v2588, %v2951
      %v2953 = vpop.f32.mrf.mxu0
      %2954 = vmatprep.mubr.bf16.mxu0 %v1731
      %2955 = vmatmul.mubr.bf16.gmra.mxu0 %v1616
      %v2956 = vpop.f32.mrf.mxu0
      %v2957 = vadd.f32 %v2588, %v2956
      %v2958 = vpop.f32.mrf.mxu0
      %v2959 = vpop.f32.mrf.mxu0
      %v2960 = vadd.f32 %v2588, %v2959
      %v2961 = vpop.f32.mrf.mxu0
      %2962 = vmatprep.mubr.bf16.mxu0 %v1734
      %2963 = vmatmul.mubr.bf16.gmra.mxu0 %v1619
      %v2964 = vpop.f32.mrf.mxu0
      %v2965 = vadd.f32 %v2588, %v2964
      %v2966 = vpop.f32.mrf.mxu0
      %v2967 = vpop.f32.mrf.mxu0
      %v2968 = vadd.f32 %v2588, %v2967
      %v2969 = vpop.f32.mrf.mxu0
      %2970 = vmatprep.mubr.bf16.mxu0 %v1737
      %2971 = vmatmul.mubr.bf16.gmra.mxu0 %v1622
      %v2972 = vpop.f32.mrf.mxu0
      %v2973 = vadd.f32 %v2588, %v2972
      %v2974 = vpop.f32.mrf.mxu0
      %v2975 = vpop.f32.mrf.mxu0
      %v2976 = vadd.f32 %v2588, %v2975
      %v2977 = vpop.f32.mrf.mxu0
      %2978 = vmatprep.mubr.bf16.mxu0 %v1740
      %2979 = vmatmul.mubr.bf16.gmra.mxu0 %v1625
      %v2980 = vpop.f32.mrf.mxu0
      %v2981 = vadd.f32 %v2588, %v2980
      %v2982 = vpop.f32.mrf.mxu0
      %v2983 = vpop.f32.mrf.mxu0
      %v2984 = vadd.f32 %v2588, %v2983
      %v2985 = vpop.f32.mrf.mxu0
      %2986 = vmatprep.mubr.bf16.mxu0 %v1743
      %2987 = vmatmul.mubr.bf16.gmra.mxu0 %v1628
      %v2988 = vpop.f32.mrf.mxu0
      %v2989 = vadd.f32 %v2588, %v2988
      %v2990 = vpop.f32.mrf.mxu0
      %v2991 = vpop.f32.mrf.mxu0
      %v2992 = vadd.f32 %v2588, %v2991
      %v2993 = vpop.f32.mrf.mxu0
      %2994 = vmatprep.mubr.bf16.mxu0 %v1746
      %2995 = vmatmul.mubr.bf16.gmra.mxu0 %v1631
      %v2996 = vpop.f32.mrf.mxu0
      %v2997 = vadd.f32 %v2588, %v2996
      %v2998 = vpop.f32.mrf.mxu0
      %v2999 = vpop.f32.mrf.mxu0
      %v3000 = vadd.f32 %v2588, %v2999
      %v3001 = vpop.f32.mrf.mxu0
      %3002 = vmatprep.mubr.bf16.mxu0 %v1749
      %3003 = vmatmul.mubr.bf16.gmra.mxu0 %v1634
      %v3004 = vpop.f32.mrf.mxu0
      %v3005 = vadd.f32 %v2588, %v3004
      %v3006 = vpop.f32.mrf.mxu0
      %v3007 = vpop.f32.mrf.mxu0
      %v3008 = vadd.f32 %v2588, %v3007
      %v3009 = vpop.f32.mrf.mxu0
      %3010 = vmatprep.mubr.bf16.mxu0 %v1752
      %3011 = vmatmul.mubr.bf16.gmra.mxu0 %v1637
      %v3012 = vpop.f32.mrf.mxu0
      %v3013 = vadd.f32 %v2588, %v3012
      %v3014 = vpop.f32.mrf.mxu0
      %v3015 = vpop.f32.mrf.mxu0
      %v3016 = vadd.f32 %v2588, %v3015
      %v3017 = vpop.f32.mrf.mxu0
      %3018 = vmatprep.mubr.bf16.mxu0 %v1755
      %3019 = vmatmul.mubr.bf16.gmra.mxu0 %v1640
      %v3020 = vpop.f32.mrf.mxu0
      %v3021 = vadd.f32 %v2588, %v3020
      %v3022 = vpop.f32.mrf.mxu0
      %v3023 = vpop.f32.mrf.mxu0
      %v3024 = vadd.f32 %v2588, %v3023
      %v3025 = vpop.f32.mrf.mxu0
      %3026 = vmatprep.mubr.bf16.mxu0 %v1758
      %3027 = vmatmul.mubr.bf16.gmra.mxu0 %v1643
      %v3028 = vpop.f32.mrf.mxu0
      %v3029 = vadd.f32 %v2588, %v3028
      %v3030 = vpop.f32.mrf.mxu0
      %v3031 = vpop.f32.mrf.mxu0
      %v3032 = vadd.f32 %v2588, %v3031
      %v3033 = vpop.f32.mrf.mxu0
      %3034 = vmatprep.mubr.bf16.mxu0 %v1761
      %3035 = vmatmul.mubr.bf16.gmra.mxu0 %v1646
      %v3036 = vpop.f32.mrf.mxu0
      %v3037 = vadd.f32 %v2588, %v3036
      %v3038 = vpop.f32.mrf.mxu0
      %v3039 = vpop.f32.mrf.mxu0
      %v3040 = vadd.f32 %v2588, %v3039
      %v3041 = vpop.f32.mrf.mxu0
      %3042 = vmatprep.mubr.bf16.mxu0 %v1764
      %3043 = vmatmul.mubr.bf16.gmra.mxu0 %v1649
      %v3044 = vpop.f32.mrf.mxu0
      %v3045 = vadd.f32 %v2588, %v3044
      %v3046 = vpop.f32.mrf.mxu0
      %v3047 = vpop.f32.mrf.mxu0
      %v3048 = vadd.f32 %v2588, %v3047
      %v3049 = vpop.f32.mrf.mxu0
      %3050 = vdwg.mxu0
      %3051 = vmatprep.subr.bf16.mxu0 0
      %3052 = vmatpush1.bf16.msra.mxu0 %v2781
      %3053 = vmatprep.subr.bf16.mxu0 0
      %3054 = vmatpush1.bf16.msra.mxu0 %v2780
      %3055 = vmatprep.subr.bf16.mxu0 0
      %3056 = vmatpush1.bf16.msra.mxu0 %v2779
      %3057 = vmatprep.subr.bf16.mxu0 0
      %3058 = vmatpush1.bf16.msra.mxu0 %v2778
      %3059 = vmatprep.subr.bf16.mxu0 0
      %3060 = vmatpush1.bf16.msra.mxu0 %v2777
      %3061 = vmatprep.subr.bf16.mxu0 0
      %3062 = vmatpush1.bf16.msra.mxu0 %v2776
      %3063 = vmatprep.subr.bf16.mxu0 0
      %3064 = vmatpush1.bf16.msra.mxu0 %v2775
      %3065 = vmatprep.subr.bf16.mxu0 0
      %3066 = vmatpush1.bf16.msra.mxu0 %v2774
      %3067 = vmatprep.subr.bf16.mxu0 0
      %3068 = vmatpush2.bf16.msra.mxu0 %v2789
      %3069 = vmatprep.subr.bf16.mxu0 0
      %3070 = vmatpush2.bf16.msra.mxu0 %v2788
      %3071 = vmatprep.subr.bf16.mxu0 0
      %3072 = vmatpush2.bf16.msra.mxu0 %v2787
      %3073 = vmatprep.subr.bf16.mxu0 0
      %3074 = vmatpush2.bf16.msra.mxu0 %v2786
      %3075 = vmatprep.subr.bf16.mxu0 0
      %3076 = vmatpush2.bf16.msra.mxu0 %v2785
      %3077 = vmatprep.subr.bf16.mxu0 0
      %3078 = vmatpush2.bf16.msra.mxu0 %v2784
      %3079 = vmatprep.subr.bf16.mxu0 0
      %3080 = vmatpush2.bf16.msra.mxu0 %v2783
      %3081 = vmatprep.subr.bf16.mxu0 0
      %3082 = vmatpush2.bf16.msra.mxu0 %v2782
      %3083 = vmatprep.mubr.bf16.mxu0 %v1964
      %3084 = vmatmul.mubr.bf16.gmra.mxu0 %v1842
      %v3085 = vpop.f32.mrf.mxu0
      %v3086 = vadd.f32 %v2925, %v3085
      %v3087 = vpop.f32.mrf.mxu0
      %v3088 = vpop.f32.mrf.mxu0
      %v3089 = vadd.f32 %v2928, %v3088
      %v3090 = vpop.f32.mrf.mxu0
      %3091 = vmatprep.mubr.bf16.mxu0 %v1967
      %3092 = vmatmul.mubr.bf16.gmra.mxu0 %v1842
      %v3093 = vpop.f32.mrf.mxu0
      %v3094 = vadd.f32 %v2933, %v3093
      %v3095 = vpop.f32.mrf.mxu0
      %v3096 = vpop.f32.mrf.mxu0
      %v3097 = vadd.f32 %v2936, %v3096
      %v3098 = vpop.f32.mrf.mxu0
      %3099 = vmatprep.mubr.bf16.mxu0 %v1970
      %3100 = vmatmul.mubr.bf16.gmra.mxu0 %v1845
      %v3101 = vpop.f32.mrf.mxu0
      %v3102 = vadd.f32 %v2941, %v3101
      %v3103 = vpop.f32.mrf.mxu0
      %v3104 = vpop.f32.mrf.mxu0
      %v3105 = vadd.f32 %v2944, %v3104
      %v3106 = vpop.f32.mrf.mxu0
      %3107 = vmatprep.mubr.bf16.mxu0 %v1973
      %3108 = vmatmul.mubr.bf16.gmra.mxu0 %v1848
      %v3109 = vpop.f32.mrf.mxu0
      %v3110 = vadd.f32 %v2949, %v3109
      %v3111 = vpop.f32.mrf.mxu0
      %v3112 = vpop.f32.mrf.mxu0
      %v3113 = vadd.f32 %v2952, %v3112
      %v3114 = vpop.f32.mrf.mxu0
      %3115 = vmatprep.mubr.bf16.mxu0 %v1976
      %3116 = vmatmul.mubr.bf16.gmra.mxu0 %v1851
      %v3117 = vpop.f32.mrf.mxu0
      %v3118 = vadd.f32 %v2957, %v3117
      %v3119 = vpop.f32.mrf.mxu0
      %v3120 = vpop.f32.mrf.mxu0
      %v3121 = vadd.f32 %v2960, %v3120
      %v3122 = vpop.f32.mrf.mxu0
      %3123 = vmatprep.mubr.bf16.mxu0 %v1979
      %3124 = vmatmul.mubr.bf16.gmra.mxu0 %v1854
      %v3125 = vpop.f32.mrf.mxu0
      %v3126 = vadd.f32 %v2965, %v3125
      %v3127 = vpop.f32.mrf.mxu0
      %v3128 = vpop.f32.mrf.mxu0
      %v3129 = vadd.f32 %v2968, %v3128
      %v3130 = vpop.f32.mrf.mxu0
      %3131 = vmatprep.mubr.bf16.mxu0 %v1982
      %3132 = vmatmul.mubr.bf16.gmra.mxu0 %v1857
      %v3133 = vpop.f32.mrf.mxu0
      %v3134 = vadd.f32 %v2973, %v3133
      %v3135 = vpop.f32.mrf.mxu0
      %v3136 = vpop.f32.mrf.mxu0
      %v3137 = vadd.f32 %v2976, %v3136
      %v3138 = vpop.f32.mrf.mxu0
      %3139 = vmatprep.mubr.bf16.mxu0 %v1985
      %3140 = vmatmul.mubr.bf16.gmra.mxu0 %v1860
      %v3141 = vpop.f32.mrf.mxu0
      %v3142 = vadd.f32 %v2981, %v3141
      %v3143 = vpop.f32.mrf.mxu0
      %v3144 = vpop.f32.mrf.mxu0
      %v3145 = vadd.f32 %v2984, %v3144
      %v3146 = vpop.f32.mrf.mxu0
      %3147 = vmatprep.mubr.bf16.mxu0 %v1988
      %3148 = vmatmul.mubr.bf16.gmra.mxu0 %v1863
      %v3149 = vpop.f32.mrf.mxu0
      %v3150 = vadd.f32 %v2989, %v3149
      %v3151 = vpop.f32.mrf.mxu0
      %v3152 = vpop.f32.mrf.mxu0
      %v3153 = vadd.f32 %v2992, %v3152
      %v3154 = vpop.f32.mrf.mxu0
      %3155 = vmatprep.mubr.bf16.mxu0 %v1991
      %3156 = vmatmul.mubr.bf16.gmra.mxu0 %v1866
      %v3157 = vpop.f32.mrf.mxu0
      %v3158 = vadd.f32 %v2997, %v3157
      %v3159 = vpop.f32.mrf.mxu0
      %v3160 = vpop.f32.mrf.mxu0
      %v3161 = vadd.f32 %v3000, %v3160
      %v3162 = vpop.f32.mrf.mxu0
      %3163 = vmatprep.mubr.bf16.mxu0 %v1994
      %3164 = vmatmul.mubr.bf16.gmra.mxu0 %v1869
      %v3165 = vpop.f32.mrf.mxu0
      %v3166 = vadd.f32 %v3005, %v3165
      %v3167 = vpop.f32.mrf.mxu0
      %v3168 = vpop.f32.mrf.mxu0
      %v3169 = vadd.f32 %v3008, %v3168
      %v3170 = vpop.f32.mrf.mxu0
      %3171 = vmatprep.mubr.bf16.mxu0 %v1997
      %3172 = vmatmul.mubr.bf16.gmra.mxu0 %v1872
      %v3173 = vpop.f32.mrf.mxu0
      %v3174 = vadd.f32 %v3013, %v3173
      %v3175 = vpop.f32.mrf.mxu0
      %v3176 = vpop.f32.mrf.mxu0
      %v3177 = vadd.f32 %v3016, %v3176
      %v3178 = vpop.f32.mrf.mxu0
      %3179 = vmatprep.mubr.bf16.mxu0 %v2000
      %3180 = vmatmul.mubr.bf16.gmra.mxu0 %v1875
      %v3181 = vpop.f32.mrf.mxu0
      %v3182 = vadd.f32 %v3021, %v3181
      %v3183 = vpop.f32.mrf.mxu0
      %v3184 = vpop.f32.mrf.mxu0
      %v3185 = vadd.f32 %v3024, %v3184
      %v3186 = vpop.f32.mrf.mxu0
      %3187 = vmatprep.mubr.bf16.mxu0 %v2003
      %3188 = vmatmul.mubr.bf16.gmra.mxu0 %v1878
      %v3189 = vpop.f32.mrf.mxu0
      %v3190 = vadd.f32 %v3029, %v3189
      %v3191 = vpop.f32.mrf.mxu0
      %v3192 = vpop.f32.mrf.mxu0
      %v3193 = vadd.f32 %v3032, %v3192
      %v3194 = vpop.f32.mrf.mxu0
      %3195 = vmatprep.mubr.bf16.mxu0 %v2006
      %3196 = vmatmul.mubr.bf16.gmra.mxu0 %v1881
      %v3197 = vpop.f32.mrf.mxu0
      %v3198 = vadd.f32 %v3037, %v3197
      %v3199 = vpop.f32.mrf.mxu0
      %v3200 = vpop.f32.mrf.mxu0
      %v3201 = vadd.f32 %v3040, %v3200
      %v3202 = vpop.f32.mrf.mxu0
      %3203 = vmatprep.mubr.bf16.mxu0 %v2009
      %3204 = vmatmul.mubr.bf16.gmra.mxu0 %v1884
      %v3205 = vpop.f32.mrf.mxu0
      %v3206 = vadd.f32 %v3045, %v3205
      %v3207 = vpop.f32.mrf.mxu0
      %v3208 = vpop.f32.mrf.mxu0
      %v3209 = vadd.f32 %v3048, %v3208
      %v3210 = vpop.f32.mrf.mxu0
      %3211 = vdwg.mxu0
      %3212 = vmatprep.subr.bf16.mxu0 0
      %3213 = vmatpush1.bf16.msra.mxu0 %v2797
      %3214 = vmatprep.subr.bf16.mxu0 0
      %3215 = vmatpush1.bf16.msra.mxu0 %v2796
      %3216 = vmatprep.subr.bf16.mxu0 0
      %3217 = vmatpush1.bf16.msra.mxu0 %v2795
      %3218 = vmatprep.subr.bf16.mxu0 0
      %3219 = vmatpush1.bf16.msra.mxu0 %v2794
      %3220 = vmatprep.subr.bf16.mxu0 0
      %3221 = vmatpush1.bf16.msra.mxu0 %v2793
      %3222 = vmatprep.subr.bf16.mxu0 0
      %3223 = vmatpush1.bf16.msra.mxu0 %v2792
      %3224 = vmatprep.subr.bf16.mxu0 0
      %3225 = vmatpush1.bf16.msra.mxu0 %v2791
      %3226 = vmatprep.subr.bf16.mxu0 0
      %3227 = vmatpush1.bf16.msra.mxu0 %v2790
      %3228 = vmatprep.subr.bf16.mxu0 0
      %3229 = vmatpush2.bf16.msra.mxu0 0
      %3230 = vmatprep.subr.bf16.mxu0 0
      %3231 = vmatpush2.bf16.msra.mxu0 0
      %3232 = vmatprep.subr.bf16.mxu0 0
      %3233 = vmatpush2.bf16.msra.mxu0 0
      %3234 = vmatprep.subr.bf16.mxu0 0
      %3235 = vmatpush2.bf16.msra.mxu0 0
      %3236 = vmatprep.subr.bf16.mxu0 0
      %3237 = vmatpush2.bf16.msra.mxu0 0
      %3238 = vmatprep.subr.bf16.mxu0 0
      %3239 = vmatpush2.bf16.msra.mxu0 0
      %3240 = vmatprep.subr.bf16.mxu0 0
      %3241 = vmatpush2.bf16.msra.mxu0 %v2799
      %3242 = vmatprep.subr.bf16.mxu0 0
      %3243 = vmatpush2.bf16.msra.mxu0 %v2798
      %3244 = vmatprep.mubr.bf16.mxu0 %v2843
      %3245 = vmatmul.mubr.bf16.gmra.mxu0 %v2188
      %v3246 = vpop.f32.mrf.mxu0
      %v3247 = vadd.f32 %v3086, %v3246
      %v3248 = vpop.f32.mrf.mxu0
      %v3249 = vpop.f32.mrf.mxu0
      %v3250 = vadd.f32 %v3089, %v3249
      %v3251 = vpop.f32.mrf.mxu0
      %3252 = vmatprep.mubr.bf16.mxu0 %v2846
      %3253 = vmatmul.mubr.bf16.gmra.mxu0 %v2191
      %v3254 = vpop.f32.mrf.mxu0
      %v3255 = vadd.f32 %v3094, %v3254
      %v3256 = vpop.f32.mrf.mxu0
      %v3257 = vpop.f32.mrf.mxu0
      %v3258 = vadd.f32 %v3097, %v3257
      %v3259 = vpop.f32.mrf.mxu0
      %3260 = vmatprep.mubr.bf16.mxu0 %v2849
      %3261 = vmatmul.mubr.bf16.gmra.mxu0 %v2194
      %v3262 = vpop.f32.mrf.mxu0
      %v3263 = vadd.f32 %v3102, %v3262
      %v3264 = vpop.f32.mrf.mxu0
      %v3265 = vpop.f32.mrf.mxu0
      %v3266 = vadd.f32 %v3105, %v3265
      %v3267 = vpop.f32.mrf.mxu0
      %3268 = vmatprep.mubr.bf16.mxu0 %v2852
      %3269 = vmatmul.mubr.bf16.gmra.mxu0 %v2197
      %v3270 = vpop.f32.mrf.mxu0
      %v3271 = vadd.f32 %v3110, %v3270
      %v3272 = vpop.f32.mrf.mxu0
      %v3273 = vpop.f32.mrf.mxu0
      %v3274 = vadd.f32 %v3113, %v3273
      %v3275 = vpop.f32.mrf.mxu0
      %3276 = vmatprep.mubr.bf16.mxu0 %v2855
      %3277 = vmatmul.mubr.bf16.gmra.mxu0 %v2200
      %v3278 = vpop.f32.mrf.mxu0
      %v3279 = vadd.f32 %v3118, %v3278
      %v3280 = vpop.f32.mrf.mxu0
      %v3281 = vpop.f32.mrf.mxu0
      %v3282 = vadd.f32 %v3121, %v3281
      %v3283 = vpop.f32.mrf.mxu0
      %3284 = vmatprep.mubr.bf16.mxu0 %v2858
      %3285 = vmatmul.mubr.bf16.gmra.mxu0 %v2203
      %v3286 = vpop.f32.mrf.mxu0
      %v3287 = vadd.f32 %v3126, %v3286
      %v3288 = vpop.f32.mrf.mxu0
      %v3289 = vpop.f32.mrf.mxu0
      %v3290 = vadd.f32 %v3129, %v3289
      %v3291 = vpop.f32.mrf.mxu0
      %3292 = vmatprep.mubr.bf16.mxu0 %v2861
      %3293 = vmatmul.mubr.bf16.gmra.mxu0 %v2206
      %v3294 = vpop.f32.mrf.mxu0
      %v3295 = vadd.f32 %v3134, %v3294
      %v3296 = vpop.f32.mrf.mxu0
      %v3297 = vpop.f32.mrf.mxu0
      %v3298 = vadd.f32 %v3137, %v3297
      %v3299 = vpop.f32.mrf.mxu0
      %3300 = vmatprep.mubr.bf16.mxu0 %v2864
      %3301 = vmatmul.mubr.bf16.gmra.mxu0 %v2209
      %v3302 = vpop.f32.mrf.mxu0
      %v3303 = vadd.f32 %v3142, %v3302
      %v3304 = vpop.f32.mrf.mxu0
      %v3305 = vpop.f32.mrf.mxu0
      %v3306 = vadd.f32 %v3145, %v3305
      %v3307 = vpop.f32.mrf.mxu0
      %3308 = vmatprep.mubr.bf16.mxu0 %v2867
      %3309 = vmatmul.mubr.bf16.gmra.mxu0 %v2212
      %v3310 = vpop.f32.mrf.mxu0
      %v3311 = vadd.f32 %v3150, %v3310
      %v3312 = vpop.f32.mrf.mxu0
      %v3313 = vpop.f32.mrf.mxu0
      %v3314 = vadd.f32 %v3153, %v3313
      %v3315 = vpop.f32.mrf.mxu0
      %3316 = vmatprep.mubr.bf16.mxu0 %v2870
      %3317 = vmatmul.mubr.bf16.gmra.mxu0 %v2215
      %v3318 = vpop.f32.mrf.mxu0
      %v3319 = vadd.f32 %v3158, %v3318
      %v3320 = vpop.f32.mrf.mxu0
      %v3321 = vpop.f32.mrf.mxu0
      %v3322 = vadd.f32 %v3161, %v3321
      %v3323 = vpop.f32.mrf.mxu0
      %3324 = vmatprep.mubr.bf16.mxu0 %v2873
      %3325 = vmatmul.mubr.bf16.gmra.mxu0 %v2218
      %v3326 = vpop.f32.mrf.mxu0
      %v3327 = vadd.f32 %v3166, %v3326
      %v3328 = vpop.f32.mrf.mxu0
      %v3329 = vpop.f32.mrf.mxu0
      %v3330 = vadd.f32 %v3169, %v3329
      %v3331 = vpop.f32.mrf.mxu0
      %3332 = vmatprep.mubr.bf16.mxu0 %v2876
      %3333 = vmatmul.mubr.bf16.gmra.mxu0 %v2221
      %v3334 = vpop.f32.mrf.mxu0
      %v3335 = vadd.f32 %v3174, %v3334
      %v3336 = vpop.f32.mrf.mxu0
      %v3337 = vpop.f32.mrf.mxu0
      %v3338 = vadd.f32 %v3177, %v3337
      %v3339 = vpop.f32.mrf.mxu0
      %3340 = vmatprep.mubr.bf16.mxu0 %v2879
      %3341 = vmatmul.mubr.bf16.gmra.mxu0 %v2224
      %v3342 = vpop.f32.mrf.mxu0
      %v3343 = vadd.f32 %v3182, %v3342
      %v3344 = vpop.f32.mrf.mxu0
      %v3345 = vpop.f32.mrf.mxu0
      %v3346 = vadd.f32 %v3185, %v3345
      %v3347 = vpop.f32.mrf.mxu0
      %3348 = vmatprep.mubr.bf16.mxu0 %v2882
      %3349 = vmatmul.mubr.bf16.gmra.mxu0 %v2227
      %v3350 = vpop.f32.mrf.mxu0
      %v3351 = vadd.f32 %v3190, %v3350
      %v3352 = vpop.f32.mrf.mxu0
      %v3353 = vpop.f32.mrf.mxu0
      %v3354 = vadd.f32 %v3193, %v3353
      %v3355 = vpop.f32.mrf.mxu0
      %3356 = vmatprep.mubr.bf16.mxu0 %v2885
      %3357 = vmatmul.mubr.bf16.gmra.mxu0 %v2230
      %v3358 = vpop.f32.mrf.mxu0
      %v3359 = vadd.f32 %v3198, %v3358
      %v3360 = vpop.f32.mrf.mxu0
      %v3361 = vpop.f32.mrf.mxu0
      %v3362 = vadd.f32 %v3201, %v3361
      %v3363 = vpop.f32.mrf.mxu0
      %3364 = vmatprep.mubr.bf16.mxu0 %v2888
      %3365 = vmatmul.mubr.bf16.gmra.mxu0 %v2233
      %v3366 = vpop.f32.mrf.mxu0
      %v3367 = vadd.f32 %v3206, %v3366
      %v3368 = vpop.f32.mrf.mxu0
      %v3369 = vpop.f32.mrf.mxu0
      %v3370 = vadd.f32 %v3209, %v3369
      %v3371 = vpop.f32.mrf.mxu0
      %3372 = vdwg.mxu0
      %v3373 = vld [vmem:[%s3] sm:$0xf]
      %v3374 = vld [vmem:[%s3 + $0x4] sm:$0xf]
      %v3375 = vld [vmem:[%s3 + $0x8] sm:$0xf]
      %v3376 = vld [vmem:[%s3 + $0xc] sm:$0xf]
      %v3377 = vld [vmem:[%s3 + $0x10] sm:$0xf]
      %v3378 = vld [vmem:[%s3 + $0x14] sm:$0xf]
      %v3379 = vld [vmem:[%s3 + $0x18] sm:$0xf]
      %v3380 = vld [vmem:[%s3 + $0x1c] sm:$0xf]
      %v3381 = vld [vmem:[%s3 + $0x20] sm:$0xf]
      %v3382 = vld [vmem:[%s3 + $0x24] sm:$0xf]
      %v3383 = vld [vmem:[%s3 + $0x28] sm:$0xf]
      %v3384 = vld [vmem:[%s3 + $0x2c] sm:$0xf]
      %v3385 = vld [vmem:[%s4] sm:$0x1]
      %v3387 = vlaneseq
      %v3388 = vshrl.u32 %v3387, 7
      %v3389 = vsub.s32 0, %v3388
      %v3390 = vrot.slane %v3385, %v3389
      %v3404 = vunpack.c.l.b16 %v3373
      %v3405 = vunpack.c.l.b16 %v3374
      %v3406 = vunpack.c.l.b16 %v3375
      %v3407 = vunpack.c.l.b16 %v3376
      %v3408 = vunpack.c.l.b16 %v3377
      %v3409 = vunpack.c.l.b16 %v3378
      %v3410 = vunpack.c.l.b16 %v3379
      %v3411 = vunpack.c.l.b16 %v3380
      %v3412 = vunpack.c.l.b16 %v3381
      %v3413 = vunpack.c.l.b16 %v3382
      %v3414 = vunpack.c.l.b16 %v3383
      %v3415 = vunpack.c.l.b16 %v3384
      %v3416 = vpack.c.b16 %v3405, %v3404
      %v3417 = vpack.c.b16 %v3407, %v3406
      %v3418 = vpack.c.b16 %v3409, %v3408
      %v3419 = vpack.c.b16 %v3411, %v3410
      %v3420 = vpack.c.b16 %v3413, %v3412
      %v3421 = vpack.c.b16 %v3415, %v3414
      %v3428 = vsel %vm1608, %v2468, 0
      %v3430 = vsel %vm1608, %v2470, 0
      %v3432 = vsel %vm1608, %v2472, 0
      %v3434 = vsel %vm1608, %v2474, 0
      %v3436 = vsel %vm1608, %v2476, 0
      %v3438 = vsel %vm1608, %v2478, 0
      %v3440 = vsel %vm1608, %v2480, 0
      %v3442 = vsel %vm1608, %v2482, 0
      %v3444 = vsel %vm1608, %v2484, 0
      %v3446 = vsel %vm1608, %v2486, 0
      %v3448 = vsel %vm1608, %v2488, 0
      %v3450 = vsel %vm1608, %v2490, 0
      %v3452 = vsel %vm1608, %v2492, 0
      %v3454 = vsel %vm1608, %v2494, 0
      %v3456 = vsel %vm1608, %v2496, 0
      %v3458 = vsel %vm1608, %v2498, 0
      %3460 = vmatprep.subr.bf16.mxu0 0
      %3461 = vmatpush1.bf16.msra.mxu0 0
      %3462 = vmatprep.subr.bf16.mxu0 0
      %3463 = vmatpush1.bf16.msra.mxu0 0
      %3464 = vmatprep.subr.bf16.mxu0 0
      %3465 = vmatpush1.bf16.msra.mxu0 %v3421
      %3466 = vmatprep.subr.bf16.mxu0 0
      %3467 = vmatpush1.bf16.msra.mxu0 %v3420
      %3468 = vmatprep.subr.bf16.mxu0 0
      %3469 = vmatpush1.bf16.msra.mxu0 %v3419
      %3470 = vmatprep.subr.bf16.mxu0 0
      %3471 = vmatpush1.bf16.msra.mxu0 %v3418
      %3472 = vmatprep.subr.bf16.mxu0 0
      %3473 = vmatpush1.bf16.msra.mxu0 %v3417
      %3474 = vmatprep.subr.bf16.mxu0 0
      %3475 = vmatpush1.bf16.msra.mxu0 %v3416
      %3476 = vmatprep.subr.bf16.mxu0 0
      %3477 = vmatpush2.bf16.msra.mxu0 0
      %3478 = vmatprep.subr.bf16.mxu0 0
      %3479 = vmatpush2.bf16.msra.mxu0 0
      %3480 = vmatprep.subr.bf16.mxu0 0
      %3481 = vmatpush2.bf16.msra.mxu0 0
      %3482 = vmatprep.subr.bf16.mxu0 0
      %3483 = vmatpush2.bf16.msra.mxu0 0
      %3484 = vmatprep.subr.bf16.mxu0 0
      %3485 = vmatpush2.bf16.msra.mxu0 0
      %3486 = vmatprep.subr.bf16.mxu0 0
      %3487 = vmatpush2.bf16.msra.mxu0 0
      %3488 = vmatprep.subr.bf16.mxu0 0
      %3489 = vmatpush2.bf16.msra.mxu0 0
      %3490 = vmatprep.subr.bf16.mxu0 0
      %3491 = vmatpush2.bf16.msra.mxu0 0
      %3492 = vmatprep.mubr.bf16.mxu0 0
      %3493 = vmatmul.mubr.bf16.gmra.mxu0 %v3428
      %v3494 = vpop.f32.mrf.mxu0
      %v3495 = vadd.f32 %v3390, %v3494
      %v3496 = vpop.f32.mrf.mxu0
      %v3497 = vpop.f32.mrf.mxu0
      %v3498 = vadd.f32 %v3390, %v3497
      %v3499 = vpop.f32.mrf.mxu0
      %3500 = vmatprep.mubr.bf16.mxu0 0
      %3501 = vmatmul.mubr.bf16.gmra.mxu0 %v3430
      %v3502 = vpop.f32.mrf.mxu0
      %v3503 = vadd.f32 %v3390, %v3502
      %v3504 = vpop.f32.mrf.mxu0
      %v3505 = vpop.f32.mrf.mxu0
      %v3506 = vadd.f32 %v3390, %v3505
      %v3507 = vpop.f32.mrf.mxu0
      %3508 = vmatprep.mubr.bf16.mxu0 0
      %3509 = vmatmul.mubr.bf16.gmra.mxu0 %v3432
      %v3510 = vpop.f32.mrf.mxu0
      %v3511 = vadd.f32 %v3390, %v3510
      %v3512 = vpop.f32.mrf.mxu0
      %v3513 = vpop.f32.mrf.mxu0
      %v3514 = vadd.f32 %v3390, %v3513
      %v3515 = vpop.f32.mrf.mxu0
      %3516 = vmatprep.mubr.bf16.mxu0 0
      %3517 = vmatmul.mubr.bf16.gmra.mxu0 %v3434
      %v3518 = vpop.f32.mrf.mxu0
      %v3519 = vadd.f32 %v3390, %v3518
      %v3520 = vpop.f32.mrf.mxu0
      %v3521 = vpop.f32.mrf.mxu0
      %v3522 = vadd.f32 %v3390, %v3521
      %v3523 = vpop.f32.mrf.mxu0
      %3524 = vmatprep.mubr.bf16.mxu0 0
      %3525 = vmatmul.mubr.bf16.gmra.mxu0 %v3436
      %v3526 = vpop.f32.mrf.mxu0
      %v3527 = vadd.f32 %v3390, %v3526
      %v3528 = vpop.f32.mrf.mxu0
      %v3529 = vpop.f32.mrf.mxu0
      %v3530 = vadd.f32 %v3390, %v3529
      %v3531 = vpop.f32.mrf.mxu0
      %3532 = vmatprep.mubr.bf16.mxu0 0
      %3533 = vmatmul.mubr.bf16.gmra.mxu0 %v3438
      %v3534 = vpop.f32.mrf.mxu0
      %v3535 = vadd.f32 %v3390, %v3534
      %v3536 = vpop.f32.mrf.mxu0
      %v3537 = vpop.f32.mrf.mxu0
      %v3538 = vadd.f32 %v3390, %v3537
      %v3539 = vpop.f32.mrf.mxu0
      %3540 = vmatprep.mubr.bf16.mxu0 0
      %3541 = vmatmul.mubr.bf16.gmra.mxu0 %v3440
      %v3542 = vpop.f32.mrf.mxu0
      %v3543 = vadd.f32 %v3390, %v3542
      %v3544 = vpop.f32.mrf.mxu0
      %v3545 = vpop.f32.mrf.mxu0
      %v3546 = vadd.f32 %v3390, %v3545
      %v3547 = vpop.f32.mrf.mxu0
      %3548 = vmatprep.mubr.bf16.mxu0 0
      %3549 = vmatmul.mubr.bf16.gmra.mxu0 %v3442
      %v3550 = vpop.f32.mrf.mxu0
      %v3551 = vadd.f32 %v3390, %v3550
      %v3552 = vpop.f32.mrf.mxu0
      %v3553 = vpop.f32.mrf.mxu0
      %v3554 = vadd.f32 %v3390, %v3553
      %v3555 = vpop.f32.mrf.mxu0
      %3556 = vmatprep.mubr.bf16.mxu0 0
      %3557 = vmatmul.mubr.bf16.gmra.mxu0 %v3444
      %v3558 = vpop.f32.mrf.mxu0
      %v3559 = vadd.f32 %v3390, %v3558
      %v3560 = vpop.f32.mrf.mxu0
      %v3561 = vpop.f32.mrf.mxu0
      %v3562 = vadd.f32 %v3390, %v3561
      %v3563 = vpop.f32.mrf.mxu0
      %3564 = vmatprep.mubr.bf16.mxu0 0
      %3565 = vmatmul.mubr.bf16.gmra.mxu0 %v3446
      %v3566 = vpop.f32.mrf.mxu0
      %v3567 = vadd.f32 %v3390, %v3566
      %v3568 = vpop.f32.mrf.mxu0
      %v3569 = vpop.f32.mrf.mxu0
      %v3570 = vadd.f32 %v3390, %v3569
      %v3571 = vpop.f32.mrf.mxu0
      %3572 = vmatprep.mubr.bf16.mxu0 0
      %3573 = vmatmul.mubr.bf16.gmra.mxu0 %v3448
      %v3574 = vpop.f32.mrf.mxu0
      %v3575 = vadd.f32 %v3390, %v3574
      %v3576 = vpop.f32.mrf.mxu0
      %v3577 = vpop.f32.mrf.mxu0
      %v3578 = vadd.f32 %v3390, %v3577
      %v3579 = vpop.f32.mrf.mxu0
      %3580 = vmatprep.mubr.bf16.mxu0 0
      %3581 = vmatmul.mubr.bf16.gmra.mxu0 %v3450
      %v3582 = vpop.f32.mrf.mxu0
      %v3583 = vadd.f32 %v3390, %v3582
      %v3584 = vpop.f32.mrf.mxu0
      %v3585 = vpop.f32.mrf.mxu0
      %v3586 = vadd.f32 %v3390, %v3585
      %v3587 = vpop.f32.mrf.mxu0
      %3588 = vmatprep.mubr.bf16.mxu0 0
      %3589 = vmatmul.mubr.bf16.gmra.mxu0 %v3452
      %v3590 = vpop.f32.mrf.mxu0
      %v3591 = vadd.f32 %v3390, %v3590
      %v3592 = vpop.f32.mrf.mxu0
      %v3593 = vpop.f32.mrf.mxu0
      %v3594 = vadd.f32 %v3390, %v3593
      %v3595 = vpop.f32.mrf.mxu0
      %3596 = vmatprep.mubr.bf16.mxu0 0
      %3597 = vmatmul.mubr.bf16.gmra.mxu0 %v3454
      %v3598 = vpop.f32.mrf.mxu0
      %v3599 = vadd.f32 %v3390, %v3598
      %v3600 = vpop.f32.mrf.mxu0
      %v3601 = vpop.f32.mrf.mxu0
      %v3602 = vadd.f32 %v3390, %v3601
      %v3603 = vpop.f32.mrf.mxu0
      %3604 = vmatprep.mubr.bf16.mxu0 0
      %3605 = vmatmul.mubr.bf16.gmra.mxu0 %v3456
      %v3606 = vpop.f32.mrf.mxu0
      %v3607 = vadd.f32 %v3390, %v3606
      %v3608 = vpop.f32.mrf.mxu0
      %v3609 = vpop.f32.mrf.mxu0
      %v3610 = vadd.f32 %v3390, %v3609
      %v3611 = vpop.f32.mrf.mxu0
      %3612 = vmatprep.mubr.bf16.mxu0 0
      %3613 = vmatmul.mubr.bf16.gmra.mxu0 %v3458
      %v3614 = vpop.f32.mrf.mxu0
      %v3615 = vadd.f32 %v3390, %v3614
      %v3616 = vpop.f32.mrf.mxu0
      %v3617 = vpop.f32.mrf.mxu0
      %v3618 = vadd.f32 %v3390, %v3617
      %v3619 = vpop.f32.mrf.mxu0
      %3620 = vdwg.mxu0
      %v3621 = vtanh.pop %v3247
      %v3622 = vtanh.pop %v3250
      %v3623 = vtanh.pop %v3255
      %v3624 = vtanh.pop %v3258
      %v3625 = vtanh.pop %v3263
      %v3626 = vtanh.pop %v3266
      %v3627 = vtanh.pop %v3271
      %v3628 = vtanh.pop %v3274
      %v3629 = vtanh.pop %v3279
      %v3630 = vtanh.pop %v3282
      %v3631 = vtanh.pop %v3287
      %v3632 = vtanh.pop %v3290
      %v3633 = vtanh.pop %v3295
      %v3634 = vtanh.pop %v3298
      %v3635 = vtanh.pop %v3303
      %v3636 = vtanh.pop %v3306
      %v3637 = vtanh.pop %v3311
      %v3638 = vtanh.pop %v3314
      %v3639 = vtanh.pop %v3319
      %v3640 = vtanh.pop %v3322
      %v3641 = vtanh.pop %v3327
      %v3642 = vtanh.pop %v3330
      %v3643 = vtanh.pop %v3335
      %v3644 = vtanh.pop %v3338
      %v3645 = vtanh.pop %v3343
      %v3646 = vtanh.pop %v3346
      %v3647 = vtanh.pop %v3351
      %v3648 = vtanh.pop %v3354
      %v3649 = vtanh.pop %v3359
      %v3650 = vtanh.pop %v3362
      %v3651 = vtanh.pop %v3367
      %v3652 = vtanh.pop %v3370
      %v3653 = vxor.u32 %v3247, 2147483648
      %v3654 = vxor.u32 %v3250, 2147483648
      %v3655 = vxor.u32 %v3255, 2147483648
      %v3656 = vxor.u32 %v3258, 2147483648
      %v3657 = vxor.u32 %v3263, 2147483648
      %v3658 = vxor.u32 %v3266, 2147483648
      %v3659 = vxor.u32 %v3271, 2147483648
      %v3660 = vxor.u32 %v3274, 2147483648
      %v3661 = vxor.u32 %v3279, 2147483648
      %v3662 = vxor.u32 %v3282, 2147483648
      %v3663 = vxor.u32 %v3287, 2147483648
      %v3664 = vxor.u32 %v3290, 2147483648
      %v3665 = vxor.u32 %v3295, 2147483648
      %v3666 = vxor.u32 %v3298, 2147483648
      %v3667 = vxor.u32 %v3303, 2147483648
      %v3668 = vxor.u32 %v3306, 2147483648
      %v3669 = vxor.u32 %v3311, 2147483648
      %v3670 = vxor.u32 %v3314, 2147483648
      %v3671 = vxor.u32 %v3319, 2147483648
      %v3672 = vxor.u32 %v3322, 2147483648
      %v3673 = vxor.u32 %v3327, 2147483648
      %v3674 = vxor.u32 %v3330, 2147483648
      %v3675 = vxor.u32 %v3335, 2147483648
      %v3676 = vxor.u32 %v3338, 2147483648
      %v3677 = vxor.u32 %v3343, 2147483648
      %v3678 = vxor.u32 %v3346, 2147483648
      %v3679 = vxor.u32 %v3351, 2147483648
      %v3680 = vxor.u32 %v3354, 2147483648
      %v3681 = vxor.u32 %v3359, 2147483648
      %v3682 = vxor.u32 %v3362, 2147483648
      %v3683 = vxor.u32 %v3367, 2147483648
      %v3684 = vxor.u32 %v3370, 2147483648
      %v3685 = vmul.f32 %v3653, 1.442695
      %v3686 = vpow.pop %v3685
      %v3687 = vmul.f32 %v3654, 1.442695
      %v3688 = vpow.pop %v3687
      %v3689 = vmul.f32 %v3655, 1.442695
      %v3690 = vpow.pop %v3689
      %v3691 = vmul.f32 %v3656, 1.442695
      %v3692 = vpow.pop %v3691
      %v3693 = vmul.f32 %v3657, 1.442695
      %v3694 = vpow.pop %v3693
      %v3695 = vmul.f32 %v3658, 1.442695
      %v3696 = vpow.pop %v3695
      %v3697 = vmul.f32 %v3659, 1.442695
      %v3698 = vpow.pop %v3697
      %v3699 = vmul.f32 %v3660, 1.442695
      %v3700 = vpow.pop %v3699
      %v3701 = vmul.f32 %v3661, 1.442695
      %v3702 = vpow.pop %v3701
      %v3703 = vmul.f32 %v3662, 1.442695
      %v3704 = vpow.pop %v3703
      %v3705 = vmul.f32 %v3663, 1.442695
      %v3706 = vpow.pop %v3705
      %v3707 = vmul.f32 %v3664, 1.442695
      %v3708 = vpow.pop %v3707
      %v3709 = vmul.f32 %v3665, 1.442695
      %v3710 = vpow.pop %v3709
      %v3711 = vmul.f32 %v3666, 1.442695
      %v3712 = vpow.pop %v3711
      %v3713 = vmul.f32 %v3667, 1.442695
      %v3714 = vpow.pop %v3713
      %v3715 = vmul.f32 %v3668, 1.442695
      %v3716 = vpow.pop %v3715
      %v3717 = vmul.f32 %v3669, 1.442695
      %v3718 = vpow.pop %v3717
      %v3719 = vmul.f32 %v3670, 1.442695
      %v3720 = vpow.pop %v3719
      %v3721 = vmul.f32 %v3671, 1.442695
      %v3722 = vpow.pop %v3721
      %v3723 = vmul.f32 %v3672, 1.442695
      %v3724 = vpow.pop %v3723
      %v3725 = vmul.f32 %v3673, 1.442695
      %v3726 = vpow.pop %v3725
      %v3727 = vmul.f32 %v3674, 1.442695
      %v3728 = vpow.pop %v3727
      %v3729 = vmul.f32 %v3675, 1.442695
      %v3730 = vpow.pop %v3729
      %v3731 = vmul.f32 %v3676, 1.442695
      %v3732 = vpow.pop %v3731
      %v3733 = vmul.f32 %v3677, 1.442695
      %v3734 = vpow.pop %v3733
      %v3735 = vmul.f32 %v3678, 1.442695
      %v3736 = vpow.pop %v3735
      %v3737 = vmul.f32 %v3679, 1.442695
      %v3738 = vpow.pop %v3737
      %v3739 = vmul.f32 %v3680, 1.442695
      %v3740 = vpow.pop %v3739
      %v3741 = vmul.f32 %v3681, 1.442695
      %v3742 = vpow.pop %v3741
      %v3743 = vmul.f32 %v3682, 1.442695
      %v3744 = vpow.pop %v3743
      %v3745 = vmul.f32 %v3683, 1.442695
      %v3746 = vpow.pop %v3745
      %v3747 = vmul.f32 %v3684, 1.442695
      %v3748 = vpow.pop %v3747
      %v3749 = vadd.f32 %v3686, 1.0
      %v3750 = vadd.f32 %v3688, 1.0
      %v3751 = vadd.f32 %v3690, 1.0
      %v3752 = vadd.f32 %v3692, 1.0
      %v3753 = vadd.f32 %v3694, 1.0
      %v3754 = vadd.f32 %v3696, 1.0
      %v3755 = vadd.f32 %v3698, 1.0
      %v3756 = vadd.f32 %v3700, 1.0
      %v3757 = vadd.f32 %v3702, 1.0
      %v3758 = vadd.f32 %v3704, 1.0
      %v3759 = vadd.f32 %v3706, 1.0
      %v3760 = vadd.f32 %v3708, 1.0
      %v3761 = vadd.f32 %v3710, 1.0
      %v3762 = vadd.f32 %v3712, 1.0
      %v3763 = vadd.f32 %v3714, 1.0
      %v3764 = vadd.f32 %v3716, 1.0
      %v3765 = vadd.f32 %v3718, 1.0
      %v3766 = vadd.f32 %v3720, 1.0
      %v3767 = vadd.f32 %v3722, 1.0
      %v3768 = vadd.f32 %v3724, 1.0
      %v3769 = vadd.f32 %v3726, 1.0
      %v3770 = vadd.f32 %v3728, 1.0
      %v3771 = vadd.f32 %v3730, 1.0
      %v3772 = vadd.f32 %v3732, 1.0
      %v3773 = vadd.f32 %v3734, 1.0
      %v3774 = vadd.f32 %v3736, 1.0
      %v3775 = vadd.f32 %v3738, 1.0
      %v3776 = vadd.f32 %v3740, 1.0
      %v3777 = vadd.f32 %v3742, 1.0
      %v3778 = vadd.f32 %v3744, 1.0
      %v3779 = vadd.f32 %v3746, 1.0
      %v3780 = vadd.f32 %v3748, 1.0
      %v3781 = vrcp.pop %v3749
      %v3782 = vmul.f32 1.0, %v3781
      %v3783 = vrcp.pop %v3750
      %v3784 = vmul.f32 1.0, %v3783
      %v3785 = vrcp.pop %v3751
      %v3786 = vmul.f32 1.0, %v3785
      %v3787 = vrcp.pop %v3752
      %v3788 = vmul.f32 1.0, %v3787
      %v3789 = vrcp.pop %v3753
      %v3790 = vmul.f32 1.0, %v3789
      %v3791 = vrcp.pop %v3754
      %v3792 = vmul.f32 1.0, %v3791
      %v3793 = vrcp.pop %v3755
      %v3794 = vmul.f32 1.0, %v3793
      %v3795 = vrcp.pop %v3756
      %v3796 = vmul.f32 1.0, %v3795
      %v3797 = vrcp.pop %v3757
      %v3798 = vmul.f32 1.0, %v3797
      %v3799 = vrcp.pop %v3758
      %v3800 = vmul.f32 1.0, %v3799
      %v3801 = vrcp.pop %v3759
      %v3802 = vmul.f32 1.0, %v3801
      %v3803 = vrcp.pop %v3760
      %v3804 = vmul.f32 1.0, %v3803
      %v3805 = vrcp.pop %v3761
      %v3806 = vmul.f32 1.0, %v3805
      %v3807 = vrcp.pop %v3762
      %v3808 = vmul.f32 1.0, %v3807
      %v3809 = vrcp.pop %v3763
      %v3810 = vmul.f32 1.0, %v3809
      %v3811 = vrcp.pop %v3764
      %v3812 = vmul.f32 1.0, %v3811
      %v3813 = vrcp.pop %v3765
      %v3814 = vmul.f32 1.0, %v3813
      %v3815 = vrcp.pop %v3766
      %v3816 = vmul.f32 1.0, %v3815
      %v3817 = vrcp.pop %v3767
      %v3818 = vmul.f32 1.0, %v3817
      %v3819 = vrcp.pop %v3768
      %v3820 = vmul.f32 1.0, %v3819
      %v3821 = vrcp.pop %v3769
      %v3822 = vmul.f32 1.0, %v3821
      %v3823 = vrcp.pop %v3770
      %v3824 = vmul.f32 1.0, %v3823
      %v3825 = vrcp.pop %v3771
      %v3826 = vmul.f32 1.0, %v3825
      %v3827 = vrcp.pop %v3772
      %v3828 = vmul.f32 1.0, %v3827
      %v3829 = vrcp.pop %v3773
      %v3830 = vmul.f32 1.0, %v3829
      %v3831 = vrcp.pop %v3774
      %v3832 = vmul.f32 1.0, %v3831
      %v3833 = vrcp.pop %v3775
      %v3834 = vmul.f32 1.0, %v3833
      %v3835 = vrcp.pop %v3776
      %v3836 = vmul.f32 1.0, %v3835
      %v3837 = vrcp.pop %v3777
      %v3838 = vmul.f32 1.0, %v3837
      %v3839 = vrcp.pop %v3778
      %v3840 = vmul.f32 1.0, %v3839
      %v3841 = vrcp.pop %v3779
      %v3842 = vmul.f32 1.0, %v3841
      %v3843 = vrcp.pop %v3780
      %v3844 = vmul.f32 1.0, %v3843
      %3877 = vrot.lane.b32.xlu0 %v3782, 96
      %v3878 = vpop.permute.xlu0 %3877
      %3879 = vrot.lane.b32.xlu0 %v3784, 96
      %v3880 = vpop.permute.xlu0 %3879
      %3881 = vrot.lane.b32.xlu0 %v3786, 96
      %v3882 = vpop.permute.xlu0 %3881
      %3883 = vrot.lane.b32.xlu0 %v3788, 96
      %v3884 = vpop.permute.xlu0 %3883
      %3885 = vrot.lane.b32.xlu0 %v3790, 96
      %v3886 = vpop.permute.xlu0 %3885
      %3887 = vrot.lane.b32.xlu0 %v3792, 96
      %v3888 = vpop.permute.xlu0 %3887
      %3889 = vrot.lane.b32.xlu0 %v3794, 96
      %v3890 = vpop.permute.xlu0 %3889
      %3891 = vrot.lane.b32.xlu0 %v3796, 96
      %v3892 = vpop.permute.xlu0 %3891
      %3893 = vrot.lane.b32.xlu0 %v3798, 96
      %v3894 = vpop.permute.xlu0 %3893
      %3895 = vrot.lane.b32.xlu0 %v3800, 96
      %v3896 = vpop.permute.xlu0 %3895
      %3897 = vrot.lane.b32.xlu0 %v3802, 96
      %v3898 = vpop.permute.xlu0 %3897
      %3899 = vrot.lane.b32.xlu0 %v3804, 96
      %v3900 = vpop.permute.xlu0 %3899
      %3901 = vrot.lane.b32.xlu0 %v3806, 96
      %v3902 = vpop.permute.xlu0 %3901
      %3903 = vrot.lane.b32.xlu0 %v3808, 96
      %v3904 = vpop.permute.xlu0 %3903
      %3905 = vrot.lane.b32.xlu0 %v3810, 96
      %v3906 = vpop.permute.xlu0 %3905
      %3907 = vrot.lane.b32.xlu0 %v3812, 96
      %v3908 = vpop.permute.xlu0 %3907
      %3909 = vrot.lane.b32.xlu0 %v3814, 96
      %v3910 = vpop.permute.xlu0 %3909
      %3911 = vrot.lane.b32.xlu0 %v3816, 96
      %v3912 = vpop.permute.xlu0 %3911
      %3913 = vrot.lane.b32.xlu0 %v3818, 96
      %v3914 = vpop.permute.xlu0 %3913
      %3915 = vrot.lane.b32.xlu0 %v3820, 96
      %v3916 = vpop.permute.xlu0 %3915
      %3917 = vrot.lane.b32.xlu0 %v3822, 96
      %v3918 = vpop.permute.xlu0 %3917
      %3919 = vrot.lane.b32.xlu0 %v3824, 96
      %v3920 = vpop.permute.xlu0 %3919
      %3921 = vrot.lane.b32.xlu0 %v3826, 96
      %v3922 = vpop.permute.xlu0 %3921
      %3923 = vrot.lane.b32.xlu0 %v3828, 96
      %v3924 = vpop.permute.xlu0 %3923
      %3925 = vrot.lane.b32.xlu0 %v3830, 96
      %v3926 = vpop.permute.xlu0 %3925
      %3927 = vrot.lane.b32.xlu0 %v3832, 96
      %v3928 = vpop.permute.xlu0 %3927
      %3929 = vrot.lane.b32.xlu0 %v3834, 96
      %v3930 = vpop.permute.xlu0 %3929
      %3931 = vrot.lane.b32.xlu0 %v3836, 96
      %v3932 = vpop.permute.xlu0 %3931
      %3933 = vrot.lane.b32.xlu0 %v3838, 96
      %v3934 = vpop.permute.xlu0 %3933
      %3935 = vrot.lane.b32.xlu0 %v3840, 96
      %v3936 = vpop.permute.xlu0 %3935
      %3937 = vrot.lane.b32.xlu0 %v3842, 96
      %v3938 = vpop.permute.xlu0 %3937
      %3939 = vrot.lane.b32.xlu0 %v3844, 96
      %v3940 = vpop.permute.xlu0 %3939
      %v3973 = vmul.f32 %v3621, %v3878
      %v3974 = vmul.f32 %v3622, %v3880
      %v3975 = vmul.f32 %v3623, %v3882
      %v3976 = vmul.f32 %v3624, %v3884
      %v3977 = vmul.f32 %v3625, %v3886
      %v3978 = vmul.f32 %v3626, %v3888
      %v3979 = vmul.f32 %v3627, %v3890
      %v3980 = vmul.f32 %v3628, %v3892
      %v3981 = vmul.f32 %v3629, %v3894
      %v3982 = vmul.f32 %v3630, %v3896
      %v3983 = vmul.f32 %v3631, %v3898
      %v3984 = vmul.f32 %v3632, %v3900
      %v3985 = vmul.f32 %v3633, %v3902
      %v3986 = vmul.f32 %v3634, %v3904
      %v3987 = vmul.f32 %v3635, %v3906
      %v3988 = vmul.f32 %v3636, %v3908
      %v3989 = vmul.f32 %v3637, %v3910
      %v3990 = vmul.f32 %v3638, %v3912
      %v3991 = vmul.f32 %v3639, %v3914
      %v3992 = vmul.f32 %v3640, %v3916
      %v3993 = vmul.f32 %v3641, %v3918
      %v3994 = vmul.f32 %v3642, %v3920
      %v3995 = vmul.f32 %v3643, %v3922
      %v3996 = vmul.f32 %v3644, %v3924
      %v3997 = vmul.f32 %v3645, %v3926
      %v3998 = vmul.f32 %v3646, %v3928
      %v3999 = vmul.f32 %v3647, %v3930
      %v4000 = vmul.f32 %v3648, %v3932
      %v4001 = vmul.f32 %v3649, %v3934
      %v4002 = vmul.f32 %v3650, %v3936
      %v4003 = vmul.f32 %v3651, %v3938
      %v4004 = vmul.f32 %v3652, %v3940
      %4037 = vrot.lane.b32.xlu0 %v3495, 64
      %v4038 = vpop.permute.xlu0 %4037
      %4039 = vrot.lane.b32.xlu0 %v3498, 64
      %v4040 = vpop.permute.xlu0 %4039
      %4041 = vrot.lane.b32.xlu0 %v3503, 64
      %v4042 = vpop.permute.xlu0 %4041
      %4043 = vrot.lane.b32.xlu0 %v3506, 64
      %v4044 = vpop.permute.xlu0 %4043
      %4045 = vrot.lane.b32.xlu0 %v3511, 64
      %v4046 = vpop.permute.xlu0 %4045
      %4047 = vrot.lane.b32.xlu0 %v3514, 64
      %v4048 = vpop.permute.xlu0 %4047
      %4049 = vrot.lane.b32.xlu0 %v3519, 64
      %v4050 = vpop.permute.xlu0 %4049
      %4051 = vrot.lane.b32.xlu0 %v3522, 64
      %v4052 = vpop.permute.xlu0 %4051
      %4053 = vrot.lane.b32.xlu0 %v3527, 64
      %v4054 = vpop.permute.xlu0 %4053
      %4055 = vrot.lane.b32.xlu0 %v3530, 64
      %v4056 = vpop.permute.xlu0 %4055
      %4057 = vrot.lane.b32.xlu0 %v3535, 64
      %v4058 = vpop.permute.xlu0 %4057
      %4059 = vrot.lane.b32.xlu0 %v3538, 64
      %v4060 = vpop.permute.xlu0 %4059
      %4061 = vrot.lane.b32.xlu0 %v3543, 64
      %v4062 = vpop.permute.xlu0 %4061
      %4063 = vrot.lane.b32.xlu0 %v3546, 64
      %v4064 = vpop.permute.xlu0 %4063
      %4065 = vrot.lane.b32.xlu0 %v3551, 64
      %v4066 = vpop.permute.xlu0 %4065
      %4067 = vrot.lane.b32.xlu0 %v3554, 64
      %v4068 = vpop.permute.xlu0 %4067
      %4069 = vrot.lane.b32.xlu0 %v3559, 64
      %v4070 = vpop.permute.xlu0 %4069
      %4071 = vrot.lane.b32.xlu0 %v3562, 64
      %v4072 = vpop.permute.xlu0 %4071
      %4073 = vrot.lane.b32.xlu0 %v3567, 64
      %v4074 = vpop.permute.xlu0 %4073
      %4075 = vrot.lane.b32.xlu0 %v3570, 64
      %v4076 = vpop.permute.xlu0 %4075
      %4077 = vrot.lane.b32.xlu0 %v3575, 64
      %v4078 = vpop.permute.xlu0 %4077
      %4079 = vrot.lane.b32.xlu0 %v3578, 64
      %v4080 = vpop.permute.xlu0 %4079
      %4081 = vrot.lane.b32.xlu0 %v3583, 64
      %v4082 = vpop.permute.xlu0 %4081
      %4083 = vrot.lane.b32.xlu0 %v3586, 64
      %v4084 = vpop.permute.xlu0 %4083
      %4085 = vrot.lane.b32.xlu0 %v3591, 64
      %v4086 = vpop.permute.xlu0 %4085
      %4087 = vrot.lane.b32.xlu0 %v3594, 64
      %v4088 = vpop.permute.xlu0 %4087
      %4089 = vrot.lane.b32.xlu0 %v3599, 64
      %v4090 = vpop.permute.xlu0 %4089
      %4091 = vrot.lane.b32.xlu0 %v3602, 64
      %v4092 = vpop.permute.xlu0 %4091
      %4093 = vrot.lane.b32.xlu0 %v3607, 64
      %v4094 = vpop.permute.xlu0 %4093
      %4095 = vrot.lane.b32.xlu0 %v3610, 64
      %v4096 = vpop.permute.xlu0 %4095
      %4097 = vrot.lane.b32.xlu0 %v3615, 64
      %v4098 = vpop.permute.xlu0 %4097
      %4099 = vrot.lane.b32.xlu0 %v3618, 64
      %v4100 = vpop.permute.xlu0 %4099
      %v4133 = vadd.f32 %v3247, %v4038
      %v4134 = vadd.f32 %v3250, %v4040
      %v4135 = vadd.f32 %v3255, %v4042
      %v4136 = vadd.f32 %v3258, %v4044
      %v4137 = vadd.f32 %v3263, %v4046
      %v4138 = vadd.f32 %v3266, %v4048
      %v4139 = vadd.f32 %v3271, %v4050
      %v4140 = vadd.f32 %v3274, %v4052
      %v4141 = vadd.f32 %v3279, %v4054
      %v4142 = vadd.f32 %v3282, %v4056
      %v4143 = vadd.f32 %v3287, %v4058
      %v4144 = vadd.f32 %v3290, %v4060
      %v4145 = vadd.f32 %v3295, %v4062
      %v4146 = vadd.f32 %v3298, %v4064
      %v4147 = vadd.f32 %v3303, %v4066
      %v4148 = vadd.f32 %v3306, %v4068
      %v4149 = vadd.f32 %v3311, %v4070
      %v4150 = vadd.f32 %v3314, %v4072
      %v4151 = vadd.f32 %v3319, %v4074
      %v4152 = vadd.f32 %v3322, %v4076
      %v4153 = vadd.f32 %v3327, %v4078
      %v4154 = vadd.f32 %v3330, %v4080
      %v4155 = vadd.f32 %v3335, %v4082
      %v4156 = vadd.f32 %v3338, %v4084
      %v4157 = vadd.f32 %v3343, %v4086
      %v4158 = vadd.f32 %v3346, %v4088
      %v4159 = vadd.f32 %v3351, %v4090
      %v4160 = vadd.f32 %v3354, %v4092
      %v4161 = vadd.f32 %v3359, %v4094
      %v4162 = vadd.f32 %v3362, %v4096
      %v4163 = vadd.f32 %v3367, %v4098
      %v4164 = vadd.f32 %v3370, %v4100
      %v4165 = vtanh.pop %v4133
      %v4166 = vtanh.pop %v4134
      %v4167 = vtanh.pop %v4135
      %v4168 = vtanh.pop %v4136
      %v4169 = vtanh.pop %v4137
      %v4170 = vtanh.pop %v4138
      %v4171 = vtanh.pop %v4139
      %v4172 = vtanh.pop %v4140
      %v4173 = vtanh.pop %v4141
      %v4174 = vtanh.pop %v4142
      %v4175 = vtanh.pop %v4143
      %v4176 = vtanh.pop %v4144
      %v4177 = vtanh.pop %v4145
      %v4178 = vtanh.pop %v4146
      %v4179 = vtanh.pop %v4147
      %v4180 = vtanh.pop %v4148
      %v4181 = vtanh.pop %v4149
      %v4182 = vtanh.pop %v4150
      %v4183 = vtanh.pop %v4151
      %v4184 = vtanh.pop %v4152
      %v4185 = vtanh.pop %v4153
      %v4186 = vtanh.pop %v4154
      %v4187 = vtanh.pop %v4155
      %v4188 = vtanh.pop %v4156
      %v4189 = vtanh.pop %v4157
      %v4190 = vtanh.pop %v4158
      %v4191 = vtanh.pop %v4159
      %v4192 = vtanh.pop %v4160
      %v4193 = vtanh.pop %v4161
      %v4194 = vtanh.pop %v4162
      %v4195 = vtanh.pop %v4163
      %v4196 = vtanh.pop %v4164
      %v4197 = vxor.u32 %v4133, 2147483648
      %v4198 = vxor.u32 %v4134, 2147483648
      %v4199 = vxor.u32 %v4135, 2147483648
      %v4200 = vxor.u32 %v4136, 2147483648
      %v4201 = vxor.u32 %v4137, 2147483648
      %v4202 = vxor.u32 %v4138, 2147483648
      %v4203 = vxor.u32 %v4139, 2147483648
      %v4204 = vxor.u32 %v4140, 2147483648
      %v4205 = vxor.u32 %v4141, 2147483648
      %v4206 = vxor.u32 %v4142, 2147483648
      %v4207 = vxor.u32 %v4143, 2147483648
      %v4208 = vxor.u32 %v4144, 2147483648
      %v4209 = vxor.u32 %v4145, 2147483648
      %v4210 = vxor.u32 %v4146, 2147483648
      %v4211 = vxor.u32 %v4147, 2147483648
      %v4212 = vxor.u32 %v4148, 2147483648
      %v4213 = vxor.u32 %v4149, 2147483648
      %v4214 = vxor.u32 %v4150, 2147483648
      %v4215 = vxor.u32 %v4151, 2147483648
      %v4216 = vxor.u32 %v4152, 2147483648
      %v4217 = vxor.u32 %v4153, 2147483648
      %v4218 = vxor.u32 %v4154, 2147483648
      %v4219 = vxor.u32 %v4155, 2147483648
      %v4220 = vxor.u32 %v4156, 2147483648
      %v4221 = vxor.u32 %v4157, 2147483648
      %v4222 = vxor.u32 %v4158, 2147483648
      %v4223 = vxor.u32 %v4159, 2147483648
      %v4224 = vxor.u32 %v4160, 2147483648
      %v4225 = vxor.u32 %v4161, 2147483648
      %v4226 = vxor.u32 %v4162, 2147483648
      %v4227 = vxor.u32 %v4163, 2147483648
      %v4228 = vxor.u32 %v4164, 2147483648
      %v4229 = vmul.f32 %v4197, 1.442695
      %v4230 = vpow.pop %v4229
      %v4231 = vmul.f32 %v4198, 1.442695
      %v4232 = vpow.pop %v4231
      %v4233 = vmul.f32 %v4199, 1.442695
      %v4234 = vpow.pop %v4233
      %v4235 = vmul.f32 %v4200, 1.442695
      %v4236 = vpow.pop %v4235
      %v4237 = vmul.f32 %v4201, 1.442695
      %v4238 = vpow.pop %v4237
      %v4239 = vmul.f32 %v4202, 1.442695
      %v4240 = vpow.pop %v4239
      %v4241 = vmul.f32 %v4203, 1.442695
      %v4242 = vpow.pop %v4241
      %v4243 = vmul.f32 %v4204, 1.442695
      %v4244 = vpow.pop %v4243
      %v4245 = vmul.f32 %v4205, 1.442695
      %v4246 = vpow.pop %v4245
      %v4247 = vmul.f32 %v4206, 1.442695
      %v4248 = vpow.pop %v4247
      %v4249 = vmul.f32 %v4207, 1.442695
      %v4250 = vpow.pop %v4249
      %v4251 = vmul.f32 %v4208, 1.442695
      %v4252 = vpow.pop %v4251
      %v4253 = vmul.f32 %v4209, 1.442695
      %v4254 = vpow.pop %v4253
      %v4255 = vmul.f32 %v4210, 1.442695
      %v4256 = vpow.pop %v4255
      %v4257 = vmul.f32 %v4211, 1.442695
      %v4258 = vpow.pop %v4257
      %v4259 = vmul.f32 %v4212, 1.442695
      %v4260 = vpow.pop %v4259
      %v4261 = vmul.f32 %v4213, 1.442695
      %v4262 = vpow.pop %v4261
      %v4263 = vmul.f32 %v4214, 1.442695
      %v4264 = vpow.pop %v4263
      %v4265 = vmul.f32 %v4215, 1.442695
      %v4266 = vpow.pop %v4265
      %v4267 = vmul.f32 %v4216, 1.442695
      %v4268 = vpow.pop %v4267
      %v4269 = vmul.f32 %v4217, 1.442695
      %v4270 = vpow.pop %v4269
      %v4271 = vmul.f32 %v4218, 1.442695
      %v4272 = vpow.pop %v4271
      %v4273 = vmul.f32 %v4219, 1.442695
      %v4274 = vpow.pop %v4273
      %v4275 = vmul.f32 %v4220, 1.442695
      %v4276 = vpow.pop %v4275
      %v4277 = vmul.f32 %v4221, 1.442695
      %v4278 = vpow.pop %v4277
      %v4279 = vmul.f32 %v4222, 1.442695
      %v4280 = vpow.pop %v4279
      %v4281 = vmul.f32 %v4223, 1.442695
      %v4282 = vpow.pop %v4281
      %v4283 = vmul.f32 %v4224, 1.442695
      %v4284 = vpow.pop %v4283
      %v4285 = vmul.f32 %v4225, 1.442695
      %v4286 = vpow.pop %v4285
      %v4287 = vmul.f32 %v4226, 1.442695
      %v4288 = vpow.pop %v4287
      %v4289 = vmul.f32 %v4227, 1.442695
      %v4290 = vpow.pop %v4289
      %v4291 = vmul.f32 %v4228, 1.442695
      %v4292 = vpow.pop %v4291
      %v4293 = vadd.f32 %v4230, 1.0
      %v4294 = vadd.f32 %v4232, 1.0
      %v4295 = vadd.f32 %v4234, 1.0
      %v4296 = vadd.f32 %v4236, 1.0
      %v4297 = vadd.f32 %v4238, 1.0
      %v4298 = vadd.f32 %v4240, 1.0
      %v4299 = vadd.f32 %v4242, 1.0
      %v4300 = vadd.f32 %v4244, 1.0
      %v4301 = vadd.f32 %v4246, 1.0
      %v4302 = vadd.f32 %v4248, 1.0
      %v4303 = vadd.f32 %v4250, 1.0
      %v4304 = vadd.f32 %v4252, 1.0
      %v4305 = vadd.f32 %v4254, 1.0
      %v4306 = vadd.f32 %v4256, 1.0
      %v4307 = vadd.f32 %v4258, 1.0
      %v4308 = vadd.f32 %v4260, 1.0
      %v4309 = vadd.f32 %v4262, 1.0
      %v4310 = vadd.f32 %v4264, 1.0
      %v4311 = vadd.f32 %v4266, 1.0
      %v4312 = vadd.f32 %v4268, 1.0
      %v4313 = vadd.f32 %v4270, 1.0
      %v4314 = vadd.f32 %v4272, 1.0
      %v4315 = vadd.f32 %v4274, 1.0
      %v4316 = vadd.f32 %v4276, 1.0
      %v4317 = vadd.f32 %v4278, 1.0
      %v4318 = vadd.f32 %v4280, 1.0
      %v4319 = vadd.f32 %v4282, 1.0
      %v4320 = vadd.f32 %v4284, 1.0
      %v4321 = vadd.f32 %v4286, 1.0
      %v4322 = vadd.f32 %v4288, 1.0
      %v4323 = vadd.f32 %v4290, 1.0
      %v4324 = vadd.f32 %v4292, 1.0
      %v4325 = vrcp.pop %v4293
      %v4326 = vmul.f32 1.0, %v4325
      %v4327 = vrcp.pop %v4294
      %v4328 = vmul.f32 1.0, %v4327
      %v4329 = vrcp.pop %v4295
      %v4330 = vmul.f32 1.0, %v4329
      %v4331 = vrcp.pop %v4296
      %v4332 = vmul.f32 1.0, %v4331
      %v4333 = vrcp.pop %v4297
      %v4334 = vmul.f32 1.0, %v4333
      %v4335 = vrcp.pop %v4298
      %v4336 = vmul.f32 1.0, %v4335
      %v4337 = vrcp.pop %v4299
      %v4338 = vmul.f32 1.0, %v4337
      %v4339 = vrcp.pop %v4300
      %v4340 = vmul.f32 1.0, %v4339
      %v4341 = vrcp.pop %v4301
      %v4342 = vmul.f32 1.0, %v4341
      %v4343 = vrcp.pop %v4302
      %v4344 = vmul.f32 1.0, %v4343
      %v4345 = vrcp.pop %v4303
      %v4346 = vmul.f32 1.0, %v4345
      %v4347 = vrcp.pop %v4304
      %v4348 = vmul.f32 1.0, %v4347
      %v4349 = vrcp.pop %v4305
      %v4350 = vmul.f32 1.0, %v4349
      %v4351 = vrcp.pop %v4306
      %v4352 = vmul.f32 1.0, %v4351
      %v4353 = vrcp.pop %v4307
      %v4354 = vmul.f32 1.0, %v4353
      %v4355 = vrcp.pop %v4308
      %v4356 = vmul.f32 1.0, %v4355
      %v4357 = vrcp.pop %v4309
      %v4358 = vmul.f32 1.0, %v4357
      %v4359 = vrcp.pop %v4310
      %v4360 = vmul.f32 1.0, %v4359
      %v4361 = vrcp.pop %v4311
      %v4362 = vmul.f32 1.0, %v4361
      %v4363 = vrcp.pop %v4312
      %v4364 = vmul.f32 1.0, %v4363
      %v4365 = vrcp.pop %v4313
      %v4366 = vmul.f32 1.0, %v4365
      %v4367 = vrcp.pop %v4314
      %v4368 = vmul.f32 1.0, %v4367
      %v4369 = vrcp.pop %v4315
      %v4370 = vmul.f32 1.0, %v4369
      %v4371 = vrcp.pop %v4316
      %v4372 = vmul.f32 1.0, %v4371
      %v4373 = vrcp.pop %v4317
      %v4374 = vmul.f32 1.0, %v4373
      %v4375 = vrcp.pop %v4318
      %v4376 = vmul.f32 1.0, %v4375
      %v4377 = vrcp.pop %v4319
      %v4378 = vmul.f32 1.0, %v4377
      %v4379 = vrcp.pop %v4320
      %v4380 = vmul.f32 1.0, %v4379
      %v4381 = vrcp.pop %v4321
      %v4382 = vmul.f32 1.0, %v4381
      %v4383 = vrcp.pop %v4322
      %v4384 = vmul.f32 1.0, %v4383
      %v4385 = vrcp.pop %v4323
      %v4386 = vmul.f32 1.0, %v4385
      %v4387 = vrcp.pop %v4324
      %v4388 = vmul.f32 1.0, %v4387
      %4421 = vrot.lane.b32.xlu0 %v4326, 96
      %v4422 = vpop.permute.xlu0 %4421
      %4423 = vrot.lane.b32.xlu0 %v4328, 96
      %v4424 = vpop.permute.xlu0 %4423
      %4425 = vrot.lane.b32.xlu0 %v4330, 96
      %v4426 = vpop.permute.xlu0 %4425
      %4427 = vrot.lane.b32.xlu0 %v4332, 96
      %v4428 = vpop.permute.xlu0 %4427
      %4429 = vrot.lane.b32.xlu0 %v4334, 96
      %v4430 = vpop.permute.xlu0 %4429
      %4431 = vrot.lane.b32.xlu0 %v4336, 96
      %v4432 = vpop.permute.xlu0 %4431
      %4433 = vrot.lane.b32.xlu0 %v4338, 96
      %v4434 = vpop.permute.xlu0 %4433
      %4435 = vrot.lane.b32.xlu0 %v4340, 96
      %v4436 = vpop.permute.xlu0 %4435
      %4437 = vrot.lane.b32.xlu0 %v4342, 96
      %v4438 = vpop.permute.xlu0 %4437
      %4439 = vrot.lane.b32.xlu0 %v4344, 96
      %v4440 = vpop.permute.xlu0 %4439
      %4441 = vrot.lane.b32.xlu0 %v4346, 96
      %v4442 = vpop.permute.xlu0 %4441
      %4443 = vrot.lane.b32.xlu0 %v4348, 96
      %v4444 = vpop.permute.xlu0 %4443
      %4445 = vrot.lane.b32.xlu0 %v4350, 96
      %v4446 = vpop.permute.xlu0 %4445
      %4447 = vrot.lane.b32.xlu0 %v4352, 96
      %v4448 = vpop.permute.xlu0 %4447
      %4449 = vrot.lane.b32.xlu0 %v4354, 96
      %v4450 = vpop.permute.xlu0 %4449
      %4451 = vrot.lane.b32.xlu0 %v4356, 96
      %v4452 = vpop.permute.xlu0 %4451
      %4453 = vrot.lane.b32.xlu0 %v4358, 96
      %v4454 = vpop.permute.xlu0 %4453
      %4455 = vrot.lane.b32.xlu0 %v4360, 96
      %v4456 = vpop.permute.xlu0 %4455
      %4457 = vrot.lane.b32.xlu0 %v4362, 96
      %v4458 = vpop.permute.xlu0 %4457
      %4459 = vrot.lane.b32.xlu0 %v4364, 96
      %v4460 = vpop.permute.xlu0 %4459
      %4461 = vrot.lane.b32.xlu0 %v4366, 96
      %v4462 = vpop.permute.xlu0 %4461
      %4463 = vrot.lane.b32.xlu0 %v4368, 96
      %v4464 = vpop.permute.xlu0 %4463
      %4465 = vrot.lane.b32.xlu0 %v4370, 96
      %v4466 = vpop.permute.xlu0 %4465
      %4467 = vrot.lane.b32.xlu0 %v4372, 96
      %v4468 = vpop.permute.xlu0 %4467
      %4469 = vrot.lane.b32.xlu0 %v4374, 96
      %v4470 = vpop.permute.xlu0 %4469
      %4471 = vrot.lane.b32.xlu0 %v4376, 96
      %v4472 = vpop.permute.xlu0 %4471
      %4473 = vrot.lane.b32.xlu0 %v4378, 96
      %v4474 = vpop.permute.xlu0 %4473
      %4475 = vrot.lane.b32.xlu0 %v4380, 96
      %v4476 = vpop.permute.xlu0 %4475
      %4477 = vrot.lane.b32.xlu0 %v4382, 96
      %v4478 = vpop.permute.xlu0 %4477
      %4479 = vrot.lane.b32.xlu0 %v4384, 96
      %v4480 = vpop.permute.xlu0 %4479
      %4481 = vrot.lane.b32.xlu0 %v4386, 96
      %v4482 = vpop.permute.xlu0 %4481
      %4483 = vrot.lane.b32.xlu0 %v4388, 96
      %v4484 = vpop.permute.xlu0 %4483
      %v4517 = vmul.f32 %v4165, %v4422
      %v4518 = vmul.f32 %v4166, %v4424
      %v4519 = vmul.f32 %v4167, %v4426
      %v4520 = vmul.f32 %v4168, %v4428
      %v4521 = vmul.f32 %v4169, %v4430
      %v4522 = vmul.f32 %v4170, %v4432
      %v4523 = vmul.f32 %v4171, %v4434
      %v4524 = vmul.f32 %v4172, %v4436
      %v4525 = vmul.f32 %v4173, %v4438
      %v4526 = vmul.f32 %v4174, %v4440
      %v4527 = vmul.f32 %v4175, %v4442
      %v4528 = vmul.f32 %v4176, %v4444
      %v4529 = vmul.f32 %v4177, %v4446
      %v4530 = vmul.f32 %v4178, %v4448
      %v4531 = vmul.f32 %v4179, %v4450
      %v4532 = vmul.f32 %v4180, %v4452
      %v4533 = vmul.f32 %v4181, %v4454
      %v4534 = vmul.f32 %v4182, %v4456
      %v4535 = vmul.f32 %v4183, %v4458
      %v4536 = vmul.f32 %v4184, %v4460
      %v4537 = vmul.f32 %v4185, %v4462
      %v4538 = vmul.f32 %v4186, %v4464
      %v4539 = vmul.f32 %v4187, %v4466
      %v4540 = vmul.f32 %v4188, %v4468
      %v4541 = vmul.f32 %v4189, %v4470
      %v4542 = vmul.f32 %v4190, %v4472
      %v4543 = vmul.f32 %v4191, %v4474
      %v4544 = vmul.f32 %v4192, %v4476
      %v4545 = vmul.f32 %v4193, %v4478
      %v4546 = vmul.f32 %v4194, %v4480
      %v4547 = vmul.f32 %v4195, %v4482
      %v4548 = vmul.f32 %v4196, %v4484
      %v4549 = vpack.c.bf16 %v4518, %v4517
      %v4550 = vpack.c.bf16 %v4520, %v4519
      %v4551 = vpack.c.bf16 %v4522, %v4521
      %v4552 = vpack.c.bf16 %v4524, %v4523
      %v4553 = vpack.c.bf16 %v4526, %v4525
      %v4554 = vpack.c.bf16 %v4528, %v4527
      %v4555 = vpack.c.bf16 %v4530, %v4529
      %v4556 = vpack.c.bf16 %v4532, %v4531
      %v4557 = vpack.c.bf16 %v4534, %v4533
      %v4558 = vpack.c.bf16 %v4536, %v4535
      %v4559 = vpack.c.bf16 %v4538, %v4537
      %v4560 = vpack.c.bf16 %v4540, %v4539
      %v4561 = vpack.c.bf16 %v4542, %v4541
      %v4562 = vpack.c.bf16 %v4544, %v4543
      %v4563 = vpack.c.bf16 %v4546, %v4545
      %v4564 = vpack.c.bf16 %v4548, %v4547
      %v4565 = vld [vmem:[%s5] sm:$0xf]
      %v4566 = vld [vmem:[%s5 + $0x4] sm:$0xf]
      %v4567 = vld [vmem:[%s5 + $0x8] sm:$0xf]
      %v4568 = vld [vmem:[%s5 + $0xc] sm:$0xf]
      %v4569 = vld [vmem:[%s6] sm:$0x1]
      %v4571 = vlaneseq
      %v4572 = vshrl.u32 %v4571, 7
      %v4573 = vsub.s32 0, %v4572
      %v4574 = vrot.slane %v4569, %v4573
      %4592 = vrot.lane.b32.xlu0 %v4549, 64
      %v4593 = vpop.permute.xlu0 %4592
      %4594 = vrot.lane.b32.xlu0 %v4550, 64
      %v4595 = vpop.permute.xlu0 %4594
      %4596 = vrot.lane.b32.xlu0 %v4551, 64
      %v4597 = vpop.permute.xlu0 %4596
      %4598 = vrot.lane.b32.xlu0 %v4552, 64
      %v4599 = vpop.permute.xlu0 %4598
      %4600 = vrot.lane.b32.xlu0 %v4553, 64
      %v4601 = vpop.permute.xlu0 %4600
      %4602 = vrot.lane.b32.xlu0 %v4554, 64
      %v4603 = vpop.permute.xlu0 %4602
      %4604 = vrot.lane.b32.xlu0 %v4555, 64
      %v4605 = vpop.permute.xlu0 %4604
      %4606 = vrot.lane.b32.xlu0 %v4556, 64
      %v4607 = vpop.permute.xlu0 %4606
      %4608 = vrot.lane.b32.xlu0 %v4557, 64
      %v4609 = vpop.permute.xlu0 %4608
      %4610 = vrot.lane.b32.xlu0 %v4558, 64
      %v4611 = vpop.permute.xlu0 %4610
      %4612 = vrot.lane.b32.xlu0 %v4559, 64
      %v4613 = vpop.permute.xlu0 %4612
      %4614 = vrot.lane.b32.xlu0 %v4560, 64
      %v4615 = vpop.permute.xlu0 %4614
      %4616 = vrot.lane.b32.xlu0 %v4561, 64
      %v4617 = vpop.permute.xlu0 %4616
      %4618 = vrot.lane.b32.xlu0 %v4562, 64
      %v4619 = vpop.permute.xlu0 %4618
      %4620 = vrot.lane.b32.xlu0 %v4563, 64
      %v4621 = vpop.permute.xlu0 %4620
      %4622 = vrot.lane.b32.xlu0 %v4564, 64
      %v4623 = vpop.permute.xlu0 %4622
      %v4628 = vunpack.c.l.b16 %v4565
      %v4629 = vunpack.c.l.b16 %v4566
      %v4630 = vunpack.c.l.b16 %v4567
      %v4631 = vunpack.c.l.b16 %v4568
      %v4632 = vpack.c.b16 %v4629, %v4628
      %v4633 = vpack.c.b16 %v4631, %v4630
      %v4637 = vsel %vm1550, %v4593, 0
      %v4640 = vsel %vm1550, %v4595, 0
      %v4643 = vsel %vm1550, %v4597, 0
      %v4646 = vsel %vm1550, %v4599, 0
      %v4649 = vsel %vm1550, %v4601, 0
      %v4652 = vsel %vm1550, %v4603, 0
      %v4655 = vsel %vm1550, %v4605, 0
      %v4658 = vsel %vm1550, %v4607, 0
      %v4661 = vsel %vm1550, %v4609, 0
      %v4664 = vsel %vm1550, %v4611, 0
      %v4667 = vsel %vm1550, %v4613, 0
      %v4670 = vsel %vm1550, %v4615, 0
      %v4673 = vsel %vm1550, %v4617, 0
      %v4676 = vsel %vm1550, %v4619, 0
      %v4679 = vsel %vm1550, %v4621, 0
      %v4682 = vsel %vm1550, %v4623, 0
      %4684 = vmatprep.subr.bf16.mxu0 0
      %4685 = vmatpush1.bf16.msra.mxu0 0
      %4686 = vmatprep.subr.bf16.mxu0 0
      %4687 = vmatpush1.bf16.msra.mxu0 0
      %4688 = vmatprep.subr.bf16.mxu0 0
      %4689 = vmatpush1.bf16.msra.mxu0 0
      %4690 = vmatprep.subr.bf16.mxu0 0
      %4691 = vmatpush1.bf16.msra.mxu0 0
      %4692 = vmatprep.subr.bf16.mxu0 0
      %4693 = vmatpush1.bf16.msra.mxu0 0
      %4694 = vmatprep.subr.bf16.mxu0 0
      %4695 = vmatpush1.bf16.msra.mxu0 0
      %4696 = vmatprep.subr.bf16.mxu0 0
      %4697 = vmatpush1.bf16.msra.mxu0 %v4633
      %4698 = vmatprep.subr.bf16.mxu0 0
      %4699 = vmatpush1.bf16.msra.mxu0 %v4632
      %4700 = vmatprep.subr.bf16.mxu0 0
      %4701 = vmatpush2.bf16.msra.mxu0 0
      %4702 = vmatprep.subr.bf16.mxu0 0
      %4703 = vmatpush2.bf16.msra.mxu0 0
      %4704 = vmatprep.subr.bf16.mxu0 0
      %4705 = vmatpush2.bf16.msra.mxu0 0
      %4706 = vmatprep.subr.bf16.mxu0 0
      %4707 = vmatpush2.bf16.msra.mxu0 0
      %4708 = vmatprep.subr.bf16.mxu0 0
      %4709 = vmatpush2.bf16.msra.mxu0 0
      %4710 = vmatprep.subr.bf16.mxu0 0
      %4711 = vmatpush2.bf16.msra.mxu0 0
      %4712 = vmatprep.subr.bf16.mxu0 0
      %4713 = vmatpush2.bf16.msra.mxu0 0
      %4714 = vmatprep.subr.bf16.mxu0 0
      %4715 = vmatpush2.bf16.msra.mxu0 0
      %4716 = vmatprep.mubr.bf16.mxu0 0
      %4717 = vmatmul.mubr.bf16.gmra.mxu0 %v4637
      %v4718 = vpop.f32.mrf.mxu0
      %v4719 = vadd.f32 %v4574, %v4718
      %v4720 = vpop.f32.mrf.mxu0
      %v4721 = vpop.f32.mrf.mxu0
      %v4722 = vadd.f32 %v4574, %v4721
      %v4723 = vpop.f32.mrf.mxu0
      %4724 = vmatprep.mubr.bf16.mxu0 0
      %4725 = vmatmul.mubr.bf16.gmra.mxu0 %v4640
      %v4726 = vpop.f32.mrf.mxu0
      %v4727 = vadd.f32 %v4574, %v4726
      %v4728 = vpop.f32.mrf.mxu0
      %v4729 = vpop.f32.mrf.mxu0
      %v4730 = vadd.f32 %v4574, %v4729
      %v4731 = vpop.f32.mrf.mxu0
      %4732 = vmatprep.mubr.bf16.mxu0 0
      %4733 = vmatmul.mubr.bf16.gmra.mxu0 %v4643
      %v4734 = vpop.f32.mrf.mxu0
      %v4735 = vadd.f32 %v4574, %v4734
      %v4736 = vpop.f32.mrf.mxu0
      %v4737 = vpop.f32.mrf.mxu0
      %v4738 = vadd.f32 %v4574, %v4737
      %v4739 = vpop.f32.mrf.mxu0
      %4740 = vmatprep.mubr.bf16.mxu0 0
      %4741 = vmatmul.mubr.bf16.gmra.mxu0 %v4646
      %v4742 = vpop.f32.mrf.mxu0
      %v4743 = vadd.f32 %v4574, %v4742
      %v4744 = vpop.f32.mrf.mxu0
      %v4745 = vpop.f32.mrf.mxu0
      %v4746 = vadd.f32 %v4574, %v4745
      %v4747 = vpop.f32.mrf.mxu0
      %4748 = vmatprep.mubr.bf16.mxu0 0
      %4749 = vmatmul.mubr.bf16.gmra.mxu0 %v4649
      %v4750 = vpop.f32.mrf.mxu0
      %v4751 = vadd.f32 %v4574, %v4750
      %v4752 = vpop.f32.mrf.mxu0
      %v4753 = vpop.f32.mrf.mxu0
      %v4754 = vadd.f32 %v4574, %v4753
      %v4755 = vpop.f32.mrf.mxu0
      %4756 = vmatprep.mubr.bf16.mxu0 0
      %4757 = vmatmul.mubr.bf16.gmra.mxu0 %v4652
      %v4758 = vpop.f32.mrf.mxu0
      %v4759 = vadd.f32 %v4574, %v4758
      %v4760 = vpop.f32.mrf.mxu0
      %v4761 = vpop.f32.mrf.mxu0
      %v4762 = vadd.f32 %v4574, %v4761
      %v4763 = vpop.f32.mrf.mxu0
      %4764 = vmatprep.mubr.bf16.mxu0 0
      %4765 = vmatmul.mubr.bf16.gmra.mxu0 %v4655
      %v4766 = vpop.f32.mrf.mxu0
      %v4767 = vadd.f32 %v4574, %v4766
      %v4768 = vpop.f32.mrf.mxu0
      %v4769 = vpop.f32.mrf.mxu0
      %v4770 = vadd.f32 %v4574, %v4769
      %v4771 = vpop.f32.mrf.mxu0
      %4772 = vmatprep.mubr.bf16.mxu0 0
      %4773 = vmatmul.mubr.bf16.gmra.mxu0 %v4658
      %v4774 = vpop.f32.mrf.mxu0
      %v4775 = vadd.f32 %v4574, %v4774
      %v4776 = vpop.f32.mrf.mxu0
      %v4777 = vpop.f32.mrf.mxu0
      %v4778 = vadd.f32 %v4574, %v4777
      %v4779 = vpop.f32.mrf.mxu0
      %4780 = vmatprep.mubr.bf16.mxu0 0
      %4781 = vmatmul.mubr.bf16.gmra.mxu0 %v4661
      %v4782 = vpop.f32.mrf.mxu0
      %v4783 = vadd.f32 %v4574, %v4782
      %v4784 = vpop.f32.mrf.mxu0
      %v4785 = vpop.f32.mrf.mxu0
      %v4786 = vadd.f32 %v4574, %v4785
      %v4787 = vpop.f32.mrf.mxu0
      %4788 = vmatprep.mubr.bf16.mxu0 0
      %4789 = vmatmul.mubr.bf16.gmra.mxu0 %v4664
      %v4790 = vpop.f32.mrf.mxu0
      %v4791 = vadd.f32 %v4574, %v4790
      %v4792 = vpop.f32.mrf.mxu0
      %v4793 = vpop.f32.mrf.mxu0
      %v4794 = vadd.f32 %v4574, %v4793
      %v4795 = vpop.f32.mrf.mxu0
      %4796 = vmatprep.mubr.bf16.mxu0 0
      %4797 = vmatmul.mubr.bf16.gmra.mxu0 %v4667
      %v4798 = vpop.f32.mrf.mxu0
      %v4799 = vadd.f32 %v4574, %v4798
      %v4800 = vpop.f32.mrf.mxu0
      %v4801 = vpop.f32.mrf.mxu0
      %v4802 = vadd.f32 %v4574, %v4801
      %v4803 = vpop.f32.mrf.mxu0
      %4804 = vmatprep.mubr.bf16.mxu0 0
      %4805 = vmatmul.mubr.bf16.gmra.mxu0 %v4670
      %v4806 = vpop.f32.mrf.mxu0
      %v4807 = vadd.f32 %v4574, %v4806
      %v4808 = vpop.f32.mrf.mxu0
      %v4809 = vpop.f32.mrf.mxu0
      %v4810 = vadd.f32 %v4574, %v4809
      %v4811 = vpop.f32.mrf.mxu0
      %4812 = vmatprep.mubr.bf16.mxu0 0
      %4813 = vmatmul.mubr.bf16.gmra.mxu0 %v4673
      %v4814 = vpop.f32.mrf.mxu0
      %v4815 = vadd.f32 %v4574, %v4814
      %v4816 = vpop.f32.mrf.mxu0
      %v4817 = vpop.f32.mrf.mxu0
      %v4818 = vadd.f32 %v4574, %v4817
      %v4819 = vpop.f32.mrf.mxu0
      %4820 = vmatprep.mubr.bf16.mxu0 0
      %4821 = vmatmul.mubr.bf16.gmra.mxu0 %v4676
      %v4822 = vpop.f32.mrf.mxu0
      %v4823 = vadd.f32 %v4574, %v4822
      %v4824 = vpop.f32.mrf.mxu0
      %v4825 = vpop.f32.mrf.mxu0
      %v4826 = vadd.f32 %v4574, %v4825
      %v4827 = vpop.f32.mrf.mxu0
      %4828 = vmatprep.mubr.bf16.mxu0 0
      %4829 = vmatmul.mubr.bf16.gmra.mxu0 %v4679
      %v4830 = vpop.f32.mrf.mxu0
      %v4831 = vadd.f32 %v4574, %v4830
      %v4832 = vpop.f32.mrf.mxu0
      %v4833 = vpop.f32.mrf.mxu0
      %v4834 = vadd.f32 %v4574, %v4833
      %v4835 = vpop.f32.mrf.mxu0
      %4836 = vmatprep.mubr.bf16.mxu0 0
      %4837 = vmatmul.mubr.bf16.gmra.mxu0 %v4682
      %v4838 = vpop.f32.mrf.mxu0
      %v4839 = vadd.f32 %v4574, %v4838
      %v4840 = vpop.f32.mrf.mxu0
      %v4841 = vpop.f32.mrf.mxu0
      %v4842 = vadd.f32 %v4574, %v4841
      %v4843 = vpop.f32.mrf.mxu0
      %4844 = vdwg.mxu0
      %4877 = vrot.lane.b32.xlu0 %v4719, 32
      %v4878 = vpop.permute.xlu0 %4877
      %4879 = vrot.lane.b32.xlu0 %v4722, 32
      %v4880 = vpop.permute.xlu0 %4879
      %4881 = vrot.lane.b32.xlu0 %v4727, 32
      %v4882 = vpop.permute.xlu0 %4881
      %4883 = vrot.lane.b32.xlu0 %v4730, 32
      %v4884 = vpop.permute.xlu0 %4883
      %4885 = vrot.lane.b32.xlu0 %v4735, 32
      %v4886 = vpop.permute.xlu0 %4885
      %4887 = vrot.lane.b32.xlu0 %v4738, 32
      %v4888 = vpop.permute.xlu0 %4887
      %4889 = vrot.lane.b32.xlu0 %v4743, 32
      %v4890 = vpop.permute.xlu0 %4889
      %4891 = vrot.lane.b32.xlu0 %v4746, 32
      %v4892 = vpop.permute.xlu0 %4891
      %4893 = vrot.lane.b32.xlu0 %v4751, 32
      %v4894 = vpop.permute.xlu0 %4893
      %4895 = vrot.lane.b32.xlu0 %v4754, 32
      %v4896 = vpop.permute.xlu0 %4895
      %4897 = vrot.lane.b32.xlu0 %v4759, 32
      %v4898 = vpop.permute.xlu0 %4897
      %4899 = vrot.lane.b32.xlu0 %v4762, 32
      %v4900 = vpop.permute.xlu0 %4899
      %4901 = vrot.lane.b32.xlu0 %v4767, 32
      %v4902 = vpop.permute.xlu0 %4901
      %4903 = vrot.lane.b32.xlu0 %v4770, 32
      %v4904 = vpop.permute.xlu0 %4903
      %4905 = vrot.lane.b32.xlu0 %v4775, 32
      %v4906 = vpop.permute.xlu0 %4905
      %4907 = vrot.lane.b32.xlu0 %v4778, 32
      %v4908 = vpop.permute.xlu0 %4907
      %4909 = vrot.lane.b32.xlu0 %v4783, 32
      %v4910 = vpop.permute.xlu0 %4909
      %4911 = vrot.lane.b32.xlu0 %v4786, 32
      %v4912 = vpop.permute.xlu0 %4911
      %4913 = vrot.lane.b32.xlu0 %v4791, 32
      %v4914 = vpop.permute.xlu0 %4913
      %4915 = vrot.lane.b32.xlu0 %v4794, 32
      %v4916 = vpop.permute.xlu0 %4915
      %4917 = vrot.lane.b32.xlu0 %v4799, 32
      %v4918 = vpop.permute.xlu0 %4917
      %4919 = vrot.lane.b32.xlu0 %v4802, 32
      %v4920 = vpop.permute.xlu0 %4919
      %4921 = vrot.lane.b32.xlu0 %v4807, 32
      %v4922 = vpop.permute.xlu0 %4921
      %4923 = vrot.lane.b32.xlu0 %v4810, 32
      %v4924 = vpop.permute.xlu0 %4923
      %4925 = vrot.lane.b32.xlu0 %v4815, 32
      %v4926 = vpop.permute.xlu0 %4925
      %4927 = vrot.lane.b32.xlu0 %v4818, 32
      %v4928 = vpop.permute.xlu0 %4927
      %4929 = vrot.lane.b32.xlu0 %v4823, 32
      %v4930 = vpop.permute.xlu0 %4929
      %4931 = vrot.lane.b32.xlu0 %v4826, 32
      %v4932 = vpop.permute.xlu0 %4931
      %4933 = vrot.lane.b32.xlu0 %v4831, 32
      %v4934 = vpop.permute.xlu0 %4933
      %4935 = vrot.lane.b32.xlu0 %v4834, 32
      %v4936 = vpop.permute.xlu0 %4935
      %4937 = vrot.lane.b32.xlu0 %v4839, 32
      %v4938 = vpop.permute.xlu0 %4937
      %4939 = vrot.lane.b32.xlu0 %v4842, 32
      %v4940 = vpop.permute.xlu0 %4939
      %v4973 = vsel %vm1550, %v3973, %v4878
      %v4974 = vsel %vm1550, %v3974, %v4880
      %v4975 = vsel %vm1550, %v3975, %v4882
      %v4976 = vsel %vm1550, %v3976, %v4884
      %v4977 = vsel %vm1550, %v3977, %v4886
      %v4978 = vsel %vm1550, %v3978, %v4888
      %v4979 = vsel %vm1550, %v3979, %v4890
      %v4980 = vsel %vm1550, %v3980, %v4892
      %v4981 = vsel %vm1550, %v3981, %v4894
      %v4982 = vsel %vm1550, %v3982, %v4896
      %v4983 = vsel %vm1550, %v3983, %v4898
      %v4984 = vsel %vm1550, %v3984, %v4900
      %v4985 = vsel %vm1550, %v3985, %v4902
      %v4986 = vsel %vm1550, %v3986, %v4904
      %v4987 = vsel %vm1550, %v3987, %v4906
      %v4988 = vsel %vm1550, %v3988, %v4908
      %v4989 = vsel %vm1550, %v3989, %v4910
      %v4990 = vsel %vm1550, %v3990, %v4912
      %v4991 = vsel %vm1550, %v3991, %v4914
      %v4992 = vsel %vm1550, %v3992, %v4916
      %v4993 = vsel %vm1550, %v3993, %v4918
      %v4994 = vsel %vm1550, %v3994, %v4920
      %v4995 = vsel %vm1550, %v3995, %v4922
      %v4996 = vsel %vm1550, %v3996, %v4924
      %v4997 = vsel %vm1550, %v3997, %v4926
      %v4998 = vsel %vm1550, %v3998, %v4928
      %v4999 = vsel %vm1550, %v3999, %v4930
      %v5000 = vsel %vm1550, %v4000, %v4932
      %v5001 = vsel %vm1550, %v4001, %v4934
      %v5002 = vsel %vm1550, %v4002, %v4936
      %v5003 = vsel %vm1550, %v4003, %v4938
      %v5004 = vsel %vm1550, %v4004, %v4940
      %v5005 = vpack.c.bf16 %v4974, %v4973
      %v5006 = vpack.c.bf16 %v4976, %v4975
      %v5007 = vpack.c.bf16 %v4978, %v4977
      %v5008 = vpack.c.bf16 %v4980, %v4979
      %v5009 = vpack.c.bf16 %v4982, %v4981
      %v5010 = vpack.c.bf16 %v4984, %v4983
      %v5011 = vpack.c.bf16 %v4986, %v4985
      %v5012 = vpack.c.bf16 %v4988, %v4987
      %v5013 = vpack.c.bf16 %v4990, %v4989
      %v5014 = vpack.c.bf16 %v4992, %v4991
      %v5015 = vpack.c.bf16 %v4994, %v4993
      %v5016 = vpack.c.bf16 %v4996, %v4995
      %v5017 = vpack.c.bf16 %v4998, %v4997
      %v5018 = vpack.c.bf16 %v5000, %v4999
      %v5019 = vpack.c.bf16 %v5002, %v5001
      %v5020 = vpack.c.bf16 %v5004, %v5003
      %v5037 = vunpack.c.l.b16 %v5005
      %v5038 = vunpack.c.h.b16 %v5005
      %v5039 = vunpack.c.l.b16 %v5006
      %v5040 = vunpack.c.h.b16 %v5006
      %v5041 = vunpack.c.l.b16 %v5007
      %v5042 = vunpack.c.h.b16 %v5007
      %v5043 = vunpack.c.l.b16 %v5008
      %v5044 = vunpack.c.h.b16 %v5008
      %v5045 = vunpack.c.l.b16 %v5009
      %v5046 = vunpack.c.h.b16 %v5009
      %v5047 = vunpack.c.l.b16 %v5010
      %v5048 = vunpack.c.h.b16 %v5010
      %v5049 = vunpack.c.l.b16 %v5011
      %v5050 = vunpack.c.h.b16 %v5011
      %v5051 = vunpack.c.l.b16 %v5012
      %v5052 = vunpack.c.h.b16 %v5012
      %v5053 = vunpack.c.l.b16 %v5013
      %v5054 = vunpack.c.h.b16 %v5013
      %v5055 = vunpack.c.l.b16 %v5014
      %v5056 = vunpack.c.h.b16 %v5014
      %v5057 = vunpack.c.l.b16 %v5015
      %v5058 = vunpack.c.h.b16 %v5015
      %v5059 = vunpack.c.l.b16 %v5016
      %v5060 = vunpack.c.h.b16 %v5016
      %v5061 = vunpack.c.l.b16 %v5017
      %v5062 = vunpack.c.h.b16 %v5017
      %v5063 = vunpack.c.l.b16 %v5018
      %v5064 = vunpack.c.h.b16 %v5018
      %v5065 = vunpack.c.l.b16 %v5019
      %v5066 = vunpack.c.h.b16 %v5019
      %v5067 = vunpack.c.l.b16 %v5020
      %v5068 = vunpack.c.h.b16 %v5020
      %v5069 = vpack.c.b16 %v5037, %v5037
      %v5070 = vpack.c.b16 %v5038, %v5038
      %v5071 = vpack.c.b16 %v5039, %v5039
      %v5072 = vpack.c.b16 %v5040, %v5040
      %v5073 = vpack.c.b16 %v5041, %v5041
      %v5074 = vpack.c.b16 %v5042, %v5042
      %v5075 = vpack.c.b16 %v5043, %v5043
      %v5076 = vpack.c.b16 %v5044, %v5044
      %v5077 = vpack.c.b16 %v5045, %v5045
      %v5078 = vpack.c.b16 %v5046, %v5046
      %v5079 = vpack.c.b16 %v5047, %v5047
      %v5080 = vpack.c.b16 %v5048, %v5048
      %v5081 = vpack.c.b16 %v5049, %v5049
      %v5082 = vpack.c.b16 %v5050, %v5050
      %v5083 = vpack.c.b16 %v5051, %v5051
      %v5084 = vpack.c.b16 %v5052, %v5052
      %v5085 = vpack.c.b16 %v5053, %v5053
      %v5086 = vpack.c.b16 %v5054, %v5054
      %v5087 = vpack.c.b16 %v5055, %v5055
      %v5088 = vpack.c.b16 %v5056, %v5056
      %v5089 = vpack.c.b16 %v5057, %v5057
      %v5090 = vpack.c.b16 %v5058, %v5058
      %v5091 = vpack.c.b16 %v5059, %v5059
      %v5092 = vpack.c.b16 %v5060, %v5060
      %v5093 = vpack.c.b16 %v5061, %v5061
      %v5094 = vpack.c.b16 %v5062, %v5062
      %v5095 = vpack.c.b16 %v5063, %v5063
      %v5096 = vpack.c.b16 %v5064, %v5064
      %v5097 = vpack.c.b16 %v5065, %v5065
      %v5098 = vpack.c.b16 %v5066, %v5066
      %v5099 = vpack.c.b16 %v5067, %v5067
      %v5100 = vpack.c.b16 %v5068, %v5068
      %vm5133 = vcmask 519168
      %5134 = vst.msk [vmem:[%s278] sm:$0xf] %vm5133, %v5069
      %5135 = vst.msk [vmem:[%s278 + $0x4] sm:$0xf] %vm5133, %v5070
      %5136 = vst.msk [vmem:[%s278 + $0x8] sm:$0xf] %vm5133, %v5071
      %5137 = vst.msk [vmem:[%s278 + $0xc] sm:$0xf] %vm5133, %v5072
      %5138 = vst.msk [vmem:[%s278 + $0x10] sm:$0xf] %vm5133, %v5073
      %5139 = vst.msk [vmem:[%s278 + $0x14] sm:$0xf] %vm5133, %v5074
      %5140 = vst.msk [vmem:[%s278 + $0x18] sm:$0xf] %vm5133, %v5075
      %5141 = vst.msk [vmem:[%s278 + $0x1c] sm:$0xf] %vm5133, %v5076
      %5142 = vst.msk [vmem:[%s278 + $0x20] sm:$0xf] %vm5133, %v5077
      %5143 = vst.msk [vmem:[%s278 + $0x24] sm:$0xf] %vm5133, %v5078
      %5144 = vst.msk [vmem:[%s278 + $0x28] sm:$0xf] %vm5133, %v5079
      %5145 = vst.msk [vmem:[%s278 + $0x2c] sm:$0xf] %vm5133, %v5080
      %5146 = vst.msk [vmem:[%s278 + $0x30] sm:$0xf] %vm5133, %v5081
      %5147 = vst.msk [vmem:[%s278 + $0x34] sm:$0xf] %vm5133, %v5082
      %5148 = vst.msk [vmem:[%s278 + $0x38] sm:$0xf] %vm5133, %v5083
      %5149 = vst.msk [vmem:[%s278 + $0x3c] sm:$0xf] %vm5133, %v5084
      %5150 = vst.msk [vmem:[%s278 + $0x40] sm:$0xf] %vm5133, %v5085
      %5151 = vst.msk [vmem:[%s278 + $0x44] sm:$0xf] %vm5133, %v5086
      %5152 = vst.msk [vmem:[%s278 + $0x48] sm:$0xf] %vm5133, %v5087
      %5153 = vst.msk [vmem:[%s278 + $0x4c] sm:$0xf] %vm5133, %v5088
      %5154 = vst.msk [vmem:[%s278 + $0x50] sm:$0xf] %vm5133, %v5089
      %5155 = vst.msk [vmem:[%s278 + $0x54] sm:$0xf] %vm5133, %v5090
      %5156 = vst.msk [vmem:[%s278 + $0x58] sm:$0xf] %vm5133, %v5091
      %5157 = vst.msk [vmem:[%s278 + $0x5c] sm:$0xf] %vm5133, %v5092
      %5158 = vst.msk [vmem:[%s278 + $0x60] sm:$0xf] %vm5133, %v5093
      %5159 = vst.msk [vmem:[%s278 + $0x64] sm:$0xf] %vm5133, %v5094
      %5160 = vst.msk [vmem:[%s278 + $0x68] sm:$0xf] %vm5133, %v5095
      %5161 = vst.msk [vmem:[%s278 + $0x6c] sm:$0xf] %vm5133, %v5096
      %5162 = vst.msk [vmem:[%s278 + $0x70] sm:$0xf] %vm5133, %v5097
      %5163 = vst.msk [vmem:[%s278 + $0x74] sm:$0xf] %vm5133, %v5098
      %5164 = vst.msk [vmem:[%s278 + $0x78] sm:$0xf] %vm5133, %v5099
      %5165 = vst.msk [vmem:[%s278 + $0x7c] sm:$0xf] %vm5133, %v5100
      %p5166 = scmp.lt.s32.totalorder %s18, 1
      %s5167 = scalar_select %p5166, %s18, 1
      %s5168 = smul.addr %s5167, 32
      %s5169 = smul.addr %s5168, 4
      %s5170 = scalar_lea.vmem %s7, %s5169
      // Predicated region
      $region49: #{gated_pixelcnn_forward.3} parent=47 // pred_check
        %p5171 = pneg %p188
      $region50: #{gated_pixelcnn_forward.3} parent=47 // pred_check_branch
        %5173 = sbr.rel (%p5171) target = $region52
      $region51: #{gated_pixelcnn_forward.3} parent=47 // pred_region
        _
      $region52: #{gated_pixelcnn_forward.3} parent=47 // pred_fallthru
        _
    $region48: #{gated_pixelcnn_forward.3} parent=5 // pred_fallthru
      _
    %p5174 = scmp.le.s32.totalorder 2, %s13
    // Predicated region
    $region53: #{gated_pixelcnn_forward.3} parent=5 // pred_check
      %p5175 = pneg %p5174
    $region54: #{gated_pixelcnn_forward.3} parent=5 // pred_check_branch
      %5177 = sbr.rel (%p5175) target = $region56
    $region55: #{gated_pixelcnn_forward.3} parent=5 // pred_region
      %s5178 = ssub.s32 %s13, 2
      // Predicated region
      $region57: #{gated_pixelcnn_forward.3} parent=55 // pred_check
        %p5179 = pneg %p194
      $region58: #{gated_pixelcnn_forward.3} parent=55 // pred_check_branch
        %5181 = sbr.rel (%p5179) target = $region60
      $region59: #{gated_pixelcnn_forward.3} parent=55 // pred_region
        %p5182 = scmp.lt.s32.totalorder %s19, 1
        %s5183 = scalar_select %p5182, %s19, 1
        %s5184 = smul.addr %s5183, 32
        %s5185 = smul.addr %s5184, 4
        %s5186 = scalar_lea.vmem %s7, %s5185
      $region60: #{gated_pixelcnn_forward.3} parent=55 // pred_fallthru
        _
    $region56: #{gated_pixelcnn_forward.3} parent=5 // pred_fallthru
      _
  $region6: #{gated_pixelcnn_forward.3} parent=0 // loop_footer
    %s17 = sadd.s32 1, %s13
  $region7: #{gated_pixelcnn_forward.3} parent=0 // loop_footer_branch
    %12 = sbr.rel target = $region3
  $region8: #{gated_pixelcnn_forward.3} parent=0 // loop_exit
    _

</llo_original>
